<compile_context>
chip_gen: v6e
topology: v6e:2x2x1
jax: 0.10.0
libtpu: 0.0.40
codegen_flags: <defaults>
</compile_context>

<pallas_src>
import functools

import jax
import jax.numpy as jnp
from jax import lax
from jax.experimental import pallas as pl
from jax.experimental.pallas import tpu as pltpu


# ------------------------------------------------------------------ kernel helpers

def _conv3x3_bias_relu(xpad, w_ref, b_ref):
    """3x3 'SAME' conv on a pre-padded NHWC value + folded bias + ReLU.

    xpad : (N, H+2, W+2, Cin) value (halo already zero)
    w_ref: (9, Cin, Cout) ref, BN scale already folded into the columns
    b_ref: (1, Cout) ref, folded conv-bias + BN shift
    returns (N, H, W, Cout) value
    """
    n, hp, wp, cin = xpad.shape
    h, w = hp - 2, wp - 2
    cout = w_ref.shape[-1]

    acc = None
    # 3x3 conv as 9 shifted matmuls on the MXU. The W(sublane)-shifted view is built
    # once per dx and reused for all dy, so only cheap H-axis slices remain per tap.
    for dx in range(3):
        x_dx = xpad[:, :, dx:dx + w, :]                      # (N, H+2, W, Cin)
        for dy in range(3):
            patch = x_dx[:, dy:dy + h, :, :].reshape(n * h * w, cin)
            t = jnp.dot(patch, w_ref[3 * dy + dx],
                        preferred_element_type=jnp.float32)
            acc = t if acc is None else acc + t

    y = jnp.maximum(acc + b_ref[...], 0.0)                   # fused bias (BN folded) + ReLU
    return y.reshape(n, h, w, cout)


def _maxpool2(y):
    """2x2 / stride-2 max pool on (N, H, W, C) via elementwise maxima (VPU, no XLU reduce)."""
    n, h, w, c = y.shape
    y = y.reshape(n, h // 2, 2, w // 2, 2, c)
    return jnp.maximum(jnp.maximum(y[:, :, 0, :, 0, :], y[:, :, 0, :, 1, :]),
                       jnp.maximum(y[:, :, 1, :, 0, :], y[:, :, 1, :, 1, :]))


# ------------------------------------------------------------------ fused kernel

def convnet_kernel(x_ref,
                   w1_ref, b1_ref, w2_ref, b2_ref, w3_ref, b3_ref, w4_ref, b4_ref,
                   wfc_ref, bfc_ref,
                   out_ref,
                   pad1_ref, pad2_ref, pad3_ref, pad4_ref,
                   *, pool_mode):
    """One batch element (grid step) of the full ConvNet, entirely in VMEM."""
    layers = ((pad1_ref, w1_ref, b1_ref),
              (pad2_ref, w2_ref, b2_ref),
              (pad3_ref, w3_ref, b3_ref),
              (pad4_ref, w4_ref, b4_ref))

    act = x_ref[...]                                          # (1, H, W, Cin)
    for pad_ref, w_ref, b_ref in layers:
        n, h, w, _ = act.shape
        # Zero-initialised padded halo buffer in VMEM (replaces wrapper-side jnp.pad
        # and its HBM round trip). Zeroed every grid step so each core is correct.
        pad_ref[...] = jnp.zeros_like(pad_ref)
        pad_ref[:, 1:h + 1, 1:w + 1, :] = act
        y = _conv3x3_bias_relu(pad_ref[...], w_ref, b_ref)
        act = _maxpool2(y)

    # Head: adaptive pool to 1x1, flatten, Linear.
    n, h, w, c = act.shape
    if pool_mode == "avg_pool":
        feat = jnp.mean(act.reshape(n, h * w, c), axis=1)
    elif pool_mode == "max_pool":
        feat = jnp.max(act.reshape(n, h * w, c), axis=1)
    else:  # max_pool is None -> just flatten
        feat = act.reshape(n, h * w * c)
    out = jnp.dot(feat, wfc_ref[...], preferred_element_type=jnp.float32) + bfc_ref[...]
    out_ref[...] = out.reshape(out_ref.shape).astype(out_ref.dtype)


# ------------------------------------------------------------------ wrapper

def convnet_forward(x_nchw, params, fc_params, max_pool="avg_pool", resize=True,
                    eps=1e-5):
    """Forward pass matching ConvNet.forward (BatchNorm in eval mode)."""
    x = jnp.transpose(x_nchw, (0, 2, 3, 1)).astype(jnp.float32)  # NCHW -> NHWC
    N, H, W, Cin = x.shape

    # Fold conv bias + BatchNorm (running stats) into the conv weights / per-channel bias.
    folded_w, folded_b = [], []
    for (w, b_conv, gamma, beta, rmean, rvar) in params:
        scale = gamma / jnp.sqrt(rvar + eps)                     # (Cout,)
        cin, cout = w.shape[2], w.shape[3]
        folded_w.append((w.reshape(9, cin, cout) * scale[None, None, :])
                        .astype(jnp.float32))
        folded_b.append(((b_conv - rmean) * scale + beta).reshape(1, cout)
                        .astype(jnp.float32))

    wfc, bfc = fc_params
    num_classes = wfc.shape[-1]
    wfc = wfc.astype(jnp.float32)
    bfc2 = bfc.reshape(1, num_classes).astype(jnp.float32)

    if not resize:
        # TODO(synk): PyTorch would feed a 4-D tensor to nn.Linear when resize=False;
        # this port always flattens inside the head kernel.
        pass

    # Per-layer padded halo-buffer scratch; one batch element per grid step.
    scratch_shapes = []
    h, w_sp = H, W
    for w9 in folded_w:
        scratch_shapes.append(pltpu.VMEM((1, h + 2, w_sp + 2, w9.shape[1]),
                                         jnp.float32))
        h, w_sp = h // 2, w_sp // 2

    def whole(a):
        return pl.BlockSpec(a.shape, lambda n, _nd=a.ndim: (0,) * _nd)

    args = [x]
    in_specs = [pl.BlockSpec((1, H, W, Cin), lambda n: (n, 0, 0, 0))]
    for w9, b9 in zip(folded_w, folded_b):
        args += [w9, b9]
        in_specs += [whole(w9), whole(b9)]
    args += [wfc, bfc2]
    in_specs += [whole(wfc), whole(bfc2)]

    out = pl.pallas_call(
        functools.partial(convnet_kernel, pool_mode=max_pool),
        out_shape=jax.ShapeDtypeStruct((N, 1, num_classes), jnp.float32),
        grid=(N,),
        in_specs=in_specs,
        out_specs=pl.BlockSpec((1, 1, num_classes), lambda n: (n, 0, 0)),
        scratch_shapes=scratch_shapes,
        compiler_params=pltpu.CompilerParams(dimension_semantics=("parallel",)),
    )(*args)
    return out.reshape(N, num_classes)


# ------------------------------------------------------------------ pure-JAX reference

def convnet_reference(x_nchw, params, fc_params, max_pool="avg_pool", eps=1e-5):
    x = jnp.transpose(x_nchw, (0, 2, 3, 1))
    for (w, b_conv, gamma, beta, rmean, rvar) in params:
        y = lax.conv_general_dilated(x, w, (1, 1), "SAME",
                                     dimension_numbers=("NHWC", "HWIO", "NHWC"))
        scale = gamma / jnp.sqrt(rvar + eps)
        bias = (b_conv - rmean) * scale + beta
        y = jnp.maximum(y * scale + bias, 0.0)
        x = lax.reduce_window(y, -jnp.inf, lax.max,
                              (1, 2, 2, 1), (1, 2, 2, 1), "VALID")
    if max_pool == "avg_pool":
        feat = jnp.mean(x, axis=(1, 2))
    elif max_pool == "max_pool":
        feat = jnp.max(x, axis=(1, 2))
    else:
        feat = x.reshape(x.shape[0], -1)
    wfc, bfc = fc_params
    return feat @ wfc + bfc


# ------------------------------------------------------------------ params

def make_params(key, x_dim, hid_dim, z_dim, num_classes):
    dims = [x_dim, hid_dim, hid_dim, hid_dim, z_dim]
    params = []
    for i in range(4):
        key, k1, k2, k3, k4, k5, k6 = jax.random.split(key, 7)
        cin, cout = dims[i], dims[i + 1]
        fan_in = 3 * 3 * cin
        w = jax.random.normal(k1, (3, 3, cin, cout), jnp.float32) / jnp.sqrt(fan_in)
        b_conv = 0.1 * jax.random.normal(k2, (cout,), jnp.float32)
        gamma = 1.0 + 0.1 * jax.random.normal(k3, (cout,), jnp.float32)
        beta = 0.1 * jax.random.normal(k4, (cout,), jnp.float32)
        rmean = 0.1 * jax.random.normal(k5, (cout,), jnp.float32)
        rvar = 1.0 + 0.1 * jnp.abs(jax.random.normal(k6, (cout,), jnp.float32))
        params.append((w, b_conv, gamma, beta, rmean, rvar))
    key, kw, kb = jax.random.split(key, 3)
    wfc = jax.random.normal(kw, (z_dim, num_classes), jnp.float32) / jnp.sqrt(z_dim)
    bfc = 0.1 * jax.random.normal(kb, (num_classes,), jnp.float32)
    return params, (wfc, bfc)


# ------------------------------------------------------------------ main

if __name__ == "__main__":
    # ConvNet(x_dim=4, hid_dim=32, z_dim=64, max_pool='avg_pool', num_classes=5, resize=True)
    x_dim, hid_dim, z_dim, num_classes = 4, 32, 64, 5
    max_pool = "avg_pool"

    key = jax.random.PRNGKey(0)
    key, kx = jax.random.split(key)
    x = jax.random.normal(kx, (2, x_dim, 16, 16), jnp.float32)  # NCHW, as in PyTorch

    params, fc_params = make_params(key, x_dim, hid_dim, z_dim, num_classes)

    fwd = jax.jit(functools.partial(convnet_forward, max_pool=max_pool))
    out = jax.block_until_ready(fwd(x, params, fc_params))

    ref = convnet_reference(x, params, fc_params, max_pool=max_pool)
    assert out.shape == (2, num_classes), out.shape
    assert jnp.allclose(out, ref, atol=1e-3, rtol=1e-3), (out, ref)

    print("KERNEL_OK")
</pallas_src>

<mosaic_0001>
module attributes {stable_mosaic.version = 11 : i64} {
  func.func @convnet_kernel(%arg0: i32, %arg1: memref<1x16x16x4xf32, #tpu.memory_space<vmem>>, %arg2: memref<9x4x32xf32, #tpu.memory_space<vmem>>, %arg3: memref<1x32xf32, #tpu.memory_space<vmem>>, %arg4: memref<9x32x32xf32, #tpu.memory_space<vmem>>, %arg5: memref<1x32xf32, #tpu.memory_space<vmem>>, %arg6: memref<9x32x32xf32, #tpu.memory_space<vmem>>, %arg7: memref<1x32xf32, #tpu.memory_space<vmem>>, %arg8: memref<9x32x64xf32, #tpu.memory_space<vmem>>, %arg9: memref<1x64xf32, #tpu.memory_space<vmem>>, %arg10: memref<64x5xf32, #tpu.memory_space<vmem>>, %arg11: memref<1x5xf32, #tpu.memory_space<vmem>>, %arg12: memref<1x1x5xf32, #tpu.memory_space<vmem>>, %arg13: memref<1x18x18x4xf32, #tpu.memory_space<vmem>>, %arg14: memref<1x10x10x32xf32, #tpu.memory_space<vmem>>, %arg15: memref<1x6x6x32xf32, #tpu.memory_space<vmem>>, %arg16: memref<1x4x4x32xf32, #tpu.memory_space<vmem>>) attributes {dimension_semantics = [#tpu.dimension_semantics<parallel>], iteration_bounds = array<i64: 2>, scalar_prefetch = 0 : i64, scratch_operands = 4 : i64, tpu.core_type = #tpu.core_type<tc>, window_params = [{transform_indices = @transform_0, window_bounds = array<i64: 1, 16, 16, 4>}, {pipeline_mode = #tpu.pipeline_mode<synchronous>, transform_indices = @transform_1, window_bounds = array<i64: 9, 4, 32>}, {pipeline_mode = #tpu.pipeline_mode<synchronous>, transform_indices = @transform_2, window_bounds = array<i64: 1, 32>}, {pipeline_mode = #tpu.pipeline_mode<synchronous>, transform_indices = @transform_3, window_bounds = array<i64: 9, 32, 32>}, {pipeline_mode = #tpu.pipeline_mode<synchronous>, transform_indices = @transform_4, window_bounds = array<i64: 1, 32>}, {pipeline_mode = #tpu.pipeline_mode<synchronous>, transform_indices = @transform_5, window_bounds = array<i64: 9, 32, 32>}, {pipeline_mode = #tpu.pipeline_mode<synchronous>, transform_indices = @transform_6, window_bounds = array<i64: 1, 32>}, {pipeline_mode = #tpu.pipeline_mode<synchronous>, transform_indices = @transform_7, window_bounds = array<i64: 9, 32, 64>}, {pipeline_mode = #tpu.pipeline_mode<synchronous>, transform_indices = @transform_8, window_bounds = array<i64: 1, 64>}, {pipeline_mode = #tpu.pipeline_mode<synchronous>, transform_indices = @transform_9, window_bounds = array<i64: 64, 5>}, {pipeline_mode = #tpu.pipeline_mode<synchronous>, transform_indices = @transform_10, window_bounds = array<i64: 1, 5>}, {transform_indices = @transform_11, window_bounds = array<i64: 1, 1, 5>}]} {
    %c0 = arith.constant 0 : index
    %c0_0 = arith.constant 0 : index
    %c0_1 = arith.constant 0 : index
    %c0_2 = arith.constant 0 : index
    %0 = vector.load %arg1[%c0, %c0_0, %c0_1, %c0_2] : memref<1x16x16x4xf32, #tpu.memory_space<vmem>>, vector<1x16x16x4xf32>
    %cst = arith.constant 0.000000e+00 : f32
    %1 = vector.broadcast %cst : f32 to vector<1x18x18x4xf32>
    %c0_3 = arith.constant 0 : index
    %c0_4 = arith.constant 0 : index
    %c0_5 = arith.constant 0 : index
    %c0_6 = arith.constant 0 : index
    %2 = vector.load %arg13[%c0_3, %c0_4, %c0_5, %c0_6] : memref<1x18x18x4xf32, #tpu.memory_space<vmem>>, vector<1x18x18x4xf32>
    tpu.vector_store %arg13[%c0_3, %c0_4, %c0_5, %c0_6], %1 {strides = array<i32>} : memref<1x18x18x4xf32, #tpu.memory_space<vmem>>, vector<1x18x18x4xf32>,
    %c0_7 = arith.constant 0 : index
    %c1 = arith.constant 1 : index
    %c1_8 = arith.constant 1 : index
    %c0_9 = arith.constant 0 : index
    %3 = vector.load %arg13[%c0_7, %c1, %c1_8, %c0_9] : memref<1x18x18x4xf32, #tpu.memory_space<vmem>>, vector<1x16x16x4xf32>
    tpu.vector_store %arg13[%c0_7, %c1, %c1_8, %c0_9], %0 {strides = array<i32>} : memref<1x18x18x4xf32, #tpu.memory_space<vmem>>, vector<1x16x16x4xf32>,
    %c0_10 = arith.constant 0 : index
    %c0_11 = arith.constant 0 : index
    %c0_12 = arith.constant 0 : index
    %c0_13 = arith.constant 0 : index
    %4 = vector.load %arg13[%c0_10, %c0_11, %c0_12, %c0_13] : memref<1x18x18x4xf32, #tpu.memory_space<vmem>>, vector<1x18x18x4xf32>
    %5 = vector.extract_strided_slice %4 {offsets = [0, 0, 0, 0], sizes = [1, 18, 16, 4], strides = [1, 1, 1, 1]} : vector<1x18x18x4xf32> to vector<1x18x16x4xf32>
    %6 = vector.extract_strided_slice %5 {offsets = [0, 0, 0, 0], sizes = [1, 16, 16, 4], strides = [1, 1, 1, 1]} : vector<1x18x16x4xf32> to vector<1x16x16x4xf32>
    %7 = vector.shape_cast %6 : vector<1x16x16x4xf32> to vector<256x4xf32>
    %c0_14 = arith.constant 0 : index
    %c0_15 = arith.constant 0 : index
    %c0_16 = arith.constant 0 : index
    %8 = vector.load %arg2[%c0_14, %c0_15, %c0_16] : memref<9x4x32xf32, #tpu.memory_space<vmem>>, vector<1x4x32xf32>
    %9 = vector.shape_cast %8 : vector<1x4x32xf32> to vector<4x32xf32>
    %cst_17 = arith.constant dense<0.000000e+00> : vector<256x32xf32>
    %10 = tpu.matmul %7, %9, %cst_17 {dimension_numbers = #tpu.dot_dimension_numbers<[1], [0], [0], [1], [0, 0, 1, 1], [], []>} : vector<256x4xf32>, vector<4x32xf32>, vector<256x32xf32> -> vector<256x32xf32>
    %11 = vector.extract_strided_slice %5 {offsets = [0, 1, 0, 0], sizes = [1, 16, 16, 4], strides = [1, 1, 1, 1]} : vector<1x18x16x4xf32> to vector<1x16x16x4xf32>
    %12 = vector.shape_cast %11 : vector<1x16x16x4xf32> to vector<256x4xf32>
    %c3 = arith.constant 3 : index
    %c0_18 = arith.constant 0 : index
    %c0_19 = arith.constant 0 : index
    %13 = vector.load %arg2[%c3, %c0_18, %c0_19] : memref<9x4x32xf32, #tpu.memory_space<vmem>>, vector<1x4x32xf32>
    %14 = vector.shape_cast %13 : vector<1x4x32xf32> to vector<4x32xf32>
    %cst_20 = arith.constant dense<0.000000e+00> : vector<256x32xf32>
    %15 = tpu.matmul %12, %14, %cst_20 {dimension_numbers = #tpu.dot_dimension_numbers<[1], [0], [0], [1], [0, 0, 1, 1], [], []>} : vector<256x4xf32>, vector<4x32xf32>, vector<256x32xf32> -> vector<256x32xf32>
    %16 = arith.addf %10, %15 : vector<256x32xf32>
    %17 = vector.extract_strided_slice %5 {offsets = [0, 2, 0, 0], sizes = [1, 16, 16, 4], strides = [1, 1, 1, 1]} : vector<1x18x16x4xf32> to vector<1x16x16x4xf32>
    %18 = vector.shape_cast %17 : vector<1x16x16x4xf32> to vector<256x4xf32>
    %c6 = arith.constant 6 : index
    %c0_21 = arith.constant 0 : index
    %c0_22 = arith.constant 0 : index
    %19 = vector.load %arg2[%c6, %c0_21, %c0_22] : memref<9x4x32xf32, #tpu.memory_space<vmem>>, vector<1x4x32xf32>
    %20 = vector.shape_cast %19 : vector<1x4x32xf32> to vector<4x32xf32>
    %cst_23 = arith.constant dense<0.000000e+00> : vector<256x32xf32>
    %21 = tpu.matmul %18, %20, %cst_23 {dimension_numbers = #tpu.dot_dimension_numbers<[1], [0], [0], [1], [0, 0, 1, 1], [], []>} : vector<256x4xf32>, vector<4x32xf32>, vector<256x32xf32> -> vector<256x32xf32>
    %22 = arith.addf %16, %21 : vector<256x32xf32>
    %23 = vector.extract_strided_slice %4 {offsets = [0, 0, 1, 0], sizes = [1, 18, 16, 4], strides = [1, 1, 1, 1]} : vector<1x18x18x4xf32> to vector<1x18x16x4xf32>
    %24 = vector.extract_strided_slice %23 {offsets = [0, 0, 0, 0], sizes = [1, 16, 16, 4], strides = [1, 1, 1, 1]} : vector<1x18x16x4xf32> to vector<1x16x16x4xf32>
    %25 = vector.shape_cast %24 : vector<1x16x16x4xf32> to vector<256x4xf32>
    %c1_24 = arith.constant 1 : index
    %c0_25 = arith.constant 0 : index
    %c0_26 = arith.constant 0 : index
    %26 = vector.load %arg2[%c1_24, %c0_25, %c0_26] : memref<9x4x32xf32, #tpu.memory_space<vmem>>, vector<1x4x32xf32>
    %27 = vector.shape_cast %26 : vector<1x4x32xf32> to vector<4x32xf32>
    %cst_27 = arith.constant dense<0.000000e+00> : vector<256x32xf32>
    %28 = tpu.matmul %25, %27, %cst_27 {dimension_numbers = #tpu.dot_dimension_numbers<[1], [0], [0], [1], [0, 0, 1, 1], [], []>} : vector<256x4xf32>, vector<4x32xf32>, vector<256x32xf32> -> vector<256x32xf32>
    %29 = arith.addf %22, %28 : vector<256x32xf32>
    %30 = vector.extract_strided_slice %23 {offsets = [0, 1, 0, 0], sizes = [1, 16, 16, 4], strides = [1, 1, 1, 1]} : vector<1x18x16x4xf32> to vector<1x16x16x4xf32>
    %31 = vector.shape_cast %30 : vector<1x16x16x4xf32> to vector<256x4xf32>
    %c4 = arith.constant 4 : index
    %c0_28 = arith.constant 0 : index
    %c0_29 = arith.constant 0 : index
    %32 = vector.load %arg2[%c4, %c0_28, %c0_29] : memref<9x4x32xf32, #tpu.memory_space<vmem>>, vector<1x4x32xf32>
    %33 = vector.shape_cast %32 : vector<1x4x32xf32> to vector<4x32xf32>
    %cst_30 = arith.constant dense<0.000000e+00> : vector<256x32xf32>
    %34 = tpu.matmul %31, %33, %cst_30 {dimension_numbers = #tpu.dot_dimension_numbers<[1], [0], [0], [1], [0, 0, 1, 1], [], []>} : vector<256x4xf32>, vector<4x32xf32>, vector<256x32xf32> -> vector<256x32xf32>
    %35 = arith.addf %29, %34 : vector<256x32xf32>
    %36 = vector.extract_strided_slice %23 {offsets = [0, 2, 0, 0], sizes = [1, 16, 16, 4], strides = [1, 1, 1, 1]} : vector<1x18x16x4xf32> to vector<1x16x16x4xf32>
    %37 = vector.shape_cast %36 : vector<1x16x16x4xf32> to vector<256x4xf32>
    %c7 = arith.constant 7 : index
    %c0_31 = arith.constant 0 : index
    %c0_32 = arith.constant 0 : index
    %38 = vector.load %arg2[%c7, %c0_31, %c0_32] : memref<9x4x32xf32, #tpu.memory_space<vmem>>, vector<1x4x32xf32>
    %39 = vector.shape_cast %38 : vector<1x4x32xf32> to vector<4x32xf32>
    %cst_33 = arith.constant dense<0.000000e+00> : vector<256x32xf32>
    %40 = tpu.matmul %37, %39, %cst_33 {dimension_numbers = #tpu.dot_dimension_numbers<[1], [0], [0], [1], [0, 0, 1, 1], [], []>} : vector<256x4xf32>, vector<4x32xf32>, vector<256x32xf32> -> vector<256x32xf32>
    %41 = arith.addf %35, %40 : vector<256x32xf32>
    %42 = vector.extract_strided_slice %4 {offsets = [0, 0, 2, 0], sizes = [1, 18, 16, 4], strides = [1, 1, 1, 1]} : vector<1x18x18x4xf32> to vector<1x18x16x4xf32>
    %43 = vector.extract_strided_slice %42 {offsets = [0, 0, 0, 0], sizes = [1, 16, 16, 4], strides = [1, 1, 1, 1]} : vector<1x18x16x4xf32> to vector<1x16x16x4xf32>
    %44 = vector.shape_cast %43 : vector<1x16x16x4xf32> to vector<256x4xf32>
    %c2 = arith.constant 2 : index
    %c0_34 = arith.constant 0 : index
    %c0_35 = arith.constant 0 : index
    %45 = vector.load %arg2[%c2, %c0_34, %c0_35] : memref<9x4x32xf32, #tpu.memory_space<vmem>>, vector<1x4x32xf32>
    %46 = vector.shape_cast %45 : vector<1x4x32xf32> to vector<4x32xf32>
    %cst_36 = arith.constant dense<0.000000e+00> : vector<256x32xf32>
    %47 = tpu.matmul %44, %46, %cst_36 {dimension_numbers = #tpu.dot_dimension_numbers<[1], [0], [0], [1], [0, 0, 1, 1], [], []>} : vector<256x4xf32>, vector<4x32xf32>, vector<256x32xf32> -> vector<256x32xf32>
    %48 = arith.addf %41, %47 : vector<256x32xf32>
    %49 = vector.extract_strided_slice %42 {offsets = [0, 1, 0, 0], sizes = [1, 16, 16, 4], strides = [1, 1, 1, 1]} : vector<1x18x16x4xf32> to vector<1x16x16x4xf32>
    %50 = vector.shape_cast %49 : vector<1x16x16x4xf32> to vector<256x4xf32>
    %c5 = arith.constant 5 : index
    %c0_37 = arith.constant 0 : index
    %c0_38 = arith.constant 0 : index
    %51 = vector.load %arg2[%c5, %c0_37, %c0_38] : memref<9x4x32xf32, #tpu.memory_space<vmem>>, vector<1x4x32xf32>
    %52 = vector.shape_cast %51 : vector<1x4x32xf32> to vector<4x32xf32>
    %cst_39 = arith.constant dense<0.000000e+00> : vector<256x32xf32>
    %53 = tpu.matmul %50, %52, %cst_39 {dimension_numbers = #tpu.dot_dimension_numbers<[1], [0], [0], [1], [0, 0, 1, 1], [], []>} : vector<256x4xf32>, vector<4x32xf32>, vector<256x32xf32> -> vector<256x32xf32>
    %54 = arith.addf %48, %53 : vector<256x32xf32>
    %55 = vector.extract_strided_slice %42 {offsets = [0, 2, 0, 0], sizes = [1, 16, 16, 4], strides = [1, 1, 1, 1]} : vector<1x18x16x4xf32> to vector<1x16x16x4xf32>
    %56 = vector.shape_cast %55 : vector<1x16x16x4xf32> to vector<256x4xf32>
    %c8 = arith.constant 8 : index
    %c0_40 = arith.constant 0 : index
    %c0_41 = arith.constant 0 : index
    %57 = vector.load %arg2[%c8, %c0_40, %c0_41] : memref<9x4x32xf32, #tpu.memory_space<vmem>>, vector<1x4x32xf32>
    %58 = vector.shape_cast %57 : vector<1x4x32xf32> to vector<4x32xf32>
    %cst_42 = arith.constant dense<0.000000e+00> : vector<256x32xf32>
    %59 = tpu.matmul %56, %58, %cst_42 {dimension_numbers = #tpu.dot_dimension_numbers<[1], [0], [0], [1], [0, 0, 1, 1], [], []>} : vector<256x4xf32>, vector<4x32xf32>, vector<256x32xf32> -> vector<256x32xf32>
    %60 = arith.addf %54, %59 : vector<256x32xf32>
    %c0_43 = arith.constant 0 : index
    %c0_44 = arith.constant 0 : index
    %61 = vector.load %arg3[%c0_43, %c0_44] : memref<1x32xf32, #tpu.memory_space<vmem>>, vector<1x32xf32>
    %62 = vector.broadcast %61 : vector<1x32xf32> to vector<256x32xf32>
    %63 = arith.addf %60, %62 : vector<256x32xf32>
    %cst_45 = arith.constant 0.000000e+00 : f32
    %64 = vector.broadcast %cst_45 : f32 to vector<256x32xf32>
    %65 = arith.maximumf %63, %64 : vector<256x32xf32>
    %66 = vector.shape_cast %65 : vector<256x32xf32> to vector<1x16x16x32xf32>
    %67 = vector.shape_cast %66 : vector<1x16x16x32xf32> to vector<1x8x2x8x2x32xf32>
    %68 = vector.extract_strided_slice %67 {offsets = [0, 0, 0, 0, 0, 0], sizes = [1, 8, 1, 8, 1, 32], strides = [1, 1, 1, 1, 1, 1]} : vector<1x8x2x8x2x32xf32> to vector<1x8x1x8x1x32xf32>
    %69 = vector.shape_cast %68 : vector<1x8x1x8x1x32xf32> to vector<1x8x8x32xf32>
    %70 = vector.extract_strided_slice %67 {offsets = [0, 0, 0, 0, 1, 0], sizes = [1, 8, 1, 8, 1, 32], strides = [1, 1, 1, 1, 1, 1]} : vector<1x8x2x8x2x32xf32> to vector<1x8x1x8x1x32xf32>
    %71 = vector.shape_cast %70 : vector<1x8x1x8x1x32xf32> to vector<1x8x8x32xf32>
    %72 = arith.maximumf %69, %71 : vector<1x8x8x32xf32>
    %73 = vector.extract_strided_slice %67 {offsets = [0, 0, 1, 0, 0, 0], sizes = [1, 8, 1, 8, 1, 32], strides = [1, 1, 1, 1, 1, 1]} : vector<1x8x2x8x2x32xf32> to vector<1x8x1x8x1x32xf32>
    %74 = vector.shape_cast %73 : vector<1x8x1x8x1x32xf32> to vector<1x8x8x32xf32>
    %75 = vector.extract_strided_slice %67 {offsets = [0, 0, 1, 0, 1, 0], sizes = [1, 8, 1, 8, 1, 32], strides = [1, 1, 1, 1, 1, 1]} : vector<1x8x2x8x2x32xf32> to vector<1x8x1x8x1x32xf32>
    %76 = vector.shape_cast %75 : vector<1x8x1x8x1x32xf32> to vector<1x8x8x32xf32>
    %77 = arith.maximumf %74, %76 : vector<1x8x8x32xf32>
    %78 = arith.maximumf %72, %77 : vector<1x8x8x32xf32>
    %cst_46 = arith.constant 0.000000e+00 : f32
    %79 = vector.broadcast %cst_46 : f32 to vector<1x10x10x32xf32>
    %c0_47 = arith.constant 0 : index
    %c0_48 = arith.constant 0 : index
    %c0_49 = arith.constant 0 : index
    %c0_50 = arith.constant 0 : index
    %80 = vector.load %arg14[%c0_47, %c0_48, %c0_49, %c0_50] : memref<1x10x10x32xf32, #tpu.memory_space<vmem>>, vector<1x10x10x32xf32>
    tpu.vector_store %arg14[%c0_47, %c0_48, %c0_49, %c0_50], %79 {strides = array<i32>} : memref<1x10x10x32xf32, #tpu.memory_space<vmem>>, vector<1x10x10x32xf32>,
    %c0_51 = arith.constant 0 : index
    %c1_52 = arith.constant 1 : index
    %c1_53 = arith.constant 1 : index
    %c0_54 = arith.constant 0 : index
    %81 = vector.load %arg14[%c0_51, %c1_52, %c1_53, %c0_54] : memref<1x10x10x32xf32, #tpu.memory_space<vmem>>, vector<1x8x8x32xf32>
    tpu.vector_store %arg14[%c0_51, %c1_52, %c1_53, %c0_54], %78 {strides = array<i32>} : memref<1x10x10x32xf32, #tpu.memory_space<vmem>>, vector<1x8x8x32xf32>,
    %c0_55 = arith.constant 0 : index
    %c0_56 = arith.constant 0 : index
    %c0_57 = arith.constant 0 : index
    %c0_58 = arith.constant 0 : index
    %82 = vector.load %arg14[%c0_55, %c0_56, %c0_57, %c0_58] : memref<1x10x10x32xf32, #tpu.memory_space<vmem>>, vector<1x10x10x32xf32>
    %83 = vector.extract_strided_slice %82 {offsets = [0, 0, 0, 0], sizes = [1, 10, 8, 32], strides = [1, 1, 1, 1]} : vector<1x10x10x32xf32> to vector<1x10x8x32xf32>
    %84 = vector.extract_strided_slice %83 {offsets = [0, 0, 0, 0], sizes = [1, 8, 8, 32], strides = [1, 1, 1, 1]} : vector<1x10x8x32xf32> to vector<1x8x8x32xf32>
    %85 = vector.shape_cast %84 : vector<1x8x8x32xf32> to vector<64x32xf32>
    %c0_59 = arith.constant 0 : index
    %c0_60 = arith.constant 0 : index
    %c0_61 = arith.constant 0 : index
    %86 = vector.load %arg4[%c0_59, %c0_60, %c0_61] : memref<9x32x32xf32, #tpu.memory_space<vmem>>, vector<1x32x32xf32>
    %87 = vector.shape_cast %86 : vector<1x32x32xf32> to vector<32x32xf32>
    %cst_62 = arith.constant dense<0.000000e+00> : vector<64x32xf32>
    %88 = tpu.matmul %85, %87, %cst_62 {dimension_numbers = #tpu.dot_dimension_numbers<[1], [0], [0], [1], [0, 0, 1, 1], [], []>} : vector<64x32xf32>, vector<32x32xf32>, vector<64x32xf32> -> vector<64x32xf32>
    %89 = vector.extract_strided_slice %83 {offsets = [0, 1, 0, 0], sizes = [1, 8, 8, 32], strides = [1, 1, 1, 1]} : vector<1x10x8x32xf32> to vector<1x8x8x32xf32>
    %90 = vector.shape_cast %89 : vector<1x8x8x32xf32> to vector<64x32xf32>
    %c3_63 = arith.constant 3 : index
    %c0_64 = arith.constant 0 : index
    %c0_65 = arith.constant 0 : index
    %91 = vector.load %arg4[%c3_63, %c0_64, %c0_65] : memref<9x32x32xf32, #tpu.memory_space<vmem>>, vector<1x32x32xf32>
    %92 = vector.shape_cast %91 : vector<1x32x32xf32> to vector<32x32xf32>
    %cst_66 = arith.constant dense<0.000000e+00> : vector<64x32xf32>
    %93 = tpu.matmul %90, %92, %cst_66 {dimension_numbers = #tpu.dot_dimension_numbers<[1], [0], [0], [1], [0, 0, 1, 1], [], []>} : vector<64x32xf32>, vector<32x32xf32>, vector<64x32xf32> -> vector<64x32xf32>
    %94 = arith.addf %88, %93 : vector<64x32xf32>
    %95 = vector.extract_strided_slice %83 {offsets = [0, 2, 0, 0], sizes = [1, 8, 8, 32], strides = [1, 1, 1, 1]} : vector<1x10x8x32xf32> to vector<1x8x8x32xf32>
    %96 = vector.shape_cast %95 : vector<1x8x8x32xf32> to vector<64x32xf32>
    %c6_67 = arith.constant 6 : index
    %c0_68 = arith.constant 0 : index
    %c0_69 = arith.constant 0 : index
    %97 = vector.load %arg4[%c6_67, %c0_68, %c0_69] : memref<9x32x32xf32, #tpu.memory_space<vmem>>, vector<1x32x32xf32>
    %98 = vector.shape_cast %97 : vector<1x32x32xf32> to vector<32x32xf32>
    %cst_70 = arith.constant dense<0.000000e+00> : vector<64x32xf32>
    %99 = tpu.matmul %96, %98, %cst_70 {dimension_numbers = #tpu.dot_dimension_numbers<[1], [0], [0], [1], [0, 0, 1, 1], [], []>} : vector<64x32xf32>, vector<32x32xf32>, vector<64x32xf32> -> vector<64x32xf32>
    %100 = arith.addf %94, %99 : vector<64x32xf32>
    %101 = vector.extract_strided_slice %82 {offsets = [0, 0, 1, 0], sizes = [1, 10, 8, 32], strides = [1, 1, 1, 1]} : vector<1x10x10x32xf32> to vector<1x10x8x32xf32>
    %102 = vector.extract_strided_slice %101 {offsets = [0, 0, 0, 0], sizes = [1, 8, 8, 32], strides = [1, 1, 1, 1]} : vector<1x10x8x32xf32> to vector<1x8x8x32xf32>
    %103 = vector.shape_cast %102 : vector<1x8x8x32xf32> to vector<64x32xf32>
    %c1_71 = arith.constant 1 : index
    %c0_72 = arith.constant 0 : index
    %c0_73 = arith.constant 0 : index
    %104 = vector.load %arg4[%c1_71, %c0_72, %c0_73] : memref<9x32x32xf32, #tpu.memory_space<vmem>>, vector<1x32x32xf32>
    %105 = vector.shape_cast %104 : vector<1x32x32xf32> to vector<32x32xf32>
    %cst_74 = arith.constant dense<0.000000e+00> : vector<64x32xf32>
    %106 = tpu.matmul %103, %105, %cst_74 {dimension_numbers = #tpu.dot_dimension_numbers<[1], [0], [0], [1], [0, 0, 1, 1], [], []>} : vector<64x32xf32>, vector<32x32xf32>, vector<64x32xf32> -> vector<64x32xf32>
    %107 = arith.addf %100, %106 : vector<64x32xf32>
    %108 = vector.extract_strided_slice %101 {offsets = [0, 1, 0, 0], sizes = [1, 8, 8, 32], strides = [1, 1, 1, 1]} : vector<1x10x8x32xf32> to vector<1x8x8x32xf32>
    %109 = vector.shape_cast %108 : vector<1x8x8x32xf32> to vector<64x32xf32>
    %c4_75 = arith.constant 4 : index
    %c0_76 = arith.constant 0 : index
    %c0_77 = arith.constant 0 : index
    %110 = vector.load %arg4[%c4_75, %c0_76, %c0_77] : memref<9x32x32xf32, #tpu.memory_space<vmem>>, vector<1x32x32xf32>
    %111 = vector.shape_cast %110 : vector<1x32x32xf32> to vector<32x32xf32>
    %cst_78 = arith.constant dense<0.000000e+00> : vector<64x32xf32>
    %112 = tpu.matmul %109, %111, %cst_78 {dimension_numbers = #tpu.dot_dimension_numbers<[1], [0], [0], [1], [0, 0, 1, 1], [], []>} : vector<64x32xf32>, vector<32x32xf32>, vector<64x32xf32> -> vector<64x32xf32>
    %113 = arith.addf %107, %112 : vector<64x32xf32>
    %114 = vector.extract_strided_slice %101 {offsets = [0, 2, 0, 0], sizes = [1, 8, 8, 32], strides = [1, 1, 1, 1]} : vector<1x10x8x32xf32> to vector<1x8x8x32xf32>
    %115 = vector.shape_cast %114 : vector<1x8x8x32xf32> to vector<64x32xf32>
    %c7_79 = arith.constant 7 : index
    %c0_80 = arith.constant 0 : index
    %c0_81 = arith.constant 0 : index
    %116 = vector.load %arg4[%c7_79, %c0_80, %c0_81] : memref<9x32x32xf32, #tpu.memory_space<vmem>>, vector<1x32x32xf32>
    %117 = vector.shape_cast %116 : vector<1x32x32xf32> to vector<32x32xf32>
    %cst_82 = arith.constant dense<0.000000e+00> : vector<64x32xf32>
    %118 = tpu.matmul %115, %117, %cst_82 {dimension_numbers = #tpu.dot_dimension_numbers<[1], [0], [0], [1], [0, 0, 1, 1], [], []>} : vector<64x32xf32>, vector<32x32xf32>, vector<64x32xf32> -> vector<64x32xf32>
    %119 = arith.addf %113, %118 : vector<64x32xf32>
    %120 = vector.extract_strided_slice %82 {offsets = [0, 0, 2, 0], sizes = [1, 10, 8, 32], strides = [1, 1, 1, 1]} : vector<1x10x10x32xf32> to vector<1x10x8x32xf32>
    %121 = vector.extract_strided_slice %120 {offsets = [0, 0, 0, 0], sizes = [1, 8, 8, 32], strides = [1, 1, 1, 1]} : vector<1x10x8x32xf32> to vector<1x8x8x32xf32>
    %122 = vector.shape_cast %121 : vector<1x8x8x32xf32> to vector<64x32xf32>
    %c2_83 = arith.constant 2 : index
    %c0_84 = arith.constant 0 : index
    %c0_85 = arith.constant 0 : index
    %123 = vector.load %arg4[%c2_83, %c0_84, %c0_85] : memref<9x32x32xf32, #tpu.memory_space<vmem>>, vector<1x32x32xf32>
    %124 = vector.shape_cast %123 : vector<1x32x32xf32> to vector<32x32xf32>
    %cst_86 = arith.constant dense<0.000000e+00> : vector<64x32xf32>
    %125 = tpu.matmul %122, %124, %cst_86 {dimension_numbers = #tpu.dot_dimension_numbers<[1], [0], [0], [1], [0, 0, 1, 1], [], []>} : vector<64x32xf32>, vector<32x32xf32>, vector<64x32xf32> -> vector<64x32xf32>
    %126 = arith.addf %119, %125 : vector<64x32xf32>
    %127 = vector.extract_strided_slice %120 {offsets = [0, 1, 0, 0], sizes = [1, 8, 8, 32], strides = [1, 1, 1, 1]} : vector<1x10x8x32xf32> to vector<1x8x8x32xf32>
    %128 = vector.shape_cast %127 : vector<1x8x8x32xf32> to vector<64x32xf32>
    %c5_87 = arith.constant 5 : index
    %c0_88 = arith.constant 0 : index
    %c0_89 = arith.constant 0 : index
    %129 = vector.load %arg4[%c5_87, %c0_88, %c0_89] : memref<9x32x32xf32, #tpu.memory_space<vmem>>, vector<1x32x32xf32>
    %130 = vector.shape_cast %129 : vector<1x32x32xf32> to vector<32x32xf32>
    %cst_90 = arith.constant dense<0.000000e+00> : vector<64x32xf32>
    %131 = tpu.matmul %128, %130, %cst_90 {dimension_numbers = #tpu.dot_dimension_numbers<[1], [0], [0], [1], [0, 0, 1, 1], [], []>} : vector<64x32xf32>, vector<32x32xf32>, vector<64x32xf32> -> vector<64x32xf32>
    %132 = arith.addf %126, %131 : vector<64x32xf32>
    %133 = vector.extract_strided_slice %120 {offsets = [0, 2, 0, 0], sizes = [1, 8, 8, 32], strides = [1, 1, 1, 1]} : vector<1x10x8x32xf32> to vector<1x8x8x32xf32>
    %134 = vector.shape_cast %133 : vector<1x8x8x32xf32> to vector<64x32xf32>
    %c8_91 = arith.constant 8 : index
    %c0_92 = arith.constant 0 : index
    %c0_93 = arith.constant 0 : index
    %135 = vector.load %arg4[%c8_91, %c0_92, %c0_93] : memref<9x32x32xf32, #tpu.memory_space<vmem>>, vector<1x32x32xf32>
    %136 = vector.shape_cast %135 : vector<1x32x32xf32> to vector<32x32xf32>
    %cst_94 = arith.constant dense<0.000000e+00> : vector<64x32xf32>
    %137 = tpu.matmul %134, %136, %cst_94 {dimension_numbers = #tpu.dot_dimension_numbers<[1], [0], [0], [1], [0, 0, 1, 1], [], []>} : vector<64x32xf32>, vector<32x32xf32>, vector<64x32xf32> -> vector<64x32xf32>
    %138 = arith.addf %132, %137 : vector<64x32xf32>
    %c0_95 = arith.constant 0 : index
    %c0_96 = arith.constant 0 : index
    %139 = vector.load %arg5[%c0_95, %c0_96] : memref<1x32xf32, #tpu.memory_space<vmem>>, vector<1x32xf32>
    %140 = vector.broadcast %139 : vector<1x32xf32> to vector<64x32xf32>
    %141 = arith.addf %138, %140 : vector<64x32xf32>
    %cst_97 = arith.constant 0.000000e+00 : f32
    %142 = vector.broadcast %cst_97 : f32 to vector<64x32xf32>
    %143 = arith.maximumf %141, %142 : vector<64x32xf32>
    %144 = vector.shape_cast %143 : vector<64x32xf32> to vector<1x8x8x32xf32>
    %145 = vector.shape_cast %144 : vector<1x8x8x32xf32> to vector<1x4x2x4x2x32xf32>
    %146 = vector.extract_strided_slice %145 {offsets = [0, 0, 0, 0, 0, 0], sizes = [1, 4, 1, 4, 1, 32], strides = [1, 1, 1, 1, 1, 1]} : vector<1x4x2x4x2x32xf32> to vector<1x4x1x4x1x32xf32>
    %147 = vector.shape_cast %146 : vector<1x4x1x4x1x32xf32> to vector<1x4x4x32xf32>
    %148 = vector.extract_strided_slice %145 {offsets = [0, 0, 0, 0, 1, 0], sizes = [1, 4, 1, 4, 1, 32], strides = [1, 1, 1, 1, 1, 1]} : vector<1x4x2x4x2x32xf32> to vector<1x4x1x4x1x32xf32>
    %149 = vector.shape_cast %148 : vector<1x4x1x4x1x32xf32> to vector<1x4x4x32xf32>
    %150 = arith.maximumf %147, %149 : vector<1x4x4x32xf32>
    %151 = vector.extract_strided_slice %145 {offsets = [0, 0, 1, 0, 0, 0], sizes = [1, 4, 1, 4, 1, 32], strides = [1, 1, 1, 1, 1, 1]} : vector<1x4x2x4x2x32xf32> to vector<1x4x1x4x1x32xf32>
    %152 = vector.shape_cast %151 : vector<1x4x1x4x1x32xf32> to vector<1x4x4x32xf32>
    %153 = vector.extract_strided_slice %145 {offsets = [0, 0, 1, 0, 1, 0], sizes = [1, 4, 1, 4, 1, 32], strides = [1, 1, 1, 1, 1, 1]} : vector<1x4x2x4x2x32xf32> to vector<1x4x1x4x1x32xf32>
    %154 = vector.shape_cast %153 : vector<1x4x1x4x1x32xf32> to vector<1x4x4x32xf32>
    %155 = arith.maximumf %152, %154 : vector<1x4x4x32xf32>
    %156 = arith.maximumf %150, %155 : vector<1x4x4x32xf32>
    %cst_98 = arith.constant 0.000000e+00 : f32
    %157 = vector.broadcast %cst_98 : f32 to vector<1x6x6x32xf32>
    %c0_99 = arith.constant 0 : index
    %c0_100 = arith.constant 0 : index
    %c0_101 = arith.constant 0 : index
    %c0_102 = arith.constant 0 : index
    %158 = vector.load %arg15[%c0_99, %c0_100, %c0_101, %c0_102] : memref<1x6x6x32xf32, #tpu.memory_space<vmem>>, vector<1x6x6x32xf32>
    tpu.vector_store %arg15[%c0_99, %c0_100, %c0_101, %c0_102], %157 {strides = array<i32>} : memref<1x6x6x32xf32, #tpu.memory_space<vmem>>, vector<1x6x6x32xf32>,
    %c0_103 = arith.constant 0 : index
    %c1_104 = arith.constant 1 : index
    %c1_105 = arith.constant 1 : index
    %c0_106 = arith.constant 0 : index
    %159 = vector.load %arg15[%c0_103, %c1_104, %c1_105, %c0_106] : memref<1x6x6x32xf32, #tpu.memory_space<vmem>>, vector<1x4x4x32xf32>
    tpu.vector_store %arg15[%c0_103, %c1_104, %c1_105, %c0_106], %156 {strides = array<i32>} : memref<1x6x6x32xf32, #tpu.memory_space<vmem>>, vector<1x4x4x32xf32>,
    %c0_107 = arith.constant 0 : index
    %c0_108 = arith.constant 0 : index
    %c0_109 = arith.constant 0 : index
    %c0_110 = arith.constant 0 : index
    %160 = vector.load %arg15[%c0_107, %c0_108, %c0_109, %c0_110] : memref<1x6x6x32xf32, #tpu.memory_space<vmem>>, vector<1x6x6x32xf32>
    %161 = vector.extract_strided_slice %160 {offsets = [0, 0, 0, 0], sizes = [1, 6, 4, 32], strides = [1, 1, 1, 1]} : vector<1x6x6x32xf32> to vector<1x6x4x32xf32>
    %162 = vector.extract_strided_slice %161 {offsets = [0, 0, 0, 0], sizes = [1, 4, 4, 32], strides = [1, 1, 1, 1]} : vector<1x6x4x32xf32> to vector<1x4x4x32xf32>
    %163 = vector.shape_cast %162 : vector<1x4x4x32xf32> to vector<16x32xf32>
    %c0_111 = arith.constant 0 : index
    %c0_112 = arith.constant 0 : index
    %c0_113 = arith.constant 0 : index
    %164 = vector.load %arg6[%c0_111, %c0_112, %c0_113] : memref<9x32x32xf32, #tpu.memory_space<vmem>>, vector<1x32x32xf32>
    %165 = vector.shape_cast %164 : vector<1x32x32xf32> to vector<32x32xf32>
    %cst_114 = arith.constant dense<0.000000e+00> : vector<16x32xf32>
    %166 = tpu.matmul %163, %165, %cst_114 {dimension_numbers = #tpu.dot_dimension_numbers<[1], [0], [0], [1], [0, 0, 1, 1], [], []>} : vector<16x32xf32>, vector<32x32xf32>, vector<16x32xf32> -> vector<16x32xf32>
    %167 = vector.extract_strided_slice %161 {offsets = [0, 1, 0, 0], sizes = [1, 4, 4, 32], strides = [1, 1, 1, 1]} : vector<1x6x4x32xf32> to vector<1x4x4x32xf32>
    %168 = vector.shape_cast %167 : vector<1x4x4x32xf32> to vector<16x32xf32>
    %c3_115 = arith.constant 3 : index
    %c0_116 = arith.constant 0 : index
    %c0_117 = arith.constant 0 : index
    %169 = vector.load %arg6[%c3_115, %c0_116, %c0_117] : memref<9x32x32xf32, #tpu.memory_space<vmem>>, vector<1x32x32xf32>
    %170 = vector.shape_cast %169 : vector<1x32x32xf32> to vector<32x32xf32>
    %cst_118 = arith.constant dense<0.000000e+00> : vector<16x32xf32>
    %171 = tpu.matmul %168, %170, %cst_118 {dimension_numbers = #tpu.dot_dimension_numbers<[1], [0], [0], [1], [0, 0, 1, 1], [], []>} : vector<16x32xf32>, vector<32x32xf32>, vector<16x32xf32> -> vector<16x32xf32>
    %172 = arith.addf %166, %171 : vector<16x32xf32>
    %173 = vector.extract_strided_slice %161 {offsets = [0, 2, 0, 0], sizes = [1, 4, 4, 32], strides = [1, 1, 1, 1]} : vector<1x6x4x32xf32> to vector<1x4x4x32xf32>
    %174 = vector.shape_cast %173 : vector<1x4x4x32xf32> to vector<16x32xf32>
    %c6_119 = arith.constant 6 : index
    %c0_120 = arith.constant 0 : index
    %c0_121 = arith.constant 0 : index
    %175 = vector.load %arg6[%c6_119, %c0_120, %c0_121] : memref<9x32x32xf32, #tpu.memory_space<vmem>>, vector<1x32x32xf32>
    %176 = vector.shape_cast %175 : vector<1x32x32xf32> to vector<32x32xf32>
    %cst_122 = arith.constant dense<0.000000e+00> : vector<16x32xf32>
    %177 = tpu.matmul %174, %176, %cst_122 {dimension_numbers = #tpu.dot_dimension_numbers<[1], [0], [0], [1], [0, 0, 1, 1], [], []>} : vector<16x32xf32>, vector<32x32xf32>, vector<16x32xf32> -> vector<16x32xf32>
    %178 = arith.addf %172, %177 : vector<16x32xf32>
    %179 = vector.extract_strided_slice %160 {offsets = [0, 0, 1, 0], sizes = [1, 6, 4, 32], strides = [1, 1, 1, 1]} : vector<1x6x6x32xf32> to vector<1x6x4x32xf32>
    %180 = vector.extract_strided_slice %179 {offsets = [0, 0, 0, 0], sizes = [1, 4, 4, 32], strides = [1, 1, 1, 1]} : vector<1x6x4x32xf32> to vector<1x4x4x32xf32>
    %181 = vector.shape_cast %180 : vector<1x4x4x32xf32> to vector<16x32xf32>
    %c1_123 = arith.constant 1 : index
    %c0_124 = arith.constant 0 : index
    %c0_125 = arith.constant 0 : index
    %182 = vector.load %arg6[%c1_123, %c0_124, %c0_125] : memref<9x32x32xf32, #tpu.memory_space<vmem>>, vector<1x32x32xf32>
    %183 = vector.shape_cast %182 : vector<1x32x32xf32> to vector<32x32xf32>
    %cst_126 = arith.constant dense<0.000000e+00> : vector<16x32xf32>
    %184 = tpu.matmul %181, %183, %cst_126 {dimension_numbers = #tpu.dot_dimension_numbers<[1], [0], [0], [1], [0, 0, 1, 1], [], []>} : vector<16x32xf32>, vector<32x32xf32>, vector<16x32xf32> -> vector<16x32xf32>
    %185 = arith.addf %178, %184 : vector<16x32xf32>
    %186 = vector.extract_strided_slice %179 {offsets = [0, 1, 0, 0], sizes = [1, 4, 4, 32], strides = [1, 1, 1, 1]} : vector<1x6x4x32xf32> to vector<1x4x4x32xf32>
    %187 = vector.shape_cast %186 : vector<1x4x4x32xf32> to vector<16x32xf32>
    %c4_127 = arith.constant 4 : index
    %c0_128 = arith.constant 0 : index
    %c0_129 = arith.constant 0 : index
    %188 = vector.load %arg6[%c4_127, %c0_128, %c0_129] : memref<9x32x32xf32, #tpu.memory_space<vmem>>, vector<1x32x32xf32>
    %189 = vector.shape_cast %188 : vector<1x32x32xf32> to vector<32x32xf32>
    %cst_130 = arith.constant dense<0.000000e+00> : vector<16x32xf32>
    %190 = tpu.matmul %187, %189, %cst_130 {dimension_numbers = #tpu.dot_dimension_numbers<[1], [0], [0], [1], [0, 0, 1, 1], [], []>} : vector<16x32xf32>, vector<32x32xf32>, vector<16x32xf32> -> vector<16x32xf32>
    %191 = arith.addf %185, %190 : vector<16x32xf32>
    %192 = vector.extract_strided_slice %179 {offsets = [0, 2, 0, 0], sizes = [1, 4, 4, 32], strides = [1, 1, 1, 1]} : vector<1x6x4x32xf32> to vector<1x4x4x32xf32>
    %193 = vector.shape_cast %192 : vector<1x4x4x32xf32> to vector<16x32xf32>
    %c7_131 = arith.constant 7 : index
    %c0_132 = arith.constant 0 : index
    %c0_133 = arith.constant 0 : index
    %194 = vector.load %arg6[%c7_131, %c0_132, %c0_133] : memref<9x32x32xf32, #tpu.memory_space<vmem>>, vector<1x32x32xf32>
    %195 = vector.shape_cast %194 : vector<1x32x32xf32> to vector<32x32xf32>
    %cst_134 = arith.constant dense<0.000000e+00> : vector<16x32xf32>
    %196 = tpu.matmul %193, %195, %cst_134 {dimension_numbers = #tpu.dot_dimension_numbers<[1], [0], [0], [1], [0, 0, 1, 1], [], []>} : vector<16x32xf32>, vector<32x32xf32>, vector<16x32xf32> -> vector<16x32xf32>
    %197 = arith.addf %191, %196 : vector<16x32xf32>
    %198 = vector.extract_strided_slice %160 {offsets = [0, 0, 2, 0], sizes = [1, 6, 4, 32], strides = [1, 1, 1, 1]} : vector<1x6x6x32xf32> to vector<1x6x4x32xf32>
    %199 = vector.extract_strided_slice %198 {offsets = [0, 0, 0, 0], sizes = [1, 4, 4, 32], strides = [1, 1, 1, 1]} : vector<1x6x4x32xf32> to vector<1x4x4x32xf32>
    %200 = vector.shape_cast %199 : vector<1x4x4x32xf32> to vector<16x32xf32>
    %c2_135 = arith.constant 2 : index
    %c0_136 = arith.constant 0 : index
    %c0_137 = arith.constant 0 : index
    %201 = vector.load %arg6[%c2_135, %c0_136, %c0_137] : memref<9x32x32xf32, #tpu.memory_space<vmem>>, vector<1x32x32xf32>
    %202 = vector.shape_cast %201 : vector<1x32x32xf32> to vector<32x32xf32>
    %cst_138 = arith.constant dense<0.000000e+00> : vector<16x32xf32>
    %203 = tpu.matmul %200, %202, %cst_138 {dimension_numbers = #tpu.dot_dimension_numbers<[1], [0], [0], [1], [0, 0, 1, 1], [], []>} : vector<16x32xf32>, vector<32x32xf32>, vector<16x32xf32> -> vector<16x32xf32>
    %204 = arith.addf %197, %203 : vector<16x32xf32>
    %205 = vector.extract_strided_slice %198 {offsets = [0, 1, 0, 0], sizes = [1, 4, 4, 32], strides = [1, 1, 1, 1]} : vector<1x6x4x32xf32> to vector<1x4x4x32xf32>
    %206 = vector.shape_cast %205 : vector<1x4x4x32xf32> to vector<16x32xf32>
    %c5_139 = arith.constant 5 : index
    %c0_140 = arith.constant 0 : index
    %c0_141 = arith.constant 0 : index
    %207 = vector.load %arg6[%c5_139, %c0_140, %c0_141] : memref<9x32x32xf32, #tpu.memory_space<vmem>>, vector<1x32x32xf32>
    %208 = vector.shape_cast %207 : vector<1x32x32xf32> to vector<32x32xf32>
    %cst_142 = arith.constant dense<0.000000e+00> : vector<16x32xf32>
    %209 = tpu.matmul %206, %208, %cst_142 {dimension_numbers = #tpu.dot_dimension_numbers<[1], [0], [0], [1], [0, 0, 1, 1], [], []>} : vector<16x32xf32>, vector<32x32xf32>, vector<16x32xf32> -> vector<16x32xf32>
    %210 = arith.addf %204, %209 : vector<16x32xf32>
    %211 = vector.extract_strided_slice %198 {offsets = [0, 2, 0, 0], sizes = [1, 4, 4, 32], strides = [1, 1, 1, 1]} : vector<1x6x4x32xf32> to vector<1x4x4x32xf32>
    %212 = vector.shape_cast %211 : vector<1x4x4x32xf32> to vector<16x32xf32>
    %c8_143 = arith.constant 8 : index
    %c0_144 = arith.constant 0 : index
    %c0_145 = arith.constant 0 : index
    %213 = vector.load %arg6[%c8_143, %c0_144, %c0_145] : memref<9x32x32xf32, #tpu.memory_space<vmem>>, vector<1x32x32xf32>
    %214 = vector.shape_cast %213 : vector<1x32x32xf32> to vector<32x32xf32>
    %cst_146 = arith.constant dense<0.000000e+00> : vector<16x32xf32>
    %215 = tpu.matmul %212, %214, %cst_146 {dimension_numbers = #tpu.dot_dimension_numbers<[1], [0], [0], [1], [0, 0, 1, 1], [], []>} : vector<16x32xf32>, vector<32x32xf32>, vector<16x32xf32> -> vector<16x32xf32>
    %216 = arith.addf %210, %215 : vector<16x32xf32>
    %c0_147 = arith.constant 0 : index
    %c0_148 = arith.constant 0 : index
    %217 = vector.load %arg7[%c0_147, %c0_148] : memref<1x32xf32, #tpu.memory_space<vmem>>, vector<1x32xf32>
    %218 = vector.broadcast %217 : vector<1x32xf32> to vector<16x32xf32>
    %219 = arith.addf %216, %218 : vector<16x32xf32>
    %cst_149 = arith.constant 0.000000e+00 : f32
    %220 = vector.broadcast %cst_149 : f32 to vector<16x32xf32>
    %221 = arith.maximumf %219, %220 : vector<16x32xf32>
    %222 = vector.shape_cast %221 : vector<16x32xf32> to vector<1x4x4x32xf32>
    %223 = vector.shape_cast %222 : vector<1x4x4x32xf32> to vector<1x2x2x2x2x32xf32>
    %224 = vector.extract_strided_slice %223 {offsets = [0, 0, 0, 0, 0, 0], sizes = [1, 2, 1, 2, 1, 32], strides = [1, 1, 1, 1, 1, 1]} : vector<1x2x2x2x2x32xf32> to vector<1x2x1x2x1x32xf32>
    %225 = vector.shape_cast %224 : vector<1x2x1x2x1x32xf32> to vector<1x2x2x32xf32>
    %226 = vector.extract_strided_slice %223 {offsets = [0, 0, 0, 0, 1, 0], sizes = [1, 2, 1, 2, 1, 32], strides = [1, 1, 1, 1, 1, 1]} : vector<1x2x2x2x2x32xf32> to vector<1x2x1x2x1x32xf32>
    %227 = vector.shape_cast %226 : vector<1x2x1x2x1x32xf32> to vector<1x2x2x32xf32>
    %228 = arith.maximumf %225, %227 : vector<1x2x2x32xf32>
    %229 = vector.extract_strided_slice %223 {offsets = [0, 0, 1, 0, 0, 0], sizes = [1, 2, 1, 2, 1, 32], strides = [1, 1, 1, 1, 1, 1]} : vector<1x2x2x2x2x32xf32> to vector<1x2x1x2x1x32xf32>
    %230 = vector.shape_cast %229 : vector<1x2x1x2x1x32xf32> to vector<1x2x2x32xf32>
    %231 = vector.extract_strided_slice %223 {offsets = [0, 0, 1, 0, 1, 0], sizes = [1, 2, 1, 2, 1, 32], strides = [1, 1, 1, 1, 1, 1]} : vector<1x2x2x2x2x32xf32> to vector<1x2x1x2x1x32xf32>
    %232 = vector.shape_cast %231 : vector<1x2x1x2x1x32xf32> to vector<1x2x2x32xf32>
    %233 = arith.maximumf %230, %232 : vector<1x2x2x32xf32>
    %234 = arith.maximumf %228, %233 : vector<1x2x2x32xf32>
    %cst_150 = arith.constant 0.000000e+00 : f32
    %235 = vector.broadcast %cst_150 : f32 to vector<1x4x4x32xf32>
    %c0_151 = arith.constant 0 : index
    %c0_152 = arith.constant 0 : index
    %c0_153 = arith.constant 0 : index
    %c0_154 = arith.constant 0 : index
    %236 = vector.load %arg16[%c0_151, %c0_152, %c0_153, %c0_154] : memref<1x4x4x32xf32, #tpu.memory_space<vmem>>, vector<1x4x4x32xf32>
    tpu.vector_store %arg16[%c0_151, %c0_152, %c0_153, %c0_154], %235 {strides = array<i32>} : memref<1x4x4x32xf32, #tpu.memory_space<vmem>>, vector<1x4x4x32xf32>,
    %c0_155 = arith.constant 0 : index
    %c1_156 = arith.constant 1 : index
    %c1_157 = arith.constant 1 : index
    %c0_158 = arith.constant 0 : index
    %237 = vector.load %arg16[%c0_155, %c1_156, %c1_157, %c0_158] : memref<1x4x4x32xf32, #tpu.memory_space<vmem>>, vector<1x2x2x32xf32>
    tpu.vector_store %arg16[%c0_155, %c1_156, %c1_157, %c0_158], %234 {strides = array<i32>} : memref<1x4x4x32xf32, #tpu.memory_space<vmem>>, vector<1x2x2x32xf32>,
    %c0_159 = arith.constant 0 : index
    %c0_160 = arith.constant 0 : index
    %c0_161 = arith.constant 0 : index
    %c0_162 = arith.constant 0 : index
    %238 = vector.load %arg16[%c0_159, %c0_160, %c0_161, %c0_162] : memref<1x4x4x32xf32, #tpu.memory_space<vmem>>, vector<1x4x4x32xf32>
    %239 = vector.extract_strided_slice %238 {offsets = [0, 0, 0, 0], sizes = [1, 4, 2, 32], strides = [1, 1, 1, 1]} : vector<1x4x4x32xf32> to vector<1x4x2x32xf32>
    %240 = vector.extract_strided_slice %239 {offsets = [0, 0, 0, 0], sizes = [1, 2, 2, 32], strides = [1, 1, 1, 1]} : vector<1x4x2x32xf32> to vector<1x2x2x32xf32>
    %241 = vector.shape_cast %240 : vector<1x2x2x32xf32> to vector<4x32xf32>
    %c0_163 = arith.constant 0 : index
    %c0_164 = arith.constant 0 : index
    %c0_165 = arith.constant 0 : index
    %242 = vector.load %arg8[%c0_163, %c0_164, %c0_165] : memref<9x32x64xf32, #tpu.memory_space<vmem>>, vector<1x32x64xf32>
    %243 = vector.shape_cast %242 : vector<1x32x64xf32> to vector<32x64xf32>
    %cst_166 = arith.constant dense<0.000000e+00> : vector<4x64xf32>
    %244 = tpu.matmul %241, %243, %cst_166 {dimension_numbers = #tpu.dot_dimension_numbers<[1], [0], [0], [1], [0, 0, 1, 1], [], []>} : vector<4x32xf32>, vector<32x64xf32>, vector<4x64xf32> -> vector<4x64xf32>
    %245 = vector.extract_strided_slice %239 {offsets = [0, 1, 0, 0], sizes = [1, 2, 2, 32], strides = [1, 1, 1, 1]} : vector<1x4x2x32xf32> to vector<1x2x2x32xf32>
    %246 = vector.shape_cast %245 : vector<1x2x2x32xf32> to vector<4x32xf32>
    %c3_167 = arith.constant 3 : index
    %c0_168 = arith.constant 0 : index
    %c0_169 = arith.constant 0 : index
    %247 = vector.load %arg8[%c3_167, %c0_168, %c0_169] : memref<9x32x64xf32, #tpu.memory_space<vmem>>, vector<1x32x64xf32>
    %248 = vector.shape_cast %247 : vector<1x32x64xf32> to vector<32x64xf32>
    %cst_170 = arith.constant dense<0.000000e+00> : vector<4x64xf32>
    %249 = tpu.matmul %246, %248, %cst_170 {dimension_numbers = #tpu.dot_dimension_numbers<[1], [0], [0], [1], [0, 0, 1, 1], [], []>} : vector<4x32xf32>, vector<32x64xf32>, vector<4x64xf32> -> vector<4x64xf32>
    %250 = arith.addf %244, %249 : vector<4x64xf32>
    %251 = vector.extract_strided_slice %239 {offsets = [0, 2, 0, 0], sizes = [1, 2, 2, 32], strides = [1, 1, 1, 1]} : vector<1x4x2x32xf32> to vector<1x2x2x32xf32>
    %252 = vector.shape_cast %251 : vector<1x2x2x32xf32> to vector<4x32xf32>
    %c6_171 = arith.constant 6 : index
    %c0_172 = arith.constant 0 : index
    %c0_173 = arith.constant 0 : index
    %253 = vector.load %arg8[%c6_171, %c0_172, %c0_173] : memref<9x32x64xf32, #tpu.memory_space<vmem>>, vector<1x32x64xf32>
    %254 = vector.shape_cast %253 : vector<1x32x64xf32> to vector<32x64xf32>
    %cst_174 = arith.constant dense<0.000000e+00> : vector<4x64xf32>
    %255 = tpu.matmul %252, %254, %cst_174 {dimension_numbers = #tpu.dot_dimension_numbers<[1], [0], [0], [1], [0, 0, 1, 1], [], []>} : vector<4x32xf32>, vector<32x64xf32>, vector<4x64xf32> -> vector<4x64xf32>
    %256 = arith.addf %250, %255 : vector<4x64xf32>
    %257 = vector.extract_strided_slice %238 {offsets = [0, 0, 1, 0], sizes = [1, 4, 2, 32], strides = [1, 1, 1, 1]} : vector<1x4x4x32xf32> to vector<1x4x2x32xf32>
    %258 = vector.extract_strided_slice %257 {offsets = [0, 0, 0, 0], sizes = [1, 2, 2, 32], strides = [1, 1, 1, 1]} : vector<1x4x2x32xf32> to vector<1x2x2x32xf32>
    %259 = vector.shape_cast %258 : vector<1x2x2x32xf32> to vector<4x32xf32>
    %c1_175 = arith.constant 1 : index
    %c0_176 = arith.constant 0 : index
    %c0_177 = arith.constant 0 : index
    %260 = vector.load %arg8[%c1_175, %c0_176, %c0_177] : memref<9x32x64xf32, #tpu.memory_space<vmem>>, vector<1x32x64xf32>
    %261 = vector.shape_cast %260 : vector<1x32x64xf32> to vector<32x64xf32>
    %cst_178 = arith.constant dense<0.000000e+00> : vector<4x64xf32>
    %262 = tpu.matmul %259, %261, %cst_178 {dimension_numbers = #tpu.dot_dimension_numbers<[1], [0], [0], [1], [0, 0, 1, 1], [], []>} : vector<4x32xf32>, vector<32x64xf32>, vector<4x64xf32> -> vector<4x64xf32>
    %263 = arith.addf %256, %262 : vector<4x64xf32>
    %264 = vector.extract_strided_slice %257 {offsets = [0, 1, 0, 0], sizes = [1, 2, 2, 32], strides = [1, 1, 1, 1]} : vector<1x4x2x32xf32> to vector<1x2x2x32xf32>
    %265 = vector.shape_cast %264 : vector<1x2x2x32xf32> to vector<4x32xf32>
    %c4_179 = arith.constant 4 : index
    %c0_180 = arith.constant 0 : index
    %c0_181 = arith.constant 0 : index
    %266 = vector.load %arg8[%c4_179, %c0_180, %c0_181] : memref<9x32x64xf32, #tpu.memory_space<vmem>>, vector<1x32x64xf32>
    %267 = vector.shape_cast %266 : vector<1x32x64xf32> to vector<32x64xf32>
    %cst_182 = arith.constant dense<0.000000e+00> : vector<4x64xf32>
    %268 = tpu.matmul %265, %267, %cst_182 {dimension_numbers = #tpu.dot_dimension_numbers<[1], [0], [0], [1], [0, 0, 1, 1], [], []>} : vector<4x32xf32>, vector<32x64xf32>, vector<4x64xf32> -> vector<4x64xf32>
    %269 = arith.addf %263, %268 : vector<4x64xf32>
    %270 = vector.extract_strided_slice %257 {offsets = [0, 2, 0, 0], sizes = [1, 2, 2, 32], strides = [1, 1, 1, 1]} : vector<1x4x2x32xf32> to vector<1x2x2x32xf32>
    %271 = vector.shape_cast %270 : vector<1x2x2x32xf32> to vector<4x32xf32>
    %c7_183 = arith.constant 7 : index
    %c0_184 = arith.constant 0 : index
    %c0_185 = arith.constant 0 : index
    %272 = vector.load %arg8[%c7_183, %c0_184, %c0_185] : memref<9x32x64xf32, #tpu.memory_space<vmem>>, vector<1x32x64xf32>
    %273 = vector.shape_cast %272 : vector<1x32x64xf32> to vector<32x64xf32>
    %cst_186 = arith.constant dense<0.000000e+00> : vector<4x64xf32>
    %274 = tpu.matmul %271, %273, %cst_186 {dimension_numbers = #tpu.dot_dimension_numbers<[1], [0], [0], [1], [0, 0, 1, 1], [], []>} : vector<4x32xf32>, vector<32x64xf32>, vector<4x64xf32> -> vector<4x64xf32>
    %275 = arith.addf %269, %274 : vector<4x64xf32>
    %276 = vector.extract_strided_slice %238 {offsets = [0, 0, 2, 0], sizes = [1, 4, 2, 32], strides = [1, 1, 1, 1]} : vector<1x4x4x32xf32> to vector<1x4x2x32xf32>
    %277 = vector.extract_strided_slice %276 {offsets = [0, 0, 0, 0], sizes = [1, 2, 2, 32], strides = [1, 1, 1, 1]} : vector<1x4x2x32xf32> to vector<1x2x2x32xf32>
    %278 = vector.shape_cast %277 : vector<1x2x2x32xf32> to vector<4x32xf32>
    %c2_187 = arith.constant 2 : index
    %c0_188 = arith.constant 0 : index
    %c0_189 = arith.constant 0 : index
    %279 = vector.load %arg8[%c2_187, %c0_188, %c0_189] : memref<9x32x64xf32, #tpu.memory_space<vmem>>, vector<1x32x64xf32>
    %280 = vector.shape_cast %279 : vector<1x32x64xf32> to vector<32x64xf32>
    %cst_190 = arith.constant dense<0.000000e+00> : vector<4x64xf32>
    %281 = tpu.matmul %278, %280, %cst_190 {dimension_numbers = #tpu.dot_dimension_numbers<[1], [0], [0], [1], [0, 0, 1, 1], [], []>} : vector<4x32xf32>, vector<32x64xf32>, vector<4x64xf32> -> vector<4x64xf32>
    %282 = arith.addf %275, %281 : vector<4x64xf32>
    %283 = vector.extract_strided_slice %276 {offsets = [0, 1, 0, 0], sizes = [1, 2, 2, 32], strides = [1, 1, 1, 1]} : vector<1x4x2x32xf32> to vector<1x2x2x32xf32>
    %284 = vector.shape_cast %283 : vector<1x2x2x32xf32> to vector<4x32xf32>
    %c5_191 = arith.constant 5 : index
    %c0_192 = arith.constant 0 : index
    %c0_193 = arith.constant 0 : index
    %285 = vector.load %arg8[%c5_191, %c0_192, %c0_193] : memref<9x32x64xf32, #tpu.memory_space<vmem>>, vector<1x32x64xf32>
    %286 = vector.shape_cast %285 : vector<1x32x64xf32> to vector<32x64xf32>
    %cst_194 = arith.constant dense<0.000000e+00> : vector<4x64xf32>
    %287 = tpu.matmul %284, %286, %cst_194 {dimension_numbers = #tpu.dot_dimension_numbers<[1], [0], [0], [1], [0, 0, 1, 1], [], []>} : vector<4x32xf32>, vector<32x64xf32>, vector<4x64xf32> -> vector<4x64xf32>
    %288 = arith.addf %282, %287 : vector<4x64xf32>
    %289 = vector.extract_strided_slice %276 {offsets = [0, 2, 0, 0], sizes = [1, 2, 2, 32], strides = [1, 1, 1, 1]} : vector<1x4x2x32xf32> to vector<1x2x2x32xf32>
    %290 = vector.shape_cast %289 : vector<1x2x2x32xf32> to vector<4x32xf32>
    %c8_195 = arith.constant 8 : index
    %c0_196 = arith.constant 0 : index
    %c0_197 = arith.constant 0 : index
    %291 = vector.load %arg8[%c8_195, %c0_196, %c0_197] : memref<9x32x64xf32, #tpu.memory_space<vmem>>, vector<1x32x64xf32>
    %292 = vector.shape_cast %291 : vector<1x32x64xf32> to vector<32x64xf32>
    %cst_198 = arith.constant dense<0.000000e+00> : vector<4x64xf32>
    %293 = tpu.matmul %290, %292, %cst_198 {dimension_numbers = #tpu.dot_dimension_numbers<[1], [0], [0], [1], [0, 0, 1, 1], [], []>} : vector<4x32xf32>, vector<32x64xf32>, vector<4x64xf32> -> vector<4x64xf32>
    %294 = arith.addf %288, %293 : vector<4x64xf32>
    %c0_199 = arith.constant 0 : index
    %c0_200 = arith.constant 0 : index
    %295 = vector.load %arg9[%c0_199, %c0_200] : memref<1x64xf32, #tpu.memory_space<vmem>>, vector<1x64xf32>
    %296 = vector.broadcast %295 : vector<1x64xf32> to vector<4x64xf32>
    %297 = arith.addf %294, %296 : vector<4x64xf32>
    %cst_201 = arith.constant 0.000000e+00 : f32
    %298 = vector.broadcast %cst_201 : f32 to vector<4x64xf32>
    %299 = arith.maximumf %297, %298 : vector<4x64xf32>
    %300 = vector.shape_cast %299 : vector<4x64xf32> to vector<1x2x2x64xf32>
    %301 = vector.shape_cast %300 : vector<1x2x2x64xf32> to vector<1x1x2x1x2x64xf32>
    %302 = vector.extract_strided_slice %301 {offsets = [0, 0, 0, 0, 0, 0], sizes = [1, 1, 1, 1, 1, 64], strides = [1, 1, 1, 1, 1, 1]} : vector<1x1x2x1x2x64xf32> to vector<1x1x1x1x1x64xf32>
    %303 = vector.shape_cast %302 : vector<1x1x1x1x1x64xf32> to vector<1x1x1x64xf32>
    %304 = vector.extract_strided_slice %301 {offsets = [0, 0, 0, 0, 1, 0], sizes = [1, 1, 1, 1, 1, 64], strides = [1, 1, 1, 1, 1, 1]} : vector<1x1x2x1x2x64xf32> to vector<1x1x1x1x1x64xf32>
    %305 = vector.shape_cast %304 : vector<1x1x1x1x1x64xf32> to vector<1x1x1x64xf32>
    %306 = arith.maximumf %303, %305 : vector<1x1x1x64xf32>
    %307 = vector.extract_strided_slice %301 {offsets = [0, 0, 1, 0, 0, 0], sizes = [1, 1, 1, 1, 1, 64], strides = [1, 1, 1, 1, 1, 1]} : vector<1x1x2x1x2x64xf32> to vector<1x1x1x1x1x64xf32>
    %308 = vector.shape_cast %307 : vector<1x1x1x1x1x64xf32> to vector<1x1x1x64xf32>
    %309 = vector.extract_strided_slice %301 {offsets = [0, 0, 1, 0, 1, 0], sizes = [1, 1, 1, 1, 1, 64], strides = [1, 1, 1, 1, 1, 1]} : vector<1x1x2x1x2x64xf32> to vector<1x1x1x1x1x64xf32>
    %310 = vector.shape_cast %309 : vector<1x1x1x1x1x64xf32> to vector<1x1x1x64xf32>
    %311 = arith.maximumf %308, %310 : vector<1x1x1x64xf32>
    %312 = arith.maximumf %306, %311 : vector<1x1x1x64xf32>
    %313 = vector.shape_cast %312 : vector<1x1x1x64xf32> to vector<1x1x64xf32>
    %cst_202 = arith.constant dense<0.000000e+00> : vector<1x64xf32>
    %314 = vector.multi_reduction <add>, %313, %cst_202 [1] : vector<1x1x64xf32> to vector<1x64xf32>
    %cst_203 = arith.constant 1.000000e+00 : f32
    %315 = vector.broadcast %cst_203 : f32 to vector<1x64xf32>
    %316 = arith.divf %314, %315 : vector<1x64xf32>
    %c0_204 = arith.constant 0 : index
    %c0_205 = arith.constant 0 : index
    %317 = vector.load %arg10[%c0_204, %c0_205] : memref<64x5xf32, #tpu.memory_space<vmem>>, vector<64x5xf32>
    %cst_206 = arith.constant dense<0.000000e+00> : vector<1x5xf32>
    %318 = tpu.matmul %316, %317, %cst_206 {dimension_numbers = #tpu.dot_dimension_numbers<[1], [0], [0], [1], [0, 0, 1, 1], [], []>} : vector<1x64xf32>, vector<64x5xf32>, vector<1x5xf32> -> vector<1x5xf32>
    %c0_207 = arith.constant 0 : index
    %c0_208 = arith.constant 0 : index
    %319 = vector.load %arg11[%c0_207, %c0_208] : memref<1x5xf32, #tpu.memory_space<vmem>>, vector<1x5xf32>
    %320 = arith.addf %318, %319 : vector<1x5xf32>
    %321 = vector.shape_cast %320 : vector<1x5xf32> to vector<1x1x5xf32>
    %c0_209 = arith.constant 0 : index
    %c0_210 = arith.constant 0 : index
    %c0_211 = arith.constant 0 : index
    %322 = vector.load %arg12[%c0_209, %c0_210, %c0_211] : memref<1x1x5xf32, #tpu.memory_space<vmem>>, vector<1x1x5xf32>
    tpu.vector_store %arg12[%c0_209, %c0_210, %c0_211], %321 {strides = array<i32>} : memref<1x1x5xf32, #tpu.memory_space<vmem>>, vector<1x1x5xf32>,
    return
  }
  func.func @transform_0(%arg0: i32) -> (i32, i32, i32, i32) {
    %c0_i32 = arith.constant 0 : i32
    %c0_i32_0 = arith.constant 0 : i32
    %c0_i32_1 = arith.constant 0 : i32
    %c0_i32_2 = arith.constant 0 : i32
    return %arg0, %c0_i32, %c0_i32_0, %c0_i32_1 : i32, i32, i32, i32
  }
  func.func @transform_1(%arg0: i32) -> (i32, i32, i32) {
    %c0_i32 = arith.constant 0 : i32
    %c0_i32_0 = arith.constant 0 : i32
    %c0_i32_1 = arith.constant 0 : i32
    %c0_i32_2 = arith.constant 0 : i32
    return %c0_i32, %c0_i32_0, %c0_i32_1 : i32, i32, i32
  }
  func.func @transform_2(%arg0: i32) -> (i32, i32) {
    %c0_i32 = arith.constant 0 : i32
    %c0_i32_0 = arith.constant 0 : i32
    %c0_i32_1 = arith.constant 0 : i32
    return %c0_i32, %c0_i32_0 : i32, i32
  }
  func.func @transform_3(%arg0: i32) -> (i32, i32, i32) {
    %c0_i32 = arith.constant 0 : i32
    %c0_i32_0 = arith.constant 0 : i32
    %c0_i32_1 = arith.constant 0 : i32
    %c0_i32_2 = arith.constant 0 : i32
    return %c0_i32, %c0_i32_0, %c0_i32_1 : i32, i32, i32
  }
  func.func @transform_4(%arg0: i32) -> (i32, i32) {
    %c0_i32 = arith.constant 0 : i32
    %c0_i32_0 = arith.constant 0 : i32
    %c0_i32_1 = arith.constant 0 : i32
    return %c0_i32, %c0_i32_0 : i32, i32
  }
  func.func @transform_5(%arg0: i32) -> (i32, i32, i32) {
    %c0_i32 = arith.constant 0 : i32
    %c0_i32_0 = arith.constant 0 : i32
    %c0_i32_1 = arith.constant 0 : i32
    %c0_i32_2 = arith.constant 0 : i32
    return %c0_i32, %c0_i32_0, %c0_i32_1 : i32, i32, i32
  }
  func.func @transform_6(%arg0: i32) -> (i32, i32) {
    %c0_i32 = arith.constant 0 : i32
    %c0_i32_0 = arith.constant 0 : i32
    %c0_i32_1 = arith.constant 0 : i32
    return %c0_i32, %c0_i32_0 : i32, i32
  }
  func.func @transform_7(%arg0: i32) -> (i32, i32, i32) {
    %c0_i32 = arith.constant 0 : i32
    %c0_i32_0 = arith.constant 0 : i32
    %c0_i32_1 = arith.constant 0 : i32
    %c0_i32_2 = arith.constant 0 : i32
    return %c0_i32, %c0_i32_0, %c0_i32_1 : i32, i32, i32
  }
  func.func @transform_8(%arg0: i32) -> (i32, i32) {
    %c0_i32 = arith.constant 0 : i32
    %c0_i32_0 = arith.constant 0 : i32
    %c0_i32_1 = arith.constant 0 : i32
    return %c0_i32, %c0_i32_0 : i32, i32
  }
  func.func @transform_9(%arg0: i32) -> (i32, i32) {
    %c0_i32 = arith.constant 0 : i32
    %c0_i32_0 = arith.constant 0 : i32
    %c0_i32_1 = arith.constant 0 : i32
    return %c0_i32, %c0_i32_0 : i32, i32
  }
  func.func @transform_10(%arg0: i32) -> (i32, i32) {
    %c0_i32 = arith.constant 0 : i32
    %c0_i32_0 = arith.constant 0 : i32
    %c0_i32_1 = arith.constant 0 : i32
    return %c0_i32, %c0_i32_0 : i32, i32
  }
  func.func @transform_11(%arg0: i32) -> (i32, i32, i32) {
    %c0_i32 = arith.constant 0 : i32
    %c0_i32_0 = arith.constant 0 : i32
    %c0_i32_1 = arith.constant 0 : i32
    return %arg0, %c0_i32, %c0_i32_0 : i32, i32, i32
  }
}

</mosaic_0001>

<llo_original>
// kernel: convnet_forward.1
$region0: #{convnet_forward.1}
  #allocation0 [shape = 'u32[]', space=smem, size = 0x4, offset = 0x4, fixed_abs, tag = 'smem constant byte address 0x4 - core index']
  #allocation1 [shape = 'u32[144,128]{1,0:T(1,128)}', space=vmem, size = 0x12000, scoped, tag = 'internal scratch']
  #allocation2 [shape = 'f32[1,18,18,4]{3,2,1,0:T(8,128)}', space=vmem, size = 0x36000, scoped, tag = 'scratch operand']
  #allocation3 [shape = 'f32[1,10,10,32]{3,2,1,0:T(8,128)}', space=vmem, size = 0x14000, scoped, tag = 'scratch operand']
  #allocation4 [shape = 'f32[1,6,6,32]{3,2,1,0:T(8,128)}', space=vmem, size = 0x6000, scoped, tag = 'scratch operand']
  #allocation5 [shape = 'f32[1,4,4,32]{3,2,1,0:T(4,128)}', space=vmem, size = 0x2000, scoped, tag = 'scratch operand']
  %s0 = inlined_call_operand.vmem [shape: f32[2,16,16,4], index: 0, kind: input, shape index: {}]
  %s1 = inlined_call_operand.vmem [shape: f32[9,4,32], index: 1, kind: input, shape index: {}]
  %s2 = inlined_call_operand.vmem [shape: f32[1,32], index: 2, kind: input, shape index: {}]
  %s3 = inlined_call_operand.vmem [shape: f32[9,32,32], index: 3, kind: input, shape index: {}]
  %s4 = inlined_call_operand.vmem [shape: f32[1,32], index: 4, kind: input, shape index: {}]
  %s5 = inlined_call_operand.vmem [shape: f32[9,32,32], index: 5, kind: input, shape index: {}]
  %s6 = inlined_call_operand.vmem [shape: f32[1,32], index: 6, kind: input, shape index: {}]
  %s7 = inlined_call_operand.vmem [shape: f32[9,32,64], index: 7, kind: input, shape index: {}]
  %s8 = inlined_call_operand.vmem [shape: f32[1,64], index: 8, kind: input, shape index: {}]
  %s9 = inlined_call_operand.vmem [shape: f32[64,5], index: 9, kind: input, shape index: {}]
  %s10 = inlined_call_operand.vmem [shape: f32[1,5], index: 10, kind: input, shape index: {}]
  %s11 = inlined_call_operand.hbm [shape: f32[2,1,5], index: 11, kind: output, shape index: {}]
  %s12 = sld [smem:[#allocation0]]
  $region77: #{convnet_forward.1} parent=0
    _
  %s14 = ssub.s32 1, %s12
  %s15 = scalar_select 0, %s14, %s12
  $region1: #{convnet_forward.1} parent=0
    #allocation6 [shape = 'u8[1024]{0}', space=vmem, size = 0x400, scoped, tag = 'output window, operand 0']
    #allocation7 [shape = 's32[2]{0}', space=sflag, size = 0x8, scoped, tag = 'scoped memory for convnet_forward.1']
    %16 = vsyncpa [#allocation7], 0
    %s17 = scalar_lea.sflag [#allocation7], 1
    %18 = vsyncpa %s17, 0
    loop: start=0, step=1, limit=4
    $region2: #{convnet_forward.1} parent=1 // loop_pre_header
      _
    $region3: #{convnet_forward.1} parent=1 // loop_header
      %s20 = sphi 0, %s24
      %p21 = scmp.ge.s32.totalorder %s20, 4
      %s30 = sphi 0, %s32
      %s33 = sphi 0, %s30
      %s34 = sphi 0, %s33
      %s50 = sphi 0, %s34
      %s54 = sphi 0, %s54
      %s56 = sphi 0, %s54
      %s57 = sphi 0, %s56
      %s71 = sphi 0, %s57
      %s75 = sphi 0, %s75
      %s77 = sphi 0, %s75
      %s78 = sphi 0, %s77
      %s92 = sphi 0, %s78
      %s96 = sphi 0, %s96
      %s98 = sphi 0, %s96
      %s99 = sphi 0, %s98
      %s113 = sphi 0, %s99
      %s117 = sphi 0, %s117
      %s119 = sphi 0, %s117
      %s120 = sphi 0, %s119
      %s134 = sphi 0, %s120
      %s138 = sphi 0, %s138
      %s140 = sphi 0, %s138
      %s141 = sphi 0, %s140
      %s155 = sphi 0, %s141
      %s159 = sphi 0, %s159
      %s161 = sphi 0, %s159
      %s162 = sphi 0, %s161
      %s176 = sphi 0, %s162
      %s180 = sphi 0, %s180
      %s182 = sphi 0, %s180
      %s183 = sphi 0, %s182
      %s197 = sphi 0, %s183
      %s201 = sphi 0, %s201
      %s203 = sphi 0, %s201
      %s204 = sphi 0, %s203
      %s218 = sphi 0, %s204
      %s222 = sphi 0, %s222
      %s224 = sphi 0, %s222
      %s225 = sphi 0, %s224
      %s239 = sphi 0, %s225
      %s243 = sphi 0, %s243
      %s245 = sphi 0, %s243
      %s246 = sphi 0, %s245
      %s260 = sphi 0, %s246
      %s266 = sphi 0, %s268
      %s269 = sphi 0, %s266
      %s270 = sphi 0, %s269
      %s286 = sphi 0, %s270
    $region4: #{convnet_forward.1} parent=1 // loop_header_branch
      %23 = sbr.rel (%p21) target = $region8
    $region5: #{convnet_forward.1} parent=1 // loop_body
      %s25 = ssub.s32 %s20, 1
      %s26 = ssub.s32 %s20, 2
      %s27 = sadd.s32 %s20, 1
      %s28 = ssub.s32 %s20, %s27
      %p29 = scmp.eq.s32.totalorder %s28, 0
      %s31 = sadd.s32 %s30, 1
      %s32 = scalar_select %p29, %s30, %s31
      %p35 = pneg %p29
      %p36 = scmp.eq.s32.totalorder %s20, 1
      %p37 = por %p35, %p36
      %p38 = scmp.ne.s32.totalorder %s30, %s33
      %p39 = scmp.eq.s32.totalorder %s20, 0
      %p40 = por %p38, %p39
      %p41 = scmp.ne.s32.totalorder %s30, %s33
      %p42 = scmp.eq.s32.totalorder %s25, 1
      %p43 = por %p41, %p42
      %p44 = scmp.ne.s32.totalorder %s33, %s34
      %p45 = scmp.eq.s32.totalorder %s25, 0
      %p46 = por %p44, %p45
      %p47 = scmp.ne.s32.totalorder %s33, %s34
      %p48 = scmp.eq.s32.totalorder %s26, 1
      %p49 = por %p47, %p48
      %p51 = scmp.ne.s32.totalorder %s34, %s50
      %p52 = scmp.eq.s32.totalorder %s26, 0
      %p53 = por %p51, %p52
      %s55 = sadd.s32 %s54, 1
      %p58 = scmp.eq.s32.totalorder %s20, 1
      %p59 = scmp.ne.s32.totalorder %s54, %s56
      %p60 = scmp.eq.s32.totalorder %s20, 0
      %p61 = por %p59, %p60
      %p62 = scmp.ne.s32.totalorder %s54, %s56
      %p63 = scmp.eq.s32.totalorder %s25, 1
      %p64 = por %p62, %p63
      %p65 = scmp.ne.s32.totalorder %s56, %s57
      %p66 = scmp.eq.s32.totalorder %s25, 0
      %p67 = por %p65, %p66
      %p68 = scmp.ne.s32.totalorder %s56, %s57
      %p69 = scmp.eq.s32.totalorder %s26, 1
      %p70 = por %p68, %p69
      %p72 = scmp.ne.s32.totalorder %s57, %s71
      %p73 = scmp.eq.s32.totalorder %s26, 0
      %p74 = por %p72, %p73
      %s76 = sadd.s32 %s75, 1
      %p79 = scmp.eq.s32.totalorder %s20, 1
      %p80 = scmp.ne.s32.totalorder %s75, %s77
      %p81 = scmp.eq.s32.totalorder %s20, 0
      %p82 = por %p80, %p81
      %p83 = scmp.ne.s32.totalorder %s75, %s77
      %p84 = scmp.eq.s32.totalorder %s25, 1
      %p85 = por %p83, %p84
      %p86 = scmp.ne.s32.totalorder %s77, %s78
      %p87 = scmp.eq.s32.totalorder %s25, 0
      %p88 = por %p86, %p87
      %p89 = scmp.ne.s32.totalorder %s77, %s78
      %p90 = scmp.eq.s32.totalorder %s26, 1
      %p91 = por %p89, %p90
      %p93 = scmp.ne.s32.totalorder %s78, %s92
      %p94 = scmp.eq.s32.totalorder %s26, 0
      %p95 = por %p93, %p94
      %s97 = sadd.s32 %s96, 1
      %p100 = scmp.eq.s32.totalorder %s20, 1
      %p101 = scmp.ne.s32.totalorder %s96, %s98
      %p102 = scmp.eq.s32.totalorder %s20, 0
      %p103 = por %p101, %p102
      %p104 = scmp.ne.s32.totalorder %s96, %s98
      %p105 = scmp.eq.s32.totalorder %s25, 1
      %p106 = por %p104, %p105
      %p107 = scmp.ne.s32.totalorder %s98, %s99
      %p108 = scmp.eq.s32.totalorder %s25, 0
      %p109 = por %p107, %p108
      %p110 = scmp.ne.s32.totalorder %s98, %s99
      %p111 = scmp.eq.s32.totalorder %s26, 1
      %p112 = por %p110, %p111
      %p114 = scmp.ne.s32.totalorder %s99, %s113
      %p115 = scmp.eq.s32.totalorder %s26, 0
      %p116 = por %p114, %p115
      %s118 = sadd.s32 %s117, 1
      %p121 = scmp.eq.s32.totalorder %s20, 1
      %p122 = scmp.ne.s32.totalorder %s117, %s119
      %p123 = scmp.eq.s32.totalorder %s20, 0
      %p124 = por %p122, %p123
      %p125 = scmp.ne.s32.totalorder %s117, %s119
      %p126 = scmp.eq.s32.totalorder %s25, 1
      %p127 = por %p125, %p126
      %p128 = scmp.ne.s32.totalorder %s119, %s120
      %p129 = scmp.eq.s32.totalorder %s25, 0
      %p130 = por %p128, %p129
      %p131 = scmp.ne.s32.totalorder %s119, %s120
      %p132 = scmp.eq.s32.totalorder %s26, 1
      %p133 = por %p131, %p132
      %p135 = scmp.ne.s32.totalorder %s120, %s134
      %p136 = scmp.eq.s32.totalorder %s26, 0
      %p137 = por %p135, %p136
      %s139 = sadd.s32 %s138, 1
      %p142 = scmp.eq.s32.totalorder %s20, 1
      %p143 = scmp.ne.s32.totalorder %s138, %s140
      %p144 = scmp.eq.s32.totalorder %s20, 0
      %p145 = por %p143, %p144
      %p146 = scmp.ne.s32.totalorder %s138, %s140
      %p147 = scmp.eq.s32.totalorder %s25, 1
      %p148 = por %p146, %p147
      %p149 = scmp.ne.s32.totalorder %s140, %s141
      %p150 = scmp.eq.s32.totalorder %s25, 0
      %p151 = por %p149, %p150
      %p152 = scmp.ne.s32.totalorder %s140, %s141
      %p153 = scmp.eq.s32.totalorder %s26, 1
      %p154 = por %p152, %p153
      %p156 = scmp.ne.s32.totalorder %s141, %s155
      %p157 = scmp.eq.s32.totalorder %s26, 0
      %p158 = por %p156, %p157
      %s160 = sadd.s32 %s159, 1
      %p163 = scmp.eq.s32.totalorder %s20, 1
      %p164 = scmp.ne.s32.totalorder %s159, %s161
      %p165 = scmp.eq.s32.totalorder %s20, 0
      %p166 = por %p164, %p165
      %p167 = scmp.ne.s32.totalorder %s159, %s161
      %p168 = scmp.eq.s32.totalorder %s25, 1
      %p169 = por %p167, %p168
      %p170 = scmp.ne.s32.totalorder %s161, %s162
      %p171 = scmp.eq.s32.totalorder %s25, 0
      %p172 = por %p170, %p171
      %p173 = scmp.ne.s32.totalorder %s161, %s162
      %p174 = scmp.eq.s32.totalorder %s26, 1
      %p175 = por %p173, %p174
      %p177 = scmp.ne.s32.totalorder %s162, %s176
      %p178 = scmp.eq.s32.totalorder %s26, 0
      %p179 = por %p177, %p178
      %s181 = sadd.s32 %s180, 1
      %p184 = scmp.eq.s32.totalorder %s20, 1
      %p185 = scmp.ne.s32.totalorder %s180, %s182
      %p186 = scmp.eq.s32.totalorder %s20, 0
      %p187 = por %p185, %p186
      %p188 = scmp.ne.s32.totalorder %s180, %s182
      %p189 = scmp.eq.s32.totalorder %s25, 1
      %p190 = por %p188, %p189
      %p191 = scmp.ne.s32.totalorder %s182, %s183
      %p192 = scmp.eq.s32.totalorder %s25, 0
      %p193 = por %p191, %p192
      %p194 = scmp.ne.s32.totalorder %s182, %s183
      %p195 = scmp.eq.s32.totalorder %s26, 1
      %p196 = por %p194, %p195
      %p198 = scmp.ne.s32.totalorder %s183, %s197
      %p199 = scmp.eq.s32.totalorder %s26, 0
      %p200 = por %p198, %p199
      %s202 = sadd.s32 %s201, 1
      %p205 = scmp.eq.s32.totalorder %s20, 1
      %p206 = scmp.ne.s32.totalorder %s201, %s203
      %p207 = scmp.eq.s32.totalorder %s20, 0
      %p208 = por %p206, %p207
      %p209 = scmp.ne.s32.totalorder %s201, %s203
      %p210 = scmp.eq.s32.totalorder %s25, 1
      %p211 = por %p209, %p210
      %p212 = scmp.ne.s32.totalorder %s203, %s204
      %p213 = scmp.eq.s32.totalorder %s25, 0
      %p214 = por %p212, %p213
      %p215 = scmp.ne.s32.totalorder %s203, %s204
      %p216 = scmp.eq.s32.totalorder %s26, 1
      %p217 = por %p215, %p216
      %p219 = scmp.ne.s32.totalorder %s204, %s218
      %p220 = scmp.eq.s32.totalorder %s26, 0
      %p221 = por %p219, %p220
      %s223 = sadd.s32 %s222, 1
      %p226 = scmp.eq.s32.totalorder %s20, 1
      %p227 = scmp.ne.s32.totalorder %s222, %s224
      %p228 = scmp.eq.s32.totalorder %s20, 0
      %p229 = por %p227, %p228
      %p230 = scmp.ne.s32.totalorder %s222, %s224
      %p231 = scmp.eq.s32.totalorder %s25, 1
      %p232 = por %p230, %p231
      %p233 = scmp.ne.s32.totalorder %s224, %s225
      %p234 = scmp.eq.s32.totalorder %s25, 0
      %p235 = por %p233, %p234
      %p236 = scmp.ne.s32.totalorder %s224, %s225
      %p237 = scmp.eq.s32.totalorder %s26, 1
      %p238 = por %p236, %p237
      %p240 = scmp.ne.s32.totalorder %s225, %s239
      %p241 = scmp.eq.s32.totalorder %s26, 0
      %p242 = por %p240, %p241
      %s244 = sadd.s32 %s243, 1
      %p247 = scmp.eq.s32.totalorder %s20, 1
      %p248 = scmp.ne.s32.totalorder %s243, %s245
      %p249 = scmp.eq.s32.totalorder %s20, 0
      %p250 = por %p248, %p249
      %p251 = scmp.ne.s32.totalorder %s243, %s245
      %p252 = scmp.eq.s32.totalorder %s25, 1
      %p253 = por %p251, %p252
      %p254 = scmp.ne.s32.totalorder %s245, %s246
      %p255 = scmp.eq.s32.totalorder %s25, 0
      %p256 = por %p254, %p255
      %p257 = scmp.ne.s32.totalorder %s245, %s246
      %p258 = scmp.eq.s32.totalorder %s26, 1
      %p259 = por %p257, %p258
      %p261 = scmp.ne.s32.totalorder %s246, %s260
      %p262 = scmp.eq.s32.totalorder %s26, 0
      %p263 = por %p261, %p262
      %s264 = ssub.s32 %s20, %s27
      %p265 = scmp.eq.s32.totalorder %s264, 0
      %s267 = sadd.s32 %s266, 1
      %s268 = scalar_select %p265, %s266, %s267
      %p271 = pneg %p265
      %p272 = scmp.eq.s32.totalorder %s20, 1
      %p273 = por %p271, %p272
      %p274 = scmp.ne.s32.totalorder %s266, %s269
      %p275 = scmp.eq.s32.totalorder %s20, 0
      %p276 = por %p274, %p275
      %p277 = scmp.ne.s32.totalorder %s266, %s269
      %p278 = scmp.eq.s32.totalorder %s25, 1
      %p279 = por %p277, %p278
      %p280 = scmp.ne.s32.totalorder %s269, %s270
      %p281 = scmp.eq.s32.totalorder %s25, 0
      %p282 = por %p280, %p281
      %p283 = scmp.ne.s32.totalorder %s269, %s270
      %p284 = scmp.eq.s32.totalorder %s26, 1
      %p285 = por %p283, %p284
      %p287 = scmp.ne.s32.totalorder %s270, %s286
      %p288 = scmp.eq.s32.totalorder %s26, 0
      %p289 = por %p287, %p288
      %p290 = scmp.le.s32.totalorder 1, %s20
      %p291 = scmp.lt.s32.totalorder %s20, 3
      %p292 = pnand %p290, %p291
      %p293 = pneg %p292
      // Predicated region
      $region9: #{convnet_forward.1} parent=5 // pred_check
        _
      $region10: #{convnet_forward.1} parent=5 // pred_check_branch
        %295 = sbr.rel (%p292) target = $region12
      $region11: #{convnet_forward.1} parent=5 // pred_region
        %s296 = ssub.s32 %s20, 1
        // Predicated region
        $region13: #{convnet_forward.1} parent=11 // pred_check
          %p297 = pneg %p67
        $region14: #{convnet_forward.1} parent=11 // pred_check_branch
          %299 = sbr.rel (%p297) target = $region16
        $region15: #{convnet_forward.1} parent=11 // pred_region
          _
        $region16: #{convnet_forward.1} parent=11 // pred_fallthru
          _
        // Predicated region
        $region17: #{convnet_forward.1} parent=11 // pred_check
          %p300 = pneg %p88
        $region18: #{convnet_forward.1} parent=11 // pred_check_branch
          %302 = sbr.rel (%p300) target = $region20
        $region19: #{convnet_forward.1} parent=11 // pred_region
          _
        $region20: #{convnet_forward.1} parent=11 // pred_fallthru
          _
        // Predicated region
        $region21: #{convnet_forward.1} parent=11 // pred_check
          %p303 = pneg %p109
        $region22: #{convnet_forward.1} parent=11 // pred_check_branch
          %305 = sbr.rel (%p303) target = $region24
        $region23: #{convnet_forward.1} parent=11 // pred_region
          _
        $region24: #{convnet_forward.1} parent=11 // pred_fallthru
          _
        // Predicated region
        $region25: #{convnet_forward.1} parent=11 // pred_check
          %p306 = pneg %p130
        $region26: #{convnet_forward.1} parent=11 // pred_check_branch
          %308 = sbr.rel (%p306) target = $region28
        $region27: #{convnet_forward.1} parent=11 // pred_region
          _
        $region28: #{convnet_forward.1} parent=11 // pred_fallthru
          _
        // Predicated region
        $region29: #{convnet_forward.1} parent=11 // pred_check
          %p309 = pneg %p151
        $region30: #{convnet_forward.1} parent=11 // pred_check_branch
          %311 = sbr.rel (%p309) target = $region32
        $region31: #{convnet_forward.1} parent=11 // pred_region
          _
        $region32: #{convnet_forward.1} parent=11 // pred_fallthru
          _
        // Predicated region
        $region33: #{convnet_forward.1} parent=11 // pred_check
          %p312 = pneg %p172
        $region34: #{convnet_forward.1} parent=11 // pred_check_branch
          %314 = sbr.rel (%p312) target = $region36
        $region35: #{convnet_forward.1} parent=11 // pred_region
          _
        $region36: #{convnet_forward.1} parent=11 // pred_fallthru
          _
        // Predicated region
        $region37: #{convnet_forward.1} parent=11 // pred_check
          %p315 = pneg %p193
        $region38: #{convnet_forward.1} parent=11 // pred_check_branch
          %317 = sbr.rel (%p315) target = $region40
        $region39: #{convnet_forward.1} parent=11 // pred_region
          _
        $region40: #{convnet_forward.1} parent=11 // pred_fallthru
          _
        // Predicated region
        $region41: #{convnet_forward.1} parent=11 // pred_check
          %p318 = pneg %p214
        $region42: #{convnet_forward.1} parent=11 // pred_check_branch
          %320 = sbr.rel (%p318) target = $region44
        $region43: #{convnet_forward.1} parent=11 // pred_region
          _
        $region44: #{convnet_forward.1} parent=11 // pred_fallthru
          _
        // Predicated region
        $region45: #{convnet_forward.1} parent=11 // pred_check
          %p321 = pneg %p235
        $region46: #{convnet_forward.1} parent=11 // pred_check_branch
          %323 = sbr.rel (%p321) target = $region48
        $region47: #{convnet_forward.1} parent=11 // pred_region
          _
        $region48: #{convnet_forward.1} parent=11 // pred_fallthru
          _
        // Predicated region
        $region49: #{convnet_forward.1} parent=11 // pred_check
          %p324 = pneg %p256
        $region50: #{convnet_forward.1} parent=11 // pred_check_branch
          %326 = sbr.rel (%p324) target = $region52
        $region51: #{convnet_forward.1} parent=11 // pred_region
          _
        $region52: #{convnet_forward.1} parent=11 // pred_fallthru
          _
      $region12: #{convnet_forward.1} parent=5 // pred_fallthru
        _
      %p327 = scmp.lt.s32.totalorder %s20, 2
      // Predicated region
      $region53: #{convnet_forward.1} parent=5 // pred_check
        %p328 = pneg %p327
      $region54: #{convnet_forward.1} parent=5 // pred_check_branch
        %330 = sbr.rel (%p328) target = $region56
      $region55: #{convnet_forward.1} parent=5 // pred_region
        // Predicated region
        $region57: #{convnet_forward.1} parent=55 // pred_check
          %p331 = pneg %p40
        $region58: #{convnet_forward.1} parent=55 // pred_check_branch
          %333 = sbr.rel (%p331) target = $region60
        $region59: #{convnet_forward.1} parent=55 // pred_region
          %p334 = scmp.lt.s32.totalorder %s20, 1
          %s335 = scalar_select %p334, %s20, 1
          %s336 = smul.addr %s335, 32
          %s337 = smul.addr %s336, 8
          %s338 = scalar_lea.vmem %s0, %s337
        $region60: #{convnet_forward.1} parent=55 // pred_fallthru
          _
      $region56: #{convnet_forward.1} parent=5 // pred_fallthru
        _
      %p339 = scmp.le.s32.totalorder 1, %s20
      %p340 = scmp.lt.s32.totalorder %s20, 3
      %p341 = pnand %p339, %p340
      %p342 = pneg %p341
      // Predicated region
      $region61: #{convnet_forward.1} parent=5 // pred_check
        _
      $region62: #{convnet_forward.1} parent=5 // pred_check_branch
        %344 = sbr.rel (%p341) target = $region64
      $region63: #{convnet_forward.1} parent=5 // pred_region
        %s345 = ssub.s32 %s20, 1
        %p346 = scmp.lt.s32.totalorder %s25, 1
        %s347 = scalar_select %p346, %s25, 1
        %s348 = smul.addr %s347, 32
        %s349 = smul.addr %s348, 8
        %s350 = scalar_lea.vmem %s0, %s349
        %p351 = pneg %p46
        %p352 = pneg %p43
        %p353 = pneg %p67
        %p354 = pneg %p64
        %p355 = pneg %p88
        %p356 = pneg %p85
        %p357 = pneg %p109
        %p358 = pneg %p106
        %p359 = pneg %p130
        %p360 = pneg %p127
        %p361 = pneg %p151
        %p362 = pneg %p148
        %p363 = pneg %p172
        %p364 = pneg %p169
        %p365 = pneg %p193
        %p366 = pneg %p190
        %p367 = pneg %p214
        %p368 = pneg %p211
        %p369 = pneg %p235
        %p370 = pneg %p232
        %p371 = pneg %p256
        %p372 = pneg %p253
        %p373 = pneg %p282
        %p374 = pneg %p279
        %s375 = sand.u32 %s269, 1
        %s376 = scalar_lea.sflag [#allocation7], %s375
        %s377 = sand.u32 %s269, 1
        %s378 = scalar_lea.vmem [#allocation6], %s377
        %p379 = scmp.lt.s32.totalorder %s25, 1
        %s380 = scalar_select %p379, %s25, 1
        %s381 = smul.addr %s380, 32
        %s382 = smul.addr %s381, 8
        %s383 = scalar_lea.vmem %s0, %s382
        %v384 = vld [vmem:[%s383] sm:$0xff]
        %v385 = vld [vmem:[%s383 + $0x8] sm:$0xff]
        %v386 = vld [vmem:[%s383 + $0x10] sm:$0xff]
        %v387 = vld [vmem:[%s383 + $0x18] sm:$0xff]
        %v388 = vld [vmem:[%s383 + $0x20] sm:$0xff]
        %v389 = vld [vmem:[%s383 + $0x28] sm:$0xff]
        %v390 = vld [vmem:[%s383 + $0x30] sm:$0xff]
        %v391 = vld [vmem:[%s383 + $0x38] sm:$0xff]
        %v392 = vld [vmem:[%s383 + $0x40] sm:$0xff]
        %v393 = vld [vmem:[%s383 + $0x48] sm:$0xff]
        %v394 = vld [vmem:[%s383 + $0x50] sm:$0xff]
        %v395 = vld [vmem:[%s383 + $0x58] sm:$0xff]
        %v396 = vld [vmem:[%s383 + $0x60] sm:$0xff]
        %v397 = vld [vmem:[%s383 + $0x68] sm:$0xff]
        %v398 = vld [vmem:[%s383 + $0x70] sm:$0xff]
        %v399 = vld [vmem:[%s383 + $0x78] sm:$0xff]
        %v400 = vld [vmem:[%s383 + $0x80] sm:$0xff]
        %v401 = vld [vmem:[%s383 + $0x88] sm:$0xff]
        %v402 = vld [vmem:[%s383 + $0x90] sm:$0xff]
        %v403 = vld [vmem:[%s383 + $0x98] sm:$0xff]
        %v404 = vld [vmem:[%s383 + $0xa0] sm:$0xff]
        %v405 = vld [vmem:[%s383 + $0xa8] sm:$0xff]
        %v406 = vld [vmem:[%s383 + $0xb0] sm:$0xff]
        %v407 = vld [vmem:[%s383 + $0xb8] sm:$0xff]
        %v408 = vld [vmem:[%s383 + $0xc0] sm:$0xff]
        %v409 = vld [vmem:[%s383 + $0xc8] sm:$0xff]
        %v410 = vld [vmem:[%s383 + $0xd0] sm:$0xff]
        %v411 = vld [vmem:[%s383 + $0xd8] sm:$0xff]
        %v412 = vld [vmem:[%s383 + $0xe0] sm:$0xff]
        %v413 = vld [vmem:[%s383 + $0xe8] sm:$0xff]
        %v414 = vld [vmem:[%s383 + $0xf0] sm:$0xff]
        %v415 = vld [vmem:[%s383 + $0xf8] sm:$0xff]
        %vm416 = vcmask 31744
        %417 = vst.msk [vmem:[#allocation2] sm:$0xff] %vm416, 0.0
        %418 = vst.msk [vmem:[#allocation2 + $0x8] sm:$0xff] %vm416, 0.0
        %vm419 = vcmask 25600
        %420 = vst.msk [vmem:[#allocation2 + $0x10] sm:$0x3] %vm419, 0.0
        %421 = vst.msk [vmem:[#allocation2 + $0x18] sm:$0xff] %vm416, 0.0
        %422 = vst.msk [vmem:[#allocation2 + $0x20] sm:$0xff] %vm416, 0.0
        %423 = vst.msk [vmem:[#allocation2 + $0x28] sm:$0x3] %vm419, 0.0
        %424 = vst.msk [vmem:[#allocation2 + $0x30] sm:$0xff] %vm416, 0.0
        %425 = vst.msk [vmem:[#allocation2 + $0x38] sm:$0xff] %vm416, 0.0
        %426 = vst.msk [vmem:[#allocation2 + $0x40] sm:$0x3] %vm419, 0.0
        %427 = vst.msk [vmem:[#allocation2 + $0x48] sm:$0xff] %vm416, 0.0
        %428 = vst.msk [vmem:[#allocation2 + $0x50] sm:$0xff] %vm416, 0.0
        %429 = vst.msk [vmem:[#allocation2 + $0x58] sm:$0x3] %vm419, 0.0
        %430 = vst.msk [vmem:[#allocation2 + $0x60] sm:$0xff] %vm416, 0.0
        %431 = vst.msk [vmem:[#allocation2 + $0x68] sm:$0xff] %vm416, 0.0
        %432 = vst.msk [vmem:[#allocation2 + $0x70] sm:$0x3] %vm419, 0.0
        %433 = vst.msk [vmem:[#allocation2 + $0x78] sm:$0xff] %vm416, 0.0
        %434 = vst.msk [vmem:[#allocation2 + $0x80] sm:$0xff] %vm416, 0.0
        %435 = vst.msk [vmem:[#allocation2 + $0x88] sm:$0x3] %vm419, 0.0
        %436 = vst.msk [vmem:[#allocation2 + $0x90] sm:$0xff] %vm416, 0.0
        %437 = vst.msk [vmem:[#allocation2 + $0x98] sm:$0xff] %vm416, 0.0
        %438 = vst.msk [vmem:[#allocation2 + $0xa0] sm:$0x3] %vm419, 0.0
        %439 = vst.msk [vmem:[#allocation2 + $0xa8] sm:$0xff] %vm416, 0.0
        %440 = vst.msk [vmem:[#allocation2 + $0xb0] sm:$0xff] %vm416, 0.0
        %441 = vst.msk [vmem:[#allocation2 + $0xb8] sm:$0x3] %vm419, 0.0
        %442 = vst.msk [vmem:[#allocation2 + $0xc0] sm:$0xff] %vm416, 0.0
        %443 = vst.msk [vmem:[#allocation2 + $0xc8] sm:$0xff] %vm416, 0.0
        %444 = vst.msk [vmem:[#allocation2 + $0xd0] sm:$0x3] %vm419, 0.0
        %445 = vst.msk [vmem:[#allocation2 + $0xd8] sm:$0xff] %vm416, 0.0
        %446 = vst.msk [vmem:[#allocation2 + $0xe0] sm:$0xff] %vm416, 0.0
        %447 = vst.msk [vmem:[#allocation2 + $0xe8] sm:$0x3] %vm419, 0.0
        %448 = vst.msk [vmem:[#allocation2 + $0xf0] sm:$0xff] %vm416, 0.0
        %449 = vst.msk [vmem:[#allocation2 + $0xf8] sm:$0xff] %vm416, 0.0
        %450 = vst.msk [vmem:[#allocation2 + $0x100] sm:$0x3] %vm419, 0.0
        %451 = vst.msk [vmem:[#allocation2 + $0x108] sm:$0xff] %vm416, 0.0
        %452 = vst.msk [vmem:[#allocation2 + $0x110] sm:$0xff] %vm416, 0.0
        %453 = vst.msk [vmem:[#allocation2 + $0x118] sm:$0x3] %vm419, 0.0
        %454 = vst.msk [vmem:[#allocation2 + $0x120] sm:$0xff] %vm416, 0.0
        %455 = vst.msk [vmem:[#allocation2 + $0x128] sm:$0xff] %vm416, 0.0
        %456 = vst.msk [vmem:[#allocation2 + $0x130] sm:$0x3] %vm419, 0.0
        %457 = vst.msk [vmem:[#allocation2 + $0x138] sm:$0xff] %vm416, 0.0
        %458 = vst.msk [vmem:[#allocation2 + $0x140] sm:$0xff] %vm416, 0.0
        %459 = vst.msk [vmem:[#allocation2 + $0x148] sm:$0x3] %vm419, 0.0
        %460 = vst.msk [vmem:[#allocation2 + $0x150] sm:$0xff] %vm416, 0.0
        %461 = vst.msk [vmem:[#allocation2 + $0x158] sm:$0xff] %vm416, 0.0
        %462 = vst.msk [vmem:[#allocation2 + $0x160] sm:$0x3] %vm419, 0.0
        %463 = vst.msk [vmem:[#allocation2 + $0x168] sm:$0xff] %vm416, 0.0
        %464 = vst.msk [vmem:[#allocation2 + $0x170] sm:$0xff] %vm416, 0.0
        %465 = vst.msk [vmem:[#allocation2 + $0x178] sm:$0x3] %vm419, 0.0
        %466 = vst.msk [vmem:[#allocation2 + $0x180] sm:$0xff] %vm416, 0.0
        %467 = vst.msk [vmem:[#allocation2 + $0x188] sm:$0xff] %vm416, 0.0
        %468 = vst.msk [vmem:[#allocation2 + $0x190] sm:$0x3] %vm419, 0.0
        %469 = vst.msk [vmem:[#allocation2 + $0x198] sm:$0xff] %vm416, 0.0
        %470 = vst.msk [vmem:[#allocation2 + $0x1a0] sm:$0xff] %vm416, 0.0
        %471 = vst.msk [vmem:[#allocation2 + $0x1a8] sm:$0x3] %vm419, 0.0
        %s472 = scalar_lea.vmem [#allocation2], 24
        %473 = vst.msk [vmem:[%s472 + $0x1] sm:$0xff] %vm416, %v384
        %474 = vst.msk [vmem:[%s472 + $0x9] sm:$0xff] %vm416, %v385
        %475 = vst.msk [vmem:[%s472 + $0x19] sm:$0xff] %vm416, %v386
        %476 = vst.msk [vmem:[%s472 + $0x21] sm:$0xff] %vm416, %v387
        %477 = vst.msk [vmem:[%s472 + $0x31] sm:$0xff] %vm416, %v388
        %478 = vst.msk [vmem:[%s472 + $0x39] sm:$0xff] %vm416, %v389
        %479 = vst.msk [vmem:[%s472 + $0x49] sm:$0xff] %vm416, %v390
        %480 = vst.msk [vmem:[%s472 + $0x51] sm:$0xff] %vm416, %v391
        %481 = vst.msk [vmem:[%s472 + $0x61] sm:$0xff] %vm416, %v392
        %482 = vst.msk [vmem:[%s472 + $0x69] sm:$0xff] %vm416, %v393
        %483 = vst.msk [vmem:[%s472 + $0x79] sm:$0xff] %vm416, %v394
        %484 = vst.msk [vmem:[%s472 + $0x81] sm:$0xff] %vm416, %v395
        %485 = vst.msk [vmem:[%s472 + $0x91] sm:$0xff] %vm416, %v396
        %486 = vst.msk [vmem:[%s472 + $0x99] sm:$0xff] %vm416, %v397
        %487 = vst.msk [vmem:[%s472 + $0xa9] sm:$0xff] %vm416, %v398
        %488 = vst.msk [vmem:[%s472 + $0xb1] sm:$0xff] %vm416, %v399
        %489 = vst.msk [vmem:[%s472 + $0xc1] sm:$0xff] %vm416, %v400
        %490 = vst.msk [vmem:[%s472 + $0xc9] sm:$0xff] %vm416, %v401
        %491 = vst.msk [vmem:[%s472 + $0xd9] sm:$0xff] %vm416, %v402
        %492 = vst.msk [vmem:[%s472 + $0xe1] sm:$0xff] %vm416, %v403
        %493 = vst.msk [vmem:[%s472 + $0xf1] sm:$0xff] %vm416, %v404
        %494 = vst.msk [vmem:[%s472 + $0xf9] sm:$0xff] %vm416, %v405
        %495 = vst.msk [vmem:[%s472 + $0x109] sm:$0xff] %vm416, %v406
        %496 = vst.msk [vmem:[%s472 + $0x111] sm:$0xff] %vm416, %v407
        %497 = vst.msk [vmem:[%s472 + $0x121] sm:$0xff] %vm416, %v408
        %498 = vst.msk [vmem:[%s472 + $0x129] sm:$0xff] %vm416, %v409
        %499 = vst.msk [vmem:[%s472 + $0x139] sm:$0xff] %vm416, %v410
        %500 = vst.msk [vmem:[%s472 + $0x141] sm:$0xff] %vm416, %v411
        %501 = vst.msk [vmem:[%s472 + $0x151] sm:$0xff] %vm416, %v412
        %502 = vst.msk [vmem:[%s472 + $0x159] sm:$0xff] %vm416, %v413
        %503 = vst.msk [vmem:[%s472 + $0x169] sm:$0xff] %vm416, %v414
        %504 = vst.msk [vmem:[%s472 + $0x171] sm:$0xff] %vm416, %v415
        %v505 = vld [vmem:[#allocation2] sm:$0xff]
        %v506 = vld [vmem:[#allocation2 + $0x8] sm:$0xff]
        %v507 = vld [vmem:[#allocation2 + $0x10] sm:$0x3]
        %v508 = vld [vmem:[#allocation2 + $0x18] sm:$0xff]
        %v509 = vld [vmem:[#allocation2 + $0x20] sm:$0xff]
        %v510 = vld [vmem:[#allocation2 + $0x28] sm:$0x3]
        %v511 = vld [vmem:[#allocation2 + $0x30] sm:$0xff]
        %v512 = vld [vmem:[#allocation2 + $0x38] sm:$0xff]
        %v513 = vld [vmem:[#allocation2 + $0x40] sm:$0x3]
        %v514 = vld [vmem:[#allocation2 + $0x48] sm:$0xff]
        %v515 = vld [vmem:[#allocation2 + $0x50] sm:$0xff]
        %v516 = vld [vmem:[#allocation2 + $0x58] sm:$0x3]
        %v517 = vld [vmem:[#allocation2 + $0x60] sm:$0xff]
        %v518 = vld [vmem:[#allocation2 + $0x68] sm:$0xff]
        %v519 = vld [vmem:[#allocation2 + $0x70] sm:$0x3]
        %v520 = vld [vmem:[#allocation2 + $0x78] sm:$0xff]
        %v521 = vld [vmem:[#allocation2 + $0x80] sm:$0xff]
        %v522 = vld [vmem:[#allocation2 + $0x88] sm:$0x3]
        %v523 = vld [vmem:[#allocation2 + $0x90] sm:$0xff]
        %v524 = vld [vmem:[#allocation2 + $0x98] sm:$0xff]
        %v525 = vld [vmem:[#allocation2 + $0xa0] sm:$0x3]
        %v526 = vld [vmem:[#allocation2 + $0xa8] sm:$0xff]
        %v527 = vld [vmem:[#allocation2 + $0xb0] sm:$0xff]
        %v528 = vld [vmem:[#allocation2 + $0xb8] sm:$0x3]
        %v529 = vld [vmem:[#allocation2 + $0xc0] sm:$0xff]
        %v530 = vld [vmem:[#allocation2 + $0xc8] sm:$0xff]
        %v531 = vld [vmem:[#allocation2 + $0xd0] sm:$0x3]
        %v532 = vld [vmem:[#allocation2 + $0xd8] sm:$0xff]
        %v533 = vld [vmem:[#allocation2 + $0xe0] sm:$0xff]
        %v534 = vld [vmem:[#allocation2 + $0xe8] sm:$0x3]
        %v535 = vld [vmem:[#allocation2 + $0xf0] sm:$0xff]
        %v536 = vld [vmem:[#allocation2 + $0xf8] sm:$0xff]
        %v537 = vld [vmem:[#allocation2 + $0x100] sm:$0x3]
        %v538 = vld [vmem:[#allocation2 + $0x108] sm:$0xff]
        %v539 = vld [vmem:[#allocation2 + $0x110] sm:$0xff]
        %v540 = vld [vmem:[#allocation2 + $0x118] sm:$0x3]
        %v541 = vld [vmem:[#allocation2 + $0x120] sm:$0xff]
        %v542 = vld [vmem:[#allocation2 + $0x128] sm:$0xff]
        %v543 = vld [vmem:[#allocation2 + $0x130] sm:$0x3]
        %v544 = vld [vmem:[#allocation2 + $0x138] sm:$0xff]
        %v545 = vld [vmem:[#allocation2 + $0x140] sm:$0xff]
        %v546 = vld [vmem:[#allocation2 + $0x148] sm:$0x3]
        %v547 = vld [vmem:[#allocation2 + $0x150] sm:$0xff]
        %v548 = vld [vmem:[#allocation2 + $0x158] sm:$0xff]
        %v549 = vld [vmem:[#allocation2 + $0x160] sm:$0x3]
        %v550 = vld [vmem:[#allocation2 + $0x168] sm:$0xff]
        %v551 = vld [vmem:[#allocation2 + $0x170] sm:$0xff]
        %v552 = vld [vmem:[#allocation2 + $0x178] sm:$0x3]
        %v553 = vld [vmem:[#allocation2 + $0x180] sm:$0xff]
        %v554 = vld [vmem:[#allocation2 + $0x188] sm:$0xff]
        %v555 = vld [vmem:[#allocation2 + $0x190] sm:$0x3]
        %v556 = vld [vmem:[#allocation2 + $0x198] sm:$0xff]
        %v557 = vld [vmem:[#allocation2 + $0x1a0] sm:$0xff]
        %v558 = vld [vmem:[#allocation2 + $0x1a8] sm:$0x3]
        %v559 = vld [vmem:[%s1] sm:$0xf]
        %s560 = scalar_lea.vmem %s1, 12
        %v561 = vld [vmem:[%s560] sm:$0xf]
        %v563 = vsel %vm416, %v508, 0
        %v566 = vsel %vm416, %v509, 0
        %v569 = vsel %vm416, %v511, 0
        %v572 = vsel %vm416, %v512, 0
        %v575 = vsel %vm416, %v514, 0
        %v578 = vsel %vm416, %v515, 0
        %v581 = vsel %vm416, %v517, 0
        %v584 = vsel %vm416, %v518, 0
        %v587 = vsel %vm416, %v520, 0
        %v590 = vsel %vm416, %v521, 0
        %v593 = vsel %vm416, %v523, 0
        %v596 = vsel %vm416, %v524, 0
        %v599 = vsel %vm416, %v526, 0
        %v602 = vsel %vm416, %v527, 0
        %v605 = vsel %vm416, %v529, 0
        %v608 = vsel %vm416, %v530, 0
        %v611 = vsel %vm416, %v532, 0
        %v614 = vsel %vm416, %v533, 0
        %v617 = vsel %vm416, %v535, 0
        %v620 = vsel %vm416, %v536, 0
        %v623 = vsel %vm416, %v538, 0
        %v626 = vsel %vm416, %v539, 0
        %v629 = vsel %vm416, %v541, 0
        %v632 = vsel %vm416, %v542, 0
        %v635 = vsel %vm416, %v544, 0
        %v638 = vsel %vm416, %v545, 0
        %v641 = vsel %vm416, %v547, 0
        %v644 = vsel %vm416, %v548, 0
        %v647 = vsel %vm416, %v550, 0
        %v650 = vsel %vm416, %v551, 0
        %v653 = vsel %vm416, %v553, 0
        %v656 = vsel %vm416, %v554, 0
        %vm658 = vcmask 1043456
        %v660 = vsel %vm658, %v561, 0
        %662 = vmatprep.subr.mxu0 0.0
        %663 = vmatpush1.msra.mxu0 0.0
        %664 = vmatprep.subr.mxu0 0.0
        %665 = vmatpush1.msra.mxu0 0.0
        %666 = vmatprep.subr.mxu0 0.0
        %667 = vmatpush1.msra.mxu0 0.0
        %668 = vmatprep.subr.mxu0 0.0
        %669 = vmatpush1.msra.mxu0 0.0
        %670 = vmatprep.subr.mxu0 0.0
        %671 = vmatpush1.msra.mxu0 0.0
        %672 = vmatprep.subr.mxu0 0.0
        %673 = vmatpush1.msra.mxu0 0.0
        %674 = vmatprep.subr.mxu0 0.0
        %675 = vmatpush1.msra.mxu0 0.0
        %676 = vmatprep.subr.mxu0 0.0
        %677 = vmatpush1.msra.mxu0 0.0
        %678 = vmatprep.subr.mxu0 0.0
        %679 = vmatpush1.msra.mxu0 0.0
        %680 = vmatprep.subr.mxu0 0.0
        %681 = vmatpush1.msra.mxu0 0.0
        %682 = vmatprep.subr.mxu0 0.0
        %683 = vmatpush1.msra.mxu0 0.0
        %684 = vmatprep.subr.mxu0 0.0
        %685 = vmatpush1.msra.mxu0 0.0
        %686 = vmatprep.subr.mxu0 0.0
        %687 = vmatpush1.msra.mxu0 0.0
        %688 = vmatprep.subr.mxu0 0.0
        %689 = vmatpush1.msra.mxu0 0.0
        %690 = vmatprep.subr.mxu0 0.0
        %691 = vmatpush1.msra.mxu0 0.0
        %692 = vmatprep.subr.mxu0 0.0
        %693 = vmatpush1.msra.mxu0 %v660
        %694 = vmatprep.subr.mxu0 0.0
        %695 = vmatpush2.msra.mxu0 0.0
        %696 = vmatprep.subr.mxu0 0.0
        %697 = vmatpush2.msra.mxu0 0.0
        %698 = vmatprep.subr.mxu0 0.0
        %699 = vmatpush2.msra.mxu0 0.0
        %700 = vmatprep.subr.mxu0 0.0
        %701 = vmatpush2.msra.mxu0 0.0
        %702 = vmatprep.subr.mxu0 0.0
        %703 = vmatpush2.msra.mxu0 0.0
        %704 = vmatprep.subr.mxu0 0.0
        %705 = vmatpush2.msra.mxu0 0.0
        %706 = vmatprep.subr.mxu0 0.0
        %707 = vmatpush2.msra.mxu0 0.0
        %708 = vmatprep.subr.mxu0 0.0
        %709 = vmatpush2.msra.mxu0 0.0
        %710 = vmatprep.subr.mxu0 0.0
        %711 = vmatpush2.msra.mxu0 0.0
        %712 = vmatprep.subr.mxu0 0.0
        %713 = vmatpush2.msra.mxu0 0.0
        %714 = vmatprep.subr.mxu0 0.0
        %715 = vmatpush2.msra.mxu0 0.0
        %716 = vmatprep.subr.mxu0 0.0
        %717 = vmatpush2.msra.mxu0 0.0
        %718 = vmatprep.subr.mxu0 0.0
        %719 = vmatpush2.msra.mxu0 0.0
        %720 = vmatprep.subr.mxu0 0.0
        %721 = vmatpush2.msra.mxu0 0.0
        %722 = vmatprep.subr.mxu0 0.0
        %723 = vmatpush2.msra.mxu0 0.0
        %724 = vmatprep.subr.mxu0 0.0
        %725 = vmatpush2.msra.mxu0 0.0
        %726 = vmatprep.mubr.f32.mxu0 0.0
        %727 = vmatmul.mubr.f32.gmra.mxu0 %v563
        %v728 = vpop.f32.mrf.mxu0
        %v729 = vadd.f32 0.0, %v728
        %v730 = vpop.f32.mrf.mxu0
        %731 = vmatprep.mubr.f32.mxu0 0.0
        %732 = vmatmul.mubr.f32.gmra.mxu0 %v566
        %v733 = vpop.f32.mrf.mxu0
        %v734 = vadd.f32 0.0, %v733
        %v735 = vpop.f32.mrf.mxu0
        %736 = vmatprep.mubr.f32.mxu0 0.0
        %737 = vmatmul.mubr.f32.gmra.mxu0 %v569
        %v738 = vpop.f32.mrf.mxu0
        %v739 = vadd.f32 0.0, %v738
        %v740 = vpop.f32.mrf.mxu0
        %741 = vmatprep.mubr.f32.mxu0 0.0
        %742 = vmatmul.mubr.f32.gmra.mxu0 %v572
        %v743 = vpop.f32.mrf.mxu0
        %v744 = vadd.f32 0.0, %v743
        %v745 = vpop.f32.mrf.mxu0
        %746 = vmatprep.mubr.f32.mxu0 0.0
        %747 = vmatmul.mubr.f32.gmra.mxu0 %v575
        %v748 = vpop.f32.mrf.mxu0
        %v749 = vadd.f32 0.0, %v748
        %v750 = vpop.f32.mrf.mxu0
        %751 = vmatprep.mubr.f32.mxu0 0.0
        %752 = vmatmul.mubr.f32.gmra.mxu0 %v578
        %v753 = vpop.f32.mrf.mxu0
        %v754 = vadd.f32 0.0, %v753
        %v755 = vpop.f32.mrf.mxu0
        %756 = vmatprep.mubr.f32.mxu0 0.0
        %757 = vmatmul.mubr.f32.gmra.mxu0 %v581
        %v758 = vpop.f32.mrf.mxu0
        %v759 = vadd.f32 0.0, %v758
        %v760 = vpop.f32.mrf.mxu0
        %761 = vmatprep.mubr.f32.mxu0 0.0
        %762 = vmatmul.mubr.f32.gmra.mxu0 %v584
        %v763 = vpop.f32.mrf.mxu0
        %v764 = vadd.f32 0.0, %v763
        %v765 = vpop.f32.mrf.mxu0
        %766 = vmatprep.mubr.f32.mxu0 0.0
        %767 = vmatmul.mubr.f32.gmra.mxu0 %v587
        %v768 = vpop.f32.mrf.mxu0
        %v769 = vadd.f32 0.0, %v768
        %v770 = vpop.f32.mrf.mxu0
        %771 = vmatprep.mubr.f32.mxu0 0.0
        %772 = vmatmul.mubr.f32.gmra.mxu0 %v590
        %v773 = vpop.f32.mrf.mxu0
        %v774 = vadd.f32 0.0, %v773
        %v775 = vpop.f32.mrf.mxu0
        %776 = vmatprep.mubr.f32.mxu0 0.0
        %777 = vmatmul.mubr.f32.gmra.mxu0 %v593
        %v778 = vpop.f32.mrf.mxu0
        %v779 = vadd.f32 0.0, %v778
        %v780 = vpop.f32.mrf.mxu0
        %781 = vmatprep.mubr.f32.mxu0 0.0
        %782 = vmatmul.mubr.f32.gmra.mxu0 %v596
        %v783 = vpop.f32.mrf.mxu0
        %v784 = vadd.f32 0.0, %v783
        %v785 = vpop.f32.mrf.mxu0
        %786 = vmatprep.mubr.f32.mxu0 0.0
        %787 = vmatmul.mubr.f32.gmra.mxu0 %v599
        %v788 = vpop.f32.mrf.mxu0
        %v789 = vadd.f32 0.0, %v788
        %v790 = vpop.f32.mrf.mxu0
        %791 = vmatprep.mubr.f32.mxu0 0.0
        %792 = vmatmul.mubr.f32.gmra.mxu0 %v602
        %v793 = vpop.f32.mrf.mxu0
        %v794 = vadd.f32 0.0, %v793
        %v795 = vpop.f32.mrf.mxu0
        %796 = vmatprep.mubr.f32.mxu0 0.0
        %797 = vmatmul.mubr.f32.gmra.mxu0 %v605
        %v798 = vpop.f32.mrf.mxu0
        %v799 = vadd.f32 0.0, %v798
        %v800 = vpop.f32.mrf.mxu0
        %801 = vmatprep.mubr.f32.mxu0 0.0
        %802 = vmatmul.mubr.f32.gmra.mxu0 %v608
        %v803 = vpop.f32.mrf.mxu0
        %v804 = vadd.f32 0.0, %v803
        %v805 = vpop.f32.mrf.mxu0
        %806 = vmatprep.mubr.f32.mxu0 0.0
        %807 = vmatmul.mubr.f32.gmra.mxu0 %v611
        %v808 = vpop.f32.mrf.mxu0
        %v809 = vadd.f32 0.0, %v808
        %v810 = vpop.f32.mrf.mxu0
        %811 = vmatprep.mubr.f32.mxu0 0.0
        %812 = vmatmul.mubr.f32.gmra.mxu0 %v614
        %v813 = vpop.f32.mrf.mxu0
        %v814 = vadd.f32 0.0, %v813
        %v815 = vpop.f32.mrf.mxu0
        %816 = vmatprep.mubr.f32.mxu0 0.0
        %817 = vmatmul.mubr.f32.gmra.mxu0 %v617
        %v818 = vpop.f32.mrf.mxu0
        %v819 = vadd.f32 0.0, %v818
        %v820 = vpop.f32.mrf.mxu0
        %821 = vmatprep.mubr.f32.mxu0 0.0
        %822 = vmatmul.mubr.f32.gmra.mxu0 %v620
        %v823 = vpop.f32.mrf.mxu0
        %v824 = vadd.f32 0.0, %v823
        %v825 = vpop.f32.mrf.mxu0
        %826 = vmatprep.mubr.f32.mxu0 0.0
        %827 = vmatmul.mubr.f32.gmra.mxu0 %v623
        %v828 = vpop.f32.mrf.mxu0
        %v829 = vadd.f32 0.0, %v828
        %v830 = vpop.f32.mrf.mxu0
        %831 = vmatprep.mubr.f32.mxu0 0.0
        %832 = vmatmul.mubr.f32.gmra.mxu0 %v626
        %v833 = vpop.f32.mrf.mxu0
        %v834 = vadd.f32 0.0, %v833
        %v835 = vpop.f32.mrf.mxu0
        %836 = vmatprep.mubr.f32.mxu0 0.0
        %837 = vmatmul.mubr.f32.gmra.mxu0 %v629
        %v838 = vpop.f32.mrf.mxu0
        %v839 = vadd.f32 0.0, %v838
        %v840 = vpop.f32.mrf.mxu0
        %841 = vmatprep.mubr.f32.mxu0 0.0
        %842 = vmatmul.mubr.f32.gmra.mxu0 %v632
        %v843 = vpop.f32.mrf.mxu0
        %v844 = vadd.f32 0.0, %v843
        %v845 = vpop.f32.mrf.mxu0
        %846 = vmatprep.mubr.f32.mxu0 0.0
        %847 = vmatmul.mubr.f32.gmra.mxu0 %v635
        %v848 = vpop.f32.mrf.mxu0
        %v849 = vadd.f32 0.0, %v848
        %v850 = vpop.f32.mrf.mxu0
        %851 = vmatprep.mubr.f32.mxu0 0.0
        %852 = vmatmul.mubr.f32.gmra.mxu0 %v638
        %v853 = vpop.f32.mrf.mxu0
        %v854 = vadd.f32 0.0, %v853
        %v855 = vpop.f32.mrf.mxu0
        %856 = vmatprep.mubr.f32.mxu0 0.0
        %857 = vmatmul.mubr.f32.gmra.mxu0 %v641
        %v858 = vpop.f32.mrf.mxu0
        %v859 = vadd.f32 0.0, %v858
        %v860 = vpop.f32.mrf.mxu0
        %861 = vmatprep.mubr.f32.mxu0 0.0
        %862 = vmatmul.mubr.f32.gmra.mxu0 %v644
        %v863 = vpop.f32.mrf.mxu0
        %v864 = vadd.f32 0.0, %v863
        %v865 = vpop.f32.mrf.mxu0
        %866 = vmatprep.mubr.f32.mxu0 0.0
        %867 = vmatmul.mubr.f32.gmra.mxu0 %v647
        %v868 = vpop.f32.mrf.mxu0
        %v869 = vadd.f32 0.0, %v868
        %v870 = vpop.f32.mrf.mxu0
        %871 = vmatprep.mubr.f32.mxu0 0.0
        %872 = vmatmul.mubr.f32.gmra.mxu0 %v650
        %v873 = vpop.f32.mrf.mxu0
        %v874 = vadd.f32 0.0, %v873
        %v875 = vpop.f32.mrf.mxu0
        %876 = vmatprep.mubr.f32.mxu0 0.0
        %877 = vmatmul.mubr.f32.gmra.mxu0 %v653
        %v878 = vpop.f32.mrf.mxu0
        %v879 = vadd.f32 0.0, %v878
        %v880 = vpop.f32.mrf.mxu0
        %881 = vmatprep.mubr.f32.mxu0 0.0
        %882 = vmatmul.mubr.f32.gmra.mxu0 %v656
        %v883 = vpop.f32.mrf.mxu0
        %v884 = vadd.f32 0.0, %v883
        %v885 = vpop.f32.mrf.mxu0
        %886 = vdwg.mxu0
        %v888 = vsel %vm416, %v505, 0
        %v891 = vsel %vm416, %v506, 0
        %v894 = vsel %vm658, %v559, 0
        %896 = vmatprep.subr.mxu0 0.0
        %897 = vmatpush1.msra.mxu0 0.0
        %898 = vmatprep.subr.mxu0 0.0
        %899 = vmatpush1.msra.mxu0 0.0
        %900 = vmatprep.subr.mxu0 0.0
        %901 = vmatpush1.msra.mxu0 0.0
        %902 = vmatprep.subr.mxu0 0.0
        %903 = vmatpush1.msra.mxu0 0.0
        %904 = vmatprep.subr.mxu0 0.0
        %905 = vmatpush1.msra.mxu0 0.0
        %906 = vmatprep.subr.mxu0 0.0
        %907 = vmatpush1.msra.mxu0 0.0
        %908 = vmatprep.subr.mxu0 0.0
        %909 = vmatpush1.msra.mxu0 0.0
        %910 = vmatprep.subr.mxu0 0.0
        %911 = vmatpush1.msra.mxu0 0.0
        %912 = vmatprep.subr.mxu0 0.0
        %913 = vmatpush1.msra.mxu0 0.0
        %914 = vmatprep.subr.mxu0 0.0
        %915 = vmatpush1.msra.mxu0 0.0
        %916 = vmatprep.subr.mxu0 0.0
        %917 = vmatpush1.msra.mxu0 0.0
        %918 = vmatprep.subr.mxu0 0.0
        %919 = vmatpush1.msra.mxu0 0.0
        %920 = vmatprep.subr.mxu0 0.0
        %921 = vmatpush1.msra.mxu0 0.0
        %922 = vmatprep.subr.mxu0 0.0
        %923 = vmatpush1.msra.mxu0 0.0
        %924 = vmatprep.subr.mxu0 0.0
        %925 = vmatpush1.msra.mxu0 0.0
        %926 = vmatprep.subr.mxu0 0.0
        %927 = vmatpush1.msra.mxu0 %v894
        %928 = vmatprep.subr.mxu0 0.0
        %929 = vmatpush2.msra.mxu0 0.0
        %930 = vmatprep.subr.mxu0 0.0
        %931 = vmatpush2.msra.mxu0 0.0
        %932 = vmatprep.subr.mxu0 0.0
        %933 = vmatpush2.msra.mxu0 0.0
        %934 = vmatprep.subr.mxu0 0.0
        %935 = vmatpush2.msra.mxu0 0.0
        %936 = vmatprep.subr.mxu0 0.0
        %937 = vmatpush2.msra.mxu0 0.0
        %938 = vmatprep.subr.mxu0 0.0
        %939 = vmatpush2.msra.mxu0 0.0
        %940 = vmatprep.subr.mxu0 0.0
        %941 = vmatpush2.msra.mxu0 0.0
        %942 = vmatprep.subr.mxu0 0.0
        %943 = vmatpush2.msra.mxu0 0.0
        %944 = vmatprep.subr.mxu0 0.0
        %945 = vmatpush2.msra.mxu0 0.0
        %946 = vmatprep.subr.mxu0 0.0
        %947 = vmatpush2.msra.mxu0 0.0
        %948 = vmatprep.subr.mxu0 0.0
        %949 = vmatpush2.msra.mxu0 0.0
        %950 = vmatprep.subr.mxu0 0.0
        %951 = vmatpush2.msra.mxu0 0.0
        %952 = vmatprep.subr.mxu0 0.0
        %953 = vmatpush2.msra.mxu0 0.0
        %954 = vmatprep.subr.mxu0 0.0
        %955 = vmatpush2.msra.mxu0 0.0
        %956 = vmatprep.subr.mxu0 0.0
        %957 = vmatpush2.msra.mxu0 0.0
        %958 = vmatprep.subr.mxu0 0.0
        %959 = vmatpush2.msra.mxu0 0.0
        %960 = vmatprep.mubr.f32.mxu0 0.0
        %961 = vmatmul.mubr.f32.gmra.mxu0 %v888
        %v962 = vpop.f32.mrf.mxu0
        %v963 = vadd.f32 %v729, %v962
        %v964 = vpop.f32.mrf.mxu0
        %965 = vmatprep.mubr.f32.mxu0 0.0
        %966 = vmatmul.mubr.f32.gmra.mxu0 %v891
        %v967 = vpop.f32.mrf.mxu0
        %v968 = vadd.f32 %v734, %v967
        %v969 = vpop.f32.mrf.mxu0
        %970 = vmatprep.mubr.f32.mxu0 0.0
        %971 = vmatmul.mubr.f32.gmra.mxu0 %v563
        %v972 = vpop.f32.mrf.mxu0
        %v973 = vadd.f32 %v739, %v972
        %v974 = vpop.f32.mrf.mxu0
        %975 = vmatprep.mubr.f32.mxu0 0.0
        %976 = vmatmul.mubr.f32.gmra.mxu0 %v566
        %v977 = vpop.f32.mrf.mxu0
        %v978 = vadd.f32 %v744, %v977
        %v979 = vpop.f32.mrf.mxu0
        %980 = vmatprep.mubr.f32.mxu0 0.0
        %981 = vmatmul.mubr.f32.gmra.mxu0 %v569
        %v982 = vpop.f32.mrf.mxu0
        %v983 = vadd.f32 %v749, %v982
        %v984 = vpop.f32.mrf.mxu0
        %985 = vmatprep.mubr.f32.mxu0 0.0
        %986 = vmatmul.mubr.f32.gmra.mxu0 %v572
        %v987 = vpop.f32.mrf.mxu0
        %v988 = vadd.f32 %v754, %v987
        %v989 = vpop.f32.mrf.mxu0
        %990 = vmatprep.mubr.f32.mxu0 0.0
        %991 = vmatmul.mubr.f32.gmra.mxu0 %v575
        %v992 = vpop.f32.mrf.mxu0
        %v993 = vadd.f32 %v759, %v992
        %v994 = vpop.f32.mrf.mxu0
        %995 = vmatprep.mubr.f32.mxu0 0.0
        %996 = vmatmul.mubr.f32.gmra.mxu0 %v578
        %v997 = vpop.f32.mrf.mxu0
        %v998 = vadd.f32 %v764, %v997
        %v999 = vpop.f32.mrf.mxu0
        %1000 = vmatprep.mubr.f32.mxu0 0.0
        %1001 = vmatmul.mubr.f32.gmra.mxu0 %v581
        %v1002 = vpop.f32.mrf.mxu0
        %v1003 = vadd.f32 %v769, %v1002
        %v1004 = vpop.f32.mrf.mxu0
        %1005 = vmatprep.mubr.f32.mxu0 0.0
        %1006 = vmatmul.mubr.f32.gmra.mxu0 %v584
        %v1007 = vpop.f32.mrf.mxu0
        %v1008 = vadd.f32 %v774, %v1007
        %v1009 = vpop.f32.mrf.mxu0
        %1010 = vmatprep.mubr.f32.mxu0 0.0
        %1011 = vmatmul.mubr.f32.gmra.mxu0 %v587
        %v1012 = vpop.f32.mrf.mxu0
        %v1013 = vadd.f32 %v779, %v1012
        %v1014 = vpop.f32.mrf.mxu0
        %1015 = vmatprep.mubr.f32.mxu0 0.0
        %1016 = vmatmul.mubr.f32.gmra.mxu0 %v590
        %v1017 = vpop.f32.mrf.mxu0
        %v1018 = vadd.f32 %v784, %v1017
        %v1019 = vpop.f32.mrf.mxu0
        %1020 = vmatprep.mubr.f32.mxu0 0.0
        %1021 = vmatmul.mubr.f32.gmra.mxu0 %v593
        %v1022 = vpop.f32.mrf.mxu0
        %v1023 = vadd.f32 %v789, %v1022
        %v1024 = vpop.f32.mrf.mxu0
        %1025 = vmatprep.mubr.f32.mxu0 0.0
        %1026 = vmatmul.mubr.f32.gmra.mxu0 %v596
        %v1027 = vpop.f32.mrf.mxu0
        %v1028 = vadd.f32 %v794, %v1027
        %v1029 = vpop.f32.mrf.mxu0
        %1030 = vmatprep.mubr.f32.mxu0 0.0
        %1031 = vmatmul.mubr.f32.gmra.mxu0 %v599
        %v1032 = vpop.f32.mrf.mxu0
        %v1033 = vadd.f32 %v799, %v1032
        %v1034 = vpop.f32.mrf.mxu0
        %1035 = vmatprep.mubr.f32.mxu0 0.0
        %1036 = vmatmul.mubr.f32.gmra.mxu0 %v602
        %v1037 = vpop.f32.mrf.mxu0
        %v1038 = vadd.f32 %v804, %v1037
        %v1039 = vpop.f32.mrf.mxu0
        %1040 = vmatprep.mubr.f32.mxu0 0.0
        %1041 = vmatmul.mubr.f32.gmra.mxu0 %v605
        %v1042 = vpop.f32.mrf.mxu0
        %v1043 = vadd.f32 %v809, %v1042
        %v1044 = vpop.f32.mrf.mxu0
        %1045 = vmatprep.mubr.f32.mxu0 0.0
        %1046 = vmatmul.mubr.f32.gmra.mxu0 %v608
        %v1047 = vpop.f32.mrf.mxu0
        %v1048 = vadd.f32 %v814, %v1047
        %v1049 = vpop.f32.mrf.mxu0
        %1050 = vmatprep.mubr.f32.mxu0 0.0
        %1051 = vmatmul.mubr.f32.gmra.mxu0 %v611
        %v1052 = vpop.f32.mrf.mxu0
        %v1053 = vadd.f32 %v819, %v1052
        %v1054 = vpop.f32.mrf.mxu0
        %1055 = vmatprep.mubr.f32.mxu0 0.0
        %1056 = vmatmul.mubr.f32.gmra.mxu0 %v614
        %v1057 = vpop.f32.mrf.mxu0
        %v1058 = vadd.f32 %v824, %v1057
        %v1059 = vpop.f32.mrf.mxu0
        %1060 = vmatprep.mubr.f32.mxu0 0.0
        %1061 = vmatmul.mubr.f32.gmra.mxu0 %v617
        %v1062 = vpop.f32.mrf.mxu0
        %v1063 = vadd.f32 %v829, %v1062
        %v1064 = vpop.f32.mrf.mxu0
        %1065 = vmatprep.mubr.f32.mxu0 0.0
        %1066 = vmatmul.mubr.f32.gmra.mxu0 %v620
        %v1067 = vpop.f32.mrf.mxu0
        %v1068 = vadd.f32 %v834, %v1067
        %v1069 = vpop.f32.mrf.mxu0
        %1070 = vmatprep.mubr.f32.mxu0 0.0
        %1071 = vmatmul.mubr.f32.gmra.mxu0 %v623
        %v1072 = vpop.f32.mrf.mxu0
        %v1073 = vadd.f32 %v839, %v1072
        %v1074 = vpop.f32.mrf.mxu0
        %1075 = vmatprep.mubr.f32.mxu0 0.0
        %1076 = vmatmul.mubr.f32.gmra.mxu0 %v626
        %v1077 = vpop.f32.mrf.mxu0
        %v1078 = vadd.f32 %v844, %v1077
        %v1079 = vpop.f32.mrf.mxu0
        %1080 = vmatprep.mubr.f32.mxu0 0.0
        %1081 = vmatmul.mubr.f32.gmra.mxu0 %v629
        %v1082 = vpop.f32.mrf.mxu0
        %v1083 = vadd.f32 %v849, %v1082
        %v1084 = vpop.f32.mrf.mxu0
        %1085 = vmatprep.mubr.f32.mxu0 0.0
        %1086 = vmatmul.mubr.f32.gmra.mxu0 %v632
        %v1087 = vpop.f32.mrf.mxu0
        %v1088 = vadd.f32 %v854, %v1087
        %v1089 = vpop.f32.mrf.mxu0
        %1090 = vmatprep.mubr.f32.mxu0 0.0
        %1091 = vmatmul.mubr.f32.gmra.mxu0 %v635
        %v1092 = vpop.f32.mrf.mxu0
        %v1093 = vadd.f32 %v859, %v1092
        %v1094 = vpop.f32.mrf.mxu0
        %1095 = vmatprep.mubr.f32.mxu0 0.0
        %1096 = vmatmul.mubr.f32.gmra.mxu0 %v638
        %v1097 = vpop.f32.mrf.mxu0
        %v1098 = vadd.f32 %v864, %v1097
        %v1099 = vpop.f32.mrf.mxu0
        %1100 = vmatprep.mubr.f32.mxu0 0.0
        %1101 = vmatmul.mubr.f32.gmra.mxu0 %v641
        %v1102 = vpop.f32.mrf.mxu0
        %v1103 = vadd.f32 %v869, %v1102
        %v1104 = vpop.f32.mrf.mxu0
        %1105 = vmatprep.mubr.f32.mxu0 0.0
        %1106 = vmatmul.mubr.f32.gmra.mxu0 %v644
        %v1107 = vpop.f32.mrf.mxu0
        %v1108 = vadd.f32 %v874, %v1107
        %v1109 = vpop.f32.mrf.mxu0
        %1110 = vmatprep.mubr.f32.mxu0 0.0
        %1111 = vmatmul.mubr.f32.gmra.mxu0 %v647
        %v1112 = vpop.f32.mrf.mxu0
        %v1113 = vadd.f32 %v879, %v1112
        %v1114 = vpop.f32.mrf.mxu0
        %1115 = vmatprep.mubr.f32.mxu0 0.0
        %1116 = vmatmul.mubr.f32.gmra.mxu0 %v650
        %v1117 = vpop.f32.mrf.mxu0
        %v1118 = vadd.f32 %v884, %v1117
        %v1119 = vpop.f32.mrf.mxu0
        %1120 = vdwg.mxu0
        %s1121 = scalar_lea.vmem %s1, 24
        %v1122 = vld [vmem:[%s1121] sm:$0xf]
        %v1124 = vsel %vm416, %v556, 0
        %v1127 = vsel %vm416, %v557, 0
        %v1130 = vsel %vm658, %v1122, 0
        %1132 = vmatprep.subr.mxu0 0.0
        %1133 = vmatpush1.msra.mxu0 0.0
        %1134 = vmatprep.subr.mxu0 0.0
        %1135 = vmatpush1.msra.mxu0 0.0
        %1136 = vmatprep.subr.mxu0 0.0
        %1137 = vmatpush1.msra.mxu0 0.0
        %1138 = vmatprep.subr.mxu0 0.0
        %1139 = vmatpush1.msra.mxu0 0.0
        %1140 = vmatprep.subr.mxu0 0.0
        %1141 = vmatpush1.msra.mxu0 0.0
        %1142 = vmatprep.subr.mxu0 0.0
        %1143 = vmatpush1.msra.mxu0 0.0
        %1144 = vmatprep.subr.mxu0 0.0
        %1145 = vmatpush1.msra.mxu0 0.0
        %1146 = vmatprep.subr.mxu0 0.0
        %1147 = vmatpush1.msra.mxu0 0.0
        %1148 = vmatprep.subr.mxu0 0.0
        %1149 = vmatpush1.msra.mxu0 0.0
        %1150 = vmatprep.subr.mxu0 0.0
        %1151 = vmatpush1.msra.mxu0 0.0
        %1152 = vmatprep.subr.mxu0 0.0
        %1153 = vmatpush1.msra.mxu0 0.0
        %1154 = vmatprep.subr.mxu0 0.0
        %1155 = vmatpush1.msra.mxu0 0.0
        %1156 = vmatprep.subr.mxu0 0.0
        %1157 = vmatpush1.msra.mxu0 0.0
        %1158 = vmatprep.subr.mxu0 0.0
        %1159 = vmatpush1.msra.mxu0 0.0
        %1160 = vmatprep.subr.mxu0 0.0
        %1161 = vmatpush1.msra.mxu0 0.0
        %1162 = vmatprep.subr.mxu0 0.0
        %1163 = vmatpush1.msra.mxu0 %v1130
        %1164 = vmatprep.subr.mxu0 0.0
        %1165 = vmatpush2.msra.mxu0 0.0
        %1166 = vmatprep.subr.mxu0 0.0
        %1167 = vmatpush2.msra.mxu0 0.0
        %1168 = vmatprep.subr.mxu0 0.0
        %1169 = vmatpush2.msra.mxu0 0.0
        %1170 = vmatprep.subr.mxu0 0.0
        %1171 = vmatpush2.msra.mxu0 0.0
        %1172 = vmatprep.subr.mxu0 0.0
        %1173 = vmatpush2.msra.mxu0 0.0
        %1174 = vmatprep.subr.mxu0 0.0
        %1175 = vmatpush2.msra.mxu0 0.0
        %1176 = vmatprep.subr.mxu0 0.0
        %1177 = vmatpush2.msra.mxu0 0.0
        %1178 = vmatprep.subr.mxu0 0.0
        %1179 = vmatpush2.msra.mxu0 0.0
        %1180 = vmatprep.subr.mxu0 0.0
        %1181 = vmatpush2.msra.mxu0 0.0
        %1182 = vmatprep.subr.mxu0 0.0
        %1183 = vmatpush2.msra.mxu0 0.0
        %1184 = vmatprep.subr.mxu0 0.0
        %1185 = vmatpush2.msra.mxu0 0.0
        %1186 = vmatprep.subr.mxu0 0.0
        %1187 = vmatpush2.msra.mxu0 0.0
        %1188 = vmatprep.subr.mxu0 0.0
        %1189 = vmatpush2.msra.mxu0 0.0
        %1190 = vmatprep.subr.mxu0 0.0
        %1191 = vmatpush2.msra.mxu0 0.0
        %1192 = vmatprep.subr.mxu0 0.0
        %1193 = vmatpush2.msra.mxu0 0.0
        %1194 = vmatprep.subr.mxu0 0.0
        %1195 = vmatpush2.msra.mxu0 0.0
        %1196 = vmatprep.mubr.f32.mxu0 0.0
        %1197 = vmatmul.mubr.f32.gmra.mxu0 %v569
        %v1198 = vpop.f32.mrf.mxu0
        %v1199 = vadd.f32 0.0, %v1198
        %v1200 = vpop.f32.mrf.mxu0
        %1201 = vmatprep.mubr.f32.mxu0 0.0
        %1202 = vmatmul.mubr.f32.gmra.mxu0 %v572
        %v1203 = vpop.f32.mrf.mxu0
        %v1204 = vadd.f32 0.0, %v1203
        %v1205 = vpop.f32.mrf.mxu0
        %1206 = vmatprep.mubr.f32.mxu0 0.0
        %1207 = vmatmul.mubr.f32.gmra.mxu0 %v575
        %v1208 = vpop.f32.mrf.mxu0
        %v1209 = vadd.f32 0.0, %v1208
        %v1210 = vpop.f32.mrf.mxu0
        %1211 = vmatprep.mubr.f32.mxu0 0.0
        %1212 = vmatmul.mubr.f32.gmra.mxu0 %v578
        %v1213 = vpop.f32.mrf.mxu0
        %v1214 = vadd.f32 0.0, %v1213
        %v1215 = vpop.f32.mrf.mxu0
        %1216 = vmatprep.mubr.f32.mxu0 0.0
        %1217 = vmatmul.mubr.f32.gmra.mxu0 %v581
        %v1218 = vpop.f32.mrf.mxu0
        %v1219 = vadd.f32 0.0, %v1218
        %v1220 = vpop.f32.mrf.mxu0
        %1221 = vmatprep.mubr.f32.mxu0 0.0
        %1222 = vmatmul.mubr.f32.gmra.mxu0 %v584
        %v1223 = vpop.f32.mrf.mxu0
        %v1224 = vadd.f32 0.0, %v1223
        %v1225 = vpop.f32.mrf.mxu0
        %1226 = vmatprep.mubr.f32.mxu0 0.0
        %1227 = vmatmul.mubr.f32.gmra.mxu0 %v587
        %v1228 = vpop.f32.mrf.mxu0
        %v1229 = vadd.f32 0.0, %v1228
        %v1230 = vpop.f32.mrf.mxu0
        %1231 = vmatprep.mubr.f32.mxu0 0.0
        %1232 = vmatmul.mubr.f32.gmra.mxu0 %v590
        %v1233 = vpop.f32.mrf.mxu0
        %v1234 = vadd.f32 0.0, %v1233
        %v1235 = vpop.f32.mrf.mxu0
        %1236 = vmatprep.mubr.f32.mxu0 0.0
        %1237 = vmatmul.mubr.f32.gmra.mxu0 %v593
        %v1238 = vpop.f32.mrf.mxu0
        %v1239 = vadd.f32 0.0, %v1238
        %v1240 = vpop.f32.mrf.mxu0
        %1241 = vmatprep.mubr.f32.mxu0 0.0
        %1242 = vmatmul.mubr.f32.gmra.mxu0 %v596
        %v1243 = vpop.f32.mrf.mxu0
        %v1244 = vadd.f32 0.0, %v1243
        %v1245 = vpop.f32.mrf.mxu0
        %1246 = vmatprep.mubr.f32.mxu0 0.0
        %1247 = vmatmul.mubr.f32.gmra.mxu0 %v599
        %v1248 = vpop.f32.mrf.mxu0
        %v1249 = vadd.f32 0.0, %v1248
        %v1250 = vpop.f32.mrf.mxu0
        %1251 = vmatprep.mubr.f32.mxu0 0.0
        %1252 = vmatmul.mubr.f32.gmra.mxu0 %v602
        %v1253 = vpop.f32.mrf.mxu0
        %v1254 = vadd.f32 0.0, %v1253
        %v1255 = vpop.f32.mrf.mxu0
        %1256 = vmatprep.mubr.f32.mxu0 0.0
        %1257 = vmatmul.mubr.f32.gmra.mxu0 %v605
        %v1258 = vpop.f32.mrf.mxu0
        %v1259 = vadd.f32 0.0, %v1258
        %v1260 = vpop.f32.mrf.mxu0
        %1261 = vmatprep.mubr.f32.mxu0 0.0
        %1262 = vmatmul.mubr.f32.gmra.mxu0 %v608
        %v1263 = vpop.f32.mrf.mxu0
        %v1264 = vadd.f32 0.0, %v1263
        %v1265 = vpop.f32.mrf.mxu0
        %1266 = vmatprep.mubr.f32.mxu0 0.0
        %1267 = vmatmul.mubr.f32.gmra.mxu0 %v611
        %v1268 = vpop.f32.mrf.mxu0
        %v1269 = vadd.f32 0.0, %v1268
        %v1270 = vpop.f32.mrf.mxu0
        %1271 = vmatprep.mubr.f32.mxu0 0.0
        %1272 = vmatmul.mubr.f32.gmra.mxu0 %v614
        %v1273 = vpop.f32.mrf.mxu0
        %v1274 = vadd.f32 0.0, %v1273
        %v1275 = vpop.f32.mrf.mxu0
        %1276 = vmatprep.mubr.f32.mxu0 0.0
        %1277 = vmatmul.mubr.f32.gmra.mxu0 %v617
        %v1278 = vpop.f32.mrf.mxu0
        %v1279 = vadd.f32 0.0, %v1278
        %v1280 = vpop.f32.mrf.mxu0
        %1281 = vmatprep.mubr.f32.mxu0 0.0
        %1282 = vmatmul.mubr.f32.gmra.mxu0 %v620
        %v1283 = vpop.f32.mrf.mxu0
        %v1284 = vadd.f32 0.0, %v1283
        %v1285 = vpop.f32.mrf.mxu0
        %1286 = vmatprep.mubr.f32.mxu0 0.0
        %1287 = vmatmul.mubr.f32.gmra.mxu0 %v623
        %v1288 = vpop.f32.mrf.mxu0
        %v1289 = vadd.f32 0.0, %v1288
        %v1290 = vpop.f32.mrf.mxu0
        %1291 = vmatprep.mubr.f32.mxu0 0.0
        %1292 = vmatmul.mubr.f32.gmra.mxu0 %v626
        %v1293 = vpop.f32.mrf.mxu0
        %v1294 = vadd.f32 0.0, %v1293
        %v1295 = vpop.f32.mrf.mxu0
        %1296 = vmatprep.mubr.f32.mxu0 0.0
        %1297 = vmatmul.mubr.f32.gmra.mxu0 %v629
        %v1298 = vpop.f32.mrf.mxu0
        %v1299 = vadd.f32 0.0, %v1298
        %v1300 = vpop.f32.mrf.mxu0
        %1301 = vmatprep.mubr.f32.mxu0 0.0
        %1302 = vmatmul.mubr.f32.gmra.mxu0 %v632
        %v1303 = vpop.f32.mrf.mxu0
        %v1304 = vadd.f32 0.0, %v1303
        %v1305 = vpop.f32.mrf.mxu0
        %1306 = vmatprep.mubr.f32.mxu0 0.0
        %1307 = vmatmul.mubr.f32.gmra.mxu0 %v635
        %v1308 = vpop.f32.mrf.mxu0
        %v1309 = vadd.f32 0.0, %v1308
        %v1310 = vpop.f32.mrf.mxu0
        %1311 = vmatprep.mubr.f32.mxu0 0.0
        %1312 = vmatmul.mubr.f32.gmra.mxu0 %v638
        %v1313 = vpop.f32.mrf.mxu0
        %v1314 = vadd.f32 0.0, %v1313
        %v1315 = vpop.f32.mrf.mxu0
        %1316 = vmatprep.mubr.f32.mxu0 0.0
        %1317 = vmatmul.mubr.f32.gmra.mxu0 %v641
        %v1318 = vpop.f32.mrf.mxu0
        %v1319 = vadd.f32 0.0, %v1318
        %v1320 = vpop.f32.mrf.mxu0
        %1321 = vmatprep.mubr.f32.mxu0 0.0
        %1322 = vmatmul.mubr.f32.gmra.mxu0 %v644
        %v1323 = vpop.f32.mrf.mxu0
        %v1324 = vadd.f32 0.0, %v1323
        %v1325 = vpop.f32.mrf.mxu0
        %1326 = vmatprep.mubr.f32.mxu0 0.0
        %1327 = vmatmul.mubr.f32.gmra.mxu0 %v647
        %v1328 = vpop.f32.mrf.mxu0
        %v1329 = vadd.f32 0.0, %v1328
        %v1330 = vpop.f32.mrf.mxu0
        %1331 = vmatprep.mubr.f32.mxu0 0.0
        %1332 = vmatmul.mubr.f32.gmra.mxu0 %v650
        %v1333 = vpop.f32.mrf.mxu0
        %v1334 = vadd.f32 0.0, %v1333
        %v1335 = vpop.f32.mrf.mxu0
        %1336 = vmatprep.mubr.f32.mxu0 0.0
        %1337 = vmatmul.mubr.f32.gmra.mxu0 %v653
        %v1338 = vpop.f32.mrf.mxu0
        %v1339 = vadd.f32 0.0, %v1338
        %v1340 = vpop.f32.mrf.mxu0
        %1341 = vmatprep.mubr.f32.mxu0 0.0
        %1342 = vmatmul.mubr.f32.gmra.mxu0 %v656
        %v1343 = vpop.f32.mrf.mxu0
        %v1344 = vadd.f32 0.0, %v1343
        %v1345 = vpop.f32.mrf.mxu0
        %1346 = vmatprep.mubr.f32.mxu0 0.0
        %1347 = vmatmul.mubr.f32.gmra.mxu0 %v1124
        %v1348 = vpop.f32.mrf.mxu0
        %v1349 = vadd.f32 0.0, %v1348
        %v1350 = vpop.f32.mrf.mxu0
        %1351 = vmatprep.mubr.f32.mxu0 0.0
        %1352 = vmatmul.mubr.f32.gmra.mxu0 %v1127
        %v1353 = vpop.f32.mrf.mxu0
        %v1354 = vadd.f32 0.0, %v1353
        %v1355 = vpop.f32.mrf.mxu0
        %1356 = vdwg.mxu0
        %v1357 = vadd.f32 %v963, %v1199
        %v1358 = vadd.f32 %v968, %v1204
        %v1359 = vadd.f32 %v973, %v1209
        %v1360 = vadd.f32 %v978, %v1214
        %v1361 = vadd.f32 %v983, %v1219
        %v1362 = vadd.f32 %v988, %v1224
        %v1363 = vadd.f32 %v993, %v1229
        %v1364 = vadd.f32 %v998, %v1234
        %v1365 = vadd.f32 %v1003, %v1239
        %v1366 = vadd.f32 %v1008, %v1244
        %v1367 = vadd.f32 %v1013, %v1249
        %v1368 = vadd.f32 %v1018, %v1254
        %v1369 = vadd.f32 %v1023, %v1259
        %v1370 = vadd.f32 %v1028, %v1264
        %v1371 = vadd.f32 %v1033, %v1269
        %v1372 = vadd.f32 %v1038, %v1274
        %v1373 = vadd.f32 %v1043, %v1279
        %v1374 = vadd.f32 %v1048, %v1284
        %v1375 = vadd.f32 %v1053, %v1289
        %v1376 = vadd.f32 %v1058, %v1294
        %v1377 = vadd.f32 %v1063, %v1299
        %v1378 = vadd.f32 %v1068, %v1304
        %v1379 = vadd.f32 %v1073, %v1309
        %v1380 = vadd.f32 %v1078, %v1314
        %v1381 = vadd.f32 %v1083, %v1319
        %v1382 = vadd.f32 %v1088, %v1324
        %v1383 = vadd.f32 %v1093, %v1329
        %v1384 = vadd.f32 %v1098, %v1334
        %v1385 = vadd.f32 %v1103, %v1339
        %v1386 = vadd.f32 %v1108, %v1344
        %v1387 = vadd.f32 %v1113, %v1349
        %v1388 = vadd.f32 %v1118, %v1354
        %vm1405 = vcmask 1046528
        %v1406 = vrot.slane %v505, 1
        %v1407 = vrot.slane %v506, 1
        %v1408 = vsel %vm1405, %v1406, %v1407
        %v1409 = vrot.slane %v507, 1
        %v1410 = vsel %vm1405, %v1407, %v1409
        %v1411 = vrot.slane %v508, 1
        %v1412 = vrot.slane %v509, 1
        %v1413 = vsel %vm1405, %v1411, %v1412
        %v1414 = vrot.slane %v510, 1
        %v1415 = vsel %vm1405, %v1412, %v1414
        %v1416 = vrot.slane %v511, 1
        %v1417 = vrot.slane %v512, 1
        %v1418 = vsel %vm1405, %v1416, %v1417
        %v1419 = vrot.slane %v513, 1
        %v1420 = vsel %vm1405, %v1417, %v1419
        %v1421 = vrot.slane %v514, 1
        %v1422 = vrot.slane %v515, 1
        %v1423 = vsel %vm1405, %v1421, %v1422
        %v1424 = vrot.slane %v516, 1
        %v1425 = vsel %vm1405, %v1422, %v1424
        %v1426 = vrot.slane %v517, 1
        %v1427 = vrot.slane %v518, 1
        %v1428 = vsel %vm1405, %v1426, %v1427
        %v1429 = vrot.slane %v519, 1
        %v1430 = vsel %vm1405, %v1427, %v1429
        %v1431 = vrot.slane %v520, 1
        %v1432 = vrot.slane %v521, 1
        %v1433 = vsel %vm1405, %v1431, %v1432
        %v1434 = vrot.slane %v522, 1
        %v1435 = vsel %vm1405, %v1432, %v1434
        %v1436 = vrot.slane %v523, 1
        %v1437 = vrot.slane %v524, 1
        %v1438 = vsel %vm1405, %v1436, %v1437
        %v1439 = vrot.slane %v525, 1
        %v1440 = vsel %vm1405, %v1437, %v1439
        %v1441 = vrot.slane %v526, 1
        %v1442 = vrot.slane %v527, 1
        %v1443 = vsel %vm1405, %v1441, %v1442
        %v1444 = vrot.slane %v528, 1
        %v1445 = vsel %vm1405, %v1442, %v1444
        %v1446 = vrot.slane %v529, 1
        %v1447 = vrot.slane %v530, 1
        %v1448 = vsel %vm1405, %v1446, %v1447
        %v1449 = vrot.slane %v531, 1
        %v1450 = vsel %vm1405, %v1447, %v1449
        %v1451 = vrot.slane %v532, 1
        %v1452 = vrot.slane %v533, 1
        %v1453 = vsel %vm1405, %v1451, %v1452
        %v1454 = vrot.slane %v534, 1
        %v1455 = vsel %vm1405, %v1452, %v1454
        %v1456 = vrot.slane %v535, 1
        %v1457 = vrot.slane %v536, 1
        %v1458 = vsel %vm1405, %v1456, %v1457
        %v1459 = vrot.slane %v537, 1
        %v1460 = vsel %vm1405, %v1457, %v1459
        %v1461 = vrot.slane %v538, 1
        %v1462 = vrot.slane %v539, 1
        %v1463 = vsel %vm1405, %v1461, %v1462
        %v1464 = vrot.slane %v540, 1
        %v1465 = vsel %vm1405, %v1462, %v1464
        %v1466 = vrot.slane %v541, 1
        %v1467 = vrot.slane %v542, 1
        %v1468 = vsel %vm1405, %v1466, %v1467
        %v1469 = vrot.slane %v543, 1
        %v1470 = vsel %vm1405, %v1467, %v1469
        %v1471 = vrot.slane %v544, 1
        %v1472 = vrot.slane %v545, 1
        %v1473 = vsel %vm1405, %v1471, %v1472
        %v1474 = vrot.slane %v546, 1
        %v1475 = vsel %vm1405, %v1472, %v1474
        %v1476 = vrot.slane %v547, 1
        %v1477 = vrot.slane %v548, 1
        %v1478 = vsel %vm1405, %v1476, %v1477
        %v1479 = vrot.slane %v549, 1
        %v1480 = vsel %vm1405, %v1477, %v1479
        %v1481 = vrot.slane %v550, 1
        %v1482 = vrot.slane %v551, 1
        %v1483 = vsel %vm1405, %v1481, %v1482
        %v1484 = vrot.slane %v552, 1
        %v1485 = vsel %vm1405, %v1482, %v1484
        %s1486 = scalar_lea.vmem %s1, 4
        %v1487 = vld [vmem:[%s1486] sm:$0xf]
        %v1488 = vsel %vm416, %v1408, 0
        %v1490 = vsel %vm416, %v1410, 0
        %v1492 = vsel %vm416, %v1413, 0
        %v1494 = vsel %vm416, %v1415, 0
        %v1496 = vsel %vm416, %v1418, 0
        %v1498 = vsel %vm416, %v1420, 0
        %v1500 = vsel %vm416, %v1423, 0
        %v1502 = vsel %vm416, %v1425, 0
        %v1504 = vsel %vm416, %v1428, 0
        %v1506 = vsel %vm416, %v1430, 0
        %v1508 = vsel %vm416, %v1433, 0
        %v1510 = vsel %vm416, %v1435, 0
        %v1512 = vsel %vm416, %v1438, 0
        %v1514 = vsel %vm416, %v1440, 0
        %v1516 = vsel %vm416, %v1443, 0
        %v1518 = vsel %vm416, %v1445, 0
        %v1520 = vsel %vm416, %v1448, 0
        %v1522 = vsel %vm416, %v1450, 0
        %v1524 = vsel %vm416, %v1453, 0
        %v1526 = vsel %vm416, %v1455, 0
        %v1528 = vsel %vm416, %v1458, 0
        %v1530 = vsel %vm416, %v1460, 0
        %v1532 = vsel %vm416, %v1463, 0
        %v1534 = vsel %vm416, %v1465, 0
        %v1536 = vsel %vm416, %v1468, 0
        %v1538 = vsel %vm416, %v1470, 0
        %v1540 = vsel %vm416, %v1473, 0
        %v1542 = vsel %vm416, %v1475, 0
        %v1544 = vsel %vm416, %v1478, 0
        %v1546 = vsel %vm416, %v1480, 0
        %v1548 = vsel %vm416, %v1483, 0
        %v1550 = vsel %vm416, %v1485, 0
        %v1553 = vsel %vm658, %v1487, 0
        %1555 = vmatprep.subr.mxu0 0.0
        %1556 = vmatpush1.msra.mxu0 0.0
        %1557 = vmatprep.subr.mxu0 0.0
        %1558 = vmatpush1.msra.mxu0 0.0
        %1559 = vmatprep.subr.mxu0 0.0
        %1560 = vmatpush1.msra.mxu0 0.0
        %1561 = vmatprep.subr.mxu0 0.0
        %1562 = vmatpush1.msra.mxu0 0.0
        %1563 = vmatprep.subr.mxu0 0.0
        %1564 = vmatpush1.msra.mxu0 0.0
        %1565 = vmatprep.subr.mxu0 0.0
        %1566 = vmatpush1.msra.mxu0 0.0
        %1567 = vmatprep.subr.mxu0 0.0
        %1568 = vmatpush1.msra.mxu0 0.0
        %1569 = vmatprep.subr.mxu0 0.0
        %1570 = vmatpush1.msra.mxu0 0.0
        %1571 = vmatprep.subr.mxu0 0.0
        %1572 = vmatpush1.msra.mxu0 0.0
        %1573 = vmatprep.subr.mxu0 0.0
        %1574 = vmatpush1.msra.mxu0 0.0
        %1575 = vmatprep.subr.mxu0 0.0
        %1576 = vmatpush1.msra.mxu0 0.0
        %1577 = vmatprep.subr.mxu0 0.0
        %1578 = vmatpush1.msra.mxu0 0.0
        %1579 = vmatprep.subr.mxu0 0.0
        %1580 = vmatpush1.msra.mxu0 0.0
        %1581 = vmatprep.subr.mxu0 0.0
        %1582 = vmatpush1.msra.mxu0 0.0
        %1583 = vmatprep.subr.mxu0 0.0
        %1584 = vmatpush1.msra.mxu0 0.0
        %1585 = vmatprep.subr.mxu0 0.0
        %1586 = vmatpush1.msra.mxu0 %v1553
        %1587 = vmatprep.subr.mxu0 0.0
        %1588 = vmatpush2.msra.mxu0 0.0
        %1589 = vmatprep.subr.mxu0 0.0
        %1590 = vmatpush2.msra.mxu0 0.0
        %1591 = vmatprep.subr.mxu0 0.0
        %1592 = vmatpush2.msra.mxu0 0.0
        %1593 = vmatprep.subr.mxu0 0.0
        %1594 = vmatpush2.msra.mxu0 0.0
        %1595 = vmatprep.subr.mxu0 0.0
        %1596 = vmatpush2.msra.mxu0 0.0
        %1597 = vmatprep.subr.mxu0 0.0
        %1598 = vmatpush2.msra.mxu0 0.0
        %1599 = vmatprep.subr.mxu0 0.0
        %1600 = vmatpush2.msra.mxu0 0.0
        %1601 = vmatprep.subr.mxu0 0.0
        %1602 = vmatpush2.msra.mxu0 0.0
        %1603 = vmatprep.subr.mxu0 0.0
        %1604 = vmatpush2.msra.mxu0 0.0
        %1605 = vmatprep.subr.mxu0 0.0
        %1606 = vmatpush2.msra.mxu0 0.0
        %1607 = vmatprep.subr.mxu0 0.0
        %1608 = vmatpush2.msra.mxu0 0.0
        %1609 = vmatprep.subr.mxu0 0.0
        %1610 = vmatpush2.msra.mxu0 0.0
        %1611 = vmatprep.subr.mxu0 0.0
        %1612 = vmatpush2.msra.mxu0 0.0
        %1613 = vmatprep.subr.mxu0 0.0
        %1614 = vmatpush2.msra.mxu0 0.0
        %1615 = vmatprep.subr.mxu0 0.0
        %1616 = vmatpush2.msra.mxu0 0.0
        %1617 = vmatprep.subr.mxu0 0.0
        %1618 = vmatpush2.msra.mxu0 0.0
        %1619 = vmatprep.mubr.f32.mxu0 0.0
        %1620 = vmatmul.mubr.f32.gmra.mxu0 %v1488
        %v1621 = vpop.f32.mrf.mxu0
        %v1622 = vadd.f32 0.0, %v1621
        %v1623 = vpop.f32.mrf.mxu0
        %1624 = vmatprep.mubr.f32.mxu0 0.0
        %1625 = vmatmul.mubr.f32.gmra.mxu0 %v1490
        %v1626 = vpop.f32.mrf.mxu0
        %v1627 = vadd.f32 0.0, %v1626
        %v1628 = vpop.f32.mrf.mxu0
        %1629 = vmatprep.mubr.f32.mxu0 0.0
        %1630 = vmatmul.mubr.f32.gmra.mxu0 %v1492
        %v1631 = vpop.f32.mrf.mxu0
        %v1632 = vadd.f32 0.0, %v1631
        %v1633 = vpop.f32.mrf.mxu0
        %1634 = vmatprep.mubr.f32.mxu0 0.0
        %1635 = vmatmul.mubr.f32.gmra.mxu0 %v1494
        %v1636 = vpop.f32.mrf.mxu0
        %v1637 = vadd.f32 0.0, %v1636
        %v1638 = vpop.f32.mrf.mxu0
        %1639 = vmatprep.mubr.f32.mxu0 0.0
        %1640 = vmatmul.mubr.f32.gmra.mxu0 %v1496
        %v1641 = vpop.f32.mrf.mxu0
        %v1642 = vadd.f32 0.0, %v1641
        %v1643 = vpop.f32.mrf.mxu0
        %1644 = vmatprep.mubr.f32.mxu0 0.0
        %1645 = vmatmul.mubr.f32.gmra.mxu0 %v1498
        %v1646 = vpop.f32.mrf.mxu0
        %v1647 = vadd.f32 0.0, %v1646
        %v1648 = vpop.f32.mrf.mxu0
        %1649 = vmatprep.mubr.f32.mxu0 0.0
        %1650 = vmatmul.mubr.f32.gmra.mxu0 %v1500
        %v1651 = vpop.f32.mrf.mxu0
        %v1652 = vadd.f32 0.0, %v1651
        %v1653 = vpop.f32.mrf.mxu0
        %1654 = vmatprep.mubr.f32.mxu0 0.0
        %1655 = vmatmul.mubr.f32.gmra.mxu0 %v1502
        %v1656 = vpop.f32.mrf.mxu0
        %v1657 = vadd.f32 0.0, %v1656
        %v1658 = vpop.f32.mrf.mxu0
        %1659 = vmatprep.mubr.f32.mxu0 0.0
        %1660 = vmatmul.mubr.f32.gmra.mxu0 %v1504
        %v1661 = vpop.f32.mrf.mxu0
        %v1662 = vadd.f32 0.0, %v1661
        %v1663 = vpop.f32.mrf.mxu0
        %1664 = vmatprep.mubr.f32.mxu0 0.0
        %1665 = vmatmul.mubr.f32.gmra.mxu0 %v1506
        %v1666 = vpop.f32.mrf.mxu0
        %v1667 = vadd.f32 0.0, %v1666
        %v1668 = vpop.f32.mrf.mxu0
        %1669 = vmatprep.mubr.f32.mxu0 0.0
        %1670 = vmatmul.mubr.f32.gmra.mxu0 %v1508
        %v1671 = vpop.f32.mrf.mxu0
        %v1672 = vadd.f32 0.0, %v1671
        %v1673 = vpop.f32.mrf.mxu0
        %1674 = vmatprep.mubr.f32.mxu0 0.0
        %1675 = vmatmul.mubr.f32.gmra.mxu0 %v1510
        %v1676 = vpop.f32.mrf.mxu0
        %v1677 = vadd.f32 0.0, %v1676
        %v1678 = vpop.f32.mrf.mxu0
        %1679 = vmatprep.mubr.f32.mxu0 0.0
        %1680 = vmatmul.mubr.f32.gmra.mxu0 %v1512
        %v1681 = vpop.f32.mrf.mxu0
        %v1682 = vadd.f32 0.0, %v1681
        %v1683 = vpop.f32.mrf.mxu0
        %1684 = vmatprep.mubr.f32.mxu0 0.0
        %1685 = vmatmul.mubr.f32.gmra.mxu0 %v1514
        %v1686 = vpop.f32.mrf.mxu0
        %v1687 = vadd.f32 0.0, %v1686
        %v1688 = vpop.f32.mrf.mxu0
        %1689 = vmatprep.mubr.f32.mxu0 0.0
        %1690 = vmatmul.mubr.f32.gmra.mxu0 %v1516
        %v1691 = vpop.f32.mrf.mxu0
        %v1692 = vadd.f32 0.0, %v1691
        %v1693 = vpop.f32.mrf.mxu0
        %1694 = vmatprep.mubr.f32.mxu0 0.0
        %1695 = vmatmul.mubr.f32.gmra.mxu0 %v1518
        %v1696 = vpop.f32.mrf.mxu0
        %v1697 = vadd.f32 0.0, %v1696
        %v1698 = vpop.f32.mrf.mxu0
        %1699 = vmatprep.mubr.f32.mxu0 0.0
        %1700 = vmatmul.mubr.f32.gmra.mxu0 %v1520
        %v1701 = vpop.f32.mrf.mxu0
        %v1702 = vadd.f32 0.0, %v1701
        %v1703 = vpop.f32.mrf.mxu0
        %1704 = vmatprep.mubr.f32.mxu0 0.0
        %1705 = vmatmul.mubr.f32.gmra.mxu0 %v1522
        %v1706 = vpop.f32.mrf.mxu0
        %v1707 = vadd.f32 0.0, %v1706
        %v1708 = vpop.f32.mrf.mxu0
        %1709 = vmatprep.mubr.f32.mxu0 0.0
        %1710 = vmatmul.mubr.f32.gmra.mxu0 %v1524
        %v1711 = vpop.f32.mrf.mxu0
        %v1712 = vadd.f32 0.0, %v1711
        %v1713 = vpop.f32.mrf.mxu0
        %1714 = vmatprep.mubr.f32.mxu0 0.0
        %1715 = vmatmul.mubr.f32.gmra.mxu0 %v1526
        %v1716 = vpop.f32.mrf.mxu0
        %v1717 = vadd.f32 0.0, %v1716
        %v1718 = vpop.f32.mrf.mxu0
        %1719 = vmatprep.mubr.f32.mxu0 0.0
        %1720 = vmatmul.mubr.f32.gmra.mxu0 %v1528
        %v1721 = vpop.f32.mrf.mxu0
        %v1722 = vadd.f32 0.0, %v1721
        %v1723 = vpop.f32.mrf.mxu0
        %1724 = vmatprep.mubr.f32.mxu0 0.0
        %1725 = vmatmul.mubr.f32.gmra.mxu0 %v1530
        %v1726 = vpop.f32.mrf.mxu0
        %v1727 = vadd.f32 0.0, %v1726
        %v1728 = vpop.f32.mrf.mxu0
        %1729 = vmatprep.mubr.f32.mxu0 0.0
        %1730 = vmatmul.mubr.f32.gmra.mxu0 %v1532
        %v1731 = vpop.f32.mrf.mxu0
        %v1732 = vadd.f32 0.0, %v1731
        %v1733 = vpop.f32.mrf.mxu0
        %1734 = vmatprep.mubr.f32.mxu0 0.0
        %1735 = vmatmul.mubr.f32.gmra.mxu0 %v1534
        %v1736 = vpop.f32.mrf.mxu0
        %v1737 = vadd.f32 0.0, %v1736
        %v1738 = vpop.f32.mrf.mxu0
        %1739 = vmatprep.mubr.f32.mxu0 0.0
        %1740 = vmatmul.mubr.f32.gmra.mxu0 %v1536
        %v1741 = vpop.f32.mrf.mxu0
        %v1742 = vadd.f32 0.0, %v1741
        %v1743 = vpop.f32.mrf.mxu0
        %1744 = vmatprep.mubr.f32.mxu0 0.0
        %1745 = vmatmul.mubr.f32.gmra.mxu0 %v1538
        %v1746 = vpop.f32.mrf.mxu0
        %v1747 = vadd.f32 0.0, %v1746
        %v1748 = vpop.f32.mrf.mxu0
        %1749 = vmatprep.mubr.f32.mxu0 0.0
        %1750 = vmatmul.mubr.f32.gmra.mxu0 %v1540
        %v1751 = vpop.f32.mrf.mxu0
        %v1752 = vadd.f32 0.0, %v1751
        %v1753 = vpop.f32.mrf.mxu0
        %1754 = vmatprep.mubr.f32.mxu0 0.0
        %1755 = vmatmul.mubr.f32.gmra.mxu0 %v1542
        %v1756 = vpop.f32.mrf.mxu0
        %v1757 = vadd.f32 0.0, %v1756
        %v1758 = vpop.f32.mrf.mxu0
        %1759 = vmatprep.mubr.f32.mxu0 0.0
        %1760 = vmatmul.mubr.f32.gmra.mxu0 %v1544
        %v1761 = vpop.f32.mrf.mxu0
        %v1762 = vadd.f32 0.0, %v1761
        %v1763 = vpop.f32.mrf.mxu0
        %1764 = vmatprep.mubr.f32.mxu0 0.0
        %1765 = vmatmul.mubr.f32.gmra.mxu0 %v1546
        %v1766 = vpop.f32.mrf.mxu0
        %v1767 = vadd.f32 0.0, %v1766
        %v1768 = vpop.f32.mrf.mxu0
        %1769 = vmatprep.mubr.f32.mxu0 0.0
        %1770 = vmatmul.mubr.f32.gmra.mxu0 %v1548
        %v1771 = vpop.f32.mrf.mxu0
        %v1772 = vadd.f32 0.0, %v1771
        %v1773 = vpop.f32.mrf.mxu0
        %1774 = vmatprep.mubr.f32.mxu0 0.0
        %1775 = vmatmul.mubr.f32.gmra.mxu0 %v1550
        %v1776 = vpop.f32.mrf.mxu0
        %v1777 = vadd.f32 0.0, %v1776
        %v1778 = vpop.f32.mrf.mxu0
        %1779 = vdwg.mxu0
        %v1780 = vadd.f32 %v1357, %v1622
        %v1781 = vadd.f32 %v1358, %v1627
        %v1782 = vadd.f32 %v1359, %v1632
        %v1783 = vadd.f32 %v1360, %v1637
        %v1784 = vadd.f32 %v1361, %v1642
        %v1785 = vadd.f32 %v1362, %v1647
        %v1786 = vadd.f32 %v1363, %v1652
        %v1787 = vadd.f32 %v1364, %v1657
        %v1788 = vadd.f32 %v1365, %v1662
        %v1789 = vadd.f32 %v1366, %v1667
        %v1790 = vadd.f32 %v1367, %v1672
        %v1791 = vadd.f32 %v1368, %v1677
        %v1792 = vadd.f32 %v1369, %v1682
        %v1793 = vadd.f32 %v1370, %v1687
        %v1794 = vadd.f32 %v1371, %v1692
        %v1795 = vadd.f32 %v1372, %v1697
        %v1796 = vadd.f32 %v1373, %v1702
        %v1797 = vadd.f32 %v1374, %v1707
        %v1798 = vadd.f32 %v1375, %v1712
        %v1799 = vadd.f32 %v1376, %v1717
        %v1800 = vadd.f32 %v1377, %v1722
        %v1801 = vadd.f32 %v1378, %v1727
        %v1802 = vadd.f32 %v1379, %v1732
        %v1803 = vadd.f32 %v1380, %v1737
        %v1804 = vadd.f32 %v1381, %v1742
        %v1805 = vadd.f32 %v1382, %v1747
        %v1806 = vadd.f32 %v1383, %v1752
        %v1807 = vadd.f32 %v1384, %v1757
        %v1808 = vadd.f32 %v1385, %v1762
        %v1809 = vadd.f32 %v1386, %v1767
        %v1810 = vadd.f32 %v1387, %v1772
        %v1811 = vadd.f32 %v1388, %v1777
        %v1813 = vrot.slane %v553, 1
        %v1814 = vrot.slane %v554, 1
        %v1815 = vsel %vm1405, %v1813, %v1814
        %v1816 = vrot.slane %v555, 1
        %v1817 = vsel %vm1405, %v1814, %v1816
        %s1818 = scalar_lea.vmem %s1, 16
        %v1819 = vld [vmem:[%s1818] sm:$0xf]
        %v1820 = vsel %vm416, %v1815, 0
        %v1822 = vsel %vm416, %v1817, 0
        %v1825 = vsel %vm658, %v1819, 0
        %1827 = vmatprep.subr.mxu0 0.0
        %1828 = vmatpush1.msra.mxu0 0.0
        %1829 = vmatprep.subr.mxu0 0.0
        %1830 = vmatpush1.msra.mxu0 0.0
        %1831 = vmatprep.subr.mxu0 0.0
        %1832 = vmatpush1.msra.mxu0 0.0
        %1833 = vmatprep.subr.mxu0 0.0
        %1834 = vmatpush1.msra.mxu0 0.0
        %1835 = vmatprep.subr.mxu0 0.0
        %1836 = vmatpush1.msra.mxu0 0.0
        %1837 = vmatprep.subr.mxu0 0.0
        %1838 = vmatpush1.msra.mxu0 0.0
        %1839 = vmatprep.subr.mxu0 0.0
        %1840 = vmatpush1.msra.mxu0 0.0
        %1841 = vmatprep.subr.mxu0 0.0
        %1842 = vmatpush1.msra.mxu0 0.0
        %1843 = vmatprep.subr.mxu0 0.0
        %1844 = vmatpush1.msra.mxu0 0.0
        %1845 = vmatprep.subr.mxu0 0.0
        %1846 = vmatpush1.msra.mxu0 0.0
        %1847 = vmatprep.subr.mxu0 0.0
        %1848 = vmatpush1.msra.mxu0 0.0
        %1849 = vmatprep.subr.mxu0 0.0
        %1850 = vmatpush1.msra.mxu0 0.0
        %1851 = vmatprep.subr.mxu0 0.0
        %1852 = vmatpush1.msra.mxu0 0.0
        %1853 = vmatprep.subr.mxu0 0.0
        %1854 = vmatpush1.msra.mxu0 0.0
        %1855 = vmatprep.subr.mxu0 0.0
        %1856 = vmatpush1.msra.mxu0 0.0
        %1857 = vmatprep.subr.mxu0 0.0
        %1858 = vmatpush1.msra.mxu0 %v1825
        %1859 = vmatprep.subr.mxu0 0.0
        %1860 = vmatpush2.msra.mxu0 0.0
        %1861 = vmatprep.subr.mxu0 0.0
        %1862 = vmatpush2.msra.mxu0 0.0
        %1863 = vmatprep.subr.mxu0 0.0
        %1864 = vmatpush2.msra.mxu0 0.0
        %1865 = vmatprep.subr.mxu0 0.0
        %1866 = vmatpush2.msra.mxu0 0.0
        %1867 = vmatprep.subr.mxu0 0.0
        %1868 = vmatpush2.msra.mxu0 0.0
        %1869 = vmatprep.subr.mxu0 0.0
        %1870 = vmatpush2.msra.mxu0 0.0
        %1871 = vmatprep.subr.mxu0 0.0
        %1872 = vmatpush2.msra.mxu0 0.0
        %1873 = vmatprep.subr.mxu0 0.0
        %1874 = vmatpush2.msra.mxu0 0.0
        %1875 = vmatprep.subr.mxu0 0.0
        %1876 = vmatpush2.msra.mxu0 0.0
        %1877 = vmatprep.subr.mxu0 0.0
        %1878 = vmatpush2.msra.mxu0 0.0
        %1879 = vmatprep.subr.mxu0 0.0
        %1880 = vmatpush2.msra.mxu0 0.0
        %1881 = vmatprep.subr.mxu0 0.0
        %1882 = vmatpush2.msra.mxu0 0.0
        %1883 = vmatprep.subr.mxu0 0.0
        %1884 = vmatpush2.msra.mxu0 0.0
        %1885 = vmatprep.subr.mxu0 0.0
        %1886 = vmatpush2.msra.mxu0 0.0
        %1887 = vmatprep.subr.mxu0 0.0
        %1888 = vmatpush2.msra.mxu0 0.0
        %1889 = vmatprep.subr.mxu0 0.0
        %1890 = vmatpush2.msra.mxu0 0.0
        %1891 = vmatprep.mubr.f32.mxu0 0.0
        %1892 = vmatmul.mubr.f32.gmra.mxu0 %v1492
        %v1893 = vpop.f32.mrf.mxu0
        %v1894 = vadd.f32 0.0, %v1893
        %v1895 = vpop.f32.mrf.mxu0
        %1896 = vmatprep.mubr.f32.mxu0 0.0
        %1897 = vmatmul.mubr.f32.gmra.mxu0 %v1494
        %v1898 = vpop.f32.mrf.mxu0
        %v1899 = vadd.f32 0.0, %v1898
        %v1900 = vpop.f32.mrf.mxu0
        %1901 = vmatprep.mubr.f32.mxu0 0.0
        %1902 = vmatmul.mubr.f32.gmra.mxu0 %v1496
        %v1903 = vpop.f32.mrf.mxu0
        %v1904 = vadd.f32 0.0, %v1903
        %v1905 = vpop.f32.mrf.mxu0
        %1906 = vmatprep.mubr.f32.mxu0 0.0
        %1907 = vmatmul.mubr.f32.gmra.mxu0 %v1498
        %v1908 = vpop.f32.mrf.mxu0
        %v1909 = vadd.f32 0.0, %v1908
        %v1910 = vpop.f32.mrf.mxu0
        %1911 = vmatprep.mubr.f32.mxu0 0.0
        %1912 = vmatmul.mubr.f32.gmra.mxu0 %v1500
        %v1913 = vpop.f32.mrf.mxu0
        %v1914 = vadd.f32 0.0, %v1913
        %v1915 = vpop.f32.mrf.mxu0
        %1916 = vmatprep.mubr.f32.mxu0 0.0
        %1917 = vmatmul.mubr.f32.gmra.mxu0 %v1502
        %v1918 = vpop.f32.mrf.mxu0
        %v1919 = vadd.f32 0.0, %v1918
        %v1920 = vpop.f32.mrf.mxu0
        %1921 = vmatprep.mubr.f32.mxu0 0.0
        %1922 = vmatmul.mubr.f32.gmra.mxu0 %v1504
        %v1923 = vpop.f32.mrf.mxu0
        %v1924 = vadd.f32 0.0, %v1923
        %v1925 = vpop.f32.mrf.mxu0
        %1926 = vmatprep.mubr.f32.mxu0 0.0
        %1927 = vmatmul.mubr.f32.gmra.mxu0 %v1506
        %v1928 = vpop.f32.mrf.mxu0
        %v1929 = vadd.f32 0.0, %v1928
        %v1930 = vpop.f32.mrf.mxu0
        %1931 = vmatprep.mubr.f32.mxu0 0.0
        %1932 = vmatmul.mubr.f32.gmra.mxu0 %v1508
        %v1933 = vpop.f32.mrf.mxu0
        %v1934 = vadd.f32 0.0, %v1933
        %v1935 = vpop.f32.mrf.mxu0
        %1936 = vmatprep.mubr.f32.mxu0 0.0
        %1937 = vmatmul.mubr.f32.gmra.mxu0 %v1510
        %v1938 = vpop.f32.mrf.mxu0
        %v1939 = vadd.f32 0.0, %v1938
        %v1940 = vpop.f32.mrf.mxu0
        %1941 = vmatprep.mubr.f32.mxu0 0.0
        %1942 = vmatmul.mubr.f32.gmra.mxu0 %v1512
        %v1943 = vpop.f32.mrf.mxu0
        %v1944 = vadd.f32 0.0, %v1943
        %v1945 = vpop.f32.mrf.mxu0
        %1946 = vmatprep.mubr.f32.mxu0 0.0
        %1947 = vmatmul.mubr.f32.gmra.mxu0 %v1514
        %v1948 = vpop.f32.mrf.mxu0
        %v1949 = vadd.f32 0.0, %v1948
        %v1950 = vpop.f32.mrf.mxu0
        %1951 = vmatprep.mubr.f32.mxu0 0.0
        %1952 = vmatmul.mubr.f32.gmra.mxu0 %v1516
        %v1953 = vpop.f32.mrf.mxu0
        %v1954 = vadd.f32 0.0, %v1953
        %v1955 = vpop.f32.mrf.mxu0
        %1956 = vmatprep.mubr.f32.mxu0 0.0
        %1957 = vmatmul.mubr.f32.gmra.mxu0 %v1518
        %v1958 = vpop.f32.mrf.mxu0
        %v1959 = vadd.f32 0.0, %v1958
        %v1960 = vpop.f32.mrf.mxu0
        %1961 = vmatprep.mubr.f32.mxu0 0.0
        %1962 = vmatmul.mubr.f32.gmra.mxu0 %v1520
        %v1963 = vpop.f32.mrf.mxu0
        %v1964 = vadd.f32 0.0, %v1963
        %v1965 = vpop.f32.mrf.mxu0
        %1966 = vmatprep.mubr.f32.mxu0 0.0
        %1967 = vmatmul.mubr.f32.gmra.mxu0 %v1522
        %v1968 = vpop.f32.mrf.mxu0
        %v1969 = vadd.f32 0.0, %v1968
        %v1970 = vpop.f32.mrf.mxu0
        %1971 = vmatprep.mubr.f32.mxu0 0.0
        %1972 = vmatmul.mubr.f32.gmra.mxu0 %v1524
        %v1973 = vpop.f32.mrf.mxu0
        %v1974 = vadd.f32 0.0, %v1973
        %v1975 = vpop.f32.mrf.mxu0
        %1976 = vmatprep.mubr.f32.mxu0 0.0
        %1977 = vmatmul.mubr.f32.gmra.mxu0 %v1526
        %v1978 = vpop.f32.mrf.mxu0
        %v1979 = vadd.f32 0.0, %v1978
        %v1980 = vpop.f32.mrf.mxu0
        %1981 = vmatprep.mubr.f32.mxu0 0.0
        %1982 = vmatmul.mubr.f32.gmra.mxu0 %v1528
        %v1983 = vpop.f32.mrf.mxu0
        %v1984 = vadd.f32 0.0, %v1983
        %v1985 = vpop.f32.mrf.mxu0
        %1986 = vmatprep.mubr.f32.mxu0 0.0
        %1987 = vmatmul.mubr.f32.gmra.mxu0 %v1530
        %v1988 = vpop.f32.mrf.mxu0
        %v1989 = vadd.f32 0.0, %v1988
        %v1990 = vpop.f32.mrf.mxu0
        %1991 = vmatprep.mubr.f32.mxu0 0.0
        %1992 = vmatmul.mubr.f32.gmra.mxu0 %v1532
        %v1993 = vpop.f32.mrf.mxu0
        %v1994 = vadd.f32 0.0, %v1993
        %v1995 = vpop.f32.mrf.mxu0
        %1996 = vmatprep.mubr.f32.mxu0 0.0
        %1997 = vmatmul.mubr.f32.gmra.mxu0 %v1534
        %v1998 = vpop.f32.mrf.mxu0
        %v1999 = vadd.f32 0.0, %v1998
        %v2000 = vpop.f32.mrf.mxu0
        %2001 = vmatprep.mubr.f32.mxu0 0.0
        %2002 = vmatmul.mubr.f32.gmra.mxu0 %v1536
        %v2003 = vpop.f32.mrf.mxu0
        %v2004 = vadd.f32 0.0, %v2003
        %v2005 = vpop.f32.mrf.mxu0
        %2006 = vmatprep.mubr.f32.mxu0 0.0
        %2007 = vmatmul.mubr.f32.gmra.mxu0 %v1538
        %v2008 = vpop.f32.mrf.mxu0
        %v2009 = vadd.f32 0.0, %v2008
        %v2010 = vpop.f32.mrf.mxu0
        %2011 = vmatprep.mubr.f32.mxu0 0.0
        %2012 = vmatmul.mubr.f32.gmra.mxu0 %v1540
        %v2013 = vpop.f32.mrf.mxu0
        %v2014 = vadd.f32 0.0, %v2013
        %v2015 = vpop.f32.mrf.mxu0
        %2016 = vmatprep.mubr.f32.mxu0 0.0
        %2017 = vmatmul.mubr.f32.gmra.mxu0 %v1542
        %v2018 = vpop.f32.mrf.mxu0
        %v2019 = vadd.f32 0.0, %v2018
        %v2020 = vpop.f32.mrf.mxu0
        %2021 = vmatprep.mubr.f32.mxu0 0.0
        %2022 = vmatmul.mubr.f32.gmra.mxu0 %v1544
        %v2023 = vpop.f32.mrf.mxu0
        %v2024 = vadd.f32 0.0, %v2023
        %v2025 = vpop.f32.mrf.mxu0
        %2026 = vmatprep.mubr.f32.mxu0 0.0
        %2027 = vmatmul.mubr.f32.gmra.mxu0 %v1546
        %v2028 = vpop.f32.mrf.mxu0
        %v2029 = vadd.f32 0.0, %v2028
        %v2030 = vpop.f32.mrf.mxu0
        %2031 = vmatprep.mubr.f32.mxu0 0.0
        %2032 = vmatmul.mubr.f32.gmra.mxu0 %v1548
        %v2033 = vpop.f32.mrf.mxu0
        %v2034 = vadd.f32 0.0, %v2033
        %v2035 = vpop.f32.mrf.mxu0
        %2036 = vmatprep.mubr.f32.mxu0 0.0
        %2037 = vmatmul.mubr.f32.gmra.mxu0 %v1550
        %v2038 = vpop.f32.mrf.mxu0
        %v2039 = vadd.f32 0.0, %v2038
        %v2040 = vpop.f32.mrf.mxu0
        %2041 = vmatprep.mubr.f32.mxu0 0.0
        %2042 = vmatmul.mubr.f32.gmra.mxu0 %v1820
        %v2043 = vpop.f32.mrf.mxu0
        %v2044 = vadd.f32 0.0, %v2043
        %v2045 = vpop.f32.mrf.mxu0
        %2046 = vmatprep.mubr.f32.mxu0 0.0
        %2047 = vmatmul.mubr.f32.gmra.mxu0 %v1822
        %v2048 = vpop.f32.mrf.mxu0
        %v2049 = vadd.f32 0.0, %v2048
        %v2050 = vpop.f32.mrf.mxu0
        %2051 = vdwg.mxu0
        %v2052 = vadd.f32 %v1780, %v1894
        %v2053 = vadd.f32 %v1781, %v1899
        %v2054 = vadd.f32 %v1782, %v1904
        %v2055 = vadd.f32 %v1783, %v1909
        %v2056 = vadd.f32 %v1784, %v1914
        %v2057 = vadd.f32 %v1785, %v1919
        %v2058 = vadd.f32 %v1786, %v1924
        %v2059 = vadd.f32 %v1787, %v1929
        %v2060 = vadd.f32 %v1788, %v1934
        %v2061 = vadd.f32 %v1789, %v1939
        %v2062 = vadd.f32 %v1790, %v1944
        %v2063 = vadd.f32 %v1791, %v1949
        %v2064 = vadd.f32 %v1792, %v1954
        %v2065 = vadd.f32 %v1793, %v1959
        %v2066 = vadd.f32 %v1794, %v1964
        %v2067 = vadd.f32 %v1795, %v1969
        %v2068 = vadd.f32 %v1796, %v1974
        %v2069 = vadd.f32 %v1797, %v1979
        %v2070 = vadd.f32 %v1798, %v1984
        %v2071 = vadd.f32 %v1799, %v1989
        %v2072 = vadd.f32 %v1800, %v1994
        %v2073 = vadd.f32 %v1801, %v1999
        %v2074 = vadd.f32 %v1802, %v2004
        %v2075 = vadd.f32 %v1803, %v2009
        %v2076 = vadd.f32 %v1804, %v2014
        %v2077 = vadd.f32 %v1805, %v2019
        %v2078 = vadd.f32 %v1806, %v2024
        %v2079 = vadd.f32 %v1807, %v2029
        %v2080 = vadd.f32 %v1808, %v2034
        %v2081 = vadd.f32 %v1809, %v2039
        %v2082 = vadd.f32 %v1810, %v2044
        %v2083 = vadd.f32 %v1811, %v2049
        %v2085 = vrot.slane %v556, 1
        %v2086 = vrot.slane %v557, 1
        %v2087 = vsel %vm1405, %v2085, %v2086
        %v2088 = vrot.slane %v558, 1
        %v2089 = vsel %vm1405, %v2086, %v2088
        %s2090 = scalar_lea.vmem %s1, 28
        %v2091 = vld [vmem:[%s2090] sm:$0xf]
        %v2092 = vsel %vm416, %v2087, 0
        %v2094 = vsel %vm416, %v2089, 0
        %v2097 = vsel %vm658, %v2091, 0
        %2099 = vmatprep.subr.mxu0 0.0
        %2100 = vmatpush1.msra.mxu0 0.0
        %2101 = vmatprep.subr.mxu0 0.0
        %2102 = vmatpush1.msra.mxu0 0.0
        %2103 = vmatprep.subr.mxu0 0.0
        %2104 = vmatpush1.msra.mxu0 0.0
        %2105 = vmatprep.subr.mxu0 0.0
        %2106 = vmatpush1.msra.mxu0 0.0
        %2107 = vmatprep.subr.mxu0 0.0
        %2108 = vmatpush1.msra.mxu0 0.0
        %2109 = vmatprep.subr.mxu0 0.0
        %2110 = vmatpush1.msra.mxu0 0.0
        %2111 = vmatprep.subr.mxu0 0.0
        %2112 = vmatpush1.msra.mxu0 0.0
        %2113 = vmatprep.subr.mxu0 0.0
        %2114 = vmatpush1.msra.mxu0 0.0
        %2115 = vmatprep.subr.mxu0 0.0
        %2116 = vmatpush1.msra.mxu0 0.0
        %2117 = vmatprep.subr.mxu0 0.0
        %2118 = vmatpush1.msra.mxu0 0.0
        %2119 = vmatprep.subr.mxu0 0.0
        %2120 = vmatpush1.msra.mxu0 0.0
        %2121 = vmatprep.subr.mxu0 0.0
        %2122 = vmatpush1.msra.mxu0 0.0
        %2123 = vmatprep.subr.mxu0 0.0
        %2124 = vmatpush1.msra.mxu0 0.0
        %2125 = vmatprep.subr.mxu0 0.0
        %2126 = vmatpush1.msra.mxu0 0.0
        %2127 = vmatprep.subr.mxu0 0.0
        %2128 = vmatpush1.msra.mxu0 0.0
        %2129 = vmatprep.subr.mxu0 0.0
        %2130 = vmatpush1.msra.mxu0 %v2097
        %2131 = vmatprep.subr.mxu0 0.0
        %2132 = vmatpush2.msra.mxu0 0.0
        %2133 = vmatprep.subr.mxu0 0.0
        %2134 = vmatpush2.msra.mxu0 0.0
        %2135 = vmatprep.subr.mxu0 0.0
        %2136 = vmatpush2.msra.mxu0 0.0
        %2137 = vmatprep.subr.mxu0 0.0
        %2138 = vmatpush2.msra.mxu0 0.0
        %2139 = vmatprep.subr.mxu0 0.0
        %2140 = vmatpush2.msra.mxu0 0.0
        %2141 = vmatprep.subr.mxu0 0.0
        %2142 = vmatpush2.msra.mxu0 0.0
        %2143 = vmatprep.subr.mxu0 0.0
        %2144 = vmatpush2.msra.mxu0 0.0
        %2145 = vmatprep.subr.mxu0 0.0
        %2146 = vmatpush2.msra.mxu0 0.0
        %2147 = vmatprep.subr.mxu0 0.0
        %2148 = vmatpush2.msra.mxu0 0.0
        %2149 = vmatprep.subr.mxu0 0.0
        %2150 = vmatpush2.msra.mxu0 0.0
        %2151 = vmatprep.subr.mxu0 0.0
        %2152 = vmatpush2.msra.mxu0 0.0
        %2153 = vmatprep.subr.mxu0 0.0
        %2154 = vmatpush2.msra.mxu0 0.0
        %2155 = vmatprep.subr.mxu0 0.0
        %2156 = vmatpush2.msra.mxu0 0.0
        %2157 = vmatprep.subr.mxu0 0.0
        %2158 = vmatpush2.msra.mxu0 0.0
        %2159 = vmatprep.subr.mxu0 0.0
        %2160 = vmatpush2.msra.mxu0 0.0
        %2161 = vmatprep.subr.mxu0 0.0
        %2162 = vmatpush2.msra.mxu0 0.0
        %2163 = vmatprep.mubr.f32.mxu0 0.0
        %2164 = vmatmul.mubr.f32.gmra.mxu0 %v1496
        %v2165 = vpop.f32.mrf.mxu0
        %v2166 = vadd.f32 0.0, %v2165
        %v2167 = vpop.f32.mrf.mxu0
        %2168 = vmatprep.mubr.f32.mxu0 0.0
        %2169 = vmatmul.mubr.f32.gmra.mxu0 %v1498
        %v2170 = vpop.f32.mrf.mxu0
        %v2171 = vadd.f32 0.0, %v2170
        %v2172 = vpop.f32.mrf.mxu0
        %2173 = vmatprep.mubr.f32.mxu0 0.0
        %2174 = vmatmul.mubr.f32.gmra.mxu0 %v1500
        %v2175 = vpop.f32.mrf.mxu0
        %v2176 = vadd.f32 0.0, %v2175
        %v2177 = vpop.f32.mrf.mxu0
        %2178 = vmatprep.mubr.f32.mxu0 0.0
        %2179 = vmatmul.mubr.f32.gmra.mxu0 %v1502
        %v2180 = vpop.f32.mrf.mxu0
        %v2181 = vadd.f32 0.0, %v2180
        %v2182 = vpop.f32.mrf.mxu0
        %2183 = vmatprep.mubr.f32.mxu0 0.0
        %2184 = vmatmul.mubr.f32.gmra.mxu0 %v1504
        %v2185 = vpop.f32.mrf.mxu0
        %v2186 = vadd.f32 0.0, %v2185
        %v2187 = vpop.f32.mrf.mxu0
        %2188 = vmatprep.mubr.f32.mxu0 0.0
        %2189 = vmatmul.mubr.f32.gmra.mxu0 %v1506
        %v2190 = vpop.f32.mrf.mxu0
        %v2191 = vadd.f32 0.0, %v2190
        %v2192 = vpop.f32.mrf.mxu0
        %2193 = vmatprep.mubr.f32.mxu0 0.0
        %2194 = vmatmul.mubr.f32.gmra.mxu0 %v1508
        %v2195 = vpop.f32.mrf.mxu0
        %v2196 = vadd.f32 0.0, %v2195
        %v2197 = vpop.f32.mrf.mxu0
        %2198 = vmatprep.mubr.f32.mxu0 0.0
        %2199 = vmatmul.mubr.f32.gmra.mxu0 %v1510
        %v2200 = vpop.f32.mrf.mxu0
        %v2201 = vadd.f32 0.0, %v2200
        %v2202 = vpop.f32.mrf.mxu0
        %2203 = vmatprep.mubr.f32.mxu0 0.0
        %2204 = vmatmul.mubr.f32.gmra.mxu0 %v1512
        %v2205 = vpop.f32.mrf.mxu0
        %v2206 = vadd.f32 0.0, %v2205
        %v2207 = vpop.f32.mrf.mxu0
        %2208 = vmatprep.mubr.f32.mxu0 0.0
        %2209 = vmatmul.mubr.f32.gmra.mxu0 %v1514
        %v2210 = vpop.f32.mrf.mxu0
        %v2211 = vadd.f32 0.0, %v2210
        %v2212 = vpop.f32.mrf.mxu0
        %2213 = vmatprep.mubr.f32.mxu0 0.0
        %2214 = vmatmul.mubr.f32.gmra.mxu0 %v1516
        %v2215 = vpop.f32.mrf.mxu0
        %v2216 = vadd.f32 0.0, %v2215
        %v2217 = vpop.f32.mrf.mxu0
        %2218 = vmatprep.mubr.f32.mxu0 0.0
        %2219 = vmatmul.mubr.f32.gmra.mxu0 %v1518
        %v2220 = vpop.f32.mrf.mxu0
        %v2221 = vadd.f32 0.0, %v2220
        %v2222 = vpop.f32.mrf.mxu0
        %2223 = vmatprep.mubr.f32.mxu0 0.0
        %2224 = vmatmul.mubr.f32.gmra.mxu0 %v1520
        %v2225 = vpop.f32.mrf.mxu0
        %v2226 = vadd.f32 0.0, %v2225
        %v2227 = vpop.f32.mrf.mxu0
        %2228 = vmatprep.mubr.f32.mxu0 0.0
        %2229 = vmatmul.mubr.f32.gmra.mxu0 %v1522
        %v2230 = vpop.f32.mrf.mxu0
        %v2231 = vadd.f32 0.0, %v2230
        %v2232 = vpop.f32.mrf.mxu0
        %2233 = vmatprep.mubr.f32.mxu0 0.0
        %2234 = vmatmul.mubr.f32.gmra.mxu0 %v1524
        %v2235 = vpop.f32.mrf.mxu0
        %v2236 = vadd.f32 0.0, %v2235
        %v2237 = vpop.f32.mrf.mxu0
        %2238 = vmatprep.mubr.f32.mxu0 0.0
        %2239 = vmatmul.mubr.f32.gmra.mxu0 %v1526
        %v2240 = vpop.f32.mrf.mxu0
        %v2241 = vadd.f32 0.0, %v2240
        %v2242 = vpop.f32.mrf.mxu0
        %2243 = vmatprep.mubr.f32.mxu0 0.0
        %2244 = vmatmul.mubr.f32.gmra.mxu0 %v1528
        %v2245 = vpop.f32.mrf.mxu0
        %v2246 = vadd.f32 0.0, %v2245
        %v2247 = vpop.f32.mrf.mxu0
        %2248 = vmatprep.mubr.f32.mxu0 0.0
        %2249 = vmatmul.mubr.f32.gmra.mxu0 %v1530
        %v2250 = vpop.f32.mrf.mxu0
        %v2251 = vadd.f32 0.0, %v2250
        %v2252 = vpop.f32.mrf.mxu0
        %2253 = vmatprep.mubr.f32.mxu0 0.0
        %2254 = vmatmul.mubr.f32.gmra.mxu0 %v1532
        %v2255 = vpop.f32.mrf.mxu0
        %v2256 = vadd.f32 0.0, %v2255
        %v2257 = vpop.f32.mrf.mxu0
        %2258 = vmatprep.mubr.f32.mxu0 0.0
        %2259 = vmatmul.mubr.f32.gmra.mxu0 %v1534
        %v2260 = vpop.f32.mrf.mxu0
        %v2261 = vadd.f32 0.0, %v2260
        %v2262 = vpop.f32.mrf.mxu0
        %2263 = vmatprep.mubr.f32.mxu0 0.0
        %2264 = vmatmul.mubr.f32.gmra.mxu0 %v1536
        %v2265 = vpop.f32.mrf.mxu0
        %v2266 = vadd.f32 0.0, %v2265
        %v2267 = vpop.f32.mrf.mxu0
        %2268 = vmatprep.mubr.f32.mxu0 0.0
        %2269 = vmatmul.mubr.f32.gmra.mxu0 %v1538
        %v2270 = vpop.f32.mrf.mxu0
        %v2271 = vadd.f32 0.0, %v2270
        %v2272 = vpop.f32.mrf.mxu0
        %2273 = vmatprep.mubr.f32.mxu0 0.0
        %2274 = vmatmul.mubr.f32.gmra.mxu0 %v1540
        %v2275 = vpop.f32.mrf.mxu0
        %v2276 = vadd.f32 0.0, %v2275
        %v2277 = vpop.f32.mrf.mxu0
        %2278 = vmatprep.mubr.f32.mxu0 0.0
        %2279 = vmatmul.mubr.f32.gmra.mxu0 %v1542
        %v2280 = vpop.f32.mrf.mxu0
        %v2281 = vadd.f32 0.0, %v2280
        %v2282 = vpop.f32.mrf.mxu0
        %2283 = vmatprep.mubr.f32.mxu0 0.0
        %2284 = vmatmul.mubr.f32.gmra.mxu0 %v1544
        %v2285 = vpop.f32.mrf.mxu0
        %v2286 = vadd.f32 0.0, %v2285
        %v2287 = vpop.f32.mrf.mxu0
        %2288 = vmatprep.mubr.f32.mxu0 0.0
        %2289 = vmatmul.mubr.f32.gmra.mxu0 %v1546
        %v2290 = vpop.f32.mrf.mxu0
        %v2291 = vadd.f32 0.0, %v2290
        %v2292 = vpop.f32.mrf.mxu0
        %2293 = vmatprep.mubr.f32.mxu0 0.0
        %2294 = vmatmul.mubr.f32.gmra.mxu0 %v1548
        %v2295 = vpop.f32.mrf.mxu0
        %v2296 = vadd.f32 0.0, %v2295
        %v2297 = vpop.f32.mrf.mxu0
        %2298 = vmatprep.mubr.f32.mxu0 0.0
        %2299 = vmatmul.mubr.f32.gmra.mxu0 %v1550
        %v2300 = vpop.f32.mrf.mxu0
        %v2301 = vadd.f32 0.0, %v2300
        %v2302 = vpop.f32.mrf.mxu0
        %2303 = vmatprep.mubr.f32.mxu0 0.0
        %2304 = vmatmul.mubr.f32.gmra.mxu0 %v1820
        %v2305 = vpop.f32.mrf.mxu0
        %v2306 = vadd.f32 0.0, %v2305
        %v2307 = vpop.f32.mrf.mxu0
        %2308 = vmatprep.mubr.f32.mxu0 0.0
        %2309 = vmatmul.mubr.f32.gmra.mxu0 %v1822
        %v2310 = vpop.f32.mrf.mxu0
        %v2311 = vadd.f32 0.0, %v2310
        %v2312 = vpop.f32.mrf.mxu0
        %2313 = vmatprep.mubr.f32.mxu0 0.0
        %2314 = vmatmul.mubr.f32.gmra.mxu0 %v2092
        %v2315 = vpop.f32.mrf.mxu0
        %v2316 = vadd.f32 0.0, %v2315
        %v2317 = vpop.f32.mrf.mxu0
        %2318 = vmatprep.mubr.f32.mxu0 0.0
        %2319 = vmatmul.mubr.f32.gmra.mxu0 %v2094
        %v2320 = vpop.f32.mrf.mxu0
        %v2321 = vadd.f32 0.0, %v2320
        %v2322 = vpop.f32.mrf.mxu0
        %2323 = vdwg.mxu0
        %v2324 = vadd.f32 %v2052, %v2166
        %v2325 = vadd.f32 %v2053, %v2171
        %v2326 = vadd.f32 %v2054, %v2176
        %v2327 = vadd.f32 %v2055, %v2181
        %v2328 = vadd.f32 %v2056, %v2186
        %v2329 = vadd.f32 %v2057, %v2191
        %v2330 = vadd.f32 %v2058, %v2196
        %v2331 = vadd.f32 %v2059, %v2201
        %v2332 = vadd.f32 %v2060, %v2206
        %v2333 = vadd.f32 %v2061, %v2211
        %v2334 = vadd.f32 %v2062, %v2216
        %v2335 = vadd.f32 %v2063, %v2221
        %v2336 = vadd.f32 %v2064, %v2226
        %v2337 = vadd.f32 %v2065, %v2231
        %v2338 = vadd.f32 %v2066, %v2236
        %v2339 = vadd.f32 %v2067, %v2241
        %v2340 = vadd.f32 %v2068, %v2246
        %v2341 = vadd.f32 %v2069, %v2251
        %v2342 = vadd.f32 %v2070, %v2256
        %v2343 = vadd.f32 %v2071, %v2261
        %v2344 = vadd.f32 %v2072, %v2266
        %v2345 = vadd.f32 %v2073, %v2271
        %v2346 = vadd.f32 %v2074, %v2276
        %v2347 = vadd.f32 %v2075, %v2281
        %v2348 = vadd.f32 %v2076, %v2286
        %v2349 = vadd.f32 %v2077, %v2291
        %v2350 = vadd.f32 %v2078, %v2296
        %v2351 = vadd.f32 %v2079, %v2301
        %v2352 = vadd.f32 %v2080, %v2306
        %v2353 = vadd.f32 %v2081, %v2311
        %v2354 = vadd.f32 %v2082, %v2316
        %v2355 = vadd.f32 %v2083, %v2321
        %vm2356 = vcmask 1045504
        %v2357 = vrot.slane %v505, 2
        %v2358 = vrot.slane %v506, 2
        %v2359 = vsel %vm2356, %v2357, %v2358
        %v2360 = vrot.slane %v507, 2
        %v2361 = vsel %vm2356, %v2358, %v2360
        %v2362 = vrot.slane %v508, 2
        %v2363 = vrot.slane %v509, 2
        %v2364 = vsel %vm2356, %v2362, %v2363
        %v2365 = vrot.slane %v510, 2
        %v2366 = vsel %vm2356, %v2363, %v2365
        %v2367 = vrot.slane %v511, 2
        %v2368 = vrot.slane %v512, 2
        %v2369 = vsel %vm2356, %v2367, %v2368
        %v2370 = vrot.slane %v513, 2
        %v2371 = vsel %vm2356, %v2368, %v2370
        %v2372 = vrot.slane %v514, 2
        %v2373 = vrot.slane %v515, 2
        %v2374 = vsel %vm2356, %v2372, %v2373
        %v2375 = vrot.slane %v516, 2
        %v2376 = vsel %vm2356, %v2373, %v2375
        %v2377 = vrot.slane %v517, 2
        %v2378 = vrot.slane %v518, 2
        %v2379 = vsel %vm2356, %v2377, %v2378
        %v2380 = vrot.slane %v519, 2
        %v2381 = vsel %vm2356, %v2378, %v2380
        %v2382 = vrot.slane %v520, 2
        %v2383 = vrot.slane %v521, 2
        %v2384 = vsel %vm2356, %v2382, %v2383
        %v2385 = vrot.slane %v522, 2
        %v2386 = vsel %vm2356, %v2383, %v2385
        %v2387 = vrot.slane %v523, 2
        %v2388 = vrot.slane %v524, 2
        %v2389 = vsel %vm2356, %v2387, %v2388
        %v2390 = vrot.slane %v525, 2
        %v2391 = vsel %vm2356, %v2388, %v2390
        %v2392 = vrot.slane %v526, 2
        %v2393 = vrot.slane %v527, 2
        %v2394 = vsel %vm2356, %v2392, %v2393
        %v2395 = vrot.slane %v528, 2
        %v2396 = vsel %vm2356, %v2393, %v2395
        %v2397 = vrot.slane %v529, 2
        %v2398 = vrot.slane %v530, 2
        %v2399 = vsel %vm2356, %v2397, %v2398
        %v2400 = vrot.slane %v531, 2
        %v2401 = vsel %vm2356, %v2398, %v2400
        %v2402 = vrot.slane %v532, 2
        %v2403 = vrot.slane %v533, 2
        %v2404 = vsel %vm2356, %v2402, %v2403
        %v2405 = vrot.slane %v534, 2
        %v2406 = vsel %vm2356, %v2403, %v2405
        %v2407 = vrot.slane %v535, 2
        %v2408 = vrot.slane %v536, 2
        %v2409 = vsel %vm2356, %v2407, %v2408
        %v2410 = vrot.slane %v537, 2
        %v2411 = vsel %vm2356, %v2408, %v2410
        %v2412 = vrot.slane %v538, 2
        %v2413 = vrot.slane %v539, 2
        %v2414 = vsel %vm2356, %v2412, %v2413
        %v2415 = vrot.slane %v540, 2
        %v2416 = vsel %vm2356, %v2413, %v2415
        %v2417 = vrot.slane %v541, 2
        %v2418 = vrot.slane %v542, 2
        %v2419 = vsel %vm2356, %v2417, %v2418
        %v2420 = vrot.slane %v543, 2
        %v2421 = vsel %vm2356, %v2418, %v2420
        %v2422 = vrot.slane %v544, 2
        %v2423 = vrot.slane %v545, 2
        %v2424 = vsel %vm2356, %v2422, %v2423
        %v2425 = vrot.slane %v546, 2
        %v2426 = vsel %vm2356, %v2423, %v2425
        %v2427 = vrot.slane %v547, 2
        %v2428 = vrot.slane %v548, 2
        %v2429 = vsel %vm2356, %v2427, %v2428
        %v2430 = vrot.slane %v549, 2
        %v2431 = vsel %vm2356, %v2428, %v2430
        %v2432 = vrot.slane %v550, 2
        %v2433 = vrot.slane %v551, 2
        %v2434 = vsel %vm2356, %v2432, %v2433
        %v2435 = vrot.slane %v552, 2
        %v2436 = vsel %vm2356, %v2433, %v2435
        %s2437 = scalar_lea.vmem %s1, 8
        %v2438 = vld [vmem:[%s2437] sm:$0xf]
        %v2439 = vsel %vm416, %v2359, 0
        %v2441 = vsel %vm416, %v2361, 0
        %v2443 = vsel %vm416, %v2364, 0
        %v2445 = vsel %vm416, %v2366, 0
        %v2447 = vsel %vm416, %v2369, 0
        %v2449 = vsel %vm416, %v2371, 0
        %v2451 = vsel %vm416, %v2374, 0
        %v2453 = vsel %vm416, %v2376, 0
        %v2455 = vsel %vm416, %v2379, 0
        %v2457 = vsel %vm416, %v2381, 0
        %v2459 = vsel %vm416, %v2384, 0
        %v2461 = vsel %vm416, %v2386, 0
        %v2463 = vsel %vm416, %v2389, 0
        %v2465 = vsel %vm416, %v2391, 0
        %v2467 = vsel %vm416, %v2394, 0
        %v2469 = vsel %vm416, %v2396, 0
        %v2471 = vsel %vm416, %v2399, 0
        %v2473 = vsel %vm416, %v2401, 0
        %v2475 = vsel %vm416, %v2404, 0
        %v2477 = vsel %vm416, %v2406, 0
        %v2479 = vsel %vm416, %v2409, 0
        %v2481 = vsel %vm416, %v2411, 0
        %v2483 = vsel %vm416, %v2414, 0
        %v2485 = vsel %vm416, %v2416, 0
        %v2487 = vsel %vm416, %v2419, 0
        %v2489 = vsel %vm416, %v2421, 0
        %v2491 = vsel %vm416, %v2424, 0
        %v2493 = vsel %vm416, %v2426, 0
        %v2495 = vsel %vm416, %v2429, 0
        %v2497 = vsel %vm416, %v2431, 0
        %v2499 = vsel %vm416, %v2434, 0
        %v2501 = vsel %vm416, %v2436, 0
        %v2504 = vsel %vm658, %v2438, 0
        %2506 = vmatprep.subr.mxu0 0.0
        %2507 = vmatpush1.msra.mxu0 0.0
        %2508 = vmatprep.subr.mxu0 0.0
        %2509 = vmatpush1.msra.mxu0 0.0
        %2510 = vmatprep.subr.mxu0 0.0
        %2511 = vmatpush1.msra.mxu0 0.0
        %2512 = vmatprep.subr.mxu0 0.0
        %2513 = vmatpush1.msra.mxu0 0.0
        %2514 = vmatprep.subr.mxu0 0.0
        %2515 = vmatpush1.msra.mxu0 0.0
        %2516 = vmatprep.subr.mxu0 0.0
        %2517 = vmatpush1.msra.mxu0 0.0
        %2518 = vmatprep.subr.mxu0 0.0
        %2519 = vmatpush1.msra.mxu0 0.0
        %2520 = vmatprep.subr.mxu0 0.0
        %2521 = vmatpush1.msra.mxu0 0.0
        %2522 = vmatprep.subr.mxu0 0.0
        %2523 = vmatpush1.msra.mxu0 0.0
        %2524 = vmatprep.subr.mxu0 0.0
        %2525 = vmatpush1.msra.mxu0 0.0
        %2526 = vmatprep.subr.mxu0 0.0
        %2527 = vmatpush1.msra.mxu0 0.0
        %2528 = vmatprep.subr.mxu0 0.0
        %2529 = vmatpush1.msra.mxu0 0.0
        %2530 = vmatprep.subr.mxu0 0.0
        %2531 = vmatpush1.msra.mxu0 0.0
        %2532 = vmatprep.subr.mxu0 0.0
        %2533 = vmatpush1.msra.mxu0 0.0
        %2534 = vmatprep.subr.mxu0 0.0
        %2535 = vmatpush1.msra.mxu0 0.0
        %2536 = vmatprep.subr.mxu0 0.0
        %2537 = vmatpush1.msra.mxu0 %v2504
        %2538 = vmatprep.subr.mxu0 0.0
        %2539 = vmatpush2.msra.mxu0 0.0
        %2540 = vmatprep.subr.mxu0 0.0
        %2541 = vmatpush2.msra.mxu0 0.0
        %2542 = vmatprep.subr.mxu0 0.0
        %2543 = vmatpush2.msra.mxu0 0.0
        %2544 = vmatprep.subr.mxu0 0.0
        %2545 = vmatpush2.msra.mxu0 0.0
        %2546 = vmatprep.subr.mxu0 0.0
        %2547 = vmatpush2.msra.mxu0 0.0
        %2548 = vmatprep.subr.mxu0 0.0
        %2549 = vmatpush2.msra.mxu0 0.0
        %2550 = vmatprep.subr.mxu0 0.0
        %2551 = vmatpush2.msra.mxu0 0.0
        %2552 = vmatprep.subr.mxu0 0.0
        %2553 = vmatpush2.msra.mxu0 0.0
        %2554 = vmatprep.subr.mxu0 0.0
        %2555 = vmatpush2.msra.mxu0 0.0
        %2556 = vmatprep.subr.mxu0 0.0
        %2557 = vmatpush2.msra.mxu0 0.0
        %2558 = vmatprep.subr.mxu0 0.0
        %2559 = vmatpush2.msra.mxu0 0.0
        %2560 = vmatprep.subr.mxu0 0.0
        %2561 = vmatpush2.msra.mxu0 0.0
        %2562 = vmatprep.subr.mxu0 0.0
        %2563 = vmatpush2.msra.mxu0 0.0
        %2564 = vmatprep.subr.mxu0 0.0
        %2565 = vmatpush2.msra.mxu0 0.0
        %2566 = vmatprep.subr.mxu0 0.0
        %2567 = vmatpush2.msra.mxu0 0.0
        %2568 = vmatprep.subr.mxu0 0.0
        %2569 = vmatpush2.msra.mxu0 0.0
        %2570 = vmatprep.mubr.f32.mxu0 0.0
        %2571 = vmatmul.mubr.f32.gmra.mxu0 %v2439
        %v2572 = vpop.f32.mrf.mxu0
        %v2573 = vadd.f32 0.0, %v2572
        %v2574 = vpop.f32.mrf.mxu0
        %2575 = vmatprep.mubr.f32.mxu0 0.0
        %2576 = vmatmul.mubr.f32.gmra.mxu0 %v2441
        %v2577 = vpop.f32.mrf.mxu0
        %v2578 = vadd.f32 0.0, %v2577
        %v2579 = vpop.f32.mrf.mxu0
        %2580 = vmatprep.mubr.f32.mxu0 0.0
        %2581 = vmatmul.mubr.f32.gmra.mxu0 %v2443
        %v2582 = vpop.f32.mrf.mxu0
        %v2583 = vadd.f32 0.0, %v2582
        %v2584 = vpop.f32.mrf.mxu0
        %2585 = vmatprep.mubr.f32.mxu0 0.0
        %2586 = vmatmul.mubr.f32.gmra.mxu0 %v2445
        %v2587 = vpop.f32.mrf.mxu0
        %v2588 = vadd.f32 0.0, %v2587
        %v2589 = vpop.f32.mrf.mxu0
        %2590 = vmatprep.mubr.f32.mxu0 0.0
        %2591 = vmatmul.mubr.f32.gmra.mxu0 %v2447
        %v2592 = vpop.f32.mrf.mxu0
        %v2593 = vadd.f32 0.0, %v2592
        %v2594 = vpop.f32.mrf.mxu0
        %2595 = vmatprep.mubr.f32.mxu0 0.0
        %2596 = vmatmul.mubr.f32.gmra.mxu0 %v2449
        %v2597 = vpop.f32.mrf.mxu0
        %v2598 = vadd.f32 0.0, %v2597
        %v2599 = vpop.f32.mrf.mxu0
        %2600 = vmatprep.mubr.f32.mxu0 0.0
        %2601 = vmatmul.mubr.f32.gmra.mxu0 %v2451
        %v2602 = vpop.f32.mrf.mxu0
        %v2603 = vadd.f32 0.0, %v2602
        %v2604 = vpop.f32.mrf.mxu0
        %2605 = vmatprep.mubr.f32.mxu0 0.0
        %2606 = vmatmul.mubr.f32.gmra.mxu0 %v2453
        %v2607 = vpop.f32.mrf.mxu0
        %v2608 = vadd.f32 0.0, %v2607
        %v2609 = vpop.f32.mrf.mxu0
        %2610 = vmatprep.mubr.f32.mxu0 0.0
        %2611 = vmatmul.mubr.f32.gmra.mxu0 %v2455
        %v2612 = vpop.f32.mrf.mxu0
        %v2613 = vadd.f32 0.0, %v2612
        %v2614 = vpop.f32.mrf.mxu0
        %2615 = vmatprep.mubr.f32.mxu0 0.0
        %2616 = vmatmul.mubr.f32.gmra.mxu0 %v2457
        %v2617 = vpop.f32.mrf.mxu0
        %v2618 = vadd.f32 0.0, %v2617
        %v2619 = vpop.f32.mrf.mxu0
        %2620 = vmatprep.mubr.f32.mxu0 0.0
        %2621 = vmatmul.mubr.f32.gmra.mxu0 %v2459
        %v2622 = vpop.f32.mrf.mxu0
        %v2623 = vadd.f32 0.0, %v2622
        %v2624 = vpop.f32.mrf.mxu0
        %2625 = vmatprep.mubr.f32.mxu0 0.0
        %2626 = vmatmul.mubr.f32.gmra.mxu0 %v2461
        %v2627 = vpop.f32.mrf.mxu0
        %v2628 = vadd.f32 0.0, %v2627
        %v2629 = vpop.f32.mrf.mxu0
        %2630 = vmatprep.mubr.f32.mxu0 0.0
        %2631 = vmatmul.mubr.f32.gmra.mxu0 %v2463
        %v2632 = vpop.f32.mrf.mxu0
        %v2633 = vadd.f32 0.0, %v2632
        %v2634 = vpop.f32.mrf.mxu0
        %2635 = vmatprep.mubr.f32.mxu0 0.0
        %2636 = vmatmul.mubr.f32.gmra.mxu0 %v2465
        %v2637 = vpop.f32.mrf.mxu0
        %v2638 = vadd.f32 0.0, %v2637
        %v2639 = vpop.f32.mrf.mxu0
        %2640 = vmatprep.mubr.f32.mxu0 0.0
        %2641 = vmatmul.mubr.f32.gmra.mxu0 %v2467
        %v2642 = vpop.f32.mrf.mxu0
        %v2643 = vadd.f32 0.0, %v2642
        %v2644 = vpop.f32.mrf.mxu0
        %2645 = vmatprep.mubr.f32.mxu0 0.0
        %2646 = vmatmul.mubr.f32.gmra.mxu0 %v2469
        %v2647 = vpop.f32.mrf.mxu0
        %v2648 = vadd.f32 0.0, %v2647
        %v2649 = vpop.f32.mrf.mxu0
        %2650 = vmatprep.mubr.f32.mxu0 0.0
        %2651 = vmatmul.mubr.f32.gmra.mxu0 %v2471
        %v2652 = vpop.f32.mrf.mxu0
        %v2653 = vadd.f32 0.0, %v2652
        %v2654 = vpop.f32.mrf.mxu0
        %2655 = vmatprep.mubr.f32.mxu0 0.0
        %2656 = vmatmul.mubr.f32.gmra.mxu0 %v2473
        %v2657 = vpop.f32.mrf.mxu0
        %v2658 = vadd.f32 0.0, %v2657
        %v2659 = vpop.f32.mrf.mxu0
        %2660 = vmatprep.mubr.f32.mxu0 0.0
        %2661 = vmatmul.mubr.f32.gmra.mxu0 %v2475
        %v2662 = vpop.f32.mrf.mxu0
        %v2663 = vadd.f32 0.0, %v2662
        %v2664 = vpop.f32.mrf.mxu0
        %2665 = vmatprep.mubr.f32.mxu0 0.0
        %2666 = vmatmul.mubr.f32.gmra.mxu0 %v2477
        %v2667 = vpop.f32.mrf.mxu0
        %v2668 = vadd.f32 0.0, %v2667
        %v2669 = vpop.f32.mrf.mxu0
        %2670 = vmatprep.mubr.f32.mxu0 0.0
        %2671 = vmatmul.mubr.f32.gmra.mxu0 %v2479
        %v2672 = vpop.f32.mrf.mxu0
        %v2673 = vadd.f32 0.0, %v2672
        %v2674 = vpop.f32.mrf.mxu0
        %2675 = vmatprep.mubr.f32.mxu0 0.0
        %2676 = vmatmul.mubr.f32.gmra.mxu0 %v2481
        %v2677 = vpop.f32.mrf.mxu0
        %v2678 = vadd.f32 0.0, %v2677
        %v2679 = vpop.f32.mrf.mxu0
        %2680 = vmatprep.mubr.f32.mxu0 0.0
        %2681 = vmatmul.mubr.f32.gmra.mxu0 %v2483
        %v2682 = vpop.f32.mrf.mxu0
        %v2683 = vadd.f32 0.0, %v2682
        %v2684 = vpop.f32.mrf.mxu0
        %2685 = vmatprep.mubr.f32.mxu0 0.0
        %2686 = vmatmul.mubr.f32.gmra.mxu0 %v2485
        %v2687 = vpop.f32.mrf.mxu0
        %v2688 = vadd.f32 0.0, %v2687
        %v2689 = vpop.f32.mrf.mxu0
        %2690 = vmatprep.mubr.f32.mxu0 0.0
        %2691 = vmatmul.mubr.f32.gmra.mxu0 %v2487
        %v2692 = vpop.f32.mrf.mxu0
        %v2693 = vadd.f32 0.0, %v2692
        %v2694 = vpop.f32.mrf.mxu0
        %2695 = vmatprep.mubr.f32.mxu0 0.0
        %2696 = vmatmul.mubr.f32.gmra.mxu0 %v2489
        %v2697 = vpop.f32.mrf.mxu0
        %v2698 = vadd.f32 0.0, %v2697
        %v2699 = vpop.f32.mrf.mxu0
        %2700 = vmatprep.mubr.f32.mxu0 0.0
        %2701 = vmatmul.mubr.f32.gmra.mxu0 %v2491
        %v2702 = vpop.f32.mrf.mxu0
        %v2703 = vadd.f32 0.0, %v2702
        %v2704 = vpop.f32.mrf.mxu0
        %2705 = vmatprep.mubr.f32.mxu0 0.0
        %2706 = vmatmul.mubr.f32.gmra.mxu0 %v2493
        %v2707 = vpop.f32.mrf.mxu0
        %v2708 = vadd.f32 0.0, %v2707
        %v2709 = vpop.f32.mrf.mxu0
        %2710 = vmatprep.mubr.f32.mxu0 0.0
        %2711 = vmatmul.mubr.f32.gmra.mxu0 %v2495
        %v2712 = vpop.f32.mrf.mxu0
        %v2713 = vadd.f32 0.0, %v2712
        %v2714 = vpop.f32.mrf.mxu0
        %2715 = vmatprep.mubr.f32.mxu0 0.0
        %2716 = vmatmul.mubr.f32.gmra.mxu0 %v2497
        %v2717 = vpop.f32.mrf.mxu0
        %v2718 = vadd.f32 0.0, %v2717
        %v2719 = vpop.f32.mrf.mxu0
        %2720 = vmatprep.mubr.f32.mxu0 0.0
        %2721 = vmatmul.mubr.f32.gmra.mxu0 %v2499
        %v2722 = vpop.f32.mrf.mxu0
        %v2723 = vadd.f32 0.0, %v2722
        %v2724 = vpop.f32.mrf.mxu0
        %2725 = vmatprep.mubr.f32.mxu0 0.0
        %2726 = vmatmul.mubr.f32.gmra.mxu0 %v2501
        %v2727 = vpop.f32.mrf.mxu0
        %v2728 = vadd.f32 0.0, %v2727
        %v2729 = vpop.f32.mrf.mxu0
        %2730 = vdwg.mxu0
        %v2731 = vadd.f32 %v2324, %v2573
        %v2732 = vadd.f32 %v2325, %v2578
        %v2733 = vadd.f32 %v2326, %v2583
        %v2734 = vadd.f32 %v2327, %v2588
        %v2735 = vadd.f32 %v2328, %v2593
        %v2736 = vadd.f32 %v2329, %v2598
        %v2737 = vadd.f32 %v2330, %v2603
        %v2738 = vadd.f32 %v2331, %v2608
        %v2739 = vadd.f32 %v2332, %v2613
        %v2740 = vadd.f32 %v2333, %v2618
        %v2741 = vadd.f32 %v2334, %v2623
        %v2742 = vadd.f32 %v2335, %v2628
        %v2743 = vadd.f32 %v2336, %v2633
        %v2744 = vadd.f32 %v2337, %v2638
        %v2745 = vadd.f32 %v2338, %v2643
        %v2746 = vadd.f32 %v2339, %v2648
        %v2747 = vadd.f32 %v2340, %v2653
        %v2748 = vadd.f32 %v2341, %v2658
        %v2749 = vadd.f32 %v2342, %v2663
        %v2750 = vadd.f32 %v2343, %v2668
        %v2751 = vadd.f32 %v2344, %v2673
        %v2752 = vadd.f32 %v2345, %v2678
        %v2753 = vadd.f32 %v2346, %v2683
        %v2754 = vadd.f32 %v2347, %v2688
        %v2755 = vadd.f32 %v2348, %v2693
        %v2756 = vadd.f32 %v2349, %v2698
        %v2757 = vadd.f32 %v2350, %v2703
        %v2758 = vadd.f32 %v2351, %v2708
        %v2759 = vadd.f32 %v2352, %v2713
        %v2760 = vadd.f32 %v2353, %v2718
        %v2761 = vadd.f32 %v2354, %v2723
        %v2762 = vadd.f32 %v2355, %v2728
        %v2763 = vrot.slane %v553, 2
        %v2764 = vrot.slane %v554, 2
        %v2765 = vsel %vm2356, %v2763, %v2764
        %v2766 = vrot.slane %v555, 2
        %v2767 = vsel %vm2356, %v2764, %v2766
        %s2768 = scalar_lea.vmem %s1, 20
        %v2769 = vld [vmem:[%s2768] sm:$0xf]
        %v2770 = vsel %vm416, %v2765, 0
        %v2772 = vsel %vm416, %v2767, 0
        %v2775 = vsel %vm658, %v2769, 0
        %2777 = vmatprep.subr.mxu0 0.0
        %2778 = vmatpush1.msra.mxu0 0.0
        %2779 = vmatprep.subr.mxu0 0.0
        %2780 = vmatpush1.msra.mxu0 0.0
        %2781 = vmatprep.subr.mxu0 0.0
        %2782 = vmatpush1.msra.mxu0 0.0
        %2783 = vmatprep.subr.mxu0 0.0
        %2784 = vmatpush1.msra.mxu0 0.0
        %2785 = vmatprep.subr.mxu0 0.0
        %2786 = vmatpush1.msra.mxu0 0.0
        %2787 = vmatprep.subr.mxu0 0.0
        %2788 = vmatpush1.msra.mxu0 0.0
        %2789 = vmatprep.subr.mxu0 0.0
        %2790 = vmatpush1.msra.mxu0 0.0
        %2791 = vmatprep.subr.mxu0 0.0
        %2792 = vmatpush1.msra.mxu0 0.0
        %2793 = vmatprep.subr.mxu0 0.0
        %2794 = vmatpush1.msra.mxu0 0.0
        %2795 = vmatprep.subr.mxu0 0.0
        %2796 = vmatpush1.msra.mxu0 0.0
        %2797 = vmatprep.subr.mxu0 0.0
        %2798 = vmatpush1.msra.mxu0 0.0
        %2799 = vmatprep.subr.mxu0 0.0
        %2800 = vmatpush1.msra.mxu0 0.0
        %2801 = vmatprep.subr.mxu0 0.0
        %2802 = vmatpush1.msra.mxu0 0.0
        %2803 = vmatprep.subr.mxu0 0.0
        %2804 = vmatpush1.msra.mxu0 0.0
        %2805 = vmatprep.subr.mxu0 0.0
        %2806 = vmatpush1.msra.mxu0 0.0
        %2807 = vmatprep.subr.mxu0 0.0
        %2808 = vmatpush1.msra.mxu0 %v2775
        %2809 = vmatprep.subr.mxu0 0.0
        %2810 = vmatpush2.msra.mxu0 0.0
        %2811 = vmatprep.subr.mxu0 0.0
        %2812 = vmatpush2.msra.mxu0 0.0
        %2813 = vmatprep.subr.mxu0 0.0
        %2814 = vmatpush2.msra.mxu0 0.0
        %2815 = vmatprep.subr.mxu0 0.0
        %2816 = vmatpush2.msra.mxu0 0.0
        %2817 = vmatprep.subr.mxu0 0.0
        %2818 = vmatpush2.msra.mxu0 0.0
        %2819 = vmatprep.subr.mxu0 0.0
        %2820 = vmatpush2.msra.mxu0 0.0
        %2821 = vmatprep.subr.mxu0 0.0
        %2822 = vmatpush2.msra.mxu0 0.0
        %2823 = vmatprep.subr.mxu0 0.0
        %2824 = vmatpush2.msra.mxu0 0.0
        %2825 = vmatprep.subr.mxu0 0.0
        %2826 = vmatpush2.msra.mxu0 0.0
        %2827 = vmatprep.subr.mxu0 0.0
        %2828 = vmatpush2.msra.mxu0 0.0
        %2829 = vmatprep.subr.mxu0 0.0
        %2830 = vmatpush2.msra.mxu0 0.0
        %2831 = vmatprep.subr.mxu0 0.0
        %2832 = vmatpush2.msra.mxu0 0.0
        %2833 = vmatprep.subr.mxu0 0.0
        %2834 = vmatpush2.msra.mxu0 0.0
        %2835 = vmatprep.subr.mxu0 0.0
        %2836 = vmatpush2.msra.mxu0 0.0
        %2837 = vmatprep.subr.mxu0 0.0
        %2838 = vmatpush2.msra.mxu0 0.0
        %2839 = vmatprep.subr.mxu0 0.0
        %2840 = vmatpush2.msra.mxu0 0.0
        %2841 = vmatprep.mubr.f32.mxu0 0.0
        %2842 = vmatmul.mubr.f32.gmra.mxu0 %v2443
        %v2843 = vpop.f32.mrf.mxu0
        %v2844 = vadd.f32 0.0, %v2843
        %v2845 = vpop.f32.mrf.mxu0
        %2846 = vmatprep.mubr.f32.mxu0 0.0
        %2847 = vmatmul.mubr.f32.gmra.mxu0 %v2445
        %v2848 = vpop.f32.mrf.mxu0
        %v2849 = vadd.f32 0.0, %v2848
        %v2850 = vpop.f32.mrf.mxu0
        %2851 = vmatprep.mubr.f32.mxu0 0.0
        %2852 = vmatmul.mubr.f32.gmra.mxu0 %v2447
        %v2853 = vpop.f32.mrf.mxu0
        %v2854 = vadd.f32 0.0, %v2853
        %v2855 = vpop.f32.mrf.mxu0
        %2856 = vmatprep.mubr.f32.mxu0 0.0
        %2857 = vmatmul.mubr.f32.gmra.mxu0 %v2449
        %v2858 = vpop.f32.mrf.mxu0
        %v2859 = vadd.f32 0.0, %v2858
        %v2860 = vpop.f32.mrf.mxu0
        %2861 = vmatprep.mubr.f32.mxu0 0.0
        %2862 = vmatmul.mubr.f32.gmra.mxu0 %v2451
        %v2863 = vpop.f32.mrf.mxu0
        %v2864 = vadd.f32 0.0, %v2863
        %v2865 = vpop.f32.mrf.mxu0
        %2866 = vmatprep.mubr.f32.mxu0 0.0
        %2867 = vmatmul.mubr.f32.gmra.mxu0 %v2453
        %v2868 = vpop.f32.mrf.mxu0
        %v2869 = vadd.f32 0.0, %v2868
        %v2870 = vpop.f32.mrf.mxu0
        %2871 = vmatprep.mubr.f32.mxu0 0.0
        %2872 = vmatmul.mubr.f32.gmra.mxu0 %v2455
        %v2873 = vpop.f32.mrf.mxu0
        %v2874 = vadd.f32 0.0, %v2873
        %v2875 = vpop.f32.mrf.mxu0
        %2876 = vmatprep.mubr.f32.mxu0 0.0
        %2877 = vmatmul.mubr.f32.gmra.mxu0 %v2457
        %v2878 = vpop.f32.mrf.mxu0
        %v2879 = vadd.f32 0.0, %v2878
        %v2880 = vpop.f32.mrf.mxu0
        %2881 = vmatprep.mubr.f32.mxu0 0.0
        %2882 = vmatmul.mubr.f32.gmra.mxu0 %v2459
        %v2883 = vpop.f32.mrf.mxu0
        %v2884 = vadd.f32 0.0, %v2883
        %v2885 = vpop.f32.mrf.mxu0
        %2886 = vmatprep.mubr.f32.mxu0 0.0
        %2887 = vmatmul.mubr.f32.gmra.mxu0 %v2461
        %v2888 = vpop.f32.mrf.mxu0
        %v2889 = vadd.f32 0.0, %v2888
        %v2890 = vpop.f32.mrf.mxu0
        %2891 = vmatprep.mubr.f32.mxu0 0.0
        %2892 = vmatmul.mubr.f32.gmra.mxu0 %v2463
        %v2893 = vpop.f32.mrf.mxu0
        %v2894 = vadd.f32 0.0, %v2893
        %v2895 = vpop.f32.mrf.mxu0
        %2896 = vmatprep.mubr.f32.mxu0 0.0
        %2897 = vmatmul.mubr.f32.gmra.mxu0 %v2465
        %v2898 = vpop.f32.mrf.mxu0
        %v2899 = vadd.f32 0.0, %v2898
        %v2900 = vpop.f32.mrf.mxu0
        %2901 = vmatprep.mubr.f32.mxu0 0.0
        %2902 = vmatmul.mubr.f32.gmra.mxu0 %v2467
        %v2903 = vpop.f32.mrf.mxu0
        %v2904 = vadd.f32 0.0, %v2903
        %v2905 = vpop.f32.mrf.mxu0
        %2906 = vmatprep.mubr.f32.mxu0 0.0
        %2907 = vmatmul.mubr.f32.gmra.mxu0 %v2469
        %v2908 = vpop.f32.mrf.mxu0
        %v2909 = vadd.f32 0.0, %v2908
        %v2910 = vpop.f32.mrf.mxu0
        %2911 = vmatprep.mubr.f32.mxu0 0.0
        %2912 = vmatmul.mubr.f32.gmra.mxu0 %v2471
        %v2913 = vpop.f32.mrf.mxu0
        %v2914 = vadd.f32 0.0, %v2913
        %v2915 = vpop.f32.mrf.mxu0
        %2916 = vmatprep.mubr.f32.mxu0 0.0
        %2917 = vmatmul.mubr.f32.gmra.mxu0 %v2473
        %v2918 = vpop.f32.mrf.mxu0
        %v2919 = vadd.f32 0.0, %v2918
        %v2920 = vpop.f32.mrf.mxu0
        %2921 = vmatprep.mubr.f32.mxu0 0.0
        %2922 = vmatmul.mubr.f32.gmra.mxu0 %v2475
        %v2923 = vpop.f32.mrf.mxu0
        %v2924 = vadd.f32 0.0, %v2923
        %v2925 = vpop.f32.mrf.mxu0
        %2926 = vmatprep.mubr.f32.mxu0 0.0
        %2927 = vmatmul.mubr.f32.gmra.mxu0 %v2477
        %v2928 = vpop.f32.mrf.mxu0
        %v2929 = vadd.f32 0.0, %v2928
        %v2930 = vpop.f32.mrf.mxu0
        %2931 = vmatprep.mubr.f32.mxu0 0.0
        %2932 = vmatmul.mubr.f32.gmra.mxu0 %v2479
        %v2933 = vpop.f32.mrf.mxu0
        %v2934 = vadd.f32 0.0, %v2933
        %v2935 = vpop.f32.mrf.mxu0
        %2936 = vmatprep.mubr.f32.mxu0 0.0
        %2937 = vmatmul.mubr.f32.gmra.mxu0 %v2481
        %v2938 = vpop.f32.mrf.mxu0
        %v2939 = vadd.f32 0.0, %v2938
        %v2940 = vpop.f32.mrf.mxu0
        %2941 = vmatprep.mubr.f32.mxu0 0.0
        %2942 = vmatmul.mubr.f32.gmra.mxu0 %v2483
        %v2943 = vpop.f32.mrf.mxu0
        %v2944 = vadd.f32 0.0, %v2943
        %v2945 = vpop.f32.mrf.mxu0
        %2946 = vmatprep.mubr.f32.mxu0 0.0
        %2947 = vmatmul.mubr.f32.gmra.mxu0 %v2485
        %v2948 = vpop.f32.mrf.mxu0
        %v2949 = vadd.f32 0.0, %v2948
        %v2950 = vpop.f32.mrf.mxu0
        %2951 = vmatprep.mubr.f32.mxu0 0.0
        %2952 = vmatmul.mubr.f32.gmra.mxu0 %v2487
        %v2953 = vpop.f32.mrf.mxu0
        %v2954 = vadd.f32 0.0, %v2953
        %v2955 = vpop.f32.mrf.mxu0
        %2956 = vmatprep.mubr.f32.mxu0 0.0
        %2957 = vmatmul.mubr.f32.gmra.mxu0 %v2489
        %v2958 = vpop.f32.mrf.mxu0
        %v2959 = vadd.f32 0.0, %v2958
        %v2960 = vpop.f32.mrf.mxu0
        %2961 = vmatprep.mubr.f32.mxu0 0.0
        %2962 = vmatmul.mubr.f32.gmra.mxu0 %v2491
        %v2963 = vpop.f32.mrf.mxu0
        %v2964 = vadd.f32 0.0, %v2963
        %v2965 = vpop.f32.mrf.mxu0
        %2966 = vmatprep.mubr.f32.mxu0 0.0
        %2967 = vmatmul.mubr.f32.gmra.mxu0 %v2493
        %v2968 = vpop.f32.mrf.mxu0
        %v2969 = vadd.f32 0.0, %v2968
        %v2970 = vpop.f32.mrf.mxu0
        %2971 = vmatprep.mubr.f32.mxu0 0.0
        %2972 = vmatmul.mubr.f32.gmra.mxu0 %v2495
        %v2973 = vpop.f32.mrf.mxu0
        %v2974 = vadd.f32 0.0, %v2973
        %v2975 = vpop.f32.mrf.mxu0
        %2976 = vmatprep.mubr.f32.mxu0 0.0
        %2977 = vmatmul.mubr.f32.gmra.mxu0 %v2497
        %v2978 = vpop.f32.mrf.mxu0
        %v2979 = vadd.f32 0.0, %v2978
        %v2980 = vpop.f32.mrf.mxu0
        %2981 = vmatprep.mubr.f32.mxu0 0.0
        %2982 = vmatmul.mubr.f32.gmra.mxu0 %v2499
        %v2983 = vpop.f32.mrf.mxu0
        %v2984 = vadd.f32 0.0, %v2983
        %v2985 = vpop.f32.mrf.mxu0
        %2986 = vmatprep.mubr.f32.mxu0 0.0
        %2987 = vmatmul.mubr.f32.gmra.mxu0 %v2501
        %v2988 = vpop.f32.mrf.mxu0
        %v2989 = vadd.f32 0.0, %v2988
        %v2990 = vpop.f32.mrf.mxu0
        %2991 = vmatprep.mubr.f32.mxu0 0.0
        %2992 = vmatmul.mubr.f32.gmra.mxu0 %v2770
        %v2993 = vpop.f32.mrf.mxu0
        %v2994 = vadd.f32 0.0, %v2993
        %v2995 = vpop.f32.mrf.mxu0
        %2996 = vmatprep.mubr.f32.mxu0 0.0
        %2997 = vmatmul.mubr.f32.gmra.mxu0 %v2772
        %v2998 = vpop.f32.mrf.mxu0
        %v2999 = vadd.f32 0.0, %v2998
        %v3000 = vpop.f32.mrf.mxu0
        %3001 = vdwg.mxu0
        %v3002 = vadd.f32 %v2731, %v2844
        %v3003 = vadd.f32 %v2732, %v2849
        %v3004 = vadd.f32 %v2733, %v2854
        %v3005 = vadd.f32 %v2734, %v2859
        %v3006 = vadd.f32 %v2735, %v2864
        %v3007 = vadd.f32 %v2736, %v2869
        %v3008 = vadd.f32 %v2737, %v2874
        %v3009 = vadd.f32 %v2738, %v2879
        %v3010 = vadd.f32 %v2739, %v2884
        %v3011 = vadd.f32 %v2740, %v2889
        %v3012 = vadd.f32 %v2741, %v2894
        %v3013 = vadd.f32 %v2742, %v2899
        %v3014 = vadd.f32 %v2743, %v2904
        %v3015 = vadd.f32 %v2744, %v2909
        %v3016 = vadd.f32 %v2745, %v2914
        %v3017 = vadd.f32 %v2746, %v2919
        %v3018 = vadd.f32 %v2747, %v2924
        %v3019 = vadd.f32 %v2748, %v2929
        %v3020 = vadd.f32 %v2749, %v2934
        %v3021 = vadd.f32 %v2750, %v2939
        %v3022 = vadd.f32 %v2751, %v2944
        %v3023 = vadd.f32 %v2752, %v2949
        %v3024 = vadd.f32 %v2753, %v2954
        %v3025 = vadd.f32 %v2754, %v2959
        %v3026 = vadd.f32 %v2755, %v2964
        %v3027 = vadd.f32 %v2756, %v2969
        %v3028 = vadd.f32 %v2757, %v2974
        %v3029 = vadd.f32 %v2758, %v2979
        %v3030 = vadd.f32 %v2759, %v2984
        %v3031 = vadd.f32 %v2760, %v2989
        %v3032 = vadd.f32 %v2761, %v2994
        %v3033 = vadd.f32 %v2762, %v2999
        %v3034 = vrot.slane %v556, 2
        %v3035 = vrot.slane %v557, 2
        %v3036 = vsel %vm2356, %v3034, %v3035
        %v3037 = vrot.slane %v558, 2
        %v3038 = vsel %vm2356, %v3035, %v3037
        %s3039 = scalar_lea.vmem %s1, 32
        %v3040 = vld [vmem:[%s3039] sm:$0xf]
        %v3041 = vsel %vm416, %v3036, 0
        %v3043 = vsel %vm416, %v3038, 0
        %v3046 = vsel %vm658, %v3040, 0
        %3048 = vmatprep.subr.mxu0 0.0
        %3049 = vmatpush1.msra.mxu0 0.0
        %3050 = vmatprep.subr.mxu0 0.0
        %3051 = vmatpush1.msra.mxu0 0.0
        %3052 = vmatprep.subr.mxu0 0.0
        %3053 = vmatpush1.msra.mxu0 0.0
        %3054 = vmatprep.subr.mxu0 0.0
        %3055 = vmatpush1.msra.mxu0 0.0
        %3056 = vmatprep.subr.mxu0 0.0
        %3057 = vmatpush1.msra.mxu0 0.0
        %3058 = vmatprep.subr.mxu0 0.0
        %3059 = vmatpush1.msra.mxu0 0.0
        %3060 = vmatprep.subr.mxu0 0.0
        %3061 = vmatpush1.msra.mxu0 0.0
        %3062 = vmatprep.subr.mxu0 0.0
        %3063 = vmatpush1.msra.mxu0 0.0
        %3064 = vmatprep.subr.mxu0 0.0
        %3065 = vmatpush1.msra.mxu0 0.0
        %3066 = vmatprep.subr.mxu0 0.0
        %3067 = vmatpush1.msra.mxu0 0.0
        %3068 = vmatprep.subr.mxu0 0.0
        %3069 = vmatpush1.msra.mxu0 0.0
        %3070 = vmatprep.subr.mxu0 0.0
        %3071 = vmatpush1.msra.mxu0 0.0
        %3072 = vmatprep.subr.mxu0 0.0
        %3073 = vmatpush1.msra.mxu0 0.0
        %3074 = vmatprep.subr.mxu0 0.0
        %3075 = vmatpush1.msra.mxu0 0.0
        %3076 = vmatprep.subr.mxu0 0.0
        %3077 = vmatpush1.msra.mxu0 0.0
        %3078 = vmatprep.subr.mxu0 0.0
        %3079 = vmatpush1.msra.mxu0 %v3046
        %3080 = vmatprep.subr.mxu0 0.0
        %3081 = vmatpush2.msra.mxu0 0.0
        %3082 = vmatprep.subr.mxu0 0.0
        %3083 = vmatpush2.msra.mxu0 0.0
        %3084 = vmatprep.subr.mxu0 0.0
        %3085 = vmatpush2.msra.mxu0 0.0
        %3086 = vmatprep.subr.mxu0 0.0
        %3087 = vmatpush2.msra.mxu0 0.0
        %3088 = vmatprep.subr.mxu0 0.0
        %3089 = vmatpush2.msra.mxu0 0.0
        %3090 = vmatprep.subr.mxu0 0.0
        %3091 = vmatpush2.msra.mxu0 0.0
        %3092 = vmatprep.subr.mxu0 0.0
        %3093 = vmatpush2.msra.mxu0 0.0
        %3094 = vmatprep.subr.mxu0 0.0
        %3095 = vmatpush2.msra.mxu0 0.0
        %3096 = vmatprep.subr.mxu0 0.0
        %3097 = vmatpush2.msra.mxu0 0.0
        %3098 = vmatprep.subr.mxu0 0.0
        %3099 = vmatpush2.msra.mxu0 0.0
        %3100 = vmatprep.subr.mxu0 0.0
        %3101 = vmatpush2.msra.mxu0 0.0
        %3102 = vmatprep.subr.mxu0 0.0
        %3103 = vmatpush2.msra.mxu0 0.0
        %3104 = vmatprep.subr.mxu0 0.0
        %3105 = vmatpush2.msra.mxu0 0.0
        %3106 = vmatprep.subr.mxu0 0.0
        %3107 = vmatpush2.msra.mxu0 0.0
        %3108 = vmatprep.subr.mxu0 0.0
        %3109 = vmatpush2.msra.mxu0 0.0
        %3110 = vmatprep.subr.mxu0 0.0
        %3111 = vmatpush2.msra.mxu0 0.0
        %3112 = vmatprep.mubr.f32.mxu0 0.0
        %3113 = vmatmul.mubr.f32.gmra.mxu0 %v2447
        %v3114 = vpop.f32.mrf.mxu0
        %v3115 = vadd.f32 0.0, %v3114
        %v3116 = vpop.f32.mrf.mxu0
        %3117 = vmatprep.mubr.f32.mxu0 0.0
        %3118 = vmatmul.mubr.f32.gmra.mxu0 %v2449
        %v3119 = vpop.f32.mrf.mxu0
        %v3120 = vadd.f32 0.0, %v3119
        %v3121 = vpop.f32.mrf.mxu0
        %3122 = vmatprep.mubr.f32.mxu0 0.0
        %3123 = vmatmul.mubr.f32.gmra.mxu0 %v2451
        %v3124 = vpop.f32.mrf.mxu0
        %v3125 = vadd.f32 0.0, %v3124
        %v3126 = vpop.f32.mrf.mxu0
        %3127 = vmatprep.mubr.f32.mxu0 0.0
        %3128 = vmatmul.mubr.f32.gmra.mxu0 %v2453
        %v3129 = vpop.f32.mrf.mxu0
        %v3130 = vadd.f32 0.0, %v3129
        %v3131 = vpop.f32.mrf.mxu0
        %3132 = vmatprep.mubr.f32.mxu0 0.0
        %3133 = vmatmul.mubr.f32.gmra.mxu0 %v2455
        %v3134 = vpop.f32.mrf.mxu0
        %v3135 = vadd.f32 0.0, %v3134
        %v3136 = vpop.f32.mrf.mxu0
        %3137 = vmatprep.mubr.f32.mxu0 0.0
        %3138 = vmatmul.mubr.f32.gmra.mxu0 %v2457
        %v3139 = vpop.f32.mrf.mxu0
        %v3140 = vadd.f32 0.0, %v3139
        %v3141 = vpop.f32.mrf.mxu0
        %3142 = vmatprep.mubr.f32.mxu0 0.0
        %3143 = vmatmul.mubr.f32.gmra.mxu0 %v2459
        %v3144 = vpop.f32.mrf.mxu0
        %v3145 = vadd.f32 0.0, %v3144
        %v3146 = vpop.f32.mrf.mxu0
        %3147 = vmatprep.mubr.f32.mxu0 0.0
        %3148 = vmatmul.mubr.f32.gmra.mxu0 %v2461
        %v3149 = vpop.f32.mrf.mxu0
        %v3150 = vadd.f32 0.0, %v3149
        %v3151 = vpop.f32.mrf.mxu0
        %3152 = vmatprep.mubr.f32.mxu0 0.0
        %3153 = vmatmul.mubr.f32.gmra.mxu0 %v2463
        %v3154 = vpop.f32.mrf.mxu0
        %v3155 = vadd.f32 0.0, %v3154
        %v3156 = vpop.f32.mrf.mxu0
        %3157 = vmatprep.mubr.f32.mxu0 0.0
        %3158 = vmatmul.mubr.f32.gmra.mxu0 %v2465
        %v3159 = vpop.f32.mrf.mxu0
        %v3160 = vadd.f32 0.0, %v3159
        %v3161 = vpop.f32.mrf.mxu0
        %3162 = vmatprep.mubr.f32.mxu0 0.0
        %3163 = vmatmul.mubr.f32.gmra.mxu0 %v2467
        %v3164 = vpop.f32.mrf.mxu0
        %v3165 = vadd.f32 0.0, %v3164
        %v3166 = vpop.f32.mrf.mxu0
        %3167 = vmatprep.mubr.f32.mxu0 0.0
        %3168 = vmatmul.mubr.f32.gmra.mxu0 %v2469
        %v3169 = vpop.f32.mrf.mxu0
        %v3170 = vadd.f32 0.0, %v3169
        %v3171 = vpop.f32.mrf.mxu0
        %3172 = vmatprep.mubr.f32.mxu0 0.0
        %3173 = vmatmul.mubr.f32.gmra.mxu0 %v2471
        %v3174 = vpop.f32.mrf.mxu0
        %v3175 = vadd.f32 0.0, %v3174
        %v3176 = vpop.f32.mrf.mxu0
        %3177 = vmatprep.mubr.f32.mxu0 0.0
        %3178 = vmatmul.mubr.f32.gmra.mxu0 %v2473
        %v3179 = vpop.f32.mrf.mxu0
        %v3180 = vadd.f32 0.0, %v3179
        %v3181 = vpop.f32.mrf.mxu0
        %3182 = vmatprep.mubr.f32.mxu0 0.0
        %3183 = vmatmul.mubr.f32.gmra.mxu0 %v2475
        %v3184 = vpop.f32.mrf.mxu0
        %v3185 = vadd.f32 0.0, %v3184
        %v3186 = vpop.f32.mrf.mxu0
        %3187 = vmatprep.mubr.f32.mxu0 0.0
        %3188 = vmatmul.mubr.f32.gmra.mxu0 %v2477
        %v3189 = vpop.f32.mrf.mxu0
        %v3190 = vadd.f32 0.0, %v3189
        %v3191 = vpop.f32.mrf.mxu0
        %3192 = vmatprep.mubr.f32.mxu0 0.0
        %3193 = vmatmul.mubr.f32.gmra.mxu0 %v2479
        %v3194 = vpop.f32.mrf.mxu0
        %v3195 = vadd.f32 0.0, %v3194
        %v3196 = vpop.f32.mrf.mxu0
        %3197 = vmatprep.mubr.f32.mxu0 0.0
        %3198 = vmatmul.mubr.f32.gmra.mxu0 %v2481
        %v3199 = vpop.f32.mrf.mxu0
        %v3200 = vadd.f32 0.0, %v3199
        %v3201 = vpop.f32.mrf.mxu0
        %3202 = vmatprep.mubr.f32.mxu0 0.0
        %3203 = vmatmul.mubr.f32.gmra.mxu0 %v2483
        %v3204 = vpop.f32.mrf.mxu0
        %v3205 = vadd.f32 0.0, %v3204
        %v3206 = vpop.f32.mrf.mxu0
        %3207 = vmatprep.mubr.f32.mxu0 0.0
        %3208 = vmatmul.mubr.f32.gmra.mxu0 %v2485
        %v3209 = vpop.f32.mrf.mxu0
        %v3210 = vadd.f32 0.0, %v3209
        %v3211 = vpop.f32.mrf.mxu0
        %3212 = vmatprep.mubr.f32.mxu0 0.0
        %3213 = vmatmul.mubr.f32.gmra.mxu0 %v2487
        %v3214 = vpop.f32.mrf.mxu0
        %v3215 = vadd.f32 0.0, %v3214
        %v3216 = vpop.f32.mrf.mxu0
        %3217 = vmatprep.mubr.f32.mxu0 0.0
        %3218 = vmatmul.mubr.f32.gmra.mxu0 %v2489
        %v3219 = vpop.f32.mrf.mxu0
        %v3220 = vadd.f32 0.0, %v3219
        %v3221 = vpop.f32.mrf.mxu0
        %3222 = vmatprep.mubr.f32.mxu0 0.0
        %3223 = vmatmul.mubr.f32.gmra.mxu0 %v2491
        %v3224 = vpop.f32.mrf.mxu0
        %v3225 = vadd.f32 0.0, %v3224
        %v3226 = vpop.f32.mrf.mxu0
        %3227 = vmatprep.mubr.f32.mxu0 0.0
        %3228 = vmatmul.mubr.f32.gmra.mxu0 %v2493
        %v3229 = vpop.f32.mrf.mxu0
        %v3230 = vadd.f32 0.0, %v3229
        %v3231 = vpop.f32.mrf.mxu0
        %3232 = vmatprep.mubr.f32.mxu0 0.0
        %3233 = vmatmul.mubr.f32.gmra.mxu0 %v2495
        %v3234 = vpop.f32.mrf.mxu0
        %v3235 = vadd.f32 0.0, %v3234
        %v3236 = vpop.f32.mrf.mxu0
        %3237 = vmatprep.mubr.f32.mxu0 0.0
        %3238 = vmatmul.mubr.f32.gmra.mxu0 %v2497
        %v3239 = vpop.f32.mrf.mxu0
        %v3240 = vadd.f32 0.0, %v3239
        %v3241 = vpop.f32.mrf.mxu0
        %3242 = vmatprep.mubr.f32.mxu0 0.0
        %3243 = vmatmul.mubr.f32.gmra.mxu0 %v2499
        %v3244 = vpop.f32.mrf.mxu0
        %v3245 = vadd.f32 0.0, %v3244
        %v3246 = vpop.f32.mrf.mxu0
        %3247 = vmatprep.mubr.f32.mxu0 0.0
        %3248 = vmatmul.mubr.f32.gmra.mxu0 %v2501
        %v3249 = vpop.f32.mrf.mxu0
        %v3250 = vadd.f32 0.0, %v3249
        %v3251 = vpop.f32.mrf.mxu0
        %3252 = vmatprep.mubr.f32.mxu0 0.0
        %3253 = vmatmul.mubr.f32.gmra.mxu0 %v2770
        %v3254 = vpop.f32.mrf.mxu0
        %v3255 = vadd.f32 0.0, %v3254
        %v3256 = vpop.f32.mrf.mxu0
        %3257 = vmatprep.mubr.f32.mxu0 0.0
        %3258 = vmatmul.mubr.f32.gmra.mxu0 %v2772
        %v3259 = vpop.f32.mrf.mxu0
        %v3260 = vadd.f32 0.0, %v3259
        %v3261 = vpop.f32.mrf.mxu0
        %3262 = vmatprep.mubr.f32.mxu0 0.0
        %3263 = vmatmul.mubr.f32.gmra.mxu0 %v3041
        %v3264 = vpop.f32.mrf.mxu0
        %v3265 = vadd.f32 0.0, %v3264
        %v3266 = vpop.f32.mrf.mxu0
        %3267 = vmatprep.mubr.f32.mxu0 0.0
        %3268 = vmatmul.mubr.f32.gmra.mxu0 %v3043
        %v3269 = vpop.f32.mrf.mxu0
        %v3270 = vadd.f32 0.0, %v3269
        %v3271 = vpop.f32.mrf.mxu0
        %3272 = vdwg.mxu0
        %v3273 = vadd.f32 %v3002, %v3115
        %v3274 = vadd.f32 %v3003, %v3120
        %v3275 = vadd.f32 %v3004, %v3125
        %v3276 = vadd.f32 %v3005, %v3130
        %v3277 = vadd.f32 %v3006, %v3135
        %v3278 = vadd.f32 %v3007, %v3140
        %v3279 = vadd.f32 %v3008, %v3145
        %v3280 = vadd.f32 %v3009, %v3150
        %v3281 = vadd.f32 %v3010, %v3155
        %v3282 = vadd.f32 %v3011, %v3160
        %v3283 = vadd.f32 %v3012, %v3165
        %v3284 = vadd.f32 %v3013, %v3170
        %v3285 = vadd.f32 %v3014, %v3175
        %v3286 = vadd.f32 %v3015, %v3180
        %v3287 = vadd.f32 %v3016, %v3185
        %v3288 = vadd.f32 %v3017, %v3190
        %v3289 = vadd.f32 %v3018, %v3195
        %v3290 = vadd.f32 %v3019, %v3200
        %v3291 = vadd.f32 %v3020, %v3205
        %v3292 = vadd.f32 %v3021, %v3210
        %v3293 = vadd.f32 %v3022, %v3215
        %v3294 = vadd.f32 %v3023, %v3220
        %v3295 = vadd.f32 %v3024, %v3225
        %v3296 = vadd.f32 %v3025, %v3230
        %v3297 = vadd.f32 %v3026, %v3235
        %v3298 = vadd.f32 %v3027, %v3240
        %v3299 = vadd.f32 %v3028, %v3245
        %v3300 = vadd.f32 %v3029, %v3250
        %v3301 = vadd.f32 %v3030, %v3255
        %v3302 = vadd.f32 %v3031, %v3260
        %v3303 = vadd.f32 %v3032, %v3265
        %v3304 = vadd.f32 %v3033, %v3270
        %v3305 = vld [vmem:[%s2] sm:$0x1]
        %v3307 = vlaneseq
        %v3308 = vshrl.u32 %v3307, 7
        %v3309 = vsub.s32 0, %v3308
        %v3310 = vrot.slane %v3305, %v3309
        %v3312 = vadd.f32 %v3273, %v3310
        %v3313 = vadd.f32 %v3274, %v3310
        %v3314 = vadd.f32 %v3275, %v3310
        %v3315 = vadd.f32 %v3276, %v3310
        %v3316 = vadd.f32 %v3277, %v3310
        %v3317 = vadd.f32 %v3278, %v3310
        %v3318 = vadd.f32 %v3279, %v3310
        %v3319 = vadd.f32 %v3280, %v3310
        %v3320 = vadd.f32 %v3281, %v3310
        %v3321 = vadd.f32 %v3282, %v3310
        %v3322 = vadd.f32 %v3283, %v3310
        %v3323 = vadd.f32 %v3284, %v3310
        %v3324 = vadd.f32 %v3285, %v3310
        %v3325 = vadd.f32 %v3286, %v3310
        %v3326 = vadd.f32 %v3287, %v3310
        %v3327 = vadd.f32 %v3288, %v3310
        %v3328 = vadd.f32 %v3289, %v3310
        %v3329 = vadd.f32 %v3290, %v3310
        %v3330 = vadd.f32 %v3291, %v3310
        %v3331 = vadd.f32 %v3292, %v3310
        %v3332 = vadd.f32 %v3293, %v3310
        %v3333 = vadd.f32 %v3294, %v3310
        %v3334 = vadd.f32 %v3295, %v3310
        %v3335 = vadd.f32 %v3296, %v3310
        %v3336 = vadd.f32 %v3297, %v3310
        %v3337 = vadd.f32 %v3298, %v3310
        %v3338 = vadd.f32 %v3299, %v3310
        %v3339 = vadd.f32 %v3300, %v3310
        %v3340 = vadd.f32 %v3301, %v3310
        %v3341 = vadd.f32 %v3302, %v3310
        %v3342 = vadd.f32 %v3303, %v3310
        %v3343 = vadd.f32 %v3304, %v3310
        %v3344 = vmax.f32 %v3312, 0.0
        %v3345 = vmax.f32 %v3313, 0.0
        %v3346 = vmax.f32 %v3314, 0.0
        %v3347 = vmax.f32 %v3315, 0.0
        %v3348 = vmax.f32 %v3316, 0.0
        %v3349 = vmax.f32 %v3317, 0.0
        %v3350 = vmax.f32 %v3318, 0.0
        %v3351 = vmax.f32 %v3319, 0.0
        %v3352 = vmax.f32 %v3320, 0.0
        %v3353 = vmax.f32 %v3321, 0.0
        %v3354 = vmax.f32 %v3322, 0.0
        %v3355 = vmax.f32 %v3323, 0.0
        %v3356 = vmax.f32 %v3324, 0.0
        %v3357 = vmax.f32 %v3325, 0.0
        %v3358 = vmax.f32 %v3326, 0.0
        %v3359 = vmax.f32 %v3327, 0.0
        %v3360 = vmax.f32 %v3328, 0.0
        %v3361 = vmax.f32 %v3329, 0.0
        %v3362 = vmax.f32 %v3330, 0.0
        %v3363 = vmax.f32 %v3331, 0.0
        %v3364 = vmax.f32 %v3332, 0.0
        %v3365 = vmax.f32 %v3333, 0.0
        %v3366 = vmax.f32 %v3334, 0.0
        %v3367 = vmax.f32 %v3335, 0.0
        %v3368 = vmax.f32 %v3336, 0.0
        %v3369 = vmax.f32 %v3337, 0.0
        %v3370 = vmax.f32 %v3338, 0.0
        %v3371 = vmax.f32 %v3339, 0.0
        %v3372 = vmax.f32 %v3340, 0.0
        %v3373 = vmax.f32 %v3341, 0.0
        %v3374 = vmax.f32 %v3342, 0.0
        %v3375 = vmax.f32 %v3343, 0.0
        %v3408 = vcombine.high %v3344, %v3344
        %v3410 = vunpack.c.l.s4 1983009808
        %v3411 = vunpack.c.0.s8 %v3410
        %v3412 = vlaneseq
        %v3413 = vshrl.u32 %v3412, 7
        %v3414 = vsub.s32 %v3411, %v3413
        %v3415 = vrot.slane %v3344, %v3414
        %v3417 = vunpack.c.l.s4 1983009808
        %v3418 = vunpack.c.0.s8 %v3417
        %v3419 = vlaneseq
        %v3420 = vshrl.u32 %v3419, 7
        %v3421 = vsub.s32 %v3418, %v3420
        %v3422 = vrot.slane %v3408, %v3421
        %v3423 = vcombine.high %v3415, %v3415
        %v3424 = vcombine.high %v3422, %v3422
        %v3425 = vcombine.high %v3345, %v3345
        %v3427 = vunpack.c.l.s4 1983009808
        %v3428 = vunpack.c.0.s8 %v3427
        %v3429 = vlaneseq
        %v3430 = vshrl.u32 %v3429, 7
        %v3431 = vsub.s32 %v3428, %v3430
        %v3432 = vrot.slane %v3345, %v3431
        %v3434 = vunpack.c.l.s4 1983009808
        %v3435 = vunpack.c.0.s8 %v3434
        %v3436 = vlaneseq
        %v3437 = vshrl.u32 %v3436, 7
        %v3438 = vsub.s32 %v3435, %v3437
        %v3439 = vrot.slane %v3425, %v3438
        %v3440 = vcombine.high %v3432, %v3432
        %v3441 = vcombine.high %v3439, %v3439
        %v3442 = vcombine.high %v3346, %v3346
        %v3444 = vunpack.c.l.s4 1983009808
        %v3445 = vunpack.c.0.s8 %v3444
        %v3446 = vlaneseq
        %v3447 = vshrl.u32 %v3446, 7
        %v3448 = vsub.s32 %v3445, %v3447
        %v3449 = vrot.slane %v3346, %v3448
        %v3451 = vunpack.c.l.s4 1983009808
        %v3452 = vunpack.c.0.s8 %v3451
        %v3453 = vlaneseq
        %v3454 = vshrl.u32 %v3453, 7
        %v3455 = vsub.s32 %v3452, %v3454
        %v3456 = vrot.slane %v3442, %v3455
        %v3457 = vcombine.high %v3449, %v3449
        %v3458 = vcombine.high %v3456, %v3456
        %v3459 = vcombine.high %v3347, %v3347
        %v3461 = vunpack.c.l.s4 1983009808
        %v3462 = vunpack.c.0.s8 %v3461
        %v3463 = vlaneseq
        %v3464 = vshrl.u32 %v3463, 7
        %v3465 = vsub.s32 %v3462, %v3464
        %v3466 = vrot.slane %v3347, %v3465
        %v3468 = vunpack.c.l.s4 1983009808
        %v3469 = vunpack.c.0.s8 %v3468
        %v3470 = vlaneseq
        %v3471 = vshrl.u32 %v3470, 7
        %v3472 = vsub.s32 %v3469, %v3471
        %v3473 = vrot.slane %v3459, %v3472
        %v3474 = vcombine.high %v3466, %v3466
        %v3475 = vcombine.high %v3473, %v3473
        %v3476 = vcombine.high %v3348, %v3348
        %v3478 = vunpack.c.l.s4 1983009808
        %v3479 = vunpack.c.0.s8 %v3478
        %v3480 = vlaneseq
        %v3481 = vshrl.u32 %v3480, 7
        %v3482 = vsub.s32 %v3479, %v3481
        %v3483 = vrot.slane %v3348, %v3482
        %v3485 = vunpack.c.l.s4 1983009808
        %v3486 = vunpack.c.0.s8 %v3485
        %v3487 = vlaneseq
        %v3488 = vshrl.u32 %v3487, 7
        %v3489 = vsub.s32 %v3486, %v3488
        %v3490 = vrot.slane %v3476, %v3489
        %v3491 = vcombine.high %v3483, %v3483
        %v3492 = vcombine.high %v3490, %v3490
        %v3493 = vcombine.high %v3349, %v3349
        %v3495 = vunpack.c.l.s4 1983009808
        %v3496 = vunpack.c.0.s8 %v3495
        %v3497 = vlaneseq
        %v3498 = vshrl.u32 %v3497, 7
        %v3499 = vsub.s32 %v3496, %v3498
        %v3500 = vrot.slane %v3349, %v3499
        %v3502 = vunpack.c.l.s4 1983009808
        %v3503 = vunpack.c.0.s8 %v3502
        %v3504 = vlaneseq
        %v3505 = vshrl.u32 %v3504, 7
        %v3506 = vsub.s32 %v3503, %v3505
        %v3507 = vrot.slane %v3493, %v3506
        %v3508 = vcombine.high %v3500, %v3500
        %v3509 = vcombine.high %v3507, %v3507
        %v3510 = vcombine.high %v3350, %v3350
        %v3512 = vunpack.c.l.s4 1983009808
        %v3513 = vunpack.c.0.s8 %v3512
        %v3514 = vlaneseq
        %v3515 = vshrl.u32 %v3514, 7
        %v3516 = vsub.s32 %v3513, %v3515
        %v3517 = vrot.slane %v3350, %v3516
        %v3519 = vunpack.c.l.s4 1983009808
        %v3520 = vunpack.c.0.s8 %v3519
        %v3521 = vlaneseq
        %v3522 = vshrl.u32 %v3521, 7
        %v3523 = vsub.s32 %v3520, %v3522
        %v3524 = vrot.slane %v3510, %v3523
        %v3525 = vcombine.high %v3517, %v3517
        %v3526 = vcombine.high %v3524, %v3524
        %v3527 = vcombine.high %v3351, %v3351
        %v3529 = vunpack.c.l.s4 1983009808
        %v3530 = vunpack.c.0.s8 %v3529
        %v3531 = vlaneseq
        %v3532 = vshrl.u32 %v3531, 7
        %v3533 = vsub.s32 %v3530, %v3532
        %v3534 = vrot.slane %v3351, %v3533
        %v3536 = vunpack.c.l.s4 1983009808
        %v3537 = vunpack.c.0.s8 %v3536
        %v3538 = vlaneseq
        %v3539 = vshrl.u32 %v3538, 7
        %v3540 = vsub.s32 %v3537, %v3539
        %v3541 = vrot.slane %v3527, %v3540
        %v3542 = vcombine.high %v3534, %v3534
        %v3543 = vcombine.high %v3541, %v3541
        %v3544 = vcombine.high %v3352, %v3352
        %v3546 = vunpack.c.l.s4 1983009808
        %v3547 = vunpack.c.0.s8 %v3546
        %v3548 = vlaneseq
        %v3549 = vshrl.u32 %v3548, 7
        %v3550 = vsub.s32 %v3547, %v3549
        %v3551 = vrot.slane %v3352, %v3550
        %v3553 = vunpack.c.l.s4 1983009808
        %v3554 = vunpack.c.0.s8 %v3553
        %v3555 = vlaneseq
        %v3556 = vshrl.u32 %v3555, 7
        %v3557 = vsub.s32 %v3554, %v3556
        %v3558 = vrot.slane %v3544, %v3557
        %v3559 = vcombine.high %v3551, %v3551
        %v3560 = vcombine.high %v3558, %v3558
        %v3561 = vcombine.high %v3353, %v3353
        %v3563 = vunpack.c.l.s4 1983009808
        %v3564 = vunpack.c.0.s8 %v3563
        %v3565 = vlaneseq
        %v3566 = vshrl.u32 %v3565, 7
        %v3567 = vsub.s32 %v3564, %v3566
        %v3568 = vrot.slane %v3353, %v3567
        %v3570 = vunpack.c.l.s4 1983009808
        %v3571 = vunpack.c.0.s8 %v3570
        %v3572 = vlaneseq
        %v3573 = vshrl.u32 %v3572, 7
        %v3574 = vsub.s32 %v3571, %v3573
        %v3575 = vrot.slane %v3561, %v3574
        %v3576 = vcombine.high %v3568, %v3568
        %v3577 = vcombine.high %v3575, %v3575
        %v3578 = vcombine.high %v3354, %v3354
        %v3580 = vunpack.c.l.s4 1983009808
        %v3581 = vunpack.c.0.s8 %v3580
        %v3582 = vlaneseq
        %v3583 = vshrl.u32 %v3582, 7
        %v3584 = vsub.s32 %v3581, %v3583
        %v3585 = vrot.slane %v3354, %v3584
        %v3587 = vunpack.c.l.s4 1983009808
        %v3588 = vunpack.c.0.s8 %v3587
        %v3589 = vlaneseq
        %v3590 = vshrl.u32 %v3589, 7
        %v3591 = vsub.s32 %v3588, %v3590
        %v3592 = vrot.slane %v3578, %v3591
        %v3593 = vcombine.high %v3585, %v3585
        %v3594 = vcombine.high %v3592, %v3592
        %v3595 = vcombine.high %v3355, %v3355
        %v3597 = vunpack.c.l.s4 1983009808
        %v3598 = vunpack.c.0.s8 %v3597
        %v3599 = vlaneseq
        %v3600 = vshrl.u32 %v3599, 7
        %v3601 = vsub.s32 %v3598, %v3600
        %v3602 = vrot.slane %v3355, %v3601
        %v3604 = vunpack.c.l.s4 1983009808
        %v3605 = vunpack.c.0.s8 %v3604
        %v3606 = vlaneseq
        %v3607 = vshrl.u32 %v3606, 7
        %v3608 = vsub.s32 %v3605, %v3607
        %v3609 = vrot.slane %v3595, %v3608
        %v3610 = vcombine.high %v3602, %v3602
        %v3611 = vcombine.high %v3609, %v3609
        %v3612 = vcombine.high %v3356, %v3356
        %v3614 = vunpack.c.l.s4 1983009808
        %v3615 = vunpack.c.0.s8 %v3614
        %v3616 = vlaneseq
        %v3617 = vshrl.u32 %v3616, 7
        %v3618 = vsub.s32 %v3615, %v3617
        %v3619 = vrot.slane %v3356, %v3618
        %v3621 = vunpack.c.l.s4 1983009808
        %v3622 = vunpack.c.0.s8 %v3621
        %v3623 = vlaneseq
        %v3624 = vshrl.u32 %v3623, 7
        %v3625 = vsub.s32 %v3622, %v3624
        %v3626 = vrot.slane %v3612, %v3625
        %v3627 = vcombine.high %v3619, %v3619
        %v3628 = vcombine.high %v3626, %v3626
        %v3629 = vcombine.high %v3357, %v3357
        %v3631 = vunpack.c.l.s4 1983009808
        %v3632 = vunpack.c.0.s8 %v3631
        %v3633 = vlaneseq
        %v3634 = vshrl.u32 %v3633, 7
        %v3635 = vsub.s32 %v3632, %v3634
        %v3636 = vrot.slane %v3357, %v3635
        %v3638 = vunpack.c.l.s4 1983009808
        %v3639 = vunpack.c.0.s8 %v3638
        %v3640 = vlaneseq
        %v3641 = vshrl.u32 %v3640, 7
        %v3642 = vsub.s32 %v3639, %v3641
        %v3643 = vrot.slane %v3629, %v3642
        %v3644 = vcombine.high %v3636, %v3636
        %v3645 = vcombine.high %v3643, %v3643
        %v3646 = vcombine.high %v3358, %v3358
        %v3648 = vunpack.c.l.s4 1983009808
        %v3649 = vunpack.c.0.s8 %v3648
        %v3650 = vlaneseq
        %v3651 = vshrl.u32 %v3650, 7
        %v3652 = vsub.s32 %v3649, %v3651
        %v3653 = vrot.slane %v3358, %v3652
        %v3655 = vunpack.c.l.s4 1983009808
        %v3656 = vunpack.c.0.s8 %v3655
        %v3657 = vlaneseq
        %v3658 = vshrl.u32 %v3657, 7
        %v3659 = vsub.s32 %v3656, %v3658
        %v3660 = vrot.slane %v3646, %v3659
        %v3661 = vcombine.high %v3653, %v3653
        %v3662 = vcombine.high %v3660, %v3660
        %v3663 = vcombine.high %v3359, %v3359
        %v3665 = vunpack.c.l.s4 1983009808
        %v3666 = vunpack.c.0.s8 %v3665
        %v3667 = vlaneseq
        %v3668 = vshrl.u32 %v3667, 7
        %v3669 = vsub.s32 %v3666, %v3668
        %v3670 = vrot.slane %v3359, %v3669
        %v3672 = vunpack.c.l.s4 1983009808
        %v3673 = vunpack.c.0.s8 %v3672
        %v3674 = vlaneseq
        %v3675 = vshrl.u32 %v3674, 7
        %v3676 = vsub.s32 %v3673, %v3675
        %v3677 = vrot.slane %v3663, %v3676
        %v3678 = vcombine.high %v3670, %v3670
        %v3679 = vcombine.high %v3677, %v3677
        %v3680 = vcombine.high %v3360, %v3360
        %v3682 = vunpack.c.l.s4 1983009808
        %v3683 = vunpack.c.0.s8 %v3682
        %v3684 = vlaneseq
        %v3685 = vshrl.u32 %v3684, 7
        %v3686 = vsub.s32 %v3683, %v3685
        %v3687 = vrot.slane %v3360, %v3686
        %v3689 = vunpack.c.l.s4 1983009808
        %v3690 = vunpack.c.0.s8 %v3689
        %v3691 = vlaneseq
        %v3692 = vshrl.u32 %v3691, 7
        %v3693 = vsub.s32 %v3690, %v3692
        %v3694 = vrot.slane %v3680, %v3693
        %v3695 = vcombine.high %v3687, %v3687
        %v3696 = vcombine.high %v3694, %v3694
        %v3697 = vcombine.high %v3361, %v3361
        %v3699 = vunpack.c.l.s4 1983009808
        %v3700 = vunpack.c.0.s8 %v3699
        %v3701 = vlaneseq
        %v3702 = vshrl.u32 %v3701, 7
        %v3703 = vsub.s32 %v3700, %v3702
        %v3704 = vrot.slane %v3361, %v3703
        %v3706 = vunpack.c.l.s4 1983009808
        %v3707 = vunpack.c.0.s8 %v3706
        %v3708 = vlaneseq
        %v3709 = vshrl.u32 %v3708, 7
        %v3710 = vsub.s32 %v3707, %v3709
        %v3711 = vrot.slane %v3697, %v3710
        %v3712 = vcombine.high %v3704, %v3704
        %v3713 = vcombine.high %v3711, %v3711
        %v3714 = vcombine.high %v3362, %v3362
        %v3716 = vunpack.c.l.s4 1983009808
        %v3717 = vunpack.c.0.s8 %v3716
        %v3718 = vlaneseq
        %v3719 = vshrl.u32 %v3718, 7
        %v3720 = vsub.s32 %v3717, %v3719
        %v3721 = vrot.slane %v3362, %v3720
        %v3723 = vunpack.c.l.s4 1983009808
        %v3724 = vunpack.c.0.s8 %v3723
        %v3725 = vlaneseq
        %v3726 = vshrl.u32 %v3725, 7
        %v3727 = vsub.s32 %v3724, %v3726
        %v3728 = vrot.slane %v3714, %v3727
        %v3729 = vcombine.high %v3721, %v3721
        %v3730 = vcombine.high %v3728, %v3728
        %v3731 = vcombine.high %v3363, %v3363
        %v3733 = vunpack.c.l.s4 1983009808
        %v3734 = vunpack.c.0.s8 %v3733
        %v3735 = vlaneseq
        %v3736 = vshrl.u32 %v3735, 7
        %v3737 = vsub.s32 %v3734, %v3736
        %v3738 = vrot.slane %v3363, %v3737
        %v3740 = vunpack.c.l.s4 1983009808
        %v3741 = vunpack.c.0.s8 %v3740
        %v3742 = vlaneseq
        %v3743 = vshrl.u32 %v3742, 7
        %v3744 = vsub.s32 %v3741, %v3743
        %v3745 = vrot.slane %v3731, %v3744
        %v3746 = vcombine.high %v3738, %v3738
        %v3747 = vcombine.high %v3745, %v3745
        %v3748 = vcombine.high %v3364, %v3364
        %v3750 = vunpack.c.l.s4 1983009808
        %v3751 = vunpack.c.0.s8 %v3750
        %v3752 = vlaneseq
        %v3753 = vshrl.u32 %v3752, 7
        %v3754 = vsub.s32 %v3751, %v3753
        %v3755 = vrot.slane %v3364, %v3754
        %v3757 = vunpack.c.l.s4 1983009808
        %v3758 = vunpack.c.0.s8 %v3757
        %v3759 = vlaneseq
        %v3760 = vshrl.u32 %v3759, 7
        %v3761 = vsub.s32 %v3758, %v3760
        %v3762 = vrot.slane %v3748, %v3761
        %v3763 = vcombine.high %v3755, %v3755
        %v3764 = vcombine.high %v3762, %v3762
        %v3765 = vcombine.high %v3365, %v3365
        %v3767 = vunpack.c.l.s4 1983009808
        %v3768 = vunpack.c.0.s8 %v3767
        %v3769 = vlaneseq
        %v3770 = vshrl.u32 %v3769, 7
        %v3771 = vsub.s32 %v3768, %v3770
        %v3772 = vrot.slane %v3365, %v3771
        %v3774 = vunpack.c.l.s4 1983009808
        %v3775 = vunpack.c.0.s8 %v3774
        %v3776 = vlaneseq
        %v3777 = vshrl.u32 %v3776, 7
        %v3778 = vsub.s32 %v3775, %v3777
        %v3779 = vrot.slane %v3765, %v3778
        %v3780 = vcombine.high %v3772, %v3772
        %v3781 = vcombine.high %v3779, %v3779
        %v3782 = vcombine.high %v3366, %v3366
        %v3784 = vunpack.c.l.s4 1983009808
        %v3785 = vunpack.c.0.s8 %v3784
        %v3786 = vlaneseq
        %v3787 = vshrl.u32 %v3786, 7
        %v3788 = vsub.s32 %v3785, %v3787
        %v3789 = vrot.slane %v3366, %v3788
        %v3791 = vunpack.c.l.s4 1983009808
        %v3792 = vunpack.c.0.s8 %v3791
        %v3793 = vlaneseq
        %v3794 = vshrl.u32 %v3793, 7
        %v3795 = vsub.s32 %v3792, %v3794
        %v3796 = vrot.slane %v3782, %v3795
        %v3797 = vcombine.high %v3789, %v3789
        %v3798 = vcombine.high %v3796, %v3796
        %v3799 = vcombine.high %v3367, %v3367
        %v3801 = vunpack.c.l.s4 1983009808
        %v3802 = vunpack.c.0.s8 %v3801
        %v3803 = vlaneseq
        %v3804 = vshrl.u32 %v3803, 7
        %v3805 = vsub.s32 %v3802, %v3804
        %v3806 = vrot.slane %v3367, %v3805
        %v3808 = vunpack.c.l.s4 1983009808
        %v3809 = vunpack.c.0.s8 %v3808
        %v3810 = vlaneseq
        %v3811 = vshrl.u32 %v3810, 7
        %v3812 = vsub.s32 %v3809, %v3811
        %v3813 = vrot.slane %v3799, %v3812
        %v3814 = vcombine.high %v3806, %v3806
        %v3815 = vcombine.high %v3813, %v3813
        %v3816 = vcombine.high %v3368, %v3368
        %v3818 = vunpack.c.l.s4 1983009808
        %v3819 = vunpack.c.0.s8 %v3818
        %v3820 = vlaneseq
        %v3821 = vshrl.u32 %v3820, 7
        %v3822 = vsub.s32 %v3819, %v3821
        %v3823 = vrot.slane %v3368, %v3822
        %v3825 = vunpack.c.l.s4 1983009808
        %v3826 = vunpack.c.0.s8 %v3825
        %v3827 = vlaneseq
        %v3828 = vshrl.u32 %v3827, 7
        %v3829 = vsub.s32 %v3826, %v3828
        %v3830 = vrot.slane %v3816, %v3829
        %v3831 = vcombine.high %v3823, %v3823
        %v3832 = vcombine.high %v3830, %v3830
        %v3833 = vcombine.high %v3369, %v3369
        %v3835 = vunpack.c.l.s4 1983009808
        %v3836 = vunpack.c.0.s8 %v3835
        %v3837 = vlaneseq
        %v3838 = vshrl.u32 %v3837, 7
        %v3839 = vsub.s32 %v3836, %v3838
        %v3840 = vrot.slane %v3369, %v3839
        %v3842 = vunpack.c.l.s4 1983009808
        %v3843 = vunpack.c.0.s8 %v3842
        %v3844 = vlaneseq
        %v3845 = vshrl.u32 %v3844, 7
        %v3846 = vsub.s32 %v3843, %v3845
        %v3847 = vrot.slane %v3833, %v3846
        %v3848 = vcombine.high %v3840, %v3840
        %v3849 = vcombine.high %v3847, %v3847
        %v3850 = vcombine.high %v3370, %v3370
        %v3852 = vunpack.c.l.s4 1983009808
        %v3853 = vunpack.c.0.s8 %v3852
        %v3854 = vlaneseq
        %v3855 = vshrl.u32 %v3854, 7
        %v3856 = vsub.s32 %v3853, %v3855
        %v3857 = vrot.slane %v3370, %v3856
        %v3859 = vunpack.c.l.s4 1983009808
        %v3860 = vunpack.c.0.s8 %v3859
        %v3861 = vlaneseq
        %v3862 = vshrl.u32 %v3861, 7
        %v3863 = vsub.s32 %v3860, %v3862
        %v3864 = vrot.slane %v3850, %v3863
        %v3865 = vcombine.high %v3857, %v3857
        %v3866 = vcombine.high %v3864, %v3864
        %v3867 = vcombine.high %v3371, %v3371
        %v3869 = vunpack.c.l.s4 1983009808
        %v3870 = vunpack.c.0.s8 %v3869
        %v3871 = vlaneseq
        %v3872 = vshrl.u32 %v3871, 7
        %v3873 = vsub.s32 %v3870, %v3872
        %v3874 = vrot.slane %v3371, %v3873
        %v3876 = vunpack.c.l.s4 1983009808
        %v3877 = vunpack.c.0.s8 %v3876
        %v3878 = vlaneseq
        %v3879 = vshrl.u32 %v3878, 7
        %v3880 = vsub.s32 %v3877, %v3879
        %v3881 = vrot.slane %v3867, %v3880
        %v3882 = vcombine.high %v3874, %v3874
        %v3883 = vcombine.high %v3881, %v3881
        %v3884 = vcombine.high %v3372, %v3372
        %v3886 = vunpack.c.l.s4 1983009808
        %v3887 = vunpack.c.0.s8 %v3886
        %v3888 = vlaneseq
        %v3889 = vshrl.u32 %v3888, 7
        %v3890 = vsub.s32 %v3887, %v3889
        %v3891 = vrot.slane %v3372, %v3890
        %v3893 = vunpack.c.l.s4 1983009808
        %v3894 = vunpack.c.0.s8 %v3893
        %v3895 = vlaneseq
        %v3896 = vshrl.u32 %v3895, 7
        %v3897 = vsub.s32 %v3894, %v3896
        %v3898 = vrot.slane %v3884, %v3897
        %v3899 = vcombine.high %v3891, %v3891
        %v3900 = vcombine.high %v3898, %v3898
        %v3901 = vcombine.high %v3373, %v3373
        %v3903 = vunpack.c.l.s4 1983009808
        %v3904 = vunpack.c.0.s8 %v3903
        %v3905 = vlaneseq
        %v3906 = vshrl.u32 %v3905, 7
        %v3907 = vsub.s32 %v3904, %v3906
        %v3908 = vrot.slane %v3373, %v3907
        %v3910 = vunpack.c.l.s4 1983009808
        %v3911 = vunpack.c.0.s8 %v3910
        %v3912 = vlaneseq
        %v3913 = vshrl.u32 %v3912, 7
        %v3914 = vsub.s32 %v3911, %v3913
        %v3915 = vrot.slane %v3901, %v3914
        %v3916 = vcombine.high %v3908, %v3908
        %v3917 = vcombine.high %v3915, %v3915
        %v3918 = vcombine.high %v3374, %v3374
        %v3920 = vunpack.c.l.s4 1983009808
        %v3921 = vunpack.c.0.s8 %v3920
        %v3922 = vlaneseq
        %v3923 = vshrl.u32 %v3922, 7
        %v3924 = vsub.s32 %v3921, %v3923
        %v3925 = vrot.slane %v3374, %v3924
        %v3927 = vunpack.c.l.s4 1983009808
        %v3928 = vunpack.c.0.s8 %v3927
        %v3929 = vlaneseq
        %v3930 = vshrl.u32 %v3929, 7
        %v3931 = vsub.s32 %v3928, %v3930
        %v3932 = vrot.slane %v3918, %v3931
        %v3933 = vcombine.high %v3925, %v3925
        %v3934 = vcombine.high %v3932, %v3932
        %v3935 = vcombine.high %v3375, %v3375
        %v3937 = vunpack.c.l.s4 1983009808
        %v3938 = vunpack.c.0.s8 %v3937
        %v3939 = vlaneseq
        %v3940 = vshrl.u32 %v3939, 7
        %v3941 = vsub.s32 %v3938, %v3940
        %v3942 = vrot.slane %v3375, %v3941
        %v3944 = vunpack.c.l.s4 1983009808
        %v3945 = vunpack.c.0.s8 %v3944
        %v3946 = vlaneseq
        %v3947 = vshrl.u32 %v3946, 7
        %v3948 = vsub.s32 %v3945, %v3947
        %v3949 = vrot.slane %v3935, %v3948
        %v3950 = vcombine.high %v3942, %v3942
        %v3951 = vcombine.high %v3949, %v3949
        %v4080 = vrot.slane %v3415, 7
        %v4081 = vrot.slane %v4080, 2
        %v4082 = vrot.slane %v3423, 7
        %v4083 = vrot.slane %v4082, 2
        %v4084 = vrot.slane %v3422, 7
        %v4085 = vrot.slane %v4084, 2
        %v4086 = vrot.slane %v3424, 7
        %v4087 = vrot.slane %v4086, 2
        %v4088 = vrot.slane %v3432, 7
        %v4089 = vrot.slane %v4088, 2
        %v4090 = vrot.slane %v3440, 7
        %v4091 = vrot.slane %v4090, 2
        %v4092 = vrot.slane %v3439, 7
        %v4093 = vrot.slane %v4092, 2
        %v4094 = vrot.slane %v3441, 7
        %v4095 = vrot.slane %v4094, 2
        %v4096 = vrot.slane %v3483, 7
        %v4097 = vrot.slane %v4096, 2
        %v4098 = vrot.slane %v3491, 7
        %v4099 = vrot.slane %v4098, 2
        %v4100 = vrot.slane %v3490, 7
        %v4101 = vrot.slane %v4100, 2
        %v4102 = vrot.slane %v3492, 7
        %v4103 = vrot.slane %v4102, 2
        %v4104 = vrot.slane %v3500, 7
        %v4105 = vrot.slane %v4104, 2
        %v4106 = vrot.slane %v3508, 7
        %v4107 = vrot.slane %v4106, 2
        %v4108 = vrot.slane %v3507, 7
        %v4109 = vrot.slane %v4108, 2
        %v4110 = vrot.slane %v3509, 7
        %v4111 = vrot.slane %v4110, 2
        %v4112 = vrot.slane %v3551, 7
        %v4113 = vrot.slane %v4112, 2
        %v4114 = vrot.slane %v3559, 7
        %v4115 = vrot.slane %v4114, 2
        %v4116 = vrot.slane %v3558, 7
        %v4117 = vrot.slane %v4116, 2
        %v4118 = vrot.slane %v3560, 7
        %v4119 = vrot.slane %v4118, 2
        %v4120 = vrot.slane %v3568, 7
        %v4121 = vrot.slane %v4120, 2
        %v4122 = vrot.slane %v3576, 7
        %v4123 = vrot.slane %v4122, 2
        %v4124 = vrot.slane %v3575, 7
        %v4125 = vrot.slane %v4124, 2
        %v4126 = vrot.slane %v3577, 7
        %v4127 = vrot.slane %v4126, 2
        %v4128 = vrot.slane %v3619, 7
        %v4129 = vrot.slane %v4128, 2
        %v4130 = vrot.slane %v3627, 7
        %v4131 = vrot.slane %v4130, 2
        %v4132 = vrot.slane %v3626, 7
        %v4133 = vrot.slane %v4132, 2
        %v4134 = vrot.slane %v3628, 7
        %v4135 = vrot.slane %v4134, 2
        %v4136 = vrot.slane %v3636, 7
        %v4137 = vrot.slane %v4136, 2
        %v4138 = vrot.slane %v3644, 7
        %v4139 = vrot.slane %v4138, 2
        %v4140 = vrot.slane %v3643, 7
        %v4141 = vrot.slane %v4140, 2
        %v4142 = vrot.slane %v3645, 7
        %v4143 = vrot.slane %v4142, 2
        %v4144 = vrot.slane %v3687, 7
        %v4145 = vrot.slane %v4144, 2
        %v4146 = vrot.slane %v3695, 7
        %v4147 = vrot.slane %v4146, 2
        %v4148 = vrot.slane %v3694, 7
        %v4149 = vrot.slane %v4148, 2
        %v4150 = vrot.slane %v3696, 7
        %v4151 = vrot.slane %v4150, 2
        %v4152 = vrot.slane %v3704, 7
        %v4153 = vrot.slane %v4152, 2
        %v4154 = vrot.slane %v3712, 7
        %v4155 = vrot.slane %v4154, 2
        %v4156 = vrot.slane %v3711, 7
        %v4157 = vrot.slane %v4156, 2
        %v4158 = vrot.slane %v3713, 7
        %v4159 = vrot.slane %v4158, 2
        %v4160 = vrot.slane %v3755, 7
        %v4161 = vrot.slane %v4160, 2
        %v4162 = vrot.slane %v3763, 7
        %v4163 = vrot.slane %v4162, 2
        %v4164 = vrot.slane %v3762, 7
        %v4165 = vrot.slane %v4164, 2
        %v4166 = vrot.slane %v3764, 7
        %v4167 = vrot.slane %v4166, 2
        %v4168 = vrot.slane %v3772, 7
        %v4169 = vrot.slane %v4168, 2
        %v4170 = vrot.slane %v3780, 7
        %v4171 = vrot.slane %v4170, 2
        %v4172 = vrot.slane %v3779, 7
        %v4173 = vrot.slane %v4172, 2
        %v4174 = vrot.slane %v3781, 7
        %v4175 = vrot.slane %v4174, 2
        %v4176 = vrot.slane %v3823, 7
        %v4177 = vrot.slane %v4176, 2
        %v4178 = vrot.slane %v3831, 7
        %v4179 = vrot.slane %v4178, 2
        %v4180 = vrot.slane %v3830, 7
        %v4181 = vrot.slane %v4180, 2
        %v4182 = vrot.slane %v3832, 7
        %v4183 = vrot.slane %v4182, 2
        %v4184 = vrot.slane %v3840, 7
        %v4185 = vrot.slane %v4184, 2
        %v4186 = vrot.slane %v3848, 7
        %v4187 = vrot.slane %v4186, 2
        %v4188 = vrot.slane %v3847, 7
        %v4189 = vrot.slane %v4188, 2
        %v4190 = vrot.slane %v3849, 7
        %v4191 = vrot.slane %v4190, 2
        %v4192 = vrot.slane %v3891, 7
        %v4193 = vrot.slane %v4192, 2
        %v4194 = vrot.slane %v3899, 7
        %v4195 = vrot.slane %v4194, 2
        %v4196 = vrot.slane %v3898, 7
        %v4197 = vrot.slane %v4196, 2
        %v4198 = vrot.slane %v3900, 7
        %v4199 = vrot.slane %v4198, 2
        %v4200 = vrot.slane %v3908, 7
        %v4201 = vrot.slane %v4200, 2
        %v4202 = vrot.slane %v3916, 7
        %v4203 = vrot.slane %v4202, 2
        %v4204 = vrot.slane %v3915, 7
        %v4205 = vrot.slane %v4204, 2
        %v4206 = vrot.slane %v3917, 7
        %v4207 = vrot.slane %v4206, 2
        %v4272 = vmax.f32 %v3415, %v4081
        %v4273 = vmax.f32 %v3423, %v4083
        %v4274 = vmax.f32 %v3422, %v4085
        %v4275 = vmax.f32 %v3424, %v4087
        %v4276 = vmax.f32 %v3432, %v4089
        %v4277 = vmax.f32 %v3440, %v4091
        %v4278 = vmax.f32 %v3439, %v4093
        %v4279 = vmax.f32 %v3441, %v4095
        %v4280 = vmax.f32 %v3483, %v4097
        %v4281 = vmax.f32 %v3491, %v4099
        %v4282 = vmax.f32 %v3490, %v4101
        %v4283 = vmax.f32 %v3492, %v4103
        %v4284 = vmax.f32 %v3500, %v4105
        %v4285 = vmax.f32 %v3508, %v4107
        %v4286 = vmax.f32 %v3507, %v4109
        %v4287 = vmax.f32 %v3509, %v4111
        %v4288 = vmax.f32 %v3551, %v4113
        %v4289 = vmax.f32 %v3559, %v4115
        %v4290 = vmax.f32 %v3558, %v4117
        %v4291 = vmax.f32 %v3560, %v4119
        %v4292 = vmax.f32 %v3568, %v4121
        %v4293 = vmax.f32 %v3576, %v4123
        %v4294 = vmax.f32 %v3575, %v4125
        %v4295 = vmax.f32 %v3577, %v4127
        %v4296 = vmax.f32 %v3619, %v4129
        %v4297 = vmax.f32 %v3627, %v4131
        %v4298 = vmax.f32 %v3626, %v4133
        %v4299 = vmax.f32 %v3628, %v4135
        %v4300 = vmax.f32 %v3636, %v4137
        %v4301 = vmax.f32 %v3644, %v4139
        %v4302 = vmax.f32 %v3643, %v4141
        %v4303 = vmax.f32 %v3645, %v4143
        %v4304 = vmax.f32 %v3687, %v4145
        %v4305 = vmax.f32 %v3695, %v4147
        %v4306 = vmax.f32 %v3694, %v4149
        %v4307 = vmax.f32 %v3696, %v4151
        %v4308 = vmax.f32 %v3704, %v4153
        %v4309 = vmax.f32 %v3712, %v4155
        %v4310 = vmax.f32 %v3711, %v4157
        %v4311 = vmax.f32 %v3713, %v4159
        %v4312 = vmax.f32 %v3755, %v4161
        %v4313 = vmax.f32 %v3763, %v4163
        %v4314 = vmax.f32 %v3762, %v4165
        %v4315 = vmax.f32 %v3764, %v4167
        %v4316 = vmax.f32 %v3772, %v4169
        %v4317 = vmax.f32 %v3780, %v4171
        %v4318 = vmax.f32 %v3779, %v4173
        %v4319 = vmax.f32 %v3781, %v4175
        %v4320 = vmax.f32 %v3823, %v4177
        %v4321 = vmax.f32 %v3831, %v4179
        %v4322 = vmax.f32 %v3830, %v4181
        %v4323 = vmax.f32 %v3832, %v4183
        %v4324 = vmax.f32 %v3840, %v4185
        %v4325 = vmax.f32 %v3848, %v4187
        %v4326 = vmax.f32 %v3847, %v4189
        %v4327 = vmax.f32 %v3849, %v4191
        %v4328 = vmax.f32 %v3891, %v4193
        %v4329 = vmax.f32 %v3899, %v4195
        %v4330 = vmax.f32 %v3898, %v4197
        %v4331 = vmax.f32 %v3900, %v4199
        %v4332 = vmax.f32 %v3908, %v4201
        %v4333 = vmax.f32 %v3916, %v4203
        %v4334 = vmax.f32 %v3915, %v4205
        %v4335 = vmax.f32 %v3917, %v4207
        %v4336 = vrot.slane %v3449, 7
        %v4337 = vrot.slane %v4336, 2
        %v4338 = vrot.slane %v3457, 7
        %v4339 = vrot.slane %v4338, 2
        %v4340 = vrot.slane %v3456, 7
        %v4341 = vrot.slane %v4340, 2
        %v4342 = vrot.slane %v3458, 7
        %v4343 = vrot.slane %v4342, 2
        %v4344 = vrot.slane %v3466, 7
        %v4345 = vrot.slane %v4344, 2
        %v4346 = vrot.slane %v3474, 7
        %v4347 = vrot.slane %v4346, 2
        %v4348 = vrot.slane %v3473, 7
        %v4349 = vrot.slane %v4348, 2
        %v4350 = vrot.slane %v3475, 7
        %v4351 = vrot.slane %v4350, 2
        %v4352 = vrot.slane %v3517, 7
        %v4353 = vrot.slane %v4352, 2
        %v4354 = vrot.slane %v3525, 7
        %v4355 = vrot.slane %v4354, 2
        %v4356 = vrot.slane %v3524, 7
        %v4357 = vrot.slane %v4356, 2
        %v4358 = vrot.slane %v3526, 7
        %v4359 = vrot.slane %v4358, 2
        %v4360 = vrot.slane %v3534, 7
        %v4361 = vrot.slane %v4360, 2
        %v4362 = vrot.slane %v3542, 7
        %v4363 = vrot.slane %v4362, 2
        %v4364 = vrot.slane %v3541, 7
        %v4365 = vrot.slane %v4364, 2
        %v4366 = vrot.slane %v3543, 7
        %v4367 = vrot.slane %v4366, 2
        %v4368 = vrot.slane %v3585, 7
        %v4369 = vrot.slane %v4368, 2
        %v4370 = vrot.slane %v3593, 7
        %v4371 = vrot.slane %v4370, 2
        %v4372 = vrot.slane %v3592, 7
        %v4373 = vrot.slane %v4372, 2
        %v4374 = vrot.slane %v3594, 7
        %v4375 = vrot.slane %v4374, 2
        %v4376 = vrot.slane %v3602, 7
        %v4377 = vrot.slane %v4376, 2
        %v4378 = vrot.slane %v3610, 7
        %v4379 = vrot.slane %v4378, 2
        %v4380 = vrot.slane %v3609, 7
        %v4381 = vrot.slane %v4380, 2
        %v4382 = vrot.slane %v3611, 7
        %v4383 = vrot.slane %v4382, 2
        %v4384 = vrot.slane %v3653, 7
        %v4385 = vrot.slane %v4384, 2
        %v4386 = vrot.slane %v3661, 7
        %v4387 = vrot.slane %v4386, 2
        %v4388 = vrot.slane %v3660, 7
        %v4389 = vrot.slane %v4388, 2
        %v4390 = vrot.slane %v3662, 7
        %v4391 = vrot.slane %v4390, 2
        %v4392 = vrot.slane %v3670, 7
        %v4393 = vrot.slane %v4392, 2
        %v4394 = vrot.slane %v3678, 7
        %v4395 = vrot.slane %v4394, 2
        %v4396 = vrot.slane %v3677, 7
        %v4397 = vrot.slane %v4396, 2
        %v4398 = vrot.slane %v3679, 7
        %v4399 = vrot.slane %v4398, 2
        %v4400 = vrot.slane %v3721, 7
        %v4401 = vrot.slane %v4400, 2
        %v4402 = vrot.slane %v3729, 7
        %v4403 = vrot.slane %v4402, 2
        %v4404 = vrot.slane %v3728, 7
        %v4405 = vrot.slane %v4404, 2
        %v4406 = vrot.slane %v3730, 7
        %v4407 = vrot.slane %v4406, 2
        %v4408 = vrot.slane %v3738, 7
        %v4409 = vrot.slane %v4408, 2
        %v4410 = vrot.slane %v3746, 7
        %v4411 = vrot.slane %v4410, 2
        %v4412 = vrot.slane %v3745, 7
        %v4413 = vrot.slane %v4412, 2
        %v4414 = vrot.slane %v3747, 7
        %v4415 = vrot.slane %v4414, 2
        %v4416 = vrot.slane %v3789, 7
        %v4417 = vrot.slane %v4416, 2
        %v4418 = vrot.slane %v3797, 7
        %v4419 = vrot.slane %v4418, 2
        %v4420 = vrot.slane %v3796, 7
        %v4421 = vrot.slane %v4420, 2
        %v4422 = vrot.slane %v3798, 7
        %v4423 = vrot.slane %v4422, 2
        %v4424 = vrot.slane %v3806, 7
        %v4425 = vrot.slane %v4424, 2
        %v4426 = vrot.slane %v3814, 7
        %v4427 = vrot.slane %v4426, 2
        %v4428 = vrot.slane %v3813, 7
        %v4429 = vrot.slane %v4428, 2
        %v4430 = vrot.slane %v3815, 7
        %v4431 = vrot.slane %v4430, 2
        %v4432 = vrot.slane %v3857, 7
        %v4433 = vrot.slane %v4432, 2
        %v4434 = vrot.slane %v3865, 7
        %v4435 = vrot.slane %v4434, 2
        %v4436 = vrot.slane %v3864, 7
        %v4437 = vrot.slane %v4436, 2
        %v4438 = vrot.slane %v3866, 7
        %v4439 = vrot.slane %v4438, 2
        %v4440 = vrot.slane %v3874, 7
        %v4441 = vrot.slane %v4440, 2
        %v4442 = vrot.slane %v3882, 7
        %v4443 = vrot.slane %v4442, 2
        %v4444 = vrot.slane %v3881, 7
        %v4445 = vrot.slane %v4444, 2
        %v4446 = vrot.slane %v3883, 7
        %v4447 = vrot.slane %v4446, 2
        %v4448 = vrot.slane %v3925, 7
        %v4449 = vrot.slane %v4448, 2
        %v4450 = vrot.slane %v3933, 7
        %v4451 = vrot.slane %v4450, 2
        %v4452 = vrot.slane %v3932, 7
        %v4453 = vrot.slane %v4452, 2
        %v4454 = vrot.slane %v3934, 7
        %v4455 = vrot.slane %v4454, 2
        %v4456 = vrot.slane %v3942, 7
        %v4457 = vrot.slane %v4456, 2
        %v4458 = vrot.slane %v3950, 7
        %v4459 = vrot.slane %v4458, 2
        %v4460 = vrot.slane %v3949, 7
        %v4461 = vrot.slane %v4460, 2
        %v4462 = vrot.slane %v3951, 7
        %v4463 = vrot.slane %v4462, 2
        %v4528 = vmax.f32 %v3449, %v4337
        %v4529 = vmax.f32 %v3457, %v4339
        %v4530 = vmax.f32 %v3456, %v4341
        %v4531 = vmax.f32 %v3458, %v4343
        %v4532 = vmax.f32 %v3466, %v4345
        %v4533 = vmax.f32 %v3474, %v4347
        %v4534 = vmax.f32 %v3473, %v4349
        %v4535 = vmax.f32 %v3475, %v4351
        %v4536 = vmax.f32 %v3517, %v4353
        %v4537 = vmax.f32 %v3525, %v4355
        %v4538 = vmax.f32 %v3524, %v4357
        %v4539 = vmax.f32 %v3526, %v4359
        %v4540 = vmax.f32 %v3534, %v4361
        %v4541 = vmax.f32 %v3542, %v4363
        %v4542 = vmax.f32 %v3541, %v4365
        %v4543 = vmax.f32 %v3543, %v4367
        %v4544 = vmax.f32 %v3585, %v4369
        %v4545 = vmax.f32 %v3593, %v4371
        %v4546 = vmax.f32 %v3592, %v4373
        %v4547 = vmax.f32 %v3594, %v4375
        %v4548 = vmax.f32 %v3602, %v4377
        %v4549 = vmax.f32 %v3610, %v4379
        %v4550 = vmax.f32 %v3609, %v4381
        %v4551 = vmax.f32 %v3611, %v4383
        %v4552 = vmax.f32 %v3653, %v4385
        %v4553 = vmax.f32 %v3661, %v4387
        %v4554 = vmax.f32 %v3660, %v4389
        %v4555 = vmax.f32 %v3662, %v4391
        %v4556 = vmax.f32 %v3670, %v4393
        %v4557 = vmax.f32 %v3678, %v4395
        %v4558 = vmax.f32 %v3677, %v4397
        %v4559 = vmax.f32 %v3679, %v4399
        %v4560 = vmax.f32 %v3721, %v4401
        %v4561 = vmax.f32 %v3729, %v4403
        %v4562 = vmax.f32 %v3728, %v4405
        %v4563 = vmax.f32 %v3730, %v4407
        %v4564 = vmax.f32 %v3738, %v4409
        %v4565 = vmax.f32 %v3746, %v4411
        %v4566 = vmax.f32 %v3745, %v4413
        %v4567 = vmax.f32 %v3747, %v4415
        %v4568 = vmax.f32 %v3789, %v4417
        %v4569 = vmax.f32 %v3797, %v4419
        %v4570 = vmax.f32 %v3796, %v4421
        %v4571 = vmax.f32 %v3798, %v4423
        %v4572 = vmax.f32 %v3806, %v4425
        %v4573 = vmax.f32 %v3814, %v4427
        %v4574 = vmax.f32 %v3813, %v4429
        %v4575 = vmax.f32 %v3815, %v4431
        %v4576 = vmax.f32 %v3857, %v4433
        %v4577 = vmax.f32 %v3865, %v4435
        %v4578 = vmax.f32 %v3864, %v4437
        %v4579 = vmax.f32 %v3866, %v4439
        %v4580 = vmax.f32 %v3874, %v4441
        %v4581 = vmax.f32 %v3882, %v4443
        %v4582 = vmax.f32 %v3881, %v4445
        %v4583 = vmax.f32 %v3883, %v4447
        %v4584 = vmax.f32 %v3925, %v4449
        %v4585 = vmax.f32 %v3933, %v4451
        %v4586 = vmax.f32 %v3932, %v4453
        %v4587 = vmax.f32 %v3934, %v4455
        %v4588 = vmax.f32 %v3942, %v4457
        %v4589 = vmax.f32 %v3950, %v4459
        %v4590 = vmax.f32 %v3949, %v4461
        %v4591 = vmax.f32 %v3951, %v4463
        %v4592 = vmax.f32 %v4272, %v4528
        %v4593 = vmax.f32 %v4273, %v4529
        %v4594 = vmax.f32 %v4274, %v4530
        %v4595 = vmax.f32 %v4275, %v4531
        %v4596 = vmax.f32 %v4276, %v4532
        %v4597 = vmax.f32 %v4277, %v4533
        %v4598 = vmax.f32 %v4278, %v4534
        %v4599 = vmax.f32 %v4279, %v4535
        %v4600 = vmax.f32 %v4280, %v4536
        %v4601 = vmax.f32 %v4281, %v4537
        %v4602 = vmax.f32 %v4282, %v4538
        %v4603 = vmax.f32 %v4283, %v4539
        %v4604 = vmax.f32 %v4284, %v4540
        %v4605 = vmax.f32 %v4285, %v4541
        %v4606 = vmax.f32 %v4286, %v4542
        %v4607 = vmax.f32 %v4287, %v4543
        %v4608 = vmax.f32 %v4288, %v4544
        %v4609 = vmax.f32 %v4289, %v4545
        %v4610 = vmax.f32 %v4290, %v4546
        %v4611 = vmax.f32 %v4291, %v4547
        %v4612 = vmax.f32 %v4292, %v4548
        %v4613 = vmax.f32 %v4293, %v4549
        %v4614 = vmax.f32 %v4294, %v4550
        %v4615 = vmax.f32 %v4295, %v4551
        %v4616 = vmax.f32 %v4296, %v4552
        %v4617 = vmax.f32 %v4297, %v4553
        %v4618 = vmax.f32 %v4298, %v4554
        %v4619 = vmax.f32 %v4299, %v4555
        %v4620 = vmax.f32 %v4300, %v4556
        %v4621 = vmax.f32 %v4301, %v4557
        %v4622 = vmax.f32 %v4302, %v4558
        %v4623 = vmax.f32 %v4303, %v4559
        %v4624 = vmax.f32 %v4304, %v4560
        %v4625 = vmax.f32 %v4305, %v4561
        %v4626 = vmax.f32 %v4306, %v4562
        %v4627 = vmax.f32 %v4307, %v4563
        %v4628 = vmax.f32 %v4308, %v4564
        %v4629 = vmax.f32 %v4309, %v4565
        %v4630 = vmax.f32 %v4310, %v4566
        %v4631 = vmax.f32 %v4311, %v4567
        %v4632 = vmax.f32 %v4312, %v4568
        %v4633 = vmax.f32 %v4313, %v4569
        %v4634 = vmax.f32 %v4314, %v4570
        %v4635 = vmax.f32 %v4315, %v4571
        %v4636 = vmax.f32 %v4316, %v4572
        %v4637 = vmax.f32 %v4317, %v4573
        %v4638 = vmax.f32 %v4318, %v4574
        %v4639 = vmax.f32 %v4319, %v4575
        %v4640 = vmax.f32 %v4320, %v4576
        %v4641 = vmax.f32 %v4321, %v4577
        %v4642 = vmax.f32 %v4322, %v4578
        %v4643 = vmax.f32 %v4323, %v4579
        %v4644 = vmax.f32 %v4324, %v4580
        %v4645 = vmax.f32 %v4325, %v4581
        %v4646 = vmax.f32 %v4326, %v4582
        %v4647 = vmax.f32 %v4327, %v4583
        %v4648 = vmax.f32 %v4328, %v4584
        %v4649 = vmax.f32 %v4329, %v4585
        %v4650 = vmax.f32 %v4330, %v4586
        %v4651 = vmax.f32 %v4331, %v4587
        %v4652 = vmax.f32 %v4332, %v4588
        %v4653 = vmax.f32 %v4333, %v4589
        %v4654 = vmax.f32 %v4334, %v4590
        %v4655 = vmax.f32 %v4335, %v4591
        %vm4656 = vcmask 261120
        %4657 = vst.msk [vmem:[#allocation3] sm:$0xff] %vm4656, 0.0
        %vm4658 = vcmask 254976
        %4659 = vst.msk [vmem:[#allocation3 + $0x8] sm:$0x3] %vm4658, 0.0
        %4660 = vst.msk [vmem:[#allocation3 + $0x10] sm:$0xff] %vm4656, 0.0
        %4661 = vst.msk [vmem:[#allocation3 + $0x18] sm:$0x3] %vm4658, 0.0
        %4662 = vst.msk [vmem:[#allocation3 + $0x20] sm:$0xff] %vm4656, 0.0
        %4663 = vst.msk [vmem:[#allocation3 + $0x28] sm:$0x3] %vm4658, 0.0
        %4664 = vst.msk [vmem:[#allocation3 + $0x30] sm:$0xff] %vm4656, 0.0
        %4665 = vst.msk [vmem:[#allocation3 + $0x38] sm:$0x3] %vm4658, 0.0
        %4666 = vst.msk [vmem:[#allocation3 + $0x40] sm:$0xff] %vm4656, 0.0
        %4667 = vst.msk [vmem:[#allocation3 + $0x48] sm:$0x3] %vm4658, 0.0
        %4668 = vst.msk [vmem:[#allocation3 + $0x50] sm:$0xff] %vm4656, 0.0
        %4669 = vst.msk [vmem:[#allocation3 + $0x58] sm:$0x3] %vm4658, 0.0
        %4670 = vst.msk [vmem:[#allocation3 + $0x60] sm:$0xff] %vm4656, 0.0
        %4671 = vst.msk [vmem:[#allocation3 + $0x68] sm:$0x3] %vm4658, 0.0
        %4672 = vst.msk [vmem:[#allocation3 + $0x70] sm:$0xff] %vm4656, 0.0
        %4673 = vst.msk [vmem:[#allocation3 + $0x78] sm:$0x3] %vm4658, 0.0
        %4674 = vst.msk [vmem:[#allocation3 + $0x80] sm:$0xff] %vm4656, 0.0
        %4675 = vst.msk [vmem:[#allocation3 + $0x88] sm:$0x3] %vm4658, 0.0
        %4676 = vst.msk [vmem:[#allocation3 + $0x90] sm:$0xff] %vm4656, 0.0
        %4677 = vst.msk [vmem:[#allocation3 + $0x98] sm:$0x3] %vm4658, 0.0
        %v4742 = vlaneseq
        %v4743 = vshrl.u32 %v4742, 7
        %v4744 = vsub.s32 0, %v4743
        %v4745 = vrot.slane %v4592, %v4744
        %v4746 = vlaneseq
        %v4747 = vshrl.u32 %v4746, 7
        %v4748 = vsub.s32 0, %v4747
        %v4749 = vrot.slane %v4593, %v4748
        %v4750 = vlaneseq
        %v4751 = vshrl.u32 %v4750, 7
        %v4752 = vsub.s32 0, %v4751
        %v4753 = vrot.slane %v4594, %v4752
        %v4754 = vlaneseq
        %v4755 = vshrl.u32 %v4754, 7
        %v4756 = vsub.s32 0, %v4755
        %v4757 = vrot.slane %v4595, %v4756
        %v4758 = vlaneseq
        %v4759 = vshrl.u32 %v4758, 7
        %v4760 = vsub.s32 0, %v4759
        %v4761 = vrot.slane %v4596, %v4760
        %v4762 = vlaneseq
        %v4763 = vshrl.u32 %v4762, 7
        %v4764 = vsub.s32 0, %v4763
        %v4765 = vrot.slane %v4597, %v4764
        %v4766 = vlaneseq
        %v4767 = vshrl.u32 %v4766, 7
        %v4768 = vsub.s32 0, %v4767
        %v4769 = vrot.slane %v4598, %v4768
        %v4770 = vlaneseq
        %v4771 = vshrl.u32 %v4770, 7
        %v4772 = vsub.s32 0, %v4771
        %v4773 = vrot.slane %v4599, %v4772
        %v4774 = vlaneseq
        %v4775 = vshrl.u32 %v4774, 7
        %v4776 = vsub.s32 0, %v4775
        %v4777 = vrot.slane %v4600, %v4776
        %v4778 = vlaneseq
        %v4779 = vshrl.u32 %v4778, 7
        %v4780 = vsub.s32 0, %v4779
        %v4781 = vrot.slane %v4601, %v4780
        %v4782 = vlaneseq
        %v4783 = vshrl.u32 %v4782, 7
        %v4784 = vsub.s32 0, %v4783
        %v4785 = vrot.slane %v4602, %v4784
        %v4786 = vlaneseq
        %v4787 = vshrl.u32 %v4786, 7
        %v4788 = vsub.s32 0, %v4787
        %v4789 = vrot.slane %v4603, %v4788
        %v4790 = vlaneseq
        %v4791 = vshrl.u32 %v4790, 7
        %v4792 = vsub.s32 0, %v4791
        %v4793 = vrot.slane %v4604, %v4792
        %v4794 = vlaneseq
        %v4795 = vshrl.u32 %v4794, 7
        %v4796 = vsub.s32 0, %v4795
        %v4797 = vrot.slane %v4605, %v4796
        %v4798 = vlaneseq
        %v4799 = vshrl.u32 %v4798, 7
        %v4800 = vsub.s32 0, %v4799
        %v4801 = vrot.slane %v4606, %v4800
        %v4802 = vlaneseq
        %v4803 = vshrl.u32 %v4802, 7
        %v4804 = vsub.s32 0, %v4803
        %v4805 = vrot.slane %v4607, %v4804
        %v4806 = vlaneseq
        %v4807 = vshrl.u32 %v4806, 7
        %v4808 = vsub.s32 0, %v4807
        %v4809 = vrot.slane %v4608, %v4808
        %v4810 = vlaneseq
        %v4811 = vshrl.u32 %v4810, 7
        %v4812 = vsub.s32 0, %v4811
        %v4813 = vrot.slane %v4609, %v4812
        %v4814 = vlaneseq
        %v4815 = vshrl.u32 %v4814, 7
        %v4816 = vsub.s32 0, %v4815
        %v4817 = vrot.slane %v4610, %v4816
        %v4818 = vlaneseq
        %v4819 = vshrl.u32 %v4818, 7
        %v4820 = vsub.s32 0, %v4819
        %v4821 = vrot.slane %v4611, %v4820
        %v4822 = vlaneseq
        %v4823 = vshrl.u32 %v4822, 7
        %v4824 = vsub.s32 0, %v4823
        %v4825 = vrot.slane %v4612, %v4824
        %v4826 = vlaneseq
        %v4827 = vshrl.u32 %v4826, 7
        %v4828 = vsub.s32 0, %v4827
        %v4829 = vrot.slane %v4613, %v4828
        %v4830 = vlaneseq
        %v4831 = vshrl.u32 %v4830, 7
        %v4832 = vsub.s32 0, %v4831
        %v4833 = vrot.slane %v4614, %v4832
        %v4834 = vlaneseq
        %v4835 = vshrl.u32 %v4834, 7
        %v4836 = vsub.s32 0, %v4835
        %v4837 = vrot.slane %v4615, %v4836
        %v4838 = vlaneseq
        %v4839 = vshrl.u32 %v4838, 7
        %v4840 = vsub.s32 0, %v4839
        %v4841 = vrot.slane %v4616, %v4840
        %v4842 = vlaneseq
        %v4843 = vshrl.u32 %v4842, 7
        %v4844 = vsub.s32 0, %v4843
        %v4845 = vrot.slane %v4617, %v4844
        %v4846 = vlaneseq
        %v4847 = vshrl.u32 %v4846, 7
        %v4848 = vsub.s32 0, %v4847
        %v4849 = vrot.slane %v4618, %v4848
        %v4850 = vlaneseq
        %v4851 = vshrl.u32 %v4850, 7
        %v4852 = vsub.s32 0, %v4851
        %v4853 = vrot.slane %v4619, %v4852
        %v4854 = vlaneseq
        %v4855 = vshrl.u32 %v4854, 7
        %v4856 = vsub.s32 0, %v4855
        %v4857 = vrot.slane %v4620, %v4856
        %v4858 = vlaneseq
        %v4859 = vshrl.u32 %v4858, 7
        %v4860 = vsub.s32 0, %v4859
        %v4861 = vrot.slane %v4621, %v4860
        %v4862 = vlaneseq
        %v4863 = vshrl.u32 %v4862, 7
        %v4864 = vsub.s32 0, %v4863
        %v4865 = vrot.slane %v4622, %v4864
        %v4866 = vlaneseq
        %v4867 = vshrl.u32 %v4866, 7
        %v4868 = vsub.s32 0, %v4867
        %v4869 = vrot.slane %v4623, %v4868
        %v4870 = vlaneseq
        %v4871 = vshrl.u32 %v4870, 7
        %v4872 = vsub.s32 0, %v4871
        %v4873 = vrot.slane %v4624, %v4872
        %v4874 = vlaneseq
        %v4875 = vshrl.u32 %v4874, 7
        %v4876 = vsub.s32 0, %v4875
        %v4877 = vrot.slane %v4625, %v4876
        %v4878 = vlaneseq
        %v4879 = vshrl.u32 %v4878, 7
        %v4880 = vsub.s32 0, %v4879
        %v4881 = vrot.slane %v4626, %v4880
        %v4882 = vlaneseq
        %v4883 = vshrl.u32 %v4882, 7
        %v4884 = vsub.s32 0, %v4883
        %v4885 = vrot.slane %v4627, %v4884
        %v4886 = vlaneseq
        %v4887 = vshrl.u32 %v4886, 7
        %v4888 = vsub.s32 0, %v4887
        %v4889 = vrot.slane %v4628, %v4888
        %v4890 = vlaneseq
        %v4891 = vshrl.u32 %v4890, 7
        %v4892 = vsub.s32 0, %v4891
        %v4893 = vrot.slane %v4629, %v4892
        %v4894 = vlaneseq
        %v4895 = vshrl.u32 %v4894, 7
        %v4896 = vsub.s32 0, %v4895
        %v4897 = vrot.slane %v4630, %v4896
        %v4898 = vlaneseq
        %v4899 = vshrl.u32 %v4898, 7
        %v4900 = vsub.s32 0, %v4899
        %v4901 = vrot.slane %v4631, %v4900
        %v4902 = vlaneseq
        %v4903 = vshrl.u32 %v4902, 7
        %v4904 = vsub.s32 0, %v4903
        %v4905 = vrot.slane %v4632, %v4904
        %v4906 = vlaneseq
        %v4907 = vshrl.u32 %v4906, 7
        %v4908 = vsub.s32 0, %v4907
        %v4909 = vrot.slane %v4633, %v4908
        %v4910 = vlaneseq
        %v4911 = vshrl.u32 %v4910, 7
        %v4912 = vsub.s32 0, %v4911
        %v4913 = vrot.slane %v4634, %v4912
        %v4914 = vlaneseq
        %v4915 = vshrl.u32 %v4914, 7
        %v4916 = vsub.s32 0, %v4915
        %v4917 = vrot.slane %v4635, %v4916
        %v4918 = vlaneseq
        %v4919 = vshrl.u32 %v4918, 7
        %v4920 = vsub.s32 0, %v4919
        %v4921 = vrot.slane %v4636, %v4920
        %v4922 = vlaneseq
        %v4923 = vshrl.u32 %v4922, 7
        %v4924 = vsub.s32 0, %v4923
        %v4925 = vrot.slane %v4637, %v4924
        %v4926 = vlaneseq
        %v4927 = vshrl.u32 %v4926, 7
        %v4928 = vsub.s32 0, %v4927
        %v4929 = vrot.slane %v4638, %v4928
        %v4930 = vlaneseq
        %v4931 = vshrl.u32 %v4930, 7
        %v4932 = vsub.s32 0, %v4931
        %v4933 = vrot.slane %v4639, %v4932
        %v4934 = vlaneseq
        %v4935 = vshrl.u32 %v4934, 7
        %v4936 = vsub.s32 0, %v4935
        %v4937 = vrot.slane %v4640, %v4936
        %v4938 = vlaneseq
        %v4939 = vshrl.u32 %v4938, 7
        %v4940 = vsub.s32 0, %v4939
        %v4941 = vrot.slane %v4641, %v4940
        %v4942 = vlaneseq
        %v4943 = vshrl.u32 %v4942, 7
        %v4944 = vsub.s32 0, %v4943
        %v4945 = vrot.slane %v4642, %v4944
        %v4946 = vlaneseq
        %v4947 = vshrl.u32 %v4946, 7
        %v4948 = vsub.s32 0, %v4947
        %v4949 = vrot.slane %v4643, %v4948
        %v4950 = vlaneseq
        %v4951 = vshrl.u32 %v4950, 7
        %v4952 = vsub.s32 0, %v4951
        %v4953 = vrot.slane %v4644, %v4952
        %v4954 = vlaneseq
        %v4955 = vshrl.u32 %v4954, 7
        %v4956 = vsub.s32 0, %v4955
        %v4957 = vrot.slane %v4645, %v4956
        %v4958 = vlaneseq
        %v4959 = vshrl.u32 %v4958, 7
        %v4960 = vsub.s32 0, %v4959
        %v4961 = vrot.slane %v4646, %v4960
        %v4962 = vlaneseq
        %v4963 = vshrl.u32 %v4962, 7
        %v4964 = vsub.s32 0, %v4963
        %v4965 = vrot.slane %v4647, %v4964
        %v4966 = vlaneseq
        %v4967 = vshrl.u32 %v4966, 7
        %v4968 = vsub.s32 0, %v4967
        %v4969 = vrot.slane %v4648, %v4968
        %v4970 = vlaneseq
        %v4971 = vshrl.u32 %v4970, 7
        %v4972 = vsub.s32 0, %v4971
        %v4973 = vrot.slane %v4649, %v4972
        %v4974 = vlaneseq
        %v4975 = vshrl.u32 %v4974, 7
        %v4976 = vsub.s32 0, %v4975
        %v4977 = vrot.slane %v4650, %v4976
        %v4978 = vlaneseq
        %v4979 = vshrl.u32 %v4978, 7
        %v4980 = vsub.s32 0, %v4979
        %v4981 = vrot.slane %v4651, %v4980
        %v4982 = vlaneseq
        %v4983 = vshrl.u32 %v4982, 7
        %v4984 = vsub.s32 0, %v4983
        %v4985 = vrot.slane %v4652, %v4984
        %v4986 = vlaneseq
        %v4987 = vshrl.u32 %v4986, 7
        %v4988 = vsub.s32 0, %v4987
        %v4989 = vrot.slane %v4653, %v4988
        %v4990 = vlaneseq
        %v4991 = vshrl.u32 %v4990, 7
        %v4992 = vsub.s32 0, %v4991
        %v4993 = vrot.slane %v4654, %v4992
        %v4994 = vlaneseq
        %v4995 = vshrl.u32 %v4994, 7
        %v4996 = vsub.s32 0, %v4995
        %v4997 = vrot.slane %v4655, %v4996
        %vm4998 = vcmask 1041409
        %v4999 = vsel %vm4998, %v4749, %v4745
        %vm5000 = vcmask 1042434
        %v5001 = vsel %vm5000, %v4753, %v4999
        %vm5002 = vcmask 1043459
        %v5003 = vsel %vm5002, %v4757, %v5001
        %vm5004 = vcmask 1044484
        %v5005 = vsel %vm5004, %v4761, %v5003
        %vm5006 = vcmask 1045509
        %v5007 = vsel %vm5006, %v4765, %v5005
        %vm5008 = vcmask 1046534
        %v5009 = vsel %vm5008, %v4769, %v5007
        %vm5010 = vcmask 1047559
        %v5011 = vsel %vm5010, %v4773, %v5009
        %v5012 = vsel %vm4998, %v4781, %v4777
        %v5013 = vsel %vm5000, %v4785, %v5012
        %v5014 = vsel %vm5002, %v4789, %v5013
        %v5015 = vsel %vm5004, %v4793, %v5014
        %v5016 = vsel %vm5006, %v4797, %v5015
        %v5017 = vsel %vm5008, %v4801, %v5016
        %v5018 = vsel %vm5010, %v4805, %v5017
        %v5019 = vsel %vm4998, %v4813, %v4809
        %v5020 = vsel %vm5000, %v4817, %v5019
        %v5021 = vsel %vm5002, %v4821, %v5020
        %v5022 = vsel %vm5004, %v4825, %v5021
        %v5023 = vsel %vm5006, %v4829, %v5022
        %v5024 = vsel %vm5008, %v4833, %v5023
        %v5025 = vsel %vm5010, %v4837, %v5024
        %v5026 = vsel %vm4998, %v4845, %v4841
        %v5027 = vsel %vm5000, %v4849, %v5026
        %v5028 = vsel %vm5002, %v4853, %v5027
        %v5029 = vsel %vm5004, %v4857, %v5028
        %v5030 = vsel %vm5006, %v4861, %v5029
        %v5031 = vsel %vm5008, %v4865, %v5030
        %v5032 = vsel %vm5010, %v4869, %v5031
        %v5033 = vsel %vm4998, %v4877, %v4873
        %v5034 = vsel %vm5000, %v4881, %v5033
        %v5035 = vsel %vm5002, %v4885, %v5034
        %v5036 = vsel %vm5004, %v4889, %v5035
        %v5037 = vsel %vm5006, %v4893, %v5036
        %v5038 = vsel %vm5008, %v4897, %v5037
        %v5039 = vsel %vm5010, %v4901, %v5038
        %v5040 = vsel %vm4998, %v4909, %v4905
        %v5041 = vsel %vm5000, %v4913, %v5040
        %v5042 = vsel %vm5002, %v4917, %v5041
        %v5043 = vsel %vm5004, %v4921, %v5042
        %v5044 = vsel %vm5006, %v4925, %v5043
        %v5045 = vsel %vm5008, %v4929, %v5044
        %v5046 = vsel %vm5010, %v4933, %v5045
        %v5047 = vsel %vm4998, %v4941, %v4937
        %v5048 = vsel %vm5000, %v4945, %v5047
        %v5049 = vsel %vm5002, %v4949, %v5048
        %v5050 = vsel %vm5004, %v4953, %v5049
        %v5051 = vsel %vm5006, %v4957, %v5050
        %v5052 = vsel %vm5008, %v4961, %v5051
        %v5053 = vsel %vm5010, %v4965, %v5052
        %v5054 = vsel %vm4998, %v4973, %v4969
        %v5055 = vsel %vm5000, %v4977, %v5054
        %v5056 = vsel %vm5002, %v4981, %v5055
        %v5057 = vsel %vm5004, %v4985, %v5056
        %v5058 = vsel %vm5006, %v4989, %v5057
        %v5059 = vsel %vm5008, %v4993, %v5058
        %v5060 = vsel %vm5010, %v4997, %v5059
        %s5069 = scalar_lea.vmem [#allocation3], 16
        %5070 = vst.msk [vmem:[%s5069 + $0x1] sm:$0xff] %vm4656, %v5011
        %5071 = vst.msk [vmem:[%s5069 + $0x11] sm:$0xff] %vm4656, %v5018
        %5072 = vst.msk [vmem:[%s5069 + $0x21] sm:$0xff] %vm4656, %v5025
        %5073 = vst.msk [vmem:[%s5069 + $0x31] sm:$0xff] %vm4656, %v5032
        %5074 = vst.msk [vmem:[%s5069 + $0x41] sm:$0xff] %vm4656, %v5039
        %5075 = vst.msk [vmem:[%s5069 + $0x51] sm:$0xff] %vm4656, %v5046
        %5076 = vst.msk [vmem:[%s5069 + $0x61] sm:$0xff] %vm4656, %v5053
        %5077 = vst.msk [vmem:[%s5069 + $0x71] sm:$0xff] %vm4656, %v5060
        %v5078 = vld [vmem:[#allocation3] sm:$0xff]
        %v5079 = vld [vmem:[#allocation3 + $0x8] sm:$0x3]
        %v5080 = vld [vmem:[#allocation3 + $0x10] sm:$0xff]
        %v5081 = vld [vmem:[#allocation3 + $0x18] sm:$0x3]
        %v5082 = vld [vmem:[#allocation3 + $0x20] sm:$0xff]
        %v5083 = vld [vmem:[#allocation3 + $0x28] sm:$0x3]
        %v5084 = vld [vmem:[#allocation3 + $0x30] sm:$0xff]
        %v5085 = vld [vmem:[#allocation3 + $0x38] sm:$0x3]
        %v5086 = vld [vmem:[#allocation3 + $0x40] sm:$0xff]
        %v5087 = vld [vmem:[#allocation3 + $0x48] sm:$0x3]
        %v5088 = vld [vmem:[#allocation3 + $0x50] sm:$0xff]
        %v5089 = vld [vmem:[#allocation3 + $0x58] sm:$0x3]
        %v5090 = vld [vmem:[#allocation3 + $0x60] sm:$0xff]
        %v5091 = vld [vmem:[#allocation3 + $0x68] sm:$0x3]
        %v5092 = vld [vmem:[#allocation3 + $0x70] sm:$0xff]
        %v5093 = vld [vmem:[#allocation3 + $0x78] sm:$0x3]
        %v5094 = vld [vmem:[#allocation3 + $0x80] sm:$0xff]
        %v5095 = vld [vmem:[#allocation3 + $0x88] sm:$0x3]
        %v5096 = vld [vmem:[#allocation3 + $0x90] sm:$0xff]
        %v5097 = vld [vmem:[#allocation3 + $0x98] sm:$0x3]
        %v5098 = vld [vmem:[%s3] sm:$0xff]
        %v5099 = vld [vmem:[%s3 + $0x8] sm:$0xff]
        %v5100 = vld [vmem:[%s3 + $0x10] sm:$0xff]
        %v5101 = vld [vmem:[%s3 + $0x18] sm:$0xff]
        %s5102 = scalar_lea.vmem %s3, 96
        %v5103 = vld [vmem:[%s5102] sm:$0xff]
        %v5104 = vld [vmem:[%s5102 + $0x8] sm:$0xff]
        %v5105 = vld [vmem:[%s5102 + $0x10] sm:$0xff]
        %v5106 = vld [vmem:[%s5102 + $0x18] sm:$0xff]
        %v5108 = vsel %vm4656, %v5080, 0
        %v5111 = vsel %vm4656, %v5082, 0
        %v5114 = vsel %vm4656, %v5084, 0
        %v5117 = vsel %vm4656, %v5086, 0
        %v5120 = vsel %vm4656, %v5088, 0
        %v5123 = vsel %vm4656, %v5090, 0
        %v5126 = vsel %vm4656, %v5092, 0
        %v5129 = vsel %vm4656, %v5094, 0
        %5131 = vmatprep.subr.mxu0 0.0
        %5132 = vmatpush1.msra.mxu0 0.0
        %5133 = vmatprep.subr.mxu0 0.0
        %5134 = vmatpush1.msra.mxu0 0.0
        %5135 = vmatprep.subr.mxu0 0.0
        %5136 = vmatpush1.msra.mxu0 0.0
        %5137 = vmatprep.subr.mxu0 0.0
        %5138 = vmatpush1.msra.mxu0 0.0
        %5139 = vmatprep.subr.mxu0 0.0
        %5140 = vmatpush1.msra.mxu0 0.0
        %5141 = vmatprep.subr.mxu0 0.0
        %5142 = vmatpush1.msra.mxu0 0.0
        %5143 = vmatprep.subr.mxu0 0.0
        %5144 = vmatpush1.msra.mxu0 0.0
        %5145 = vmatprep.subr.mxu0 0.0
        %5146 = vmatpush1.msra.mxu0 0.0
        %5147 = vmatprep.subr.mxu0 0.0
        %5148 = vmatpush1.msra.mxu0 0.0
        %5149 = vmatprep.subr.mxu0 0.0
        %5150 = vmatpush1.msra.mxu0 0.0
        %5151 = vmatprep.subr.mxu0 0.0
        %5152 = vmatpush1.msra.mxu0 0.0
        %5153 = vmatprep.subr.mxu0 0.0
        %5154 = vmatpush1.msra.mxu0 0.0
        %5155 = vmatprep.subr.mxu0 0.0
        %5156 = vmatpush1.msra.mxu0 %v5106
        %5157 = vmatprep.subr.mxu0 0.0
        %5158 = vmatpush1.msra.mxu0 %v5105
        %5159 = vmatprep.subr.mxu0 0.0
        %5160 = vmatpush1.msra.mxu0 %v5104
        %5161 = vmatprep.subr.mxu0 0.0
        %5162 = vmatpush1.msra.mxu0 %v5103
        %5163 = vmatprep.subr.mxu0 0.0
        %5164 = vmatpush2.msra.mxu0 0.0
        %5165 = vmatprep.subr.mxu0 0.0
        %5166 = vmatpush2.msra.mxu0 0.0
        %5167 = vmatprep.subr.mxu0 0.0
        %5168 = vmatpush2.msra.mxu0 0.0
        %5169 = vmatprep.subr.mxu0 0.0
        %5170 = vmatpush2.msra.mxu0 0.0
        %5171 = vmatprep.subr.mxu0 0.0
        %5172 = vmatpush2.msra.mxu0 0.0
        %5173 = vmatprep.subr.mxu0 0.0
        %5174 = vmatpush2.msra.mxu0 0.0
        %5175 = vmatprep.subr.mxu0 0.0
        %5176 = vmatpush2.msra.mxu0 0.0
        %5177 = vmatprep.subr.mxu0 0.0
        %5178 = vmatpush2.msra.mxu0 0.0
        %5179 = vmatprep.subr.mxu0 0.0
        %5180 = vmatpush2.msra.mxu0 0.0
        %5181 = vmatprep.subr.mxu0 0.0
        %5182 = vmatpush2.msra.mxu0 0.0
        %5183 = vmatprep.subr.mxu0 0.0
        %5184 = vmatpush2.msra.mxu0 0.0
        %5185 = vmatprep.subr.mxu0 0.0
        %5186 = vmatpush2.msra.mxu0 0.0
        %5187 = vmatprep.subr.mxu0 0.0
        %5188 = vmatpush2.msra.mxu0 0.0
        %5189 = vmatprep.subr.mxu0 0.0
        %5190 = vmatpush2.msra.mxu0 0.0
        %5191 = vmatprep.subr.mxu0 0.0
        %5192 = vmatpush2.msra.mxu0 0.0
        %5193 = vmatprep.subr.mxu0 0.0
        %5194 = vmatpush2.msra.mxu0 0.0
        %5195 = vmatprep.mubr.f32.mxu0 0.0
        %5196 = vmatmul.mubr.f32.gmra.mxu0 %v5108
        %v5197 = vpop.f32.mrf.mxu0
        %v5198 = vadd.f32 0.0, %v5197
        %v5199 = vpop.f32.mrf.mxu0
        %5200 = vmatprep.mubr.f32.mxu0 0.0
        %5201 = vmatmul.mubr.f32.gmra.mxu0 %v5111
        %v5202 = vpop.f32.mrf.mxu0
        %v5203 = vadd.f32 0.0, %v5202
        %v5204 = vpop.f32.mrf.mxu0
        %5205 = vmatprep.mubr.f32.mxu0 0.0
        %5206 = vmatmul.mubr.f32.gmra.mxu0 %v5114
        %v5207 = vpop.f32.mrf.mxu0
        %v5208 = vadd.f32 0.0, %v5207
        %v5209 = vpop.f32.mrf.mxu0
        %5210 = vmatprep.mubr.f32.mxu0 0.0
        %5211 = vmatmul.mubr.f32.gmra.mxu0 %v5117
        %v5212 = vpop.f32.mrf.mxu0
        %v5213 = vadd.f32 0.0, %v5212
        %v5214 = vpop.f32.mrf.mxu0
        %5215 = vmatprep.mubr.f32.mxu0 0.0
        %5216 = vmatmul.mubr.f32.gmra.mxu0 %v5120
        %v5217 = vpop.f32.mrf.mxu0
        %v5218 = vadd.f32 0.0, %v5217
        %v5219 = vpop.f32.mrf.mxu0
        %5220 = vmatprep.mubr.f32.mxu0 0.0
        %5221 = vmatmul.mubr.f32.gmra.mxu0 %v5123
        %v5222 = vpop.f32.mrf.mxu0
        %v5223 = vadd.f32 0.0, %v5222
        %v5224 = vpop.f32.mrf.mxu0
        %5225 = vmatprep.mubr.f32.mxu0 0.0
        %5226 = vmatmul.mubr.f32.gmra.mxu0 %v5126
        %v5227 = vpop.f32.mrf.mxu0
        %v5228 = vadd.f32 0.0, %v5227
        %v5229 = vpop.f32.mrf.mxu0
        %5230 = vmatprep.mubr.f32.mxu0 0.0
        %5231 = vmatmul.mubr.f32.gmra.mxu0 %v5129
        %v5232 = vpop.f32.mrf.mxu0
        %v5233 = vadd.f32 0.0, %v5232
        %v5234 = vpop.f32.mrf.mxu0
        %5235 = vdwg.mxu0
        %v5237 = vsel %vm4656, %v5078, 0
        %5239 = vmatprep.subr.mxu0 0.0
        %5240 = vmatpush1.msra.mxu0 0.0
        %5241 = vmatprep.subr.mxu0 0.0
        %5242 = vmatpush1.msra.mxu0 0.0
        %5243 = vmatprep.subr.mxu0 0.0
        %5244 = vmatpush1.msra.mxu0 0.0
        %5245 = vmatprep.subr.mxu0 0.0
        %5246 = vmatpush1.msra.mxu0 0.0
        %5247 = vmatprep.subr.mxu0 0.0
        %5248 = vmatpush1.msra.mxu0 0.0
        %5249 = vmatprep.subr.mxu0 0.0
        %5250 = vmatpush1.msra.mxu0 0.0
        %5251 = vmatprep.subr.mxu0 0.0
        %5252 = vmatpush1.msra.mxu0 0.0
        %5253 = vmatprep.subr.mxu0 0.0
        %5254 = vmatpush1.msra.mxu0 0.0
        %5255 = vmatprep.subr.mxu0 0.0
        %5256 = vmatpush1.msra.mxu0 0.0
        %5257 = vmatprep.subr.mxu0 0.0
        %5258 = vmatpush1.msra.mxu0 0.0
        %5259 = vmatprep.subr.mxu0 0.0
        %5260 = vmatpush1.msra.mxu0 0.0
        %5261 = vmatprep.subr.mxu0 0.0
        %5262 = vmatpush1.msra.mxu0 0.0
        %5263 = vmatprep.subr.mxu0 0.0
        %5264 = vmatpush1.msra.mxu0 %v5101
        %5265 = vmatprep.subr.mxu0 0.0
        %5266 = vmatpush1.msra.mxu0 %v5100
        %5267 = vmatprep.subr.mxu0 0.0
        %5268 = vmatpush1.msra.mxu0 %v5099
        %5269 = vmatprep.subr.mxu0 0.0
        %5270 = vmatpush1.msra.mxu0 %v5098
        %5271 = vmatprep.subr.mxu0 0.0
        %5272 = vmatpush2.msra.mxu0 0.0
        %5273 = vmatprep.subr.mxu0 0.0
        %5274 = vmatpush2.msra.mxu0 0.0
        %5275 = vmatprep.subr.mxu0 0.0
        %5276 = vmatpush2.msra.mxu0 0.0
        %5277 = vmatprep.subr.mxu0 0.0
        %5278 = vmatpush2.msra.mxu0 0.0
        %5279 = vmatprep.subr.mxu0 0.0
        %5280 = vmatpush2.msra.mxu0 0.0
        %5281 = vmatprep.subr.mxu0 0.0
        %5282 = vmatpush2.msra.mxu0 0.0
        %5283 = vmatprep.subr.mxu0 0.0
        %5284 = vmatpush2.msra.mxu0 0.0
        %5285 = vmatprep.subr.mxu0 0.0
        %5286 = vmatpush2.msra.mxu0 0.0
        %5287 = vmatprep.subr.mxu0 0.0
        %5288 = vmatpush2.msra.mxu0 0.0
        %5289 = vmatprep.subr.mxu0 0.0
        %5290 = vmatpush2.msra.mxu0 0.0
        %5291 = vmatprep.subr.mxu0 0.0
        %5292 = vmatpush2.msra.mxu0 0.0
        %5293 = vmatprep.subr.mxu0 0.0
        %5294 = vmatpush2.msra.mxu0 0.0
        %5295 = vmatprep.subr.mxu0 0.0
        %5296 = vmatpush2.msra.mxu0 0.0
        %5297 = vmatprep.subr.mxu0 0.0
        %5298 = vmatpush2.msra.mxu0 0.0
        %5299 = vmatprep.subr.mxu0 0.0
        %5300 = vmatpush2.msra.mxu0 0.0
        %5301 = vmatprep.subr.mxu0 0.0
        %5302 = vmatpush2.msra.mxu0 0.0
        %5303 = vmatprep.mubr.f32.mxu0 0.0
        %5304 = vmatmul.mubr.f32.gmra.mxu0 %v5237
        %v5305 = vpop.f32.mrf.mxu0
        %v5306 = vadd.f32 %v5198, %v5305
        %v5307 = vpop.f32.mrf.mxu0
        %5308 = vmatprep.mubr.f32.mxu0 0.0
        %5309 = vmatmul.mubr.f32.gmra.mxu0 %v5108
        %v5310 = vpop.f32.mrf.mxu0
        %v5311 = vadd.f32 %v5203, %v5310
        %v5312 = vpop.f32.mrf.mxu0
        %5313 = vmatprep.mubr.f32.mxu0 0.0
        %5314 = vmatmul.mubr.f32.gmra.mxu0 %v5111
        %v5315 = vpop.f32.mrf.mxu0
        %v5316 = vadd.f32 %v5208, %v5315
        %v5317 = vpop.f32.mrf.mxu0
        %5318 = vmatprep.mubr.f32.mxu0 0.0
        %5319 = vmatmul.mubr.f32.gmra.mxu0 %v5114
        %v5320 = vpop.f32.mrf.mxu0
        %v5321 = vadd.f32 %v5213, %v5320
        %v5322 = vpop.f32.mrf.mxu0
        %5323 = vmatprep.mubr.f32.mxu0 0.0
        %5324 = vmatmul.mubr.f32.gmra.mxu0 %v5117
        %v5325 = vpop.f32.mrf.mxu0
        %v5326 = vadd.f32 %v5218, %v5325
        %v5327 = vpop.f32.mrf.mxu0
        %5328 = vmatprep.mubr.f32.mxu0 0.0
        %5329 = vmatmul.mubr.f32.gmra.mxu0 %v5120
        %v5330 = vpop.f32.mrf.mxu0
        %v5331 = vadd.f32 %v5223, %v5330
        %v5332 = vpop.f32.mrf.mxu0
        %5333 = vmatprep.mubr.f32.mxu0 0.0
        %5334 = vmatmul.mubr.f32.gmra.mxu0 %v5123
        %v5335 = vpop.f32.mrf.mxu0
        %v5336 = vadd.f32 %v5228, %v5335
        %v5337 = vpop.f32.mrf.mxu0
        %5338 = vmatprep.mubr.f32.mxu0 0.0
        %5339 = vmatmul.mubr.f32.gmra.mxu0 %v5126
        %v5340 = vpop.f32.mrf.mxu0
        %v5341 = vadd.f32 %v5233, %v5340
        %v5342 = vpop.f32.mrf.mxu0
        %5343 = vdwg.mxu0
        %s5344 = scalar_lea.vmem %s3, 192
        %v5345 = vld [vmem:[%s5344] sm:$0xff]
        %v5346 = vld [vmem:[%s5344 + $0x8] sm:$0xff]
        %v5347 = vld [vmem:[%s5344 + $0x10] sm:$0xff]
        %v5348 = vld [vmem:[%s5344 + $0x18] sm:$0xff]
        %v5350 = vsel %vm4656, %v5096, 0
        %5352 = vmatprep.subr.mxu0 0.0
        %5353 = vmatpush1.msra.mxu0 0.0
        %5354 = vmatprep.subr.mxu0 0.0
        %5355 = vmatpush1.msra.mxu0 0.0
        %5356 = vmatprep.subr.mxu0 0.0
        %5357 = vmatpush1.msra.mxu0 0.0
        %5358 = vmatprep.subr.mxu0 0.0
        %5359 = vmatpush1.msra.mxu0 0.0
        %5360 = vmatprep.subr.mxu0 0.0
        %5361 = vmatpush1.msra.mxu0 0.0
        %5362 = vmatprep.subr.mxu0 0.0
        %5363 = vmatpush1.msra.mxu0 0.0
        %5364 = vmatprep.subr.mxu0 0.0
        %5365 = vmatpush1.msra.mxu0 0.0
        %5366 = vmatprep.subr.mxu0 0.0
        %5367 = vmatpush1.msra.mxu0 0.0
        %5368 = vmatprep.subr.mxu0 0.0
        %5369 = vmatpush1.msra.mxu0 0.0
        %5370 = vmatprep.subr.mxu0 0.0
        %5371 = vmatpush1.msra.mxu0 0.0
        %5372 = vmatprep.subr.mxu0 0.0
        %5373 = vmatpush1.msra.mxu0 0.0
        %5374 = vmatprep.subr.mxu0 0.0
        %5375 = vmatpush1.msra.mxu0 0.0
        %5376 = vmatprep.subr.mxu0 0.0
        %5377 = vmatpush1.msra.mxu0 %v5348
        %5378 = vmatprep.subr.mxu0 0.0
        %5379 = vmatpush1.msra.mxu0 %v5347
        %5380 = vmatprep.subr.mxu0 0.0
        %5381 = vmatpush1.msra.mxu0 %v5346
        %5382 = vmatprep.subr.mxu0 0.0
        %5383 = vmatpush1.msra.mxu0 %v5345
        %5384 = vmatprep.subr.mxu0 0.0
        %5385 = vmatpush2.msra.mxu0 0.0
        %5386 = vmatprep.subr.mxu0 0.0
        %5387 = vmatpush2.msra.mxu0 0.0
        %5388 = vmatprep.subr.mxu0 0.0
        %5389 = vmatpush2.msra.mxu0 0.0
        %5390 = vmatprep.subr.mxu0 0.0
        %5391 = vmatpush2.msra.mxu0 0.0
        %5392 = vmatprep.subr.mxu0 0.0
        %5393 = vmatpush2.msra.mxu0 0.0
        %5394 = vmatprep.subr.mxu0 0.0
        %5395 = vmatpush2.msra.mxu0 0.0
        %5396 = vmatprep.subr.mxu0 0.0
        %5397 = vmatpush2.msra.mxu0 0.0
        %5398 = vmatprep.subr.mxu0 0.0
        %5399 = vmatpush2.msra.mxu0 0.0
        %5400 = vmatprep.subr.mxu0 0.0
        %5401 = vmatpush2.msra.mxu0 0.0
        %5402 = vmatprep.subr.mxu0 0.0
        %5403 = vmatpush2.msra.mxu0 0.0
        %5404 = vmatprep.subr.mxu0 0.0
        %5405 = vmatpush2.msra.mxu0 0.0
        %5406 = vmatprep.subr.mxu0 0.0
        %5407 = vmatpush2.msra.mxu0 0.0
        %5408 = vmatprep.subr.mxu0 0.0
        %5409 = vmatpush2.msra.mxu0 0.0
        %5410 = vmatprep.subr.mxu0 0.0
        %5411 = vmatpush2.msra.mxu0 0.0
        %5412 = vmatprep.subr.mxu0 0.0
        %5413 = vmatpush2.msra.mxu0 0.0
        %5414 = vmatprep.subr.mxu0 0.0
        %5415 = vmatpush2.msra.mxu0 0.0
        %5416 = vmatprep.mubr.f32.mxu0 0.0
        %5417 = vmatmul.mubr.f32.gmra.mxu0 %v5111
        %v5418 = vpop.f32.mrf.mxu0
        %v5419 = vadd.f32 0.0, %v5418
        %v5420 = vpop.f32.mrf.mxu0
        %5421 = vmatprep.mubr.f32.mxu0 0.0
        %5422 = vmatmul.mubr.f32.gmra.mxu0 %v5114
        %v5423 = vpop.f32.mrf.mxu0
        %v5424 = vadd.f32 0.0, %v5423
        %v5425 = vpop.f32.mrf.mxu0
        %5426 = vmatprep.mubr.f32.mxu0 0.0
        %5427 = vmatmul.mubr.f32.gmra.mxu0 %v5117
        %v5428 = vpop.f32.mrf.mxu0
        %v5429 = vadd.f32 0.0, %v5428
        %v5430 = vpop.f32.mrf.mxu0
        %5431 = vmatprep.mubr.f32.mxu0 0.0
        %5432 = vmatmul.mubr.f32.gmra.mxu0 %v5120
        %v5433 = vpop.f32.mrf.mxu0
        %v5434 = vadd.f32 0.0, %v5433
        %v5435 = vpop.f32.mrf.mxu0
        %5436 = vmatprep.mubr.f32.mxu0 0.0
        %5437 = vmatmul.mubr.f32.gmra.mxu0 %v5123
        %v5438 = vpop.f32.mrf.mxu0
        %v5439 = vadd.f32 0.0, %v5438
        %v5440 = vpop.f32.mrf.mxu0
        %5441 = vmatprep.mubr.f32.mxu0 0.0
        %5442 = vmatmul.mubr.f32.gmra.mxu0 %v5126
        %v5443 = vpop.f32.mrf.mxu0
        %v5444 = vadd.f32 0.0, %v5443
        %v5445 = vpop.f32.mrf.mxu0
        %5446 = vmatprep.mubr.f32.mxu0 0.0
        %5447 = vmatmul.mubr.f32.gmra.mxu0 %v5129
        %v5448 = vpop.f32.mrf.mxu0
        %v5449 = vadd.f32 0.0, %v5448
        %v5450 = vpop.f32.mrf.mxu0
        %5451 = vmatprep.mubr.f32.mxu0 0.0
        %5452 = vmatmul.mubr.f32.gmra.mxu0 %v5350
        %v5453 = vpop.f32.mrf.mxu0
        %v5454 = vadd.f32 0.0, %v5453
        %v5455 = vpop.f32.mrf.mxu0
        %5456 = vdwg.mxu0
        %v5457 = vadd.f32 %v5306, %v5419
        %v5458 = vadd.f32 %v5311, %v5424
        %v5459 = vadd.f32 %v5316, %v5429
        %v5460 = vadd.f32 %v5321, %v5434
        %v5461 = vadd.f32 %v5326, %v5439
        %v5462 = vadd.f32 %v5331, %v5444
        %v5463 = vadd.f32 %v5336, %v5449
        %v5464 = vadd.f32 %v5341, %v5454
        %v5473 = vrot.slane %v5078, 1
        %v5474 = vrot.slane %v5079, 1
        %v5475 = vsel %vm1405, %v5473, %v5474
        %v5476 = vrot.slane %v5080, 1
        %v5477 = vrot.slane %v5081, 1
        %v5478 = vsel %vm1405, %v5476, %v5477
        %v5479 = vrot.slane %v5082, 1
        %v5480 = vrot.slane %v5083, 1
        %v5481 = vsel %vm1405, %v5479, %v5480
        %v5482 = vrot.slane %v5084, 1
        %v5483 = vrot.slane %v5085, 1
        %v5484 = vsel %vm1405, %v5482, %v5483
        %v5485 = vrot.slane %v5086, 1
        %v5486 = vrot.slane %v5087, 1
        %v5487 = vsel %vm1405, %v5485, %v5486
        %v5488 = vrot.slane %v5088, 1
        %v5489 = vrot.slane %v5089, 1
        %v5490 = vsel %vm1405, %v5488, %v5489
        %v5491 = vrot.slane %v5090, 1
        %v5492 = vrot.slane %v5091, 1
        %v5493 = vsel %vm1405, %v5491, %v5492
        %v5494 = vrot.slane %v5092, 1
        %v5495 = vrot.slane %v5093, 1
        %v5496 = vsel %vm1405, %v5494, %v5495
        %s5497 = scalar_lea.vmem %s3, 32
        %v5498 = vld [vmem:[%s5497] sm:$0xff]
        %v5499 = vld [vmem:[%s5497 + $0x8] sm:$0xff]
        %v5500 = vld [vmem:[%s5497 + $0x10] sm:$0xff]
        %v5501 = vld [vmem:[%s5497 + $0x18] sm:$0xff]
        %v5502 = vsel %vm4656, %v5475, 0
        %v5504 = vsel %vm4656, %v5478, 0
        %v5506 = vsel %vm4656, %v5481, 0
        %v5508 = vsel %vm4656, %v5484, 0
        %v5510 = vsel %vm4656, %v5487, 0
        %v5512 = vsel %vm4656, %v5490, 0
        %v5514 = vsel %vm4656, %v5493, 0
        %v5516 = vsel %vm4656, %v5496, 0
        %5518 = vmatprep.subr.mxu0 0.0
        %5519 = vmatpush1.msra.mxu0 0.0
        %5520 = vmatprep.subr.mxu0 0.0
        %5521 = vmatpush1.msra.mxu0 0.0
        %5522 = vmatprep.subr.mxu0 0.0
        %5523 = vmatpush1.msra.mxu0 0.0
        %5524 = vmatprep.subr.mxu0 0.0
        %5525 = vmatpush1.msra.mxu0 0.0
        %5526 = vmatprep.subr.mxu0 0.0
        %5527 = vmatpush1.msra.mxu0 0.0
        %5528 = vmatprep.subr.mxu0 0.0
        %5529 = vmatpush1.msra.mxu0 0.0
        %5530 = vmatprep.subr.mxu0 0.0
        %5531 = vmatpush1.msra.mxu0 0.0
        %5532 = vmatprep.subr.mxu0 0.0
        %5533 = vmatpush1.msra.mxu0 0.0
        %5534 = vmatprep.subr.mxu0 0.0
        %5535 = vmatpush1.msra.mxu0 0.0
        %5536 = vmatprep.subr.mxu0 0.0
        %5537 = vmatpush1.msra.mxu0 0.0
        %5538 = vmatprep.subr.mxu0 0.0
        %5539 = vmatpush1.msra.mxu0 0.0
        %5540 = vmatprep.subr.mxu0 0.0
        %5541 = vmatpush1.msra.mxu0 0.0
        %5542 = vmatprep.subr.mxu0 0.0
        %5543 = vmatpush1.msra.mxu0 %v5501
        %5544 = vmatprep.subr.mxu0 0.0
        %5545 = vmatpush1.msra.mxu0 %v5500
        %5546 = vmatprep.subr.mxu0 0.0
        %5547 = vmatpush1.msra.mxu0 %v5499
        %5548 = vmatprep.subr.mxu0 0.0
        %5549 = vmatpush1.msra.mxu0 %v5498
        %5550 = vmatprep.subr.mxu0 0.0
        %5551 = vmatpush2.msra.mxu0 0.0
        %5552 = vmatprep.subr.mxu0 0.0
        %5553 = vmatpush2.msra.mxu0 0.0
        %5554 = vmatprep.subr.mxu0 0.0
        %5555 = vmatpush2.msra.mxu0 0.0
        %5556 = vmatprep.subr.mxu0 0.0
        %5557 = vmatpush2.msra.mxu0 0.0
        %5558 = vmatprep.subr.mxu0 0.0
        %5559 = vmatpush2.msra.mxu0 0.0
        %5560 = vmatprep.subr.mxu0 0.0
        %5561 = vmatpush2.msra.mxu0 0.0
        %5562 = vmatprep.subr.mxu0 0.0
        %5563 = vmatpush2.msra.mxu0 0.0
        %5564 = vmatprep.subr.mxu0 0.0
        %5565 = vmatpush2.msra.mxu0 0.0
        %5566 = vmatprep.subr.mxu0 0.0
        %5567 = vmatpush2.msra.mxu0 0.0
        %5568 = vmatprep.subr.mxu0 0.0
        %5569 = vmatpush2.msra.mxu0 0.0
        %5570 = vmatprep.subr.mxu0 0.0
        %5571 = vmatpush2.msra.mxu0 0.0
        %5572 = vmatprep.subr.mxu0 0.0
        %5573 = vmatpush2.msra.mxu0 0.0
        %5574 = vmatprep.subr.mxu0 0.0
        %5575 = vmatpush2.msra.mxu0 0.0
        %5576 = vmatprep.subr.mxu0 0.0
        %5577 = vmatpush2.msra.mxu0 0.0
        %5578 = vmatprep.subr.mxu0 0.0
        %5579 = vmatpush2.msra.mxu0 0.0
        %5580 = vmatprep.subr.mxu0 0.0
        %5581 = vmatpush2.msra.mxu0 0.0
        %5582 = vmatprep.mubr.f32.mxu0 0.0
        %5583 = vmatmul.mubr.f32.gmra.mxu0 %v5502
        %v5584 = vpop.f32.mrf.mxu0
        %v5585 = vadd.f32 0.0, %v5584
        %v5586 = vpop.f32.mrf.mxu0
        %5587 = vmatprep.mubr.f32.mxu0 0.0
        %5588 = vmatmul.mubr.f32.gmra.mxu0 %v5504
        %v5589 = vpop.f32.mrf.mxu0
        %v5590 = vadd.f32 0.0, %v5589
        %v5591 = vpop.f32.mrf.mxu0
        %5592 = vmatprep.mubr.f32.mxu0 0.0
        %5593 = vmatmul.mubr.f32.gmra.mxu0 %v5506
        %v5594 = vpop.f32.mrf.mxu0
        %v5595 = vadd.f32 0.0, %v5594
        %v5596 = vpop.f32.mrf.mxu0
        %5597 = vmatprep.mubr.f32.mxu0 0.0
        %5598 = vmatmul.mubr.f32.gmra.mxu0 %v5508
        %v5599 = vpop.f32.mrf.mxu0
        %v5600 = vadd.f32 0.0, %v5599
        %v5601 = vpop.f32.mrf.mxu0
        %5602 = vmatprep.mubr.f32.mxu0 0.0
        %5603 = vmatmul.mubr.f32.gmra.mxu0 %v5510
        %v5604 = vpop.f32.mrf.mxu0
        %v5605 = vadd.f32 0.0, %v5604
        %v5606 = vpop.f32.mrf.mxu0
        %5607 = vmatprep.mubr.f32.mxu0 0.0
        %5608 = vmatmul.mubr.f32.gmra.mxu0 %v5512
        %v5609 = vpop.f32.mrf.mxu0
        %v5610 = vadd.f32 0.0, %v5609
        %v5611 = vpop.f32.mrf.mxu0
        %5612 = vmatprep.mubr.f32.mxu0 0.0
        %5613 = vmatmul.mubr.f32.gmra.mxu0 %v5514
        %v5614 = vpop.f32.mrf.mxu0
        %v5615 = vadd.f32 0.0, %v5614
        %v5616 = vpop.f32.mrf.mxu0
        %5617 = vmatprep.mubr.f32.mxu0 0.0
        %5618 = vmatmul.mubr.f32.gmra.mxu0 %v5516
        %v5619 = vpop.f32.mrf.mxu0
        %v5620 = vadd.f32 0.0, %v5619
        %v5621 = vpop.f32.mrf.mxu0
        %5622 = vdwg.mxu0
        %v5623 = vadd.f32 %v5457, %v5585
        %v5624 = vadd.f32 %v5458, %v5590
        %v5625 = vadd.f32 %v5459, %v5595
        %v5626 = vadd.f32 %v5460, %v5600
        %v5627 = vadd.f32 %v5461, %v5605
        %v5628 = vadd.f32 %v5462, %v5610
        %v5629 = vadd.f32 %v5463, %v5615
        %v5630 = vadd.f32 %v5464, %v5620
        %v5632 = vrot.slane %v5094, 1
        %v5633 = vrot.slane %v5095, 1
        %v5634 = vsel %vm1405, %v5632, %v5633
        %s5635 = scalar_lea.vmem %s3, 128
        %v5636 = vld [vmem:[%s5635] sm:$0xff]
        %v5637 = vld [vmem:[%s5635 + $0x8] sm:$0xff]
        %v5638 = vld [vmem:[%s5635 + $0x10] sm:$0xff]
        %v5639 = vld [vmem:[%s5635 + $0x18] sm:$0xff]
        %v5640 = vsel %vm4656, %v5634, 0
        %5642 = vmatprep.subr.mxu0 0.0
        %5643 = vmatpush1.msra.mxu0 0.0
        %5644 = vmatprep.subr.mxu0 0.0
        %5645 = vmatpush1.msra.mxu0 0.0
        %5646 = vmatprep.subr.mxu0 0.0
        %5647 = vmatpush1.msra.mxu0 0.0
        %5648 = vmatprep.subr.mxu0 0.0
        %5649 = vmatpush1.msra.mxu0 0.0
        %5650 = vmatprep.subr.mxu0 0.0
        %5651 = vmatpush1.msra.mxu0 0.0
        %5652 = vmatprep.subr.mxu0 0.0
        %5653 = vmatpush1.msra.mxu0 0.0
        %5654 = vmatprep.subr.mxu0 0.0
        %5655 = vmatpush1.msra.mxu0 0.0
        %5656 = vmatprep.subr.mxu0 0.0
        %5657 = vmatpush1.msra.mxu0 0.0
        %5658 = vmatprep.subr.mxu0 0.0
        %5659 = vmatpush1.msra.mxu0 0.0
        %5660 = vmatprep.subr.mxu0 0.0
        %5661 = vmatpush1.msra.mxu0 0.0
        %5662 = vmatprep.subr.mxu0 0.0
        %5663 = vmatpush1.msra.mxu0 0.0
        %5664 = vmatprep.subr.mxu0 0.0
        %5665 = vmatpush1.msra.mxu0 0.0
        %5666 = vmatprep.subr.mxu0 0.0
        %5667 = vmatpush1.msra.mxu0 %v5639
        %5668 = vmatprep.subr.mxu0 0.0
        %5669 = vmatpush1.msra.mxu0 %v5638
        %5670 = vmatprep.subr.mxu0 0.0
        %5671 = vmatpush1.msra.mxu0 %v5637
        %5672 = vmatprep.subr.mxu0 0.0
        %5673 = vmatpush1.msra.mxu0 %v5636
        %5674 = vmatprep.subr.mxu0 0.0
        %5675 = vmatpush2.msra.mxu0 0.0
        %5676 = vmatprep.subr.mxu0 0.0
        %5677 = vmatpush2.msra.mxu0 0.0
        %5678 = vmatprep.subr.mxu0 0.0
        %5679 = vmatpush2.msra.mxu0 0.0
        %5680 = vmatprep.subr.mxu0 0.0
        %5681 = vmatpush2.msra.mxu0 0.0
        %5682 = vmatprep.subr.mxu0 0.0
        %5683 = vmatpush2.msra.mxu0 0.0
        %5684 = vmatprep.subr.mxu0 0.0
        %5685 = vmatpush2.msra.mxu0 0.0
        %5686 = vmatprep.subr.mxu0 0.0
        %5687 = vmatpush2.msra.mxu0 0.0
        %5688 = vmatprep.subr.mxu0 0.0
        %5689 = vmatpush2.msra.mxu0 0.0
        %5690 = vmatprep.subr.mxu0 0.0
        %5691 = vmatpush2.msra.mxu0 0.0
        %5692 = vmatprep.subr.mxu0 0.0
        %5693 = vmatpush2.msra.mxu0 0.0
        %5694 = vmatprep.subr.mxu0 0.0
        %5695 = vmatpush2.msra.mxu0 0.0
        %5696 = vmatprep.subr.mxu0 0.0
        %5697 = vmatpush2.msra.mxu0 0.0
        %5698 = vmatprep.subr.mxu0 0.0
        %5699 = vmatpush2.msra.mxu0 0.0
        %5700 = vmatprep.subr.mxu0 0.0
        %5701 = vmatpush2.msra.mxu0 0.0
        %5702 = vmatprep.subr.mxu0 0.0
        %5703 = vmatpush2.msra.mxu0 0.0
        %5704 = vmatprep.subr.mxu0 0.0
        %5705 = vmatpush2.msra.mxu0 0.0
        %5706 = vmatprep.mubr.f32.mxu0 0.0
        %5707 = vmatmul.mubr.f32.gmra.mxu0 %v5504
        %v5708 = vpop.f32.mrf.mxu0
        %v5709 = vadd.f32 0.0, %v5708
        %v5710 = vpop.f32.mrf.mxu0
        %5711 = vmatprep.mubr.f32.mxu0 0.0
        %5712 = vmatmul.mubr.f32.gmra.mxu0 %v5506
        %v5713 = vpop.f32.mrf.mxu0
        %v5714 = vadd.f32 0.0, %v5713
        %v5715 = vpop.f32.mrf.mxu0
        %5716 = vmatprep.mubr.f32.mxu0 0.0
        %5717 = vmatmul.mubr.f32.gmra.mxu0 %v5508
        %v5718 = vpop.f32.mrf.mxu0
        %v5719 = vadd.f32 0.0, %v5718
        %v5720 = vpop.f32.mrf.mxu0
        %5721 = vmatprep.mubr.f32.mxu0 0.0
        %5722 = vmatmul.mubr.f32.gmra.mxu0 %v5510
        %v5723 = vpop.f32.mrf.mxu0
        %v5724 = vadd.f32 0.0, %v5723
        %v5725 = vpop.f32.mrf.mxu0
        %5726 = vmatprep.mubr.f32.mxu0 0.0
        %5727 = vmatmul.mubr.f32.gmra.mxu0 %v5512
        %v5728 = vpop.f32.mrf.mxu0
        %v5729 = vadd.f32 0.0, %v5728
        %v5730 = vpop.f32.mrf.mxu0
        %5731 = vmatprep.mubr.f32.mxu0 0.0
        %5732 = vmatmul.mubr.f32.gmra.mxu0 %v5514
        %v5733 = vpop.f32.mrf.mxu0
        %v5734 = vadd.f32 0.0, %v5733
        %v5735 = vpop.f32.mrf.mxu0
        %5736 = vmatprep.mubr.f32.mxu0 0.0
        %5737 = vmatmul.mubr.f32.gmra.mxu0 %v5516
        %v5738 = vpop.f32.mrf.mxu0
        %v5739 = vadd.f32 0.0, %v5738
        %v5740 = vpop.f32.mrf.mxu0
        %5741 = vmatprep.mubr.f32.mxu0 0.0
        %5742 = vmatmul.mubr.f32.gmra.mxu0 %v5640
        %v5743 = vpop.f32.mrf.mxu0
        %v5744 = vadd.f32 0.0, %v5743
        %v5745 = vpop.f32.mrf.mxu0
        %5746 = vdwg.mxu0
        %v5747 = vadd.f32 %v5623, %v5709
        %v5748 = vadd.f32 %v5624, %v5714
        %v5749 = vadd.f32 %v5625, %v5719
        %v5750 = vadd.f32 %v5626, %v5724
        %v5751 = vadd.f32 %v5627, %v5729
        %v5752 = vadd.f32 %v5628, %v5734
        %v5753 = vadd.f32 %v5629, %v5739
        %v5754 = vadd.f32 %v5630, %v5744
        %v5756 = vrot.slane %v5096, 1
        %v5757 = vrot.slane %v5097, 1
        %v5758 = vsel %vm1405, %v5756, %v5757
        %s5759 = scalar_lea.vmem %s3, 224
        %v5760 = vld [vmem:[%s5759] sm:$0xff]
        %v5761 = vld [vmem:[%s5759 + $0x8] sm:$0xff]
        %v5762 = vld [vmem:[%s5759 + $0x10] sm:$0xff]
        %v5763 = vld [vmem:[%s5759 + $0x18] sm:$0xff]
        %v5764 = vsel %vm4656, %v5758, 0
        %5766 = vmatprep.subr.mxu0 0.0
        %5767 = vmatpush1.msra.mxu0 0.0
        %5768 = vmatprep.subr.mxu0 0.0
        %5769 = vmatpush1.msra.mxu0 0.0
        %5770 = vmatprep.subr.mxu0 0.0
        %5771 = vmatpush1.msra.mxu0 0.0
        %5772 = vmatprep.subr.mxu0 0.0
        %5773 = vmatpush1.msra.mxu0 0.0
        %5774 = vmatprep.subr.mxu0 0.0
        %5775 = vmatpush1.msra.mxu0 0.0
        %5776 = vmatprep.subr.mxu0 0.0
        %5777 = vmatpush1.msra.mxu0 0.0
        %5778 = vmatprep.subr.mxu0 0.0
        %5779 = vmatpush1.msra.mxu0 0.0
        %5780 = vmatprep.subr.mxu0 0.0
        %5781 = vmatpush1.msra.mxu0 0.0
        %5782 = vmatprep.subr.mxu0 0.0
        %5783 = vmatpush1.msra.mxu0 0.0
        %5784 = vmatprep.subr.mxu0 0.0
        %5785 = vmatpush1.msra.mxu0 0.0
        %5786 = vmatprep.subr.mxu0 0.0
        %5787 = vmatpush1.msra.mxu0 0.0
        %5788 = vmatprep.subr.mxu0 0.0
        %5789 = vmatpush1.msra.mxu0 0.0
        %5790 = vmatprep.subr.mxu0 0.0
        %5791 = vmatpush1.msra.mxu0 %v5763
        %5792 = vmatprep.subr.mxu0 0.0
        %5793 = vmatpush1.msra.mxu0 %v5762
        %5794 = vmatprep.subr.mxu0 0.0
        %5795 = vmatpush1.msra.mxu0 %v5761
        %5796 = vmatprep.subr.mxu0 0.0
        %5797 = vmatpush1.msra.mxu0 %v5760
        %5798 = vmatprep.subr.mxu0 0.0
        %5799 = vmatpush2.msra.mxu0 0.0
        %5800 = vmatprep.subr.mxu0 0.0
        %5801 = vmatpush2.msra.mxu0 0.0
        %5802 = vmatprep.subr.mxu0 0.0
        %5803 = vmatpush2.msra.mxu0 0.0
        %5804 = vmatprep.subr.mxu0 0.0
        %5805 = vmatpush2.msra.mxu0 0.0
        %5806 = vmatprep.subr.mxu0 0.0
        %5807 = vmatpush2.msra.mxu0 0.0
        %5808 = vmatprep.subr.mxu0 0.0
        %5809 = vmatpush2.msra.mxu0 0.0
        %5810 = vmatprep.subr.mxu0 0.0
        %5811 = vmatpush2.msra.mxu0 0.0
        %5812 = vmatprep.subr.mxu0 0.0
        %5813 = vmatpush2.msra.mxu0 0.0
        %5814 = vmatprep.subr.mxu0 0.0
        %5815 = vmatpush2.msra.mxu0 0.0
        %5816 = vmatprep.subr.mxu0 0.0
        %5817 = vmatpush2.msra.mxu0 0.0
        %5818 = vmatprep.subr.mxu0 0.0
        %5819 = vmatpush2.msra.mxu0 0.0
        %5820 = vmatprep.subr.mxu0 0.0
        %5821 = vmatpush2.msra.mxu0 0.0
        %5822 = vmatprep.subr.mxu0 0.0
        %5823 = vmatpush2.msra.mxu0 0.0
        %5824 = vmatprep.subr.mxu0 0.0
        %5825 = vmatpush2.msra.mxu0 0.0
        %5826 = vmatprep.subr.mxu0 0.0
        %5827 = vmatpush2.msra.mxu0 0.0
        %5828 = vmatprep.subr.mxu0 0.0
        %5829 = vmatpush2.msra.mxu0 0.0
        %5830 = vmatprep.mubr.f32.mxu0 0.0
        %5831 = vmatmul.mubr.f32.gmra.mxu0 %v5506
        %v5832 = vpop.f32.mrf.mxu0
        %v5833 = vadd.f32 0.0, %v5832
        %v5834 = vpop.f32.mrf.mxu0
        %5835 = vmatprep.mubr.f32.mxu0 0.0
        %5836 = vmatmul.mubr.f32.gmra.mxu0 %v5508
        %v5837 = vpop.f32.mrf.mxu0
        %v5838 = vadd.f32 0.0, %v5837
        %v5839 = vpop.f32.mrf.mxu0
        %5840 = vmatprep.mubr.f32.mxu0 0.0
        %5841 = vmatmul.mubr.f32.gmra.mxu0 %v5510
        %v5842 = vpop.f32.mrf.mxu0
        %v5843 = vadd.f32 0.0, %v5842
        %v5844 = vpop.f32.mrf.mxu0
        %5845 = vmatprep.mubr.f32.mxu0 0.0
        %5846 = vmatmul.mubr.f32.gmra.mxu0 %v5512
        %v5847 = vpop.f32.mrf.mxu0
        %v5848 = vadd.f32 0.0, %v5847
        %v5849 = vpop.f32.mrf.mxu0
        %5850 = vmatprep.mubr.f32.mxu0 0.0
        %5851 = vmatmul.mubr.f32.gmra.mxu0 %v5514
        %v5852 = vpop.f32.mrf.mxu0
        %v5853 = vadd.f32 0.0, %v5852
        %v5854 = vpop.f32.mrf.mxu0
        %5855 = vmatprep.mubr.f32.mxu0 0.0
        %5856 = vmatmul.mubr.f32.gmra.mxu0 %v5516
        %v5857 = vpop.f32.mrf.mxu0
        %v5858 = vadd.f32 0.0, %v5857
        %v5859 = vpop.f32.mrf.mxu0
        %5860 = vmatprep.mubr.f32.mxu0 0.0
        %5861 = vmatmul.mubr.f32.gmra.mxu0 %v5640
        %v5862 = vpop.f32.mrf.mxu0
        %v5863 = vadd.f32 0.0, %v5862
        %v5864 = vpop.f32.mrf.mxu0
        %5865 = vmatprep.mubr.f32.mxu0 0.0
        %5866 = vmatmul.mubr.f32.gmra.mxu0 %v5764
        %v5867 = vpop.f32.mrf.mxu0
        %v5868 = vadd.f32 0.0, %v5867
        %v5869 = vpop.f32.mrf.mxu0
        %5870 = vdwg.mxu0
        %v5871 = vadd.f32 %v5747, %v5833
        %v5872 = vadd.f32 %v5748, %v5838
        %v5873 = vadd.f32 %v5749, %v5843
        %v5874 = vadd.f32 %v5750, %v5848
        %v5875 = vadd.f32 %v5751, %v5853
        %v5876 = vadd.f32 %v5752, %v5858
        %v5877 = vadd.f32 %v5753, %v5863
        %v5878 = vadd.f32 %v5754, %v5868
        %v5879 = vrot.slane %v5078, 2
        %v5880 = vrot.slane %v5079, 2
        %v5881 = vsel %vm2356, %v5879, %v5880
        %v5882 = vrot.slane %v5080, 2
        %v5883 = vrot.slane %v5081, 2
        %v5884 = vsel %vm2356, %v5882, %v5883
        %v5885 = vrot.slane %v5082, 2
        %v5886 = vrot.slane %v5083, 2
        %v5887 = vsel %vm2356, %v5885, %v5886
        %v5888 = vrot.slane %v5084, 2
        %v5889 = vrot.slane %v5085, 2
        %v5890 = vsel %vm2356, %v5888, %v5889
        %v5891 = vrot.slane %v5086, 2
        %v5892 = vrot.slane %v5087, 2
        %v5893 = vsel %vm2356, %v5891, %v5892
        %v5894 = vrot.slane %v5088, 2
        %v5895 = vrot.slane %v5089, 2
        %v5896 = vsel %vm2356, %v5894, %v5895
        %v5897 = vrot.slane %v5090, 2
        %v5898 = vrot.slane %v5091, 2
        %v5899 = vsel %vm2356, %v5897, %v5898
        %v5900 = vrot.slane %v5092, 2
        %v5901 = vrot.slane %v5093, 2
        %v5902 = vsel %vm2356, %v5900, %v5901
        %s5903 = scalar_lea.vmem %s3, 64
        %v5904 = vld [vmem:[%s5903] sm:$0xff]
        %v5905 = vld [vmem:[%s5903 + $0x8] sm:$0xff]
        %v5906 = vld [vmem:[%s5903 + $0x10] sm:$0xff]
        %v5907 = vld [vmem:[%s5903 + $0x18] sm:$0xff]
        %v5908 = vsel %vm4656, %v5881, 0
        %v5910 = vsel %vm4656, %v5884, 0
        %v5912 = vsel %vm4656, %v5887, 0
        %v5914 = vsel %vm4656, %v5890, 0
        %v5916 = vsel %vm4656, %v5893, 0
        %v5918 = vsel %vm4656, %v5896, 0
        %v5920 = vsel %vm4656, %v5899, 0
        %v5922 = vsel %vm4656, %v5902, 0
        %5924 = vmatprep.subr.mxu0 0.0
        %5925 = vmatpush1.msra.mxu0 0.0
        %5926 = vmatprep.subr.mxu0 0.0
        %5927 = vmatpush1.msra.mxu0 0.0
        %5928 = vmatprep.subr.mxu0 0.0
        %5929 = vmatpush1.msra.mxu0 0.0
        %5930 = vmatprep.subr.mxu0 0.0
        %5931 = vmatpush1.msra.mxu0 0.0
        %5932 = vmatprep.subr.mxu0 0.0
        %5933 = vmatpush1.msra.mxu0 0.0
        %5934 = vmatprep.subr.mxu0 0.0
        %5935 = vmatpush1.msra.mxu0 0.0
        %5936 = vmatprep.subr.mxu0 0.0
        %5937 = vmatpush1.msra.mxu0 0.0
        %5938 = vmatprep.subr.mxu0 0.0
        %5939 = vmatpush1.msra.mxu0 0.0
        %5940 = vmatprep.subr.mxu0 0.0
        %5941 = vmatpush1.msra.mxu0 0.0
        %5942 = vmatprep.subr.mxu0 0.0
        %5943 = vmatpush1.msra.mxu0 0.0
        %5944 = vmatprep.subr.mxu0 0.0
        %5945 = vmatpush1.msra.mxu0 0.0
        %5946 = vmatprep.subr.mxu0 0.0
        %5947 = vmatpush1.msra.mxu0 0.0
        %5948 = vmatprep.subr.mxu0 0.0
        %5949 = vmatpush1.msra.mxu0 %v5907
        %5950 = vmatprep.subr.mxu0 0.0
        %5951 = vmatpush1.msra.mxu0 %v5906
        %5952 = vmatprep.subr.mxu0 0.0
        %5953 = vmatpush1.msra.mxu0 %v5905
        %5954 = vmatprep.subr.mxu0 0.0
        %5955 = vmatpush1.msra.mxu0 %v5904
        %5956 = vmatprep.subr.mxu0 0.0
        %5957 = vmatpush2.msra.mxu0 0.0
        %5958 = vmatprep.subr.mxu0 0.0
        %5959 = vmatpush2.msra.mxu0 0.0
        %5960 = vmatprep.subr.mxu0 0.0
        %5961 = vmatpush2.msra.mxu0 0.0
        %5962 = vmatprep.subr.mxu0 0.0
        %5963 = vmatpush2.msra.mxu0 0.0
        %5964 = vmatprep.subr.mxu0 0.0
        %5965 = vmatpush2.msra.mxu0 0.0
        %5966 = vmatprep.subr.mxu0 0.0
        %5967 = vmatpush2.msra.mxu0 0.0
        %5968 = vmatprep.subr.mxu0 0.0
        %5969 = vmatpush2.msra.mxu0 0.0
        %5970 = vmatprep.subr.mxu0 0.0
        %5971 = vmatpush2.msra.mxu0 0.0
        %5972 = vmatprep.subr.mxu0 0.0
        %5973 = vmatpush2.msra.mxu0 0.0
        %5974 = vmatprep.subr.mxu0 0.0
        %5975 = vmatpush2.msra.mxu0 0.0
        %5976 = vmatprep.subr.mxu0 0.0
        %5977 = vmatpush2.msra.mxu0 0.0
        %5978 = vmatprep.subr.mxu0 0.0
        %5979 = vmatpush2.msra.mxu0 0.0
        %5980 = vmatprep.subr.mxu0 0.0
        %5981 = vmatpush2.msra.mxu0 0.0
        %5982 = vmatprep.subr.mxu0 0.0
        %5983 = vmatpush2.msra.mxu0 0.0
        %5984 = vmatprep.subr.mxu0 0.0
        %5985 = vmatpush2.msra.mxu0 0.0
        %5986 = vmatprep.subr.mxu0 0.0
        %5987 = vmatpush2.msra.mxu0 0.0
        %5988 = vmatprep.mubr.f32.mxu0 0.0
        %5989 = vmatmul.mubr.f32.gmra.mxu0 %v5908
        %v5990 = vpop.f32.mrf.mxu0
        %v5991 = vadd.f32 0.0, %v5990
        %v5992 = vpop.f32.mrf.mxu0
        %5993 = vmatprep.mubr.f32.mxu0 0.0
        %5994 = vmatmul.mubr.f32.gmra.mxu0 %v5910
        %v5995 = vpop.f32.mrf.mxu0
        %v5996 = vadd.f32 0.0, %v5995
        %v5997 = vpop.f32.mrf.mxu0
        %5998 = vmatprep.mubr.f32.mxu0 0.0
        %5999 = vmatmul.mubr.f32.gmra.mxu0 %v5912
        %v6000 = vpop.f32.mrf.mxu0
        %v6001 = vadd.f32 0.0, %v6000
        %v6002 = vpop.f32.mrf.mxu0
        %6003 = vmatprep.mubr.f32.mxu0 0.0
        %6004 = vmatmul.mubr.f32.gmra.mxu0 %v5914
        %v6005 = vpop.f32.mrf.mxu0
        %v6006 = vadd.f32 0.0, %v6005
        %v6007 = vpop.f32.mrf.mxu0
        %6008 = vmatprep.mubr.f32.mxu0 0.0
        %6009 = vmatmul.mubr.f32.gmra.mxu0 %v5916
        %v6010 = vpop.f32.mrf.mxu0
        %v6011 = vadd.f32 0.0, %v6010
        %v6012 = vpop.f32.mrf.mxu0
        %6013 = vmatprep.mubr.f32.mxu0 0.0
        %6014 = vmatmul.mubr.f32.gmra.mxu0 %v5918
        %v6015 = vpop.f32.mrf.mxu0
        %v6016 = vadd.f32 0.0, %v6015
        %v6017 = vpop.f32.mrf.mxu0
        %6018 = vmatprep.mubr.f32.mxu0 0.0
        %6019 = vmatmul.mubr.f32.gmra.mxu0 %v5920
        %v6020 = vpop.f32.mrf.mxu0
        %v6021 = vadd.f32 0.0, %v6020
        %v6022 = vpop.f32.mrf.mxu0
        %6023 = vmatprep.mubr.f32.mxu0 0.0
        %6024 = vmatmul.mubr.f32.gmra.mxu0 %v5922
        %v6025 = vpop.f32.mrf.mxu0
        %v6026 = vadd.f32 0.0, %v6025
        %v6027 = vpop.f32.mrf.mxu0
        %6028 = vdwg.mxu0
        %v6029 = vadd.f32 %v5871, %v5991
        %v6030 = vadd.f32 %v5872, %v5996
        %v6031 = vadd.f32 %v5873, %v6001
        %v6032 = vadd.f32 %v5874, %v6006
        %v6033 = vadd.f32 %v5875, %v6011
        %v6034 = vadd.f32 %v5876, %v6016
        %v6035 = vadd.f32 %v5877, %v6021
        %v6036 = vadd.f32 %v5878, %v6026
        %v6037 = vrot.slane %v5094, 2
        %v6038 = vrot.slane %v5095, 2
        %v6039 = vsel %vm2356, %v6037, %v6038
        %s6040 = scalar_lea.vmem %s3, 160
        %v6041 = vld [vmem:[%s6040] sm:$0xff]
        %v6042 = vld [vmem:[%s6040 + $0x8] sm:$0xff]
        %v6043 = vld [vmem:[%s6040 + $0x10] sm:$0xff]
        %v6044 = vld [vmem:[%s6040 + $0x18] sm:$0xff]
        %v6045 = vsel %vm4656, %v6039, 0
        %6047 = vmatprep.subr.mxu0 0.0
        %6048 = vmatpush1.msra.mxu0 0.0
        %6049 = vmatprep.subr.mxu0 0.0
        %6050 = vmatpush1.msra.mxu0 0.0
        %6051 = vmatprep.subr.mxu0 0.0
        %6052 = vmatpush1.msra.mxu0 0.0
        %6053 = vmatprep.subr.mxu0 0.0
        %6054 = vmatpush1.msra.mxu0 0.0
        %6055 = vmatprep.subr.mxu0 0.0
        %6056 = vmatpush1.msra.mxu0 0.0
        %6057 = vmatprep.subr.mxu0 0.0
        %6058 = vmatpush1.msra.mxu0 0.0
        %6059 = vmatprep.subr.mxu0 0.0
        %6060 = vmatpush1.msra.mxu0 0.0
        %6061 = vmatprep.subr.mxu0 0.0
        %6062 = vmatpush1.msra.mxu0 0.0
        %6063 = vmatprep.subr.mxu0 0.0
        %6064 = vmatpush1.msra.mxu0 0.0
        %6065 = vmatprep.subr.mxu0 0.0
        %6066 = vmatpush1.msra.mxu0 0.0
        %6067 = vmatprep.subr.mxu0 0.0
        %6068 = vmatpush1.msra.mxu0 0.0
        %6069 = vmatprep.subr.mxu0 0.0
        %6070 = vmatpush1.msra.mxu0 0.0
        %6071 = vmatprep.subr.mxu0 0.0
        %6072 = vmatpush1.msra.mxu0 %v6044
        %6073 = vmatprep.subr.mxu0 0.0
        %6074 = vmatpush1.msra.mxu0 %v6043
        %6075 = vmatprep.subr.mxu0 0.0
        %6076 = vmatpush1.msra.mxu0 %v6042
        %6077 = vmatprep.subr.mxu0 0.0
        %6078 = vmatpush1.msra.mxu0 %v6041
        %6079 = vmatprep.subr.mxu0 0.0
        %6080 = vmatpush2.msra.mxu0 0.0
        %6081 = vmatprep.subr.mxu0 0.0
        %6082 = vmatpush2.msra.mxu0 0.0
        %6083 = vmatprep.subr.mxu0 0.0
        %6084 = vmatpush2.msra.mxu0 0.0
        %6085 = vmatprep.subr.mxu0 0.0
        %6086 = vmatpush2.msra.mxu0 0.0
        %6087 = vmatprep.subr.mxu0 0.0
        %6088 = vmatpush2.msra.mxu0 0.0
        %6089 = vmatprep.subr.mxu0 0.0
        %6090 = vmatpush2.msra.mxu0 0.0
        %6091 = vmatprep.subr.mxu0 0.0
        %6092 = vmatpush2.msra.mxu0 0.0
        %6093 = vmatprep.subr.mxu0 0.0
        %6094 = vmatpush2.msra.mxu0 0.0
        %6095 = vmatprep.subr.mxu0 0.0
        %6096 = vmatpush2.msra.mxu0 0.0
        %6097 = vmatprep.subr.mxu0 0.0
        %6098 = vmatpush2.msra.mxu0 0.0
        %6099 = vmatprep.subr.mxu0 0.0
        %6100 = vmatpush2.msra.mxu0 0.0
        %6101 = vmatprep.subr.mxu0 0.0
        %6102 = vmatpush2.msra.mxu0 0.0
        %6103 = vmatprep.subr.mxu0 0.0
        %6104 = vmatpush2.msra.mxu0 0.0
        %6105 = vmatprep.subr.mxu0 0.0
        %6106 = vmatpush2.msra.mxu0 0.0
        %6107 = vmatprep.subr.mxu0 0.0
        %6108 = vmatpush2.msra.mxu0 0.0
        %6109 = vmatprep.subr.mxu0 0.0
        %6110 = vmatpush2.msra.mxu0 0.0
        %6111 = vmatprep.mubr.f32.mxu0 0.0
        %6112 = vmatmul.mubr.f32.gmra.mxu0 %v5910
        %v6113 = vpop.f32.mrf.mxu0
        %v6114 = vadd.f32 0.0, %v6113
        %v6115 = vpop.f32.mrf.mxu0
        %6116 = vmatprep.mubr.f32.mxu0 0.0
        %6117 = vmatmul.mubr.f32.gmra.mxu0 %v5912
        %v6118 = vpop.f32.mrf.mxu0
        %v6119 = vadd.f32 0.0, %v6118
        %v6120 = vpop.f32.mrf.mxu0
        %6121 = vmatprep.mubr.f32.mxu0 0.0
        %6122 = vmatmul.mubr.f32.gmra.mxu0 %v5914
        %v6123 = vpop.f32.mrf.mxu0
        %v6124 = vadd.f32 0.0, %v6123
        %v6125 = vpop.f32.mrf.mxu0
        %6126 = vmatprep.mubr.f32.mxu0 0.0
        %6127 = vmatmul.mubr.f32.gmra.mxu0 %v5916
        %v6128 = vpop.f32.mrf.mxu0
        %v6129 = vadd.f32 0.0, %v6128
        %v6130 = vpop.f32.mrf.mxu0
        %6131 = vmatprep.mubr.f32.mxu0 0.0
        %6132 = vmatmul.mubr.f32.gmra.mxu0 %v5918
        %v6133 = vpop.f32.mrf.mxu0
        %v6134 = vadd.f32 0.0, %v6133
        %v6135 = vpop.f32.mrf.mxu0
        %6136 = vmatprep.mubr.f32.mxu0 0.0
        %6137 = vmatmul.mubr.f32.gmra.mxu0 %v5920
        %v6138 = vpop.f32.mrf.mxu0
        %v6139 = vadd.f32 0.0, %v6138
        %v6140 = vpop.f32.mrf.mxu0
        %6141 = vmatprep.mubr.f32.mxu0 0.0
        %6142 = vmatmul.mubr.f32.gmra.mxu0 %v5922
        %v6143 = vpop.f32.mrf.mxu0
        %v6144 = vadd.f32 0.0, %v6143
        %v6145 = vpop.f32.mrf.mxu0
        %6146 = vmatprep.mubr.f32.mxu0 0.0
        %6147 = vmatmul.mubr.f32.gmra.mxu0 %v6045
        %v6148 = vpop.f32.mrf.mxu0
        %v6149 = vadd.f32 0.0, %v6148
        %v6150 = vpop.f32.mrf.mxu0
        %6151 = vdwg.mxu0
        %v6152 = vadd.f32 %v6029, %v6114
        %v6153 = vadd.f32 %v6030, %v6119
        %v6154 = vadd.f32 %v6031, %v6124
        %v6155 = vadd.f32 %v6032, %v6129
        %v6156 = vadd.f32 %v6033, %v6134
        %v6157 = vadd.f32 %v6034, %v6139
        %v6158 = vadd.f32 %v6035, %v6144
        %v6159 = vadd.f32 %v6036, %v6149
        %v6160 = vrot.slane %v5096, 2
        %v6161 = vrot.slane %v5097, 2
        %v6162 = vsel %vm2356, %v6160, %v6161
        %s6163 = scalar_lea.vmem %s3, 256
        %v6164 = vld [vmem:[%s6163] sm:$0xff]
        %v6165 = vld [vmem:[%s6163 + $0x8] sm:$0xff]
        %v6166 = vld [vmem:[%s6163 + $0x10] sm:$0xff]
        %v6167 = vld [vmem:[%s6163 + $0x18] sm:$0xff]
        %v6168 = vsel %vm4656, %v6162, 0
        %6170 = vmatprep.subr.mxu0 0.0
        %6171 = vmatpush1.msra.mxu0 0.0
        %6172 = vmatprep.subr.mxu0 0.0
        %6173 = vmatpush1.msra.mxu0 0.0
        %6174 = vmatprep.subr.mxu0 0.0
        %6175 = vmatpush1.msra.mxu0 0.0
        %6176 = vmatprep.subr.mxu0 0.0
        %6177 = vmatpush1.msra.mxu0 0.0
        %6178 = vmatprep.subr.mxu0 0.0
        %6179 = vmatpush1.msra.mxu0 0.0
        %6180 = vmatprep.subr.mxu0 0.0
        %6181 = vmatpush1.msra.mxu0 0.0
        %6182 = vmatprep.subr.mxu0 0.0
        %6183 = vmatpush1.msra.mxu0 0.0
        %6184 = vmatprep.subr.mxu0 0.0
        %6185 = vmatpush1.msra.mxu0 0.0
        %6186 = vmatprep.subr.mxu0 0.0
        %6187 = vmatpush1.msra.mxu0 0.0
        %6188 = vmatprep.subr.mxu0 0.0
        %6189 = vmatpush1.msra.mxu0 0.0
        %6190 = vmatprep.subr.mxu0 0.0
        %6191 = vmatpush1.msra.mxu0 0.0
        %6192 = vmatprep.subr.mxu0 0.0
        %6193 = vmatpush1.msra.mxu0 0.0
        %6194 = vmatprep.subr.mxu0 0.0
        %6195 = vmatpush1.msra.mxu0 %v6167
        %6196 = vmatprep.subr.mxu0 0.0
        %6197 = vmatpush1.msra.mxu0 %v6166
        %6198 = vmatprep.subr.mxu0 0.0
        %6199 = vmatpush1.msra.mxu0 %v6165
        %6200 = vmatprep.subr.mxu0 0.0
        %6201 = vmatpush1.msra.mxu0 %v6164
        %6202 = vmatprep.subr.mxu0 0.0
        %6203 = vmatpush2.msra.mxu0 0.0
        %6204 = vmatprep.subr.mxu0 0.0
        %6205 = vmatpush2.msra.mxu0 0.0
        %6206 = vmatprep.subr.mxu0 0.0
        %6207 = vmatpush2.msra.mxu0 0.0
        %6208 = vmatprep.subr.mxu0 0.0
        %6209 = vmatpush2.msra.mxu0 0.0
        %6210 = vmatprep.subr.mxu0 0.0
        %6211 = vmatpush2.msra.mxu0 0.0
        %6212 = vmatprep.subr.mxu0 0.0
        %6213 = vmatpush2.msra.mxu0 0.0
        %6214 = vmatprep.subr.mxu0 0.0
        %6215 = vmatpush2.msra.mxu0 0.0
        %6216 = vmatprep.subr.mxu0 0.0
        %6217 = vmatpush2.msra.mxu0 0.0
        %6218 = vmatprep.subr.mxu0 0.0
        %6219 = vmatpush2.msra.mxu0 0.0
        %6220 = vmatprep.subr.mxu0 0.0
        %6221 = vmatpush2.msra.mxu0 0.0
        %6222 = vmatprep.subr.mxu0 0.0
        %6223 = vmatpush2.msra.mxu0 0.0
        %6224 = vmatprep.subr.mxu0 0.0
        %6225 = vmatpush2.msra.mxu0 0.0
        %6226 = vmatprep.subr.mxu0 0.0
        %6227 = vmatpush2.msra.mxu0 0.0
        %6228 = vmatprep.subr.mxu0 0.0
        %6229 = vmatpush2.msra.mxu0 0.0
        %6230 = vmatprep.subr.mxu0 0.0
        %6231 = vmatpush2.msra.mxu0 0.0
        %6232 = vmatprep.subr.mxu0 0.0
        %6233 = vmatpush2.msra.mxu0 0.0
        %6234 = vmatprep.mubr.f32.mxu0 0.0
        %6235 = vmatmul.mubr.f32.gmra.mxu0 %v5912
        %v6236 = vpop.f32.mrf.mxu0
        %v6237 = vadd.f32 0.0, %v6236
        %v6238 = vpop.f32.mrf.mxu0
        %6239 = vmatprep.mubr.f32.mxu0 0.0
        %6240 = vmatmul.mubr.f32.gmra.mxu0 %v5914
        %v6241 = vpop.f32.mrf.mxu0
        %v6242 = vadd.f32 0.0, %v6241
        %v6243 = vpop.f32.mrf.mxu0
        %6244 = vmatprep.mubr.f32.mxu0 0.0
        %6245 = vmatmul.mubr.f32.gmra.mxu0 %v5916
        %v6246 = vpop.f32.mrf.mxu0
        %v6247 = vadd.f32 0.0, %v6246
        %v6248 = vpop.f32.mrf.mxu0
        %6249 = vmatprep.mubr.f32.mxu0 0.0
        %6250 = vmatmul.mubr.f32.gmra.mxu0 %v5918
        %v6251 = vpop.f32.mrf.mxu0
        %v6252 = vadd.f32 0.0, %v6251
        %v6253 = vpop.f32.mrf.mxu0
        %6254 = vmatprep.mubr.f32.mxu0 0.0
        %6255 = vmatmul.mubr.f32.gmra.mxu0 %v5920
        %v6256 = vpop.f32.mrf.mxu0
        %v6257 = vadd.f32 0.0, %v6256
        %v6258 = vpop.f32.mrf.mxu0
        %6259 = vmatprep.mubr.f32.mxu0 0.0
        %6260 = vmatmul.mubr.f32.gmra.mxu0 %v5922
        %v6261 = vpop.f32.mrf.mxu0
        %v6262 = vadd.f32 0.0, %v6261
        %v6263 = vpop.f32.mrf.mxu0
        %6264 = vmatprep.mubr.f32.mxu0 0.0
        %6265 = vmatmul.mubr.f32.gmra.mxu0 %v6045
        %v6266 = vpop.f32.mrf.mxu0
        %v6267 = vadd.f32 0.0, %v6266
        %v6268 = vpop.f32.mrf.mxu0
        %6269 = vmatprep.mubr.f32.mxu0 0.0
        %6270 = vmatmul.mubr.f32.gmra.mxu0 %v6168
        %v6271 = vpop.f32.mrf.mxu0
        %v6272 = vadd.f32 0.0, %v6271
        %v6273 = vpop.f32.mrf.mxu0
        %6274 = vdwg.mxu0
        %v6275 = vadd.f32 %v6152, %v6237
        %v6276 = vadd.f32 %v6153, %v6242
        %v6277 = vadd.f32 %v6154, %v6247
        %v6278 = vadd.f32 %v6155, %v6252
        %v6279 = vadd.f32 %v6156, %v6257
        %v6280 = vadd.f32 %v6157, %v6262
        %v6281 = vadd.f32 %v6158, %v6267
        %v6282 = vadd.f32 %v6159, %v6272
        %v6283 = vld [vmem:[%s4] sm:$0x1]
        %v6285 = vlaneseq
        %v6286 = vshrl.u32 %v6285, 7
        %v6287 = vsub.s32 0, %v6286
        %v6288 = vrot.slane %v6283, %v6287
        %v6290 = vadd.f32 %v6275, %v6288
        %v6291 = vadd.f32 %v6276, %v6288
        %v6292 = vadd.f32 %v6277, %v6288
        %v6293 = vadd.f32 %v6278, %v6288
        %v6294 = vadd.f32 %v6279, %v6288
        %v6295 = vadd.f32 %v6280, %v6288
        %v6296 = vadd.f32 %v6281, %v6288
        %v6297 = vadd.f32 %v6282, %v6288
        %v6298 = vmax.f32 %v6290, 0.0
        %v6299 = vmax.f32 %v6291, 0.0
        %v6300 = vmax.f32 %v6292, 0.0
        %v6301 = vmax.f32 %v6293, 0.0
        %v6302 = vmax.f32 %v6294, 0.0
        %v6303 = vmax.f32 %v6295, 0.0
        %v6304 = vmax.f32 %v6296, 0.0
        %v6305 = vmax.f32 %v6297, 0.0
        %v6314 = vcombine.high %v6298, %v6298
        %v6316 = vunpack.c.l.s4 1983009808
        %v6317 = vunpack.c.0.s8 %v6316
        %v6318 = vlaneseq
        %v6319 = vshrl.u32 %v6318, 7
        %v6320 = vsub.s32 %v6317, %v6319
        %v6321 = vrot.slane %v6298, %v6320
        %v6323 = vunpack.c.l.s4 1983009808
        %v6324 = vunpack.c.0.s8 %v6323
        %v6325 = vlaneseq
        %v6326 = vshrl.u32 %v6325, 7
        %v6327 = vsub.s32 %v6324, %v6326
        %v6328 = vrot.slane %v6314, %v6327
        %v6329 = vcombine.high %v6321, %v6321
        %v6330 = vcombine.high %v6328, %v6328
        %v6331 = vcombine.high %v6299, %v6299
        %v6333 = vunpack.c.l.s4 1983009808
        %v6334 = vunpack.c.0.s8 %v6333
        %v6335 = vlaneseq
        %v6336 = vshrl.u32 %v6335, 7
        %v6337 = vsub.s32 %v6334, %v6336
        %v6338 = vrot.slane %v6299, %v6337
        %v6340 = vunpack.c.l.s4 1983009808
        %v6341 = vunpack.c.0.s8 %v6340
        %v6342 = vlaneseq
        %v6343 = vshrl.u32 %v6342, 7
        %v6344 = vsub.s32 %v6341, %v6343
        %v6345 = vrot.slane %v6331, %v6344
        %v6346 = vcombine.high %v6338, %v6338
        %v6347 = vcombine.high %v6345, %v6345
        %v6348 = vcombine.high %v6300, %v6300
        %v6350 = vunpack.c.l.s4 1983009808
        %v6351 = vunpack.c.0.s8 %v6350
        %v6352 = vlaneseq
        %v6353 = vshrl.u32 %v6352, 7
        %v6354 = vsub.s32 %v6351, %v6353
        %v6355 = vrot.slane %v6300, %v6354
        %v6357 = vunpack.c.l.s4 1983009808
        %v6358 = vunpack.c.0.s8 %v6357
        %v6359 = vlaneseq
        %v6360 = vshrl.u32 %v6359, 7
        %v6361 = vsub.s32 %v6358, %v6360
        %v6362 = vrot.slane %v6348, %v6361
        %v6363 = vcombine.high %v6355, %v6355
        %v6364 = vcombine.high %v6362, %v6362
        %v6365 = vcombine.high %v6301, %v6301
        %v6367 = vunpack.c.l.s4 1983009808
        %v6368 = vunpack.c.0.s8 %v6367
        %v6369 = vlaneseq
        %v6370 = vshrl.u32 %v6369, 7
        %v6371 = vsub.s32 %v6368, %v6370
        %v6372 = vrot.slane %v6301, %v6371
        %v6374 = vunpack.c.l.s4 1983009808
        %v6375 = vunpack.c.0.s8 %v6374
        %v6376 = vlaneseq
        %v6377 = vshrl.u32 %v6376, 7
        %v6378 = vsub.s32 %v6375, %v6377
        %v6379 = vrot.slane %v6365, %v6378
        %v6380 = vcombine.high %v6372, %v6372
        %v6381 = vcombine.high %v6379, %v6379
        %v6382 = vcombine.high %v6302, %v6302
        %v6384 = vunpack.c.l.s4 1983009808
        %v6385 = vunpack.c.0.s8 %v6384
        %v6386 = vlaneseq
        %v6387 = vshrl.u32 %v6386, 7
        %v6388 = vsub.s32 %v6385, %v6387
        %v6389 = vrot.slane %v6302, %v6388
        %v6391 = vunpack.c.l.s4 1983009808
        %v6392 = vunpack.c.0.s8 %v6391
        %v6393 = vlaneseq
        %v6394 = vshrl.u32 %v6393, 7
        %v6395 = vsub.s32 %v6392, %v6394
        %v6396 = vrot.slane %v6382, %v6395
        %v6397 = vcombine.high %v6389, %v6389
        %v6398 = vcombine.high %v6396, %v6396
        %v6399 = vcombine.high %v6303, %v6303
        %v6401 = vunpack.c.l.s4 1983009808
        %v6402 = vunpack.c.0.s8 %v6401
        %v6403 = vlaneseq
        %v6404 = vshrl.u32 %v6403, 7
        %v6405 = vsub.s32 %v6402, %v6404
        %v6406 = vrot.slane %v6303, %v6405
        %v6408 = vunpack.c.l.s4 1983009808
        %v6409 = vunpack.c.0.s8 %v6408
        %v6410 = vlaneseq
        %v6411 = vshrl.u32 %v6410, 7
        %v6412 = vsub.s32 %v6409, %v6411
        %v6413 = vrot.slane %v6399, %v6412
        %v6414 = vcombine.high %v6406, %v6406
        %v6415 = vcombine.high %v6413, %v6413
        %v6416 = vcombine.high %v6304, %v6304
        %v6418 = vunpack.c.l.s4 1983009808
        %v6419 = vunpack.c.0.s8 %v6418
        %v6420 = vlaneseq
        %v6421 = vshrl.u32 %v6420, 7
        %v6422 = vsub.s32 %v6419, %v6421
        %v6423 = vrot.slane %v6304, %v6422
        %v6425 = vunpack.c.l.s4 1983009808
        %v6426 = vunpack.c.0.s8 %v6425
        %v6427 = vlaneseq
        %v6428 = vshrl.u32 %v6427, 7
        %v6429 = vsub.s32 %v6426, %v6428
        %v6430 = vrot.slane %v6416, %v6429
        %v6431 = vcombine.high %v6423, %v6423
        %v6432 = vcombine.high %v6430, %v6430
        %v6433 = vcombine.high %v6305, %v6305
        %v6435 = vunpack.c.l.s4 1983009808
        %v6436 = vunpack.c.0.s8 %v6435
        %v6437 = vlaneseq
        %v6438 = vshrl.u32 %v6437, 7
        %v6439 = vsub.s32 %v6436, %v6438
        %v6440 = vrot.slane %v6305, %v6439
        %v6442 = vunpack.c.l.s4 1983009808
        %v6443 = vunpack.c.0.s8 %v6442
        %v6444 = vlaneseq
        %v6445 = vshrl.u32 %v6444, 7
        %v6446 = vsub.s32 %v6443, %v6445
        %v6447 = vrot.slane %v6433, %v6446
        %v6448 = vcombine.high %v6440, %v6440
        %v6449 = vcombine.high %v6447, %v6447
        %v6482 = vrot.slane %v6321, 7
        %v6483 = vrot.slane %v6482, 2
        %v6484 = vrot.slane %v6329, 7
        %v6485 = vrot.slane %v6484, 2
        %v6486 = vrot.slane %v6328, 7
        %v6487 = vrot.slane %v6486, 2
        %v6488 = vrot.slane %v6330, 7
        %v6489 = vrot.slane %v6488, 2
        %v6490 = vrot.slane %v6355, 7
        %v6491 = vrot.slane %v6490, 2
        %v6492 = vrot.slane %v6363, 7
        %v6493 = vrot.slane %v6492, 2
        %v6494 = vrot.slane %v6362, 7
        %v6495 = vrot.slane %v6494, 2
        %v6496 = vrot.slane %v6364, 7
        %v6497 = vrot.slane %v6496, 2
        %v6498 = vrot.slane %v6389, 7
        %v6499 = vrot.slane %v6498, 2
        %v6500 = vrot.slane %v6397, 7
        %v6501 = vrot.slane %v6500, 2
        %v6502 = vrot.slane %v6396, 7
        %v6503 = vrot.slane %v6502, 2
        %v6504 = vrot.slane %v6398, 7
        %v6505 = vrot.slane %v6504, 2
        %v6506 = vrot.slane %v6423, 7
        %v6507 = vrot.slane %v6506, 2
        %v6508 = vrot.slane %v6431, 7
        %v6509 = vrot.slane %v6508, 2
        %v6510 = vrot.slane %v6430, 7
        %v6511 = vrot.slane %v6510, 2
        %v6512 = vrot.slane %v6432, 7
        %v6513 = vrot.slane %v6512, 2
        %v6530 = vmax.f32 %v6321, %v6483
        %v6531 = vmax.f32 %v6329, %v6485
        %v6532 = vmax.f32 %v6328, %v6487
        %v6533 = vmax.f32 %v6330, %v6489
        %v6534 = vmax.f32 %v6355, %v6491
        %v6535 = vmax.f32 %v6363, %v6493
        %v6536 = vmax.f32 %v6362, %v6495
        %v6537 = vmax.f32 %v6364, %v6497
        %v6538 = vmax.f32 %v6389, %v6499
        %v6539 = vmax.f32 %v6397, %v6501
        %v6540 = vmax.f32 %v6396, %v6503
        %v6541 = vmax.f32 %v6398, %v6505
        %v6542 = vmax.f32 %v6423, %v6507
        %v6543 = vmax.f32 %v6431, %v6509
        %v6544 = vmax.f32 %v6430, %v6511
        %v6545 = vmax.f32 %v6432, %v6513
        %v6546 = vrot.slane %v6338, 7
        %v6547 = vrot.slane %v6546, 2
        %v6548 = vrot.slane %v6346, 7
        %v6549 = vrot.slane %v6548, 2
        %v6550 = vrot.slane %v6345, 7
        %v6551 = vrot.slane %v6550, 2
        %v6552 = vrot.slane %v6347, 7
        %v6553 = vrot.slane %v6552, 2
        %v6554 = vrot.slane %v6372, 7
        %v6555 = vrot.slane %v6554, 2
        %v6556 = vrot.slane %v6380, 7
        %v6557 = vrot.slane %v6556, 2
        %v6558 = vrot.slane %v6379, 7
        %v6559 = vrot.slane %v6558, 2
        %v6560 = vrot.slane %v6381, 7
        %v6561 = vrot.slane %v6560, 2
        %v6562 = vrot.slane %v6406, 7
        %v6563 = vrot.slane %v6562, 2
        %v6564 = vrot.slane %v6414, 7
        %v6565 = vrot.slane %v6564, 2
        %v6566 = vrot.slane %v6413, 7
        %v6567 = vrot.slane %v6566, 2
        %v6568 = vrot.slane %v6415, 7
        %v6569 = vrot.slane %v6568, 2
        %v6570 = vrot.slane %v6440, 7
        %v6571 = vrot.slane %v6570, 2
        %v6572 = vrot.slane %v6448, 7
        %v6573 = vrot.slane %v6572, 2
        %v6574 = vrot.slane %v6447, 7
        %v6575 = vrot.slane %v6574, 2
        %v6576 = vrot.slane %v6449, 7
        %v6577 = vrot.slane %v6576, 2
        %v6594 = vmax.f32 %v6338, %v6547
        %v6595 = vmax.f32 %v6346, %v6549
        %v6596 = vmax.f32 %v6345, %v6551
        %v6597 = vmax.f32 %v6347, %v6553
        %v6598 = vmax.f32 %v6372, %v6555
        %v6599 = vmax.f32 %v6380, %v6557
        %v6600 = vmax.f32 %v6379, %v6559
        %v6601 = vmax.f32 %v6381, %v6561
        %v6602 = vmax.f32 %v6406, %v6563
        %v6603 = vmax.f32 %v6414, %v6565
        %v6604 = vmax.f32 %v6413, %v6567
        %v6605 = vmax.f32 %v6415, %v6569
        %v6606 = vmax.f32 %v6440, %v6571
        %v6607 = vmax.f32 %v6448, %v6573
        %v6608 = vmax.f32 %v6447, %v6575
        %v6609 = vmax.f32 %v6449, %v6577
        %v6610 = vmax.f32 %v6530, %v6594
        %v6611 = vmax.f32 %v6531, %v6595
        %v6612 = vmax.f32 %v6532, %v6596
        %v6613 = vmax.f32 %v6533, %v6597
        %v6614 = vmax.f32 %v6534, %v6598
        %v6615 = vmax.f32 %v6535, %v6599
        %v6616 = vmax.f32 %v6536, %v6600
        %v6617 = vmax.f32 %v6537, %v6601
        %v6618 = vmax.f32 %v6538, %v6602
        %v6619 = vmax.f32 %v6539, %v6603
        %v6620 = vmax.f32 %v6540, %v6604
        %v6621 = vmax.f32 %v6541, %v6605
        %v6622 = vmax.f32 %v6542, %v6606
        %v6623 = vmax.f32 %v6543, %v6607
        %v6624 = vmax.f32 %v6544, %v6608
        %v6625 = vmax.f32 %v6545, %v6609
        %vm6626 = vcmask 259072
        %6627 = vst.msk [vmem:[#allocation4] sm:$0x3f] %vm6626, 0.0
        %6628 = vst.msk [vmem:[#allocation4 + $0x8] sm:$0x3f] %vm6626, 0.0
        %6629 = vst.msk [vmem:[#allocation4 + $0x10] sm:$0x3f] %vm6626, 0.0
        %6630 = vst.msk [vmem:[#allocation4 + $0x18] sm:$0x3f] %vm6626, 0.0
        %6631 = vst.msk [vmem:[#allocation4 + $0x20] sm:$0x3f] %vm6626, 0.0
        %6632 = vst.msk [vmem:[#allocation4 + $0x28] sm:$0x3f] %vm6626, 0.0
        %v6649 = vlaneseq
        %v6650 = vshrl.u32 %v6649, 7
        %v6651 = vsub.s32 0, %v6650
        %v6652 = vrot.slane %v6610, %v6651
        %v6653 = vlaneseq
        %v6654 = vshrl.u32 %v6653, 7
        %v6655 = vsub.s32 0, %v6654
        %v6656 = vrot.slane %v6611, %v6655
        %v6657 = vlaneseq
        %v6658 = vshrl.u32 %v6657, 7
        %v6659 = vsub.s32 0, %v6658
        %v6660 = vrot.slane %v6612, %v6659
        %v6661 = vlaneseq
        %v6662 = vshrl.u32 %v6661, 7
        %v6663 = vsub.s32 0, %v6662
        %v6664 = vrot.slane %v6613, %v6663
        %v6665 = vlaneseq
        %v6666 = vshrl.u32 %v6665, 7
        %v6667 = vsub.s32 0, %v6666
        %v6668 = vrot.slane %v6614, %v6667
        %v6669 = vlaneseq
        %v6670 = vshrl.u32 %v6669, 7
        %v6671 = vsub.s32 0, %v6670
        %v6672 = vrot.slane %v6615, %v6671
        %v6673 = vlaneseq
        %v6674 = vshrl.u32 %v6673, 7
        %v6675 = vsub.s32 0, %v6674
        %v6676 = vrot.slane %v6616, %v6675
        %v6677 = vlaneseq
        %v6678 = vshrl.u32 %v6677, 7
        %v6679 = vsub.s32 0, %v6678
        %v6680 = vrot.slane %v6617, %v6679
        %v6681 = vlaneseq
        %v6682 = vshrl.u32 %v6681, 7
        %v6683 = vsub.s32 0, %v6682
        %v6684 = vrot.slane %v6618, %v6683
        %v6685 = vlaneseq
        %v6686 = vshrl.u32 %v6685, 7
        %v6687 = vsub.s32 0, %v6686
        %v6688 = vrot.slane %v6619, %v6687
        %v6689 = vlaneseq
        %v6690 = vshrl.u32 %v6689, 7
        %v6691 = vsub.s32 0, %v6690
        %v6692 = vrot.slane %v6620, %v6691
        %v6693 = vlaneseq
        %v6694 = vshrl.u32 %v6693, 7
        %v6695 = vsub.s32 0, %v6694
        %v6696 = vrot.slane %v6621, %v6695
        %v6697 = vlaneseq
        %v6698 = vshrl.u32 %v6697, 7
        %v6699 = vsub.s32 0, %v6698
        %v6700 = vrot.slane %v6622, %v6699
        %v6701 = vlaneseq
        %v6702 = vshrl.u32 %v6701, 7
        %v6703 = vsub.s32 0, %v6702
        %v6704 = vrot.slane %v6623, %v6703
        %v6705 = vlaneseq
        %v6706 = vshrl.u32 %v6705, 7
        %v6707 = vsub.s32 0, %v6706
        %v6708 = vrot.slane %v6624, %v6707
        %v6709 = vlaneseq
        %v6710 = vshrl.u32 %v6709, 7
        %v6711 = vsub.s32 0, %v6710
        %v6712 = vrot.slane %v6625, %v6711
        %v6713 = vsel %vm4998, %v6656, %v6652
        %v6714 = vsel %vm5000, %v6660, %v6713
        %v6715 = vsel %vm5002, %v6664, %v6714
        %v6716 = vsel %vm4998, %v6672, %v6668
        %v6717 = vsel %vm5000, %v6676, %v6716
        %v6718 = vsel %vm5002, %v6680, %v6717
        %v6719 = vsel %vm4998, %v6688, %v6684
        %v6720 = vsel %vm5000, %v6692, %v6719
        %v6721 = vsel %vm5002, %v6696, %v6720
        %v6722 = vsel %vm4998, %v6704, %v6700
        %v6723 = vsel %vm5000, %v6708, %v6722
        %v6724 = vsel %vm5002, %v6712, %v6723
        %s6729 = scalar_lea.vmem [#allocation4], 8
        %vm6730 = vcmask 257024
        %6731 = vst.msk [vmem:[%s6729 + $0x1] sm:$0xf] %vm6730, %v6715
        %6732 = vst.msk [vmem:[%s6729 + $0x9] sm:$0xf] %vm6730, %v6718
        %6733 = vst.msk [vmem:[%s6729 + $0x11] sm:$0xf] %vm6730, %v6721
        %6734 = vst.msk [vmem:[%s6729 + $0x19] sm:$0xf] %vm6730, %v6724
        %v6735 = vld [vmem:[#allocation4] sm:$0x3f]
        %v6736 = vld [vmem:[#allocation4 + $0x8] sm:$0x3f]
        %v6737 = vld [vmem:[#allocation4 + $0x10] sm:$0x3f]
        %v6738 = vld [vmem:[#allocation4 + $0x18] sm:$0x3f]
        %v6739 = vld [vmem:[#allocation4 + $0x20] sm:$0x3f]
        %v6740 = vld [vmem:[#allocation4 + $0x28] sm:$0x3f]
        %v6741 = vld [vmem:[%s5] sm:$0xff]
        %v6742 = vld [vmem:[%s5 + $0x8] sm:$0xff]
        %v6743 = vld [vmem:[%s5 + $0x10] sm:$0xff]
        %v6744 = vld [vmem:[%s5 + $0x18] sm:$0xff]
        %s6745 = scalar_lea.vmem %s5, 96
        %v6746 = vld [vmem:[%s6745] sm:$0xff]
        %v6747 = vld [vmem:[%s6745 + $0x8] sm:$0xff]
        %v6748 = vld [vmem:[%s6745 + $0x10] sm:$0xff]
        %v6749 = vld [vmem:[%s6745 + $0x18] sm:$0xff]
        %v6754 = vcombine.low %v6736, %v6737
        %v6755 = vcombine.low %v6738, %v6739
        %v6756 = vsel %vm4656, %v6754, 0
        %v6758 = vsel %vm4656, %v6755, 0
        %6760 = vmatprep.subr.mxu0 0.0
        %6761 = vmatpush1.msra.mxu0 0.0
        %6762 = vmatprep.subr.mxu0 0.0
        %6763 = vmatpush1.msra.mxu0 0.0
        %6764 = vmatprep.subr.mxu0 0.0
        %6765 = vmatpush1.msra.mxu0 0.0
        %6766 = vmatprep.subr.mxu0 0.0
        %6767 = vmatpush1.msra.mxu0 0.0
        %6768 = vmatprep.subr.mxu0 0.0
        %6769 = vmatpush1.msra.mxu0 0.0
        %6770 = vmatprep.subr.mxu0 0.0
        %6771 = vmatpush1.msra.mxu0 0.0
        %6772 = vmatprep.subr.mxu0 0.0
        %6773 = vmatpush1.msra.mxu0 0.0
        %6774 = vmatprep.subr.mxu0 0.0
        %6775 = vmatpush1.msra.mxu0 0.0
        %6776 = vmatprep.subr.mxu0 0.0
        %6777 = vmatpush1.msra.mxu0 0.0
        %6778 = vmatprep.subr.mxu0 0.0
        %6779 = vmatpush1.msra.mxu0 0.0
        %6780 = vmatprep.subr.mxu0 0.0
        %6781 = vmatpush1.msra.mxu0 0.0
        %6782 = vmatprep.subr.mxu0 0.0
        %6783 = vmatpush1.msra.mxu0 0.0
        %6784 = vmatprep.subr.mxu0 0.0
        %6785 = vmatpush1.msra.mxu0 %v6749
        %6786 = vmatprep.subr.mxu0 0.0
        %6787 = vmatpush1.msra.mxu0 %v6748
        %6788 = vmatprep.subr.mxu0 0.0
        %6789 = vmatpush1.msra.mxu0 %v6747
        %6790 = vmatprep.subr.mxu0 0.0
        %6791 = vmatpush1.msra.mxu0 %v6746
        %6792 = vmatprep.subr.mxu0 0.0
        %6793 = vmatpush2.msra.mxu0 0.0
        %6794 = vmatprep.subr.mxu0 0.0
        %6795 = vmatpush2.msra.mxu0 0.0
        %6796 = vmatprep.subr.mxu0 0.0
        %6797 = vmatpush2.msra.mxu0 0.0
        %6798 = vmatprep.subr.mxu0 0.0
        %6799 = vmatpush2.msra.mxu0 0.0
        %6800 = vmatprep.subr.mxu0 0.0
        %6801 = vmatpush2.msra.mxu0 0.0
        %6802 = vmatprep.subr.mxu0 0.0
        %6803 = vmatpush2.msra.mxu0 0.0
        %6804 = vmatprep.subr.mxu0 0.0
        %6805 = vmatpush2.msra.mxu0 0.0
        %6806 = vmatprep.subr.mxu0 0.0
        %6807 = vmatpush2.msra.mxu0 0.0
        %6808 = vmatprep.subr.mxu0 0.0
        %6809 = vmatpush2.msra.mxu0 0.0
        %6810 = vmatprep.subr.mxu0 0.0
        %6811 = vmatpush2.msra.mxu0 0.0
        %6812 = vmatprep.subr.mxu0 0.0
        %6813 = vmatpush2.msra.mxu0 0.0
        %6814 = vmatprep.subr.mxu0 0.0
        %6815 = vmatpush2.msra.mxu0 0.0
        %6816 = vmatprep.subr.mxu0 0.0
        %6817 = vmatpush2.msra.mxu0 0.0
        %6818 = vmatprep.subr.mxu0 0.0
        %6819 = vmatpush2.msra.mxu0 0.0
        %6820 = vmatprep.subr.mxu0 0.0
        %6821 = vmatpush2.msra.mxu0 0.0
        %6822 = vmatprep.subr.mxu0 0.0
        %6823 = vmatpush2.msra.mxu0 0.0
        %6824 = vmatprep.mubr.f32.mxu0 0.0
        %6825 = vmatmul.mubr.f32.gmra.mxu0 %v6756
        %v6826 = vpop.f32.mrf.mxu0
        %v6827 = vadd.f32 0.0, %v6826
        %v6828 = vpop.f32.mrf.mxu0
        %6829 = vmatprep.mubr.f32.mxu0 0.0
        %6830 = vmatmul.mubr.f32.gmra.mxu0 %v6758
        %v6831 = vpop.f32.mrf.mxu0
        %v6832 = vadd.f32 0.0, %v6831
        %v6833 = vpop.f32.mrf.mxu0
        %6834 = vdwg.mxu0
        %v6836 = vcombine.low %v6735, %v6736
        %v6837 = vcombine.low %v6737, %v6738
        %v6838 = vsel %vm4656, %v6836, 0
        %v6840 = vsel %vm4656, %v6837, 0
        %6842 = vmatprep.subr.mxu0 0.0
        %6843 = vmatpush1.msra.mxu0 0.0
        %6844 = vmatprep.subr.mxu0 0.0
        %6845 = vmatpush1.msra.mxu0 0.0
        %6846 = vmatprep.subr.mxu0 0.0
        %6847 = vmatpush1.msra.mxu0 0.0
        %6848 = vmatprep.subr.mxu0 0.0
        %6849 = vmatpush1.msra.mxu0 0.0
        %6850 = vmatprep.subr.mxu0 0.0
        %6851 = vmatpush1.msra.mxu0 0.0
        %6852 = vmatprep.subr.mxu0 0.0
        %6853 = vmatpush1.msra.mxu0 0.0
        %6854 = vmatprep.subr.mxu0 0.0
        %6855 = vmatpush1.msra.mxu0 0.0
        %6856 = vmatprep.subr.mxu0 0.0
        %6857 = vmatpush1.msra.mxu0 0.0
        %6858 = vmatprep.subr.mxu0 0.0
        %6859 = vmatpush1.msra.mxu0 0.0
        %6860 = vmatprep.subr.mxu0 0.0
        %6861 = vmatpush1.msra.mxu0 0.0
        %6862 = vmatprep.subr.mxu0 0.0
        %6863 = vmatpush1.msra.mxu0 0.0
        %6864 = vmatprep.subr.mxu0 0.0
        %6865 = vmatpush1.msra.mxu0 0.0
        %6866 = vmatprep.subr.mxu0 0.0
        %6867 = vmatpush1.msra.mxu0 %v6744
        %6868 = vmatprep.subr.mxu0 0.0
        %6869 = vmatpush1.msra.mxu0 %v6743
        %6870 = vmatprep.subr.mxu0 0.0
        %6871 = vmatpush1.msra.mxu0 %v6742
        %6872 = vmatprep.subr.mxu0 0.0
        %6873 = vmatpush1.msra.mxu0 %v6741
        %6874 = vmatprep.subr.mxu0 0.0
        %6875 = vmatpush2.msra.mxu0 0.0
        %6876 = vmatprep.subr.mxu0 0.0
        %6877 = vmatpush2.msra.mxu0 0.0
        %6878 = vmatprep.subr.mxu0 0.0
        %6879 = vmatpush2.msra.mxu0 0.0
        %6880 = vmatprep.subr.mxu0 0.0
        %6881 = vmatpush2.msra.mxu0 0.0
        %6882 = vmatprep.subr.mxu0 0.0
        %6883 = vmatpush2.msra.mxu0 0.0
        %6884 = vmatprep.subr.mxu0 0.0
        %6885 = vmatpush2.msra.mxu0 0.0
        %6886 = vmatprep.subr.mxu0 0.0
        %6887 = vmatpush2.msra.mxu0 0.0
        %6888 = vmatprep.subr.mxu0 0.0
        %6889 = vmatpush2.msra.mxu0 0.0
        %6890 = vmatprep.subr.mxu0 0.0
        %6891 = vmatpush2.msra.mxu0 0.0
        %6892 = vmatprep.subr.mxu0 0.0
        %6893 = vmatpush2.msra.mxu0 0.0
        %6894 = vmatprep.subr.mxu0 0.0
        %6895 = vmatpush2.msra.mxu0 0.0
        %6896 = vmatprep.subr.mxu0 0.0
        %6897 = vmatpush2.msra.mxu0 0.0
        %6898 = vmatprep.subr.mxu0 0.0
        %6899 = vmatpush2.msra.mxu0 0.0
        %6900 = vmatprep.subr.mxu0 0.0
        %6901 = vmatpush2.msra.mxu0 0.0
        %6902 = vmatprep.subr.mxu0 0.0
        %6903 = vmatpush2.msra.mxu0 0.0
        %6904 = vmatprep.subr.mxu0 0.0
        %6905 = vmatpush2.msra.mxu0 0.0
        %6906 = vmatprep.mubr.f32.mxu0 0.0
        %6907 = vmatmul.mubr.f32.gmra.mxu0 %v6838
        %v6908 = vpop.f32.mrf.mxu0
        %v6909 = vadd.f32 %v6827, %v6908
        %v6910 = vpop.f32.mrf.mxu0
        %6911 = vmatprep.mubr.f32.mxu0 0.0
        %6912 = vmatmul.mubr.f32.gmra.mxu0 %v6840
        %v6913 = vpop.f32.mrf.mxu0
        %v6914 = vadd.f32 %v6832, %v6913
        %v6915 = vpop.f32.mrf.mxu0
        %6916 = vdwg.mxu0
        %s6917 = scalar_lea.vmem %s5, 192
        %v6918 = vld [vmem:[%s6917] sm:$0xff]
        %v6919 = vld [vmem:[%s6917 + $0x8] sm:$0xff]
        %v6920 = vld [vmem:[%s6917 + $0x10] sm:$0xff]
        %v6921 = vld [vmem:[%s6917 + $0x18] sm:$0xff]
        %v6923 = vcombine.low %v6739, %v6740
        %v6924 = vsel %vm4656, %v6923, 0
        %6926 = vmatprep.subr.mxu0 0.0
        %6927 = vmatpush1.msra.mxu0 0.0
        %6928 = vmatprep.subr.mxu0 0.0
        %6929 = vmatpush1.msra.mxu0 0.0
        %6930 = vmatprep.subr.mxu0 0.0
        %6931 = vmatpush1.msra.mxu0 0.0
        %6932 = vmatprep.subr.mxu0 0.0
        %6933 = vmatpush1.msra.mxu0 0.0
        %6934 = vmatprep.subr.mxu0 0.0
        %6935 = vmatpush1.msra.mxu0 0.0
        %6936 = vmatprep.subr.mxu0 0.0
        %6937 = vmatpush1.msra.mxu0 0.0
        %6938 = vmatprep.subr.mxu0 0.0
        %6939 = vmatpush1.msra.mxu0 0.0
        %6940 = vmatprep.subr.mxu0 0.0
        %6941 = vmatpush1.msra.mxu0 0.0
        %6942 = vmatprep.subr.mxu0 0.0
        %6943 = vmatpush1.msra.mxu0 0.0
        %6944 = vmatprep.subr.mxu0 0.0
        %6945 = vmatpush1.msra.mxu0 0.0
        %6946 = vmatprep.subr.mxu0 0.0
        %6947 = vmatpush1.msra.mxu0 0.0
        %6948 = vmatprep.subr.mxu0 0.0
        %6949 = vmatpush1.msra.mxu0 0.0
        %6950 = vmatprep.subr.mxu0 0.0
        %6951 = vmatpush1.msra.mxu0 %v6921
        %6952 = vmatprep.subr.mxu0 0.0
        %6953 = vmatpush1.msra.mxu0 %v6920
        %6954 = vmatprep.subr.mxu0 0.0
        %6955 = vmatpush1.msra.mxu0 %v6919
        %6956 = vmatprep.subr.mxu0 0.0
        %6957 = vmatpush1.msra.mxu0 %v6918
        %6958 = vmatprep.subr.mxu0 0.0
        %6959 = vmatpush2.msra.mxu0 0.0
        %6960 = vmatprep.subr.mxu0 0.0
        %6961 = vmatpush2.msra.mxu0 0.0
        %6962 = vmatprep.subr.mxu0 0.0
        %6963 = vmatpush2.msra.mxu0 0.0
        %6964 = vmatprep.subr.mxu0 0.0
        %6965 = vmatpush2.msra.mxu0 0.0
        %6966 = vmatprep.subr.mxu0 0.0
        %6967 = vmatpush2.msra.mxu0 0.0
        %6968 = vmatprep.subr.mxu0 0.0
        %6969 = vmatpush2.msra.mxu0 0.0
        %6970 = vmatprep.subr.mxu0 0.0
        %6971 = vmatpush2.msra.mxu0 0.0
        %6972 = vmatprep.subr.mxu0 0.0
        %6973 = vmatpush2.msra.mxu0 0.0
        %6974 = vmatprep.subr.mxu0 0.0
        %6975 = vmatpush2.msra.mxu0 0.0
        %6976 = vmatprep.subr.mxu0 0.0
        %6977 = vmatpush2.msra.mxu0 0.0
        %6978 = vmatprep.subr.mxu0 0.0
        %6979 = vmatpush2.msra.mxu0 0.0
        %6980 = vmatprep.subr.mxu0 0.0
        %6981 = vmatpush2.msra.mxu0 0.0
        %6982 = vmatprep.subr.mxu0 0.0
        %6983 = vmatpush2.msra.mxu0 0.0
        %6984 = vmatprep.subr.mxu0 0.0
        %6985 = vmatpush2.msra.mxu0 0.0
        %6986 = vmatprep.subr.mxu0 0.0
        %6987 = vmatpush2.msra.mxu0 0.0
        %6988 = vmatprep.subr.mxu0 0.0
        %6989 = vmatpush2.msra.mxu0 0.0
        %6990 = vmatprep.mubr.f32.mxu0 0.0
        %6991 = vmatmul.mubr.f32.gmra.mxu0 %v6840
        %v6992 = vpop.f32.mrf.mxu0
        %v6993 = vadd.f32 0.0, %v6992
        %v6994 = vpop.f32.mrf.mxu0
        %6995 = vmatprep.mubr.f32.mxu0 0.0
        %6996 = vmatmul.mubr.f32.gmra.mxu0 %v6924
        %v6997 = vpop.f32.mrf.mxu0
        %v6998 = vadd.f32 0.0, %v6997
        %v6999 = vpop.f32.mrf.mxu0
        %7000 = vdwg.mxu0
        %v7001 = vadd.f32 %v6909, %v6993
        %v7002 = vadd.f32 %v6914, %v6998
        %v7003 = vcombine.high %v6735, %v6735
        %v7004 = vcombine.high %v6736, %v6736
        %v7005 = vcombine.high %v6737, %v6737
        %v7006 = vcombine.high %v6738, %v6738
        %vm7007 = vcmask 1042432
        %vm7008 = vcmask 1046532
        %vm7009 = vmor %vm7007, %vm7008
        %v7010 = vrot.slane %v6735, 5
        %v7011 = vrot.slane %v7010, 4
        %v7012 = vrot.slane %v7003, 5
        %v7013 = vsel %vm7009, %v7011, %v7012
        %v7014 = vrot.slane %v6736, 5
        %v7015 = vrot.slane %v7014, 4
        %v7016 = vrot.slane %v7004, 5
        %v7017 = vsel %vm7009, %v7015, %v7016
        %v7018 = vrot.slane %v6737, 5
        %v7019 = vrot.slane %v7018, 4
        %v7020 = vrot.slane %v7005, 5
        %v7021 = vsel %vm7009, %v7019, %v7020
        %v7022 = vrot.slane %v6738, 5
        %v7023 = vrot.slane %v7022, 4
        %v7024 = vrot.slane %v7006, 5
        %v7025 = vsel %vm7009, %v7023, %v7024
        %s7026 = scalar_lea.vmem %s5, 32
        %v7027 = vld [vmem:[%s7026] sm:$0xff]
        %v7028 = vld [vmem:[%s7026 + $0x8] sm:$0xff]
        %v7029 = vld [vmem:[%s7026 + $0x10] sm:$0xff]
        %v7030 = vld [vmem:[%s7026 + $0x18] sm:$0xff]
        %v7031 = vcombine.low %v7013, %v7017
        %v7032 = vcombine.low %v7021, %v7025
        %v7033 = vsel %vm4656, %v7031, 0
        %v7035 = vsel %vm4656, %v7032, 0
        %7037 = vmatprep.subr.mxu0 0.0
        %7038 = vmatpush1.msra.mxu0 0.0
        %7039 = vmatprep.subr.mxu0 0.0
        %7040 = vmatpush1.msra.mxu0 0.0
        %7041 = vmatprep.subr.mxu0 0.0
        %7042 = vmatpush1.msra.mxu0 0.0
        %7043 = vmatprep.subr.mxu0 0.0
        %7044 = vmatpush1.msra.mxu0 0.0
        %7045 = vmatprep.subr.mxu0 0.0
        %7046 = vmatpush1.msra.mxu0 0.0
        %7047 = vmatprep.subr.mxu0 0.0
        %7048 = vmatpush1.msra.mxu0 0.0
        %7049 = vmatprep.subr.mxu0 0.0
        %7050 = vmatpush1.msra.mxu0 0.0
        %7051 = vmatprep.subr.mxu0 0.0
        %7052 = vmatpush1.msra.mxu0 0.0
        %7053 = vmatprep.subr.mxu0 0.0
        %7054 = vmatpush1.msra.mxu0 0.0
        %7055 = vmatprep.subr.mxu0 0.0
        %7056 = vmatpush1.msra.mxu0 0.0
        %7057 = vmatprep.subr.mxu0 0.0
        %7058 = vmatpush1.msra.mxu0 0.0
        %7059 = vmatprep.subr.mxu0 0.0
        %7060 = vmatpush1.msra.mxu0 0.0
        %7061 = vmatprep.subr.mxu0 0.0
        %7062 = vmatpush1.msra.mxu0 %v7030
        %7063 = vmatprep.subr.mxu0 0.0
        %7064 = vmatpush1.msra.mxu0 %v7029
        %7065 = vmatprep.subr.mxu0 0.0
        %7066 = vmatpush1.msra.mxu0 %v7028
        %7067 = vmatprep.subr.mxu0 0.0
        %7068 = vmatpush1.msra.mxu0 %v7027
        %7069 = vmatprep.subr.mxu0 0.0
        %7070 = vmatpush2.msra.mxu0 0.0
        %7071 = vmatprep.subr.mxu0 0.0
        %7072 = vmatpush2.msra.mxu0 0.0
        %7073 = vmatprep.subr.mxu0 0.0
        %7074 = vmatpush2.msra.mxu0 0.0
        %7075 = vmatprep.subr.mxu0 0.0
        %7076 = vmatpush2.msra.mxu0 0.0
        %7077 = vmatprep.subr.mxu0 0.0
        %7078 = vmatpush2.msra.mxu0 0.0
        %7079 = vmatprep.subr.mxu0 0.0
        %7080 = vmatpush2.msra.mxu0 0.0
        %7081 = vmatprep.subr.mxu0 0.0
        %7082 = vmatpush2.msra.mxu0 0.0
        %7083 = vmatprep.subr.mxu0 0.0
        %7084 = vmatpush2.msra.mxu0 0.0
        %7085 = vmatprep.subr.mxu0 0.0
        %7086 = vmatpush2.msra.mxu0 0.0
        %7087 = vmatprep.subr.mxu0 0.0
        %7088 = vmatpush2.msra.mxu0 0.0
        %7089 = vmatprep.subr.mxu0 0.0
        %7090 = vmatpush2.msra.mxu0 0.0
        %7091 = vmatprep.subr.mxu0 0.0
        %7092 = vmatpush2.msra.mxu0 0.0
        %7093 = vmatprep.subr.mxu0 0.0
        %7094 = vmatpush2.msra.mxu0 0.0
        %7095 = vmatprep.subr.mxu0 0.0
        %7096 = vmatpush2.msra.mxu0 0.0
        %7097 = vmatprep.subr.mxu0 0.0
        %7098 = vmatpush2.msra.mxu0 0.0
        %7099 = vmatprep.subr.mxu0 0.0
        %7100 = vmatpush2.msra.mxu0 0.0
        %7101 = vmatprep.mubr.f32.mxu0 0.0
        %7102 = vmatmul.mubr.f32.gmra.mxu0 %v7033
        %v7103 = vpop.f32.mrf.mxu0
        %v7104 = vadd.f32 0.0, %v7103
        %v7105 = vpop.f32.mrf.mxu0
        %7106 = vmatprep.mubr.f32.mxu0 0.0
        %7107 = vmatmul.mubr.f32.gmra.mxu0 %v7035
        %v7108 = vpop.f32.mrf.mxu0
        %v7109 = vadd.f32 0.0, %v7108
        %v7110 = vpop.f32.mrf.mxu0
        %7111 = vdwg.mxu0
        %v7112 = vadd.f32 %v7001, %v7104
        %v7113 = vadd.f32 %v7002, %v7109
        %v7114 = vcombine.high %v6739, %v6739
        %v7115 = vrot.slane %v6739, 5
        %v7116 = vrot.slane %v7115, 4
        %v7117 = vrot.slane %v7114, 5
        %v7118 = vsel %vm7009, %v7116, %v7117
        %s7119 = scalar_lea.vmem %s5, 128
        %v7120 = vld [vmem:[%s7119] sm:$0xff]
        %v7121 = vld [vmem:[%s7119 + $0x8] sm:$0xff]
        %v7122 = vld [vmem:[%s7119 + $0x10] sm:$0xff]
        %v7123 = vld [vmem:[%s7119 + $0x18] sm:$0xff]
        %v7124 = vcombine.low %v7017, %v7021
        %v7125 = vcombine.low %v7025, %v7118
        %v7126 = vsel %vm4656, %v7124, 0
        %v7128 = vsel %vm4656, %v7125, 0
        %7130 = vmatprep.subr.mxu0 0.0
        %7131 = vmatpush1.msra.mxu0 0.0
        %7132 = vmatprep.subr.mxu0 0.0
        %7133 = vmatpush1.msra.mxu0 0.0
        %7134 = vmatprep.subr.mxu0 0.0
        %7135 = vmatpush1.msra.mxu0 0.0
        %7136 = vmatprep.subr.mxu0 0.0
        %7137 = vmatpush1.msra.mxu0 0.0
        %7138 = vmatprep.subr.mxu0 0.0
        %7139 = vmatpush1.msra.mxu0 0.0
        %7140 = vmatprep.subr.mxu0 0.0
        %7141 = vmatpush1.msra.mxu0 0.0
        %7142 = vmatprep.subr.mxu0 0.0
        %7143 = vmatpush1.msra.mxu0 0.0
        %7144 = vmatprep.subr.mxu0 0.0
        %7145 = vmatpush1.msra.mxu0 0.0
        %7146 = vmatprep.subr.mxu0 0.0
        %7147 = vmatpush1.msra.mxu0 0.0
        %7148 = vmatprep.subr.mxu0 0.0
        %7149 = vmatpush1.msra.mxu0 0.0
        %7150 = vmatprep.subr.mxu0 0.0
        %7151 = vmatpush1.msra.mxu0 0.0
        %7152 = vmatprep.subr.mxu0 0.0
        %7153 = vmatpush1.msra.mxu0 0.0
        %7154 = vmatprep.subr.mxu0 0.0
        %7155 = vmatpush1.msra.mxu0 %v7123
        %7156 = vmatprep.subr.mxu0 0.0
        %7157 = vmatpush1.msra.mxu0 %v7122
        %7158 = vmatprep.subr.mxu0 0.0
        %7159 = vmatpush1.msra.mxu0 %v7121
        %7160 = vmatprep.subr.mxu0 0.0
        %7161 = vmatpush1.msra.mxu0 %v7120
        %7162 = vmatprep.subr.mxu0 0.0
        %7163 = vmatpush2.msra.mxu0 0.0
        %7164 = vmatprep.subr.mxu0 0.0
        %7165 = vmatpush2.msra.mxu0 0.0
        %7166 = vmatprep.subr.mxu0 0.0
        %7167 = vmatpush2.msra.mxu0 0.0
        %7168 = vmatprep.subr.mxu0 0.0
        %7169 = vmatpush2.msra.mxu0 0.0
        %7170 = vmatprep.subr.mxu0 0.0
        %7171 = vmatpush2.msra.mxu0 0.0
        %7172 = vmatprep.subr.mxu0 0.0
        %7173 = vmatpush2.msra.mxu0 0.0
        %7174 = vmatprep.subr.mxu0 0.0
        %7175 = vmatpush2.msra.mxu0 0.0
        %7176 = vmatprep.subr.mxu0 0.0
        %7177 = vmatpush2.msra.mxu0 0.0
        %7178 = vmatprep.subr.mxu0 0.0
        %7179 = vmatpush2.msra.mxu0 0.0
        %7180 = vmatprep.subr.mxu0 0.0
        %7181 = vmatpush2.msra.mxu0 0.0
        %7182 = vmatprep.subr.mxu0 0.0
        %7183 = vmatpush2.msra.mxu0 0.0
        %7184 = vmatprep.subr.mxu0 0.0
        %7185 = vmatpush2.msra.mxu0 0.0
        %7186 = vmatprep.subr.mxu0 0.0
        %7187 = vmatpush2.msra.mxu0 0.0
        %7188 = vmatprep.subr.mxu0 0.0
        %7189 = vmatpush2.msra.mxu0 0.0
        %7190 = vmatprep.subr.mxu0 0.0
        %7191 = vmatpush2.msra.mxu0 0.0
        %7192 = vmatprep.subr.mxu0 0.0
        %7193 = vmatpush2.msra.mxu0 0.0
        %7194 = vmatprep.mubr.f32.mxu0 0.0
        %7195 = vmatmul.mubr.f32.gmra.mxu0 %v7126
        %v7196 = vpop.f32.mrf.mxu0
        %v7197 = vadd.f32 0.0, %v7196
        %v7198 = vpop.f32.mrf.mxu0
        %7199 = vmatprep.mubr.f32.mxu0 0.0
        %7200 = vmatmul.mubr.f32.gmra.mxu0 %v7128
        %v7201 = vpop.f32.mrf.mxu0
        %v7202 = vadd.f32 0.0, %v7201
        %v7203 = vpop.f32.mrf.mxu0
        %7204 = vdwg.mxu0
        %v7205 = vadd.f32 %v7112, %v7197
        %v7206 = vadd.f32 %v7113, %v7202
        %v7207 = vcombine.high %v6740, %v6740
        %v7208 = vrot.slane %v6740, 5
        %v7209 = vrot.slane %v7208, 4
        %v7210 = vrot.slane %v7207, 5
        %v7211 = vsel %vm7009, %v7209, %v7210
        %s7212 = scalar_lea.vmem %s5, 224
        %v7213 = vld [vmem:[%s7212] sm:$0xff]
        %v7214 = vld [vmem:[%s7212 + $0x8] sm:$0xff]
        %v7215 = vld [vmem:[%s7212 + $0x10] sm:$0xff]
        %v7216 = vld [vmem:[%s7212 + $0x18] sm:$0xff]
        %v7217 = vcombine.low %v7118, %v7211
        %v7218 = vsel %vm4656, %v7217, 0
        %7220 = vmatprep.subr.mxu0 0.0
        %7221 = vmatpush1.msra.mxu0 0.0
        %7222 = vmatprep.subr.mxu0 0.0
        %7223 = vmatpush1.msra.mxu0 0.0
        %7224 = vmatprep.subr.mxu0 0.0
        %7225 = vmatpush1.msra.mxu0 0.0
        %7226 = vmatprep.subr.mxu0 0.0
        %7227 = vmatpush1.msra.mxu0 0.0
        %7228 = vmatprep.subr.mxu0 0.0
        %7229 = vmatpush1.msra.mxu0 0.0
        %7230 = vmatprep.subr.mxu0 0.0
        %7231 = vmatpush1.msra.mxu0 0.0
        %7232 = vmatprep.subr.mxu0 0.0
        %7233 = vmatpush1.msra.mxu0 0.0
        %7234 = vmatprep.subr.mxu0 0.0
        %7235 = vmatpush1.msra.mxu0 0.0
        %7236 = vmatprep.subr.mxu0 0.0
        %7237 = vmatpush1.msra.mxu0 0.0
        %7238 = vmatprep.subr.mxu0 0.0
        %7239 = vmatpush1.msra.mxu0 0.0
        %7240 = vmatprep.subr.mxu0 0.0
        %7241 = vmatpush1.msra.mxu0 0.0
        %7242 = vmatprep.subr.mxu0 0.0
        %7243 = vmatpush1.msra.mxu0 0.0
        %7244 = vmatprep.subr.mxu0 0.0
        %7245 = vmatpush1.msra.mxu0 %v7216
        %7246 = vmatprep.subr.mxu0 0.0
        %7247 = vmatpush1.msra.mxu0 %v7215
        %7248 = vmatprep.subr.mxu0 0.0
        %7249 = vmatpush1.msra.mxu0 %v7214
        %7250 = vmatprep.subr.mxu0 0.0
        %7251 = vmatpush1.msra.mxu0 %v7213
        %7252 = vmatprep.subr.mxu0 0.0
        %7253 = vmatpush2.msra.mxu0 0.0
        %7254 = vmatprep.subr.mxu0 0.0
        %7255 = vmatpush2.msra.mxu0 0.0
        %7256 = vmatprep.subr.mxu0 0.0
        %7257 = vmatpush2.msra.mxu0 0.0
        %7258 = vmatprep.subr.mxu0 0.0
        %7259 = vmatpush2.msra.mxu0 0.0
        %7260 = vmatprep.subr.mxu0 0.0
        %7261 = vmatpush2.msra.mxu0 0.0
        %7262 = vmatprep.subr.mxu0 0.0
        %7263 = vmatpush2.msra.mxu0 0.0
        %7264 = vmatprep.subr.mxu0 0.0
        %7265 = vmatpush2.msra.mxu0 0.0
        %7266 = vmatprep.subr.mxu0 0.0
        %7267 = vmatpush2.msra.mxu0 0.0
        %7268 = vmatprep.subr.mxu0 0.0
        %7269 = vmatpush2.msra.mxu0 0.0
        %7270 = vmatprep.subr.mxu0 0.0
        %7271 = vmatpush2.msra.mxu0 0.0
        %7272 = vmatprep.subr.mxu0 0.0
        %7273 = vmatpush2.msra.mxu0 0.0
        %7274 = vmatprep.subr.mxu0 0.0
        %7275 = vmatpush2.msra.mxu0 0.0
        %7276 = vmatprep.subr.mxu0 0.0
        %7277 = vmatpush2.msra.mxu0 0.0
        %7278 = vmatprep.subr.mxu0 0.0
        %7279 = vmatpush2.msra.mxu0 0.0
        %7280 = vmatprep.subr.mxu0 0.0
        %7281 = vmatpush2.msra.mxu0 0.0
        %7282 = vmatprep.subr.mxu0 0.0
        %7283 = vmatpush2.msra.mxu0 0.0
        %7284 = vmatprep.mubr.f32.mxu0 0.0
        %7285 = vmatmul.mubr.f32.gmra.mxu0 %v7035
        %v7286 = vpop.f32.mrf.mxu0
        %v7287 = vadd.f32 0.0, %v7286
        %v7288 = vpop.f32.mrf.mxu0
        %7289 = vmatprep.mubr.f32.mxu0 0.0
        %7290 = vmatmul.mubr.f32.gmra.mxu0 %v7218
        %v7291 = vpop.f32.mrf.mxu0
        %v7292 = vadd.f32 0.0, %v7291
        %v7293 = vpop.f32.mrf.mxu0
        %7294 = vdwg.mxu0
        %v7295 = vadd.f32 %v7205, %v7287
        %v7296 = vadd.f32 %v7206, %v7292
        %vm7297 = vcmask 1041408
        %vm7298 = vcmask 1045508
        %vm7299 = vmor %vm7297, %vm7298
        %v7300 = vrot.slane %v6735, 6
        %v7301 = vrot.slane %v7300, 4
        %v7302 = vrot.slane %v7003, 6
        %v7303 = vsel %vm7299, %v7301, %v7302
        %v7304 = vrot.slane %v6736, 6
        %v7305 = vrot.slane %v7304, 4
        %v7306 = vrot.slane %v7004, 6
        %v7307 = vsel %vm7299, %v7305, %v7306
        %v7308 = vrot.slane %v6737, 6
        %v7309 = vrot.slane %v7308, 4
        %v7310 = vrot.slane %v7005, 6
        %v7311 = vsel %vm7299, %v7309, %v7310
        %v7312 = vrot.slane %v6738, 6
        %v7313 = vrot.slane %v7312, 4
        %v7314 = vrot.slane %v7006, 6
        %v7315 = vsel %vm7299, %v7313, %v7314
        %s7316 = scalar_lea.vmem %s5, 64
        %v7317 = vld [vmem:[%s7316] sm:$0xff]
        %v7318 = vld [vmem:[%s7316 + $0x8] sm:$0xff]
        %v7319 = vld [vmem:[%s7316 + $0x10] sm:$0xff]
        %v7320 = vld [vmem:[%s7316 + $0x18] sm:$0xff]
        %v7321 = vcombine.low %v7303, %v7307
        %v7322 = vcombine.low %v7311, %v7315
        %v7323 = vsel %vm4656, %v7321, 0
        %v7325 = vsel %vm4656, %v7322, 0
        %7327 = vmatprep.subr.mxu0 0.0
        %7328 = vmatpush1.msra.mxu0 0.0
        %7329 = vmatprep.subr.mxu0 0.0
        %7330 = vmatpush1.msra.mxu0 0.0
        %7331 = vmatprep.subr.mxu0 0.0
        %7332 = vmatpush1.msra.mxu0 0.0
        %7333 = vmatprep.subr.mxu0 0.0
        %7334 = vmatpush1.msra.mxu0 0.0
        %7335 = vmatprep.subr.mxu0 0.0
        %7336 = vmatpush1.msra.mxu0 0.0
        %7337 = vmatprep.subr.mxu0 0.0
        %7338 = vmatpush1.msra.mxu0 0.0
        %7339 = vmatprep.subr.mxu0 0.0
        %7340 = vmatpush1.msra.mxu0 0.0
        %7341 = vmatprep.subr.mxu0 0.0
        %7342 = vmatpush1.msra.mxu0 0.0
        %7343 = vmatprep.subr.mxu0 0.0
        %7344 = vmatpush1.msra.mxu0 0.0
        %7345 = vmatprep.subr.mxu0 0.0
        %7346 = vmatpush1.msra.mxu0 0.0
        %7347 = vmatprep.subr.mxu0 0.0
        %7348 = vmatpush1.msra.mxu0 0.0
        %7349 = vmatprep.subr.mxu0 0.0
        %7350 = vmatpush1.msra.mxu0 0.0
        %7351 = vmatprep.subr.mxu0 0.0
        %7352 = vmatpush1.msra.mxu0 %v7320
        %7353 = vmatprep.subr.mxu0 0.0
        %7354 = vmatpush1.msra.mxu0 %v7319
        %7355 = vmatprep.subr.mxu0 0.0
        %7356 = vmatpush1.msra.mxu0 %v7318
        %7357 = vmatprep.subr.mxu0 0.0
        %7358 = vmatpush1.msra.mxu0 %v7317
        %7359 = vmatprep.subr.mxu0 0.0
        %7360 = vmatpush2.msra.mxu0 0.0
        %7361 = vmatprep.subr.mxu0 0.0
        %7362 = vmatpush2.msra.mxu0 0.0
        %7363 = vmatprep.subr.mxu0 0.0
        %7364 = vmatpush2.msra.mxu0 0.0
        %7365 = vmatprep.subr.mxu0 0.0
        %7366 = vmatpush2.msra.mxu0 0.0
        %7367 = vmatprep.subr.mxu0 0.0
        %7368 = vmatpush2.msra.mxu0 0.0
        %7369 = vmatprep.subr.mxu0 0.0
        %7370 = vmatpush2.msra.mxu0 0.0
        %7371 = vmatprep.subr.mxu0 0.0
        %7372 = vmatpush2.msra.mxu0 0.0
        %7373 = vmatprep.subr.mxu0 0.0
        %7374 = vmatpush2.msra.mxu0 0.0
        %7375 = vmatprep.subr.mxu0 0.0
        %7376 = vmatpush2.msra.mxu0 0.0
        %7377 = vmatprep.subr.mxu0 0.0
        %7378 = vmatpush2.msra.mxu0 0.0
        %7379 = vmatprep.subr.mxu0 0.0
        %7380 = vmatpush2.msra.mxu0 0.0
        %7381 = vmatprep.subr.mxu0 0.0
        %7382 = vmatpush2.msra.mxu0 0.0
        %7383 = vmatprep.subr.mxu0 0.0
        %7384 = vmatpush2.msra.mxu0 0.0
        %7385 = vmatprep.subr.mxu0 0.0
        %7386 = vmatpush2.msra.mxu0 0.0
        %7387 = vmatprep.subr.mxu0 0.0
        %7388 = vmatpush2.msra.mxu0 0.0
        %7389 = vmatprep.subr.mxu0 0.0
        %7390 = vmatpush2.msra.mxu0 0.0
        %7391 = vmatprep.mubr.f32.mxu0 0.0
        %7392 = vmatmul.mubr.f32.gmra.mxu0 %v7323
        %v7393 = vpop.f32.mrf.mxu0
        %v7394 = vadd.f32 0.0, %v7393
        %v7395 = vpop.f32.mrf.mxu0
        %7396 = vmatprep.mubr.f32.mxu0 0.0
        %7397 = vmatmul.mubr.f32.gmra.mxu0 %v7325
        %v7398 = vpop.f32.mrf.mxu0
        %v7399 = vadd.f32 0.0, %v7398
        %v7400 = vpop.f32.mrf.mxu0
        %7401 = vdwg.mxu0
        %v7402 = vadd.f32 %v7295, %v7394
        %v7403 = vadd.f32 %v7296, %v7399
        %v7404 = vrot.slane %v6739, 6
        %v7405 = vrot.slane %v7404, 4
        %v7406 = vrot.slane %v7114, 6
        %v7407 = vsel %vm7299, %v7405, %v7406
        %s7408 = scalar_lea.vmem %s5, 160
        %v7409 = vld [vmem:[%s7408] sm:$0xff]
        %v7410 = vld [vmem:[%s7408 + $0x8] sm:$0xff]
        %v7411 = vld [vmem:[%s7408 + $0x10] sm:$0xff]
        %v7412 = vld [vmem:[%s7408 + $0x18] sm:$0xff]
        %v7413 = vcombine.low %v7307, %v7311
        %v7414 = vcombine.low %v7315, %v7407
        %v7415 = vsel %vm4656, %v7413, 0
        %v7417 = vsel %vm4656, %v7414, 0
        %7419 = vmatprep.subr.mxu0 0.0
        %7420 = vmatpush1.msra.mxu0 0.0
        %7421 = vmatprep.subr.mxu0 0.0
        %7422 = vmatpush1.msra.mxu0 0.0
        %7423 = vmatprep.subr.mxu0 0.0
        %7424 = vmatpush1.msra.mxu0 0.0
        %7425 = vmatprep.subr.mxu0 0.0
        %7426 = vmatpush1.msra.mxu0 0.0
        %7427 = vmatprep.subr.mxu0 0.0
        %7428 = vmatpush1.msra.mxu0 0.0
        %7429 = vmatprep.subr.mxu0 0.0
        %7430 = vmatpush1.msra.mxu0 0.0
        %7431 = vmatprep.subr.mxu0 0.0
        %7432 = vmatpush1.msra.mxu0 0.0
        %7433 = vmatprep.subr.mxu0 0.0
        %7434 = vmatpush1.msra.mxu0 0.0
        %7435 = vmatprep.subr.mxu0 0.0
        %7436 = vmatpush1.msra.mxu0 0.0
        %7437 = vmatprep.subr.mxu0 0.0
        %7438 = vmatpush1.msra.mxu0 0.0
        %7439 = vmatprep.subr.mxu0 0.0
        %7440 = vmatpush1.msra.mxu0 0.0
        %7441 = vmatprep.subr.mxu0 0.0
        %7442 = vmatpush1.msra.mxu0 0.0
        %7443 = vmatprep.subr.mxu0 0.0
        %7444 = vmatpush1.msra.mxu0 %v7412
        %7445 = vmatprep.subr.mxu0 0.0
        %7446 = vmatpush1.msra.mxu0 %v7411
        %7447 = vmatprep.subr.mxu0 0.0
        %7448 = vmatpush1.msra.mxu0 %v7410
        %7449 = vmatprep.subr.mxu0 0.0
        %7450 = vmatpush1.msra.mxu0 %v7409
        %7451 = vmatprep.subr.mxu0 0.0
        %7452 = vmatpush2.msra.mxu0 0.0
        %7453 = vmatprep.subr.mxu0 0.0
        %7454 = vmatpush2.msra.mxu0 0.0
        %7455 = vmatprep.subr.mxu0 0.0
        %7456 = vmatpush2.msra.mxu0 0.0
        %7457 = vmatprep.subr.mxu0 0.0
        %7458 = vmatpush2.msra.mxu0 0.0
        %7459 = vmatprep.subr.mxu0 0.0
        %7460 = vmatpush2.msra.mxu0 0.0
        %7461 = vmatprep.subr.mxu0 0.0
        %7462 = vmatpush2.msra.mxu0 0.0
        %7463 = vmatprep.subr.mxu0 0.0
        %7464 = vmatpush2.msra.mxu0 0.0
        %7465 = vmatprep.subr.mxu0 0.0
        %7466 = vmatpush2.msra.mxu0 0.0
        %7467 = vmatprep.subr.mxu0 0.0
        %7468 = vmatpush2.msra.mxu0 0.0
        %7469 = vmatprep.subr.mxu0 0.0
        %7470 = vmatpush2.msra.mxu0 0.0
        %7471 = vmatprep.subr.mxu0 0.0
        %7472 = vmatpush2.msra.mxu0 0.0
        %7473 = vmatprep.subr.mxu0 0.0
        %7474 = vmatpush2.msra.mxu0 0.0
        %7475 = vmatprep.subr.mxu0 0.0
        %7476 = vmatpush2.msra.mxu0 0.0
        %7477 = vmatprep.subr.mxu0 0.0
        %7478 = vmatpush2.msra.mxu0 0.0
        %7479 = vmatprep.subr.mxu0 0.0
        %7480 = vmatpush2.msra.mxu0 0.0
        %7481 = vmatprep.subr.mxu0 0.0
        %7482 = vmatpush2.msra.mxu0 0.0
        %7483 = vmatprep.mubr.f32.mxu0 0.0
        %7484 = vmatmul.mubr.f32.gmra.mxu0 %v7415
        %v7485 = vpop.f32.mrf.mxu0
        %v7486 = vadd.f32 0.0, %v7485
        %v7487 = vpop.f32.mrf.mxu0
        %7488 = vmatprep.mubr.f32.mxu0 0.0
        %7489 = vmatmul.mubr.f32.gmra.mxu0 %v7417
        %v7490 = vpop.f32.mrf.mxu0
        %v7491 = vadd.f32 0.0, %v7490
        %v7492 = vpop.f32.mrf.mxu0
        %7493 = vdwg.mxu0
        %v7494 = vadd.f32 %v7402, %v7486
        %v7495 = vadd.f32 %v7403, %v7491
        %v7496 = vrot.slane %v6740, 6
        %v7497 = vrot.slane %v7496, 4
        %v7498 = vrot.slane %v7207, 6
        %v7499 = vsel %vm7299, %v7497, %v7498
        %s7500 = scalar_lea.vmem %s5, 256
        %v7501 = vld [vmem:[%s7500] sm:$0xff]
        %v7502 = vld [vmem:[%s7500 + $0x8] sm:$0xff]
        %v7503 = vld [vmem:[%s7500 + $0x10] sm:$0xff]
        %v7504 = vld [vmem:[%s7500 + $0x18] sm:$0xff]
        %v7505 = vcombine.low %v7407, %v7499
        %v7506 = vsel %vm4656, %v7505, 0
        %7508 = vmatprep.subr.mxu0 0.0
        %7509 = vmatpush1.msra.mxu0 0.0
        %7510 = vmatprep.subr.mxu0 0.0
        %7511 = vmatpush1.msra.mxu0 0.0
        %7512 = vmatprep.subr.mxu0 0.0
        %7513 = vmatpush1.msra.mxu0 0.0
        %7514 = vmatprep.subr.mxu0 0.0
        %7515 = vmatpush1.msra.mxu0 0.0
        %7516 = vmatprep.subr.mxu0 0.0
        %7517 = vmatpush1.msra.mxu0 0.0
        %7518 = vmatprep.subr.mxu0 0.0
        %7519 = vmatpush1.msra.mxu0 0.0
        %7520 = vmatprep.subr.mxu0 0.0
        %7521 = vmatpush1.msra.mxu0 0.0
        %7522 = vmatprep.subr.mxu0 0.0
        %7523 = vmatpush1.msra.mxu0 0.0
        %7524 = vmatprep.subr.mxu0 0.0
        %7525 = vmatpush1.msra.mxu0 0.0
        %7526 = vmatprep.subr.mxu0 0.0
        %7527 = vmatpush1.msra.mxu0 0.0
        %7528 = vmatprep.subr.mxu0 0.0
        %7529 = vmatpush1.msra.mxu0 0.0
        %7530 = vmatprep.subr.mxu0 0.0
        %7531 = vmatpush1.msra.mxu0 0.0
        %7532 = vmatprep.subr.mxu0 0.0
        %7533 = vmatpush1.msra.mxu0 %v7504
        %7534 = vmatprep.subr.mxu0 0.0
        %7535 = vmatpush1.msra.mxu0 %v7503
        %7536 = vmatprep.subr.mxu0 0.0
        %7537 = vmatpush1.msra.mxu0 %v7502
        %7538 = vmatprep.subr.mxu0 0.0
        %7539 = vmatpush1.msra.mxu0 %v7501
        %7540 = vmatprep.subr.mxu0 0.0
        %7541 = vmatpush2.msra.mxu0 0.0
        %7542 = vmatprep.subr.mxu0 0.0
        %7543 = vmatpush2.msra.mxu0 0.0
        %7544 = vmatprep.subr.mxu0 0.0
        %7545 = vmatpush2.msra.mxu0 0.0
        %7546 = vmatprep.subr.mxu0 0.0
        %7547 = vmatpush2.msra.mxu0 0.0
        %7548 = vmatprep.subr.mxu0 0.0
        %7549 = vmatpush2.msra.mxu0 0.0
        %7550 = vmatprep.subr.mxu0 0.0
        %7551 = vmatpush2.msra.mxu0 0.0
        %7552 = vmatprep.subr.mxu0 0.0
        %7553 = vmatpush2.msra.mxu0 0.0
        %7554 = vmatprep.subr.mxu0 0.0
        %7555 = vmatpush2.msra.mxu0 0.0
        %7556 = vmatprep.subr.mxu0 0.0
        %7557 = vmatpush2.msra.mxu0 0.0
        %7558 = vmatprep.subr.mxu0 0.0
        %7559 = vmatpush2.msra.mxu0 0.0
        %7560 = vmatprep.subr.mxu0 0.0
        %7561 = vmatpush2.msra.mxu0 0.0
        %7562 = vmatprep.subr.mxu0 0.0
        %7563 = vmatpush2.msra.mxu0 0.0
        %7564 = vmatprep.subr.mxu0 0.0
        %7565 = vmatpush2.msra.mxu0 0.0
        %7566 = vmatprep.subr.mxu0 0.0
        %7567 = vmatpush2.msra.mxu0 0.0
        %7568 = vmatprep.subr.mxu0 0.0
        %7569 = vmatpush2.msra.mxu0 0.0
        %7570 = vmatprep.subr.mxu0 0.0
        %7571 = vmatpush2.msra.mxu0 0.0
        %7572 = vmatprep.mubr.f32.mxu0 0.0
        %7573 = vmatmul.mubr.f32.gmra.mxu0 %v7325
        %v7574 = vpop.f32.mrf.mxu0
        %v7575 = vadd.f32 0.0, %v7574
        %v7576 = vpop.f32.mrf.mxu0
        %7577 = vmatprep.mubr.f32.mxu0 0.0
        %7578 = vmatmul.mubr.f32.gmra.mxu0 %v7506
        %v7579 = vpop.f32.mrf.mxu0
        %v7580 = vadd.f32 0.0, %v7579
        %v7581 = vpop.f32.mrf.mxu0
        %7582 = vdwg.mxu0
        %v7583 = vadd.f32 %v7494, %v7575
        %v7584 = vadd.f32 %v7495, %v7580
        %v7585 = vld [vmem:[%s6] sm:$0x1]
        %v7587 = vlaneseq
        %v7588 = vshrl.u32 %v7587, 7
        %v7589 = vsub.s32 0, %v7588
        %v7590 = vrot.slane %v7585, %v7589
        %v7592 = vadd.f32 %v7583, %v7590
        %v7593 = vadd.f32 %v7584, %v7590
        %v7594 = vmax.f32 %v7592, 0.0
        %v7595 = vmax.f32 %v7593, 0.0
        %v7598 = vcombine.high %v7594, %v7594
        %v7600 = vunpack.c.l.s4 1983009808
        %v7601 = vunpack.c.0.s8 %v7600
        %v7602 = vlaneseq
        %v7603 = vshrl.u32 %v7602, 7
        %v7604 = vsub.s32 %v7601, %v7603
        %v7605 = vrot.slane %v7594, %v7604
        %v7607 = vunpack.c.l.s4 1983009808
        %v7608 = vunpack.c.0.s8 %v7607
        %v7609 = vlaneseq
        %v7610 = vshrl.u32 %v7609, 7
        %v7611 = vsub.s32 %v7608, %v7610
        %v7612 = vrot.slane %v7598, %v7611
        %v7613 = vcombine.high %v7605, %v7605
        %v7614 = vcombine.high %v7612, %v7612
        %v7615 = vcombine.high %v7595, %v7595
        %v7617 = vunpack.c.l.s4 1983009808
        %v7618 = vunpack.c.0.s8 %v7617
        %v7619 = vlaneseq
        %v7620 = vshrl.u32 %v7619, 7
        %v7621 = vsub.s32 %v7618, %v7620
        %v7622 = vrot.slane %v7595, %v7621
        %v7624 = vunpack.c.l.s4 1983009808
        %v7625 = vunpack.c.0.s8 %v7624
        %v7626 = vlaneseq
        %v7627 = vshrl.u32 %v7626, 7
        %v7628 = vsub.s32 %v7625, %v7627
        %v7629 = vrot.slane %v7615, %v7628
        %v7630 = vcombine.high %v7622, %v7622
        %v7631 = vcombine.high %v7629, %v7629
        %v7640 = vrot.slane %v7605, 7
        %v7641 = vrot.slane %v7640, 2
        %v7642 = vrot.slane %v7613, 7
        %v7643 = vrot.slane %v7642, 2
        %v7644 = vrot.slane %v7622, 7
        %v7645 = vrot.slane %v7644, 2
        %v7646 = vrot.slane %v7630, 7
        %v7647 = vrot.slane %v7646, 2
        %v7652 = vmax.f32 %v7605, %v7641
        %v7653 = vmax.f32 %v7613, %v7643
        %v7654 = vmax.f32 %v7622, %v7645
        %v7655 = vmax.f32 %v7630, %v7647
        %v7656 = vrot.slane %v7612, 7
        %v7657 = vrot.slane %v7656, 2
        %v7658 = vrot.slane %v7614, 7
        %v7659 = vrot.slane %v7658, 2
        %v7660 = vrot.slane %v7629, 7
        %v7661 = vrot.slane %v7660, 2
        %v7662 = vrot.slane %v7631, 7
        %v7663 = vrot.slane %v7662, 2
        %v7668 = vmax.f32 %v7612, %v7657
        %v7669 = vmax.f32 %v7614, %v7659
        %v7670 = vmax.f32 %v7629, %v7661
        %v7671 = vmax.f32 %v7631, %v7663
        %v7672 = vmax.f32 %v7652, %v7668
        %v7673 = vmax.f32 %v7653, %v7669
        %v7674 = vmax.f32 %v7654, %v7670
        %v7675 = vmax.f32 %v7655, %v7671
        %7676 = vst.msk [vmem:[#allocation5] sm:$0xf] %vm6730, 0.0
        %7677 = vst.msk [vmem:[#allocation5 + $0x4] sm:$0xf] %vm6730, 0.0
        %7678 = vst.msk [vmem:[#allocation5 + $0x8] sm:$0xf] %vm6730, 0.0
        %7679 = vst.msk [vmem:[#allocation5 + $0xc] sm:$0xf] %vm6730, 0.0
        %v7684 = vlaneseq
        %v7685 = vshrl.u32 %v7684, 7
        %v7686 = vsub.s32 0, %v7685
        %v7687 = vrot.slane %v7672, %v7686
        %v7688 = vlaneseq
        %v7689 = vshrl.u32 %v7688, 7
        %v7690 = vsub.s32 0, %v7689
        %v7691 = vrot.slane %v7673, %v7690
        %v7692 = vlaneseq
        %v7693 = vshrl.u32 %v7692, 7
        %v7694 = vsub.s32 0, %v7693
        %v7695 = vrot.slane %v7674, %v7694
        %v7696 = vlaneseq
        %v7697 = vshrl.u32 %v7696, 7
        %v7698 = vsub.s32 0, %v7697
        %v7699 = vrot.slane %v7675, %v7698
        %v7700 = vsel %vm4998, %v7691, %v7687
        %v7701 = vsel %vm4998, %v7699, %v7695
        %s7704 = scalar_lea.vmem [#allocation5], 4
        %7705 = vst.msk [vmem:[%s7704 + $0x1] sm:$0x3] %vm4658, %v7700
        %7706 = vst.msk [vmem:[%s7704 + $0x5] sm:$0x3] %vm4658, %v7701
        %v7707 = vld [vmem:[#allocation5] sm:$0xf]
        %v7708 = vld [vmem:[#allocation5 + $0x4] sm:$0xf]
        %v7709 = vld [vmem:[#allocation5 + $0x8] sm:$0xf]
        %v7710 = vld [vmem:[#allocation5 + $0xc] sm:$0xf]
        %v7711 = vld [vmem:[%s7] sm:$0xff]
        %v7712 = vld [vmem:[%s7 + $0x8] sm:$0xff]
        %v7713 = vld [vmem:[%s7 + $0x10] sm:$0xff]
        %v7714 = vld [vmem:[%s7 + $0x18] sm:$0xff]
        %s7715 = scalar_lea.vmem %s7, 96
        %v7716 = vld [vmem:[%s7715] sm:$0xff]
        %v7717 = vld [vmem:[%s7715 + $0x8] sm:$0xff]
        %v7718 = vld [vmem:[%s7715 + $0x10] sm:$0xff]
        %v7719 = vld [vmem:[%s7715 + $0x18] sm:$0xff]
        %v7722 = vcombine.low %v7708, %v7709
        %v7724 = vunpack.c.l.s4 1983009808
        %v7725 = vunpack.c.0.s8 %v7724
        %v7726 = vlaneseq
        %v7727 = vshrl.u32 %v7726, 7
        %v7728 = vsub.s32 %v7725, %v7727
        %v7729 = vrot.slane %v7722, %v7728
        %v7730 = vsel %vm4656, %v7729, 0
        %7732 = vmatprep.subr.mxu0 0.0
        %7733 = vmatpush1.msra.mxu0 0.0
        %7734 = vmatprep.subr.mxu0 0.0
        %7735 = vmatpush1.msra.mxu0 0.0
        %7736 = vmatprep.subr.mxu0 0.0
        %7737 = vmatpush1.msra.mxu0 0.0
        %7738 = vmatprep.subr.mxu0 0.0
        %7739 = vmatpush1.msra.mxu0 0.0
        %7740 = vmatprep.subr.mxu0 0.0
        %7741 = vmatpush1.msra.mxu0 0.0
        %7742 = vmatprep.subr.mxu0 0.0
        %7743 = vmatpush1.msra.mxu0 0.0
        %7744 = vmatprep.subr.mxu0 0.0
        %7745 = vmatpush1.msra.mxu0 0.0
        %7746 = vmatprep.subr.mxu0 0.0
        %7747 = vmatpush1.msra.mxu0 0.0
        %7748 = vmatprep.subr.mxu0 0.0
        %7749 = vmatpush1.msra.mxu0 0.0
        %7750 = vmatprep.subr.mxu0 0.0
        %7751 = vmatpush1.msra.mxu0 0.0
        %7752 = vmatprep.subr.mxu0 0.0
        %7753 = vmatpush1.msra.mxu0 0.0
        %7754 = vmatprep.subr.mxu0 0.0
        %7755 = vmatpush1.msra.mxu0 0.0
        %7756 = vmatprep.subr.mxu0 0.0
        %7757 = vmatpush1.msra.mxu0 %v7719
        %7758 = vmatprep.subr.mxu0 0.0
        %7759 = vmatpush1.msra.mxu0 %v7718
        %7760 = vmatprep.subr.mxu0 0.0
        %7761 = vmatpush1.msra.mxu0 %v7717
        %7762 = vmatprep.subr.mxu0 0.0
        %7763 = vmatpush1.msra.mxu0 %v7716
        %7764 = vmatprep.subr.mxu0 0.0
        %7765 = vmatpush2.msra.mxu0 0.0
        %7766 = vmatprep.subr.mxu0 0.0
        %7767 = vmatpush2.msra.mxu0 0.0
        %7768 = vmatprep.subr.mxu0 0.0
        %7769 = vmatpush2.msra.mxu0 0.0
        %7770 = vmatprep.subr.mxu0 0.0
        %7771 = vmatpush2.msra.mxu0 0.0
        %7772 = vmatprep.subr.mxu0 0.0
        %7773 = vmatpush2.msra.mxu0 0.0
        %7774 = vmatprep.subr.mxu0 0.0
        %7775 = vmatpush2.msra.mxu0 0.0
        %7776 = vmatprep.subr.mxu0 0.0
        %7777 = vmatpush2.msra.mxu0 0.0
        %7778 = vmatprep.subr.mxu0 0.0
        %7779 = vmatpush2.msra.mxu0 0.0
        %7780 = vmatprep.subr.mxu0 0.0
        %7781 = vmatpush2.msra.mxu0 0.0
        %7782 = vmatprep.subr.mxu0 0.0
        %7783 = vmatpush2.msra.mxu0 0.0
        %7784 = vmatprep.subr.mxu0 0.0
        %7785 = vmatpush2.msra.mxu0 0.0
        %7786 = vmatprep.subr.mxu0 0.0
        %7787 = vmatpush2.msra.mxu0 0.0
        %7788 = vmatprep.subr.mxu0 0.0
        %7789 = vmatpush2.msra.mxu0 0.0
        %7790 = vmatprep.subr.mxu0 0.0
        %7791 = vmatpush2.msra.mxu0 0.0
        %7792 = vmatprep.subr.mxu0 0.0
        %7793 = vmatpush2.msra.mxu0 0.0
        %7794 = vmatprep.subr.mxu0 0.0
        %7795 = vmatpush2.msra.mxu0 0.0
        %7796 = vmatprep.mubr.f32.mxu0 0.0
        %7797 = vmatmul.mubr.f32.gmra.mxu0 %v7730
        %v7798 = vpop.f32.mrf.mxu0
        %v7799 = vadd.f32 0.0, %v7798
        %v7800 = vpop.f32.mrf.mxu0
        %7801 = vdwg.mxu0
        %v7803 = vcombine.low %v7707, %v7708
        %v7805 = vunpack.c.l.s4 1983009808
        %v7806 = vunpack.c.0.s8 %v7805
        %v7807 = vlaneseq
        %v7808 = vshrl.u32 %v7807, 7
        %v7809 = vsub.s32 %v7806, %v7808
        %v7810 = vrot.slane %v7803, %v7809
        %v7811 = vsel %vm4656, %v7810, 0
        %7813 = vmatprep.subr.mxu0 0.0
        %7814 = vmatpush1.msra.mxu0 0.0
        %7815 = vmatprep.subr.mxu0 0.0
        %7816 = vmatpush1.msra.mxu0 0.0
        %7817 = vmatprep.subr.mxu0 0.0
        %7818 = vmatpush1.msra.mxu0 0.0
        %7819 = vmatprep.subr.mxu0 0.0
        %7820 = vmatpush1.msra.mxu0 0.0
        %7821 = vmatprep.subr.mxu0 0.0
        %7822 = vmatpush1.msra.mxu0 0.0
        %7823 = vmatprep.subr.mxu0 0.0
        %7824 = vmatpush1.msra.mxu0 0.0
        %7825 = vmatprep.subr.mxu0 0.0
        %7826 = vmatpush1.msra.mxu0 0.0
        %7827 = vmatprep.subr.mxu0 0.0
        %7828 = vmatpush1.msra.mxu0 0.0
        %7829 = vmatprep.subr.mxu0 0.0
        %7830 = vmatpush1.msra.mxu0 0.0
        %7831 = vmatprep.subr.mxu0 0.0
        %7832 = vmatpush1.msra.mxu0 0.0
        %7833 = vmatprep.subr.mxu0 0.0
        %7834 = vmatpush1.msra.mxu0 0.0
        %7835 = vmatprep.subr.mxu0 0.0
        %7836 = vmatpush1.msra.mxu0 0.0
        %7837 = vmatprep.subr.mxu0 0.0
        %7838 = vmatpush1.msra.mxu0 %v7714
        %7839 = vmatprep.subr.mxu0 0.0
        %7840 = vmatpush1.msra.mxu0 %v7713
        %7841 = vmatprep.subr.mxu0 0.0
        %7842 = vmatpush1.msra.mxu0 %v7712
        %7843 = vmatprep.subr.mxu0 0.0
        %7844 = vmatpush1.msra.mxu0 %v7711
        %7845 = vmatprep.subr.mxu0 0.0
        %7846 = vmatpush2.msra.mxu0 0.0
        %7847 = vmatprep.subr.mxu0 0.0
        %7848 = vmatpush2.msra.mxu0 0.0
        %7849 = vmatprep.subr.mxu0 0.0
        %7850 = vmatpush2.msra.mxu0 0.0
        %7851 = vmatprep.subr.mxu0 0.0
        %7852 = vmatpush2.msra.mxu0 0.0
        %7853 = vmatprep.subr.mxu0 0.0
        %7854 = vmatpush2.msra.mxu0 0.0
        %7855 = vmatprep.subr.mxu0 0.0
        %7856 = vmatpush2.msra.mxu0 0.0
        %7857 = vmatprep.subr.mxu0 0.0
        %7858 = vmatpush2.msra.mxu0 0.0
        %7859 = vmatprep.subr.mxu0 0.0
        %7860 = vmatpush2.msra.mxu0 0.0
        %7861 = vmatprep.subr.mxu0 0.0
        %7862 = vmatpush2.msra.mxu0 0.0
        %7863 = vmatprep.subr.mxu0 0.0
        %7864 = vmatpush2.msra.mxu0 0.0
        %7865 = vmatprep.subr.mxu0 0.0
        %7866 = vmatpush2.msra.mxu0 0.0
        %7867 = vmatprep.subr.mxu0 0.0
        %7868 = vmatpush2.msra.mxu0 0.0
        %7869 = vmatprep.subr.mxu0 0.0
        %7870 = vmatpush2.msra.mxu0 0.0
        %7871 = vmatprep.subr.mxu0 0.0
        %7872 = vmatpush2.msra.mxu0 0.0
        %7873 = vmatprep.subr.mxu0 0.0
        %7874 = vmatpush2.msra.mxu0 0.0
        %7875 = vmatprep.subr.mxu0 0.0
        %7876 = vmatpush2.msra.mxu0 0.0
        %7877 = vmatprep.mubr.f32.mxu0 0.0
        %7878 = vmatmul.mubr.f32.gmra.mxu0 %v7811
        %v7879 = vpop.f32.mrf.mxu0
        %v7880 = vadd.f32 %v7799, %v7879
        %v7881 = vpop.f32.mrf.mxu0
        %7882 = vdwg.mxu0
        %s7883 = scalar_lea.vmem %s7, 192
        %v7884 = vld [vmem:[%s7883] sm:$0xff]
        %v7885 = vld [vmem:[%s7883 + $0x8] sm:$0xff]
        %v7886 = vld [vmem:[%s7883 + $0x10] sm:$0xff]
        %v7887 = vld [vmem:[%s7883 + $0x18] sm:$0xff]
        %v7889 = vcombine.low %v7709, %v7710
        %v7891 = vunpack.c.l.s4 1983009808
        %v7892 = vunpack.c.0.s8 %v7891
        %v7893 = vlaneseq
        %v7894 = vshrl.u32 %v7893, 7
        %v7895 = vsub.s32 %v7892, %v7894
        %v7896 = vrot.slane %v7889, %v7895
        %v7897 = vsel %vm4656, %v7896, 0
        %7899 = vmatprep.subr.mxu0 0.0
        %7900 = vmatpush1.msra.mxu0 0.0
        %7901 = vmatprep.subr.mxu0 0.0
        %7902 = vmatpush1.msra.mxu0 0.0
        %7903 = vmatprep.subr.mxu0 0.0
        %7904 = vmatpush1.msra.mxu0 0.0
        %7905 = vmatprep.subr.mxu0 0.0
        %7906 = vmatpush1.msra.mxu0 0.0
        %7907 = vmatprep.subr.mxu0 0.0
        %7908 = vmatpush1.msra.mxu0 0.0
        %7909 = vmatprep.subr.mxu0 0.0
        %7910 = vmatpush1.msra.mxu0 0.0
        %7911 = vmatprep.subr.mxu0 0.0
        %7912 = vmatpush1.msra.mxu0 0.0
        %7913 = vmatprep.subr.mxu0 0.0
        %7914 = vmatpush1.msra.mxu0 0.0
        %7915 = vmatprep.subr.mxu0 0.0
        %7916 = vmatpush1.msra.mxu0 0.0
        %7917 = vmatprep.subr.mxu0 0.0
        %7918 = vmatpush1.msra.mxu0 0.0
        %7919 = vmatprep.subr.mxu0 0.0
        %7920 = vmatpush1.msra.mxu0 0.0
        %7921 = vmatprep.subr.mxu0 0.0
        %7922 = vmatpush1.msra.mxu0 0.0
        %7923 = vmatprep.subr.mxu0 0.0
        %7924 = vmatpush1.msra.mxu0 %v7887
        %7925 = vmatprep.subr.mxu0 0.0
        %7926 = vmatpush1.msra.mxu0 %v7886
        %7927 = vmatprep.subr.mxu0 0.0
        %7928 = vmatpush1.msra.mxu0 %v7885
        %7929 = vmatprep.subr.mxu0 0.0
        %7930 = vmatpush1.msra.mxu0 %v7884
        %7931 = vmatprep.subr.mxu0 0.0
        %7932 = vmatpush2.msra.mxu0 0.0
        %7933 = vmatprep.subr.mxu0 0.0
        %7934 = vmatpush2.msra.mxu0 0.0
        %7935 = vmatprep.subr.mxu0 0.0
        %7936 = vmatpush2.msra.mxu0 0.0
        %7937 = vmatprep.subr.mxu0 0.0
        %7938 = vmatpush2.msra.mxu0 0.0
        %7939 = vmatprep.subr.mxu0 0.0
        %7940 = vmatpush2.msra.mxu0 0.0
        %7941 = vmatprep.subr.mxu0 0.0
        %7942 = vmatpush2.msra.mxu0 0.0
        %7943 = vmatprep.subr.mxu0 0.0
        %7944 = vmatpush2.msra.mxu0 0.0
        %7945 = vmatprep.subr.mxu0 0.0
        %7946 = vmatpush2.msra.mxu0 0.0
        %7947 = vmatprep.subr.mxu0 0.0
        %7948 = vmatpush2.msra.mxu0 0.0
        %7949 = vmatprep.subr.mxu0 0.0
        %7950 = vmatpush2.msra.mxu0 0.0
        %7951 = vmatprep.subr.mxu0 0.0
        %7952 = vmatpush2.msra.mxu0 0.0
        %7953 = vmatprep.subr.mxu0 0.0
        %7954 = vmatpush2.msra.mxu0 0.0
        %7955 = vmatprep.subr.mxu0 0.0
        %7956 = vmatpush2.msra.mxu0 0.0
        %7957 = vmatprep.subr.mxu0 0.0
        %7958 = vmatpush2.msra.mxu0 0.0
        %7959 = vmatprep.subr.mxu0 0.0
        %7960 = vmatpush2.msra.mxu0 0.0
        %7961 = vmatprep.subr.mxu0 0.0
        %7962 = vmatpush2.msra.mxu0 0.0
        %7963 = vmatprep.mubr.f32.mxu0 0.0
        %7964 = vmatmul.mubr.f32.gmra.mxu0 %v7897
        %v7965 = vpop.f32.mrf.mxu0
        %v7966 = vadd.f32 0.0, %v7965
        %v7967 = vpop.f32.mrf.mxu0
        %7968 = vdwg.mxu0
        %v7969 = vadd.f32 %v7880, %v7966
        %v7971 = vunpack.c.l.s4 1983009808
        %v7972 = vunpack.c.0.s8 %v7971
        %v7973 = vlaneseq
        %v7974 = vshrl.u32 %v7973, 7
        %v7975 = vsub.s32 %v7972, %v7974
        %v7976 = vrot.slane %v7707, %v7975
        %v7977 = vcombine.high %v7976, %v7976
        %v7979 = vunpack.c.l.s4 1983009808
        %v7980 = vunpack.c.0.s8 %v7979
        %v7981 = vlaneseq
        %v7982 = vshrl.u32 %v7981, 7
        %v7983 = vsub.s32 %v7980, %v7982
        %v7984 = vrot.slane %v7708, %v7983
        %v7985 = vcombine.high %v7984, %v7984
        %vm7986 = vcmask 1040384
        %vm7987 = vmor %vm7986, %vm5000
        %vm7988 = vmor %vm7987, %vm5004
        %vm7989 = vmor %vm7988, %vm5008
        %v7990 = vrot.slane %v7976, 7
        %v7991 = vrot.slane %v7990, 2
        %v7992 = vrot.slane %v7977, 7
        %v7993 = vsel %vm7989, %v7991, %v7992
        %v7994 = vrot.slane %v7984, 7
        %v7995 = vrot.slane %v7994, 2
        %v7996 = vrot.slane %v7985, 7
        %v7997 = vsel %vm7989, %v7995, %v7996
        %s7998 = scalar_lea.vmem %s7, 32
        %v7999 = vld [vmem:[%s7998] sm:$0xff]
        %v8000 = vld [vmem:[%s7998 + $0x8] sm:$0xff]
        %v8001 = vld [vmem:[%s7998 + $0x10] sm:$0xff]
        %v8002 = vld [vmem:[%s7998 + $0x18] sm:$0xff]
        %v8003 = vcombine.low %v7993, %v7997
        %v8005 = vunpack.c.l.s4 1983009808
        %v8006 = vunpack.c.0.s8 %v8005
        %v8007 = vlaneseq
        %v8008 = vshrl.u32 %v8007, 7
        %v8009 = vsub.s32 %v8006, %v8008
        %v8010 = vrot.slane %v8003, %v8009
        %v8011 = vsel %vm4656, %v8010, 0
        %8013 = vmatprep.subr.mxu0 0.0
        %8014 = vmatpush1.msra.mxu0 0.0
        %8015 = vmatprep.subr.mxu0 0.0
        %8016 = vmatpush1.msra.mxu0 0.0
        %8017 = vmatprep.subr.mxu0 0.0
        %8018 = vmatpush1.msra.mxu0 0.0
        %8019 = vmatprep.subr.mxu0 0.0
        %8020 = vmatpush1.msra.mxu0 0.0
        %8021 = vmatprep.subr.mxu0 0.0
        %8022 = vmatpush1.msra.mxu0 0.0
        %8023 = vmatprep.subr.mxu0 0.0
        %8024 = vmatpush1.msra.mxu0 0.0
        %8025 = vmatprep.subr.mxu0 0.0
        %8026 = vmatpush1.msra.mxu0 0.0
        %8027 = vmatprep.subr.mxu0 0.0
        %8028 = vmatpush1.msra.mxu0 0.0
        %8029 = vmatprep.subr.mxu0 0.0
        %8030 = vmatpush1.msra.mxu0 0.0
        %8031 = vmatprep.subr.mxu0 0.0
        %8032 = vmatpush1.msra.mxu0 0.0
        %8033 = vmatprep.subr.mxu0 0.0
        %8034 = vmatpush1.msra.mxu0 0.0
        %8035 = vmatprep.subr.mxu0 0.0
        %8036 = vmatpush1.msra.mxu0 0.0
        %8037 = vmatprep.subr.mxu0 0.0
        %8038 = vmatpush1.msra.mxu0 %v8002
        %8039 = vmatprep.subr.mxu0 0.0
        %8040 = vmatpush1.msra.mxu0 %v8001
        %8041 = vmatprep.subr.mxu0 0.0
        %8042 = vmatpush1.msra.mxu0 %v8000
        %8043 = vmatprep.subr.mxu0 0.0
        %8044 = vmatpush1.msra.mxu0 %v7999
        %8045 = vmatprep.subr.mxu0 0.0
        %8046 = vmatpush2.msra.mxu0 0.0
        %8047 = vmatprep.subr.mxu0 0.0
        %8048 = vmatpush2.msra.mxu0 0.0
        %8049 = vmatprep.subr.mxu0 0.0
        %8050 = vmatpush2.msra.mxu0 0.0
        %8051 = vmatprep.subr.mxu0 0.0
        %8052 = vmatpush2.msra.mxu0 0.0
        %8053 = vmatprep.subr.mxu0 0.0
        %8054 = vmatpush2.msra.mxu0 0.0
        %8055 = vmatprep.subr.mxu0 0.0
        %8056 = vmatpush2.msra.mxu0 0.0
        %8057 = vmatprep.subr.mxu0 0.0
        %8058 = vmatpush2.msra.mxu0 0.0
        %8059 = vmatprep.subr.mxu0 0.0
        %8060 = vmatpush2.msra.mxu0 0.0
        %8061 = vmatprep.subr.mxu0 0.0
        %8062 = vmatpush2.msra.mxu0 0.0
        %8063 = vmatprep.subr.mxu0 0.0
        %8064 = vmatpush2.msra.mxu0 0.0
        %8065 = vmatprep.subr.mxu0 0.0
        %8066 = vmatpush2.msra.mxu0 0.0
        %8067 = vmatprep.subr.mxu0 0.0
        %8068 = vmatpush2.msra.mxu0 0.0
        %8069 = vmatprep.subr.mxu0 0.0
        %8070 = vmatpush2.msra.mxu0 0.0
        %8071 = vmatprep.subr.mxu0 0.0
        %8072 = vmatpush2.msra.mxu0 0.0
        %8073 = vmatprep.subr.mxu0 0.0
        %8074 = vmatpush2.msra.mxu0 0.0
        %8075 = vmatprep.subr.mxu0 0.0
        %8076 = vmatpush2.msra.mxu0 0.0
        %8077 = vmatprep.mubr.f32.mxu0 0.0
        %8078 = vmatmul.mubr.f32.gmra.mxu0 %v8011
        %v8079 = vpop.f32.mrf.mxu0
        %v8080 = vadd.f32 0.0, %v8079
        %v8081 = vpop.f32.mrf.mxu0
        %8082 = vdwg.mxu0
        %v8083 = vadd.f32 %v7969, %v8080
        %v8085 = vunpack.c.l.s4 1983009808
        %v8086 = vunpack.c.0.s8 %v8085
        %v8087 = vlaneseq
        %v8088 = vshrl.u32 %v8087, 7
        %v8089 = vsub.s32 %v8086, %v8088
        %v8090 = vrot.slane %v7709, %v8089
        %v8091 = vcombine.high %v8090, %v8090
        %v8092 = vrot.slane %v8090, 7
        %v8093 = vrot.slane %v8092, 2
        %v8094 = vrot.slane %v8091, 7
        %v8095 = vsel %vm7989, %v8093, %v8094
        %s8096 = scalar_lea.vmem %s7, 128
        %v8097 = vld [vmem:[%s8096] sm:$0xff]
        %v8098 = vld [vmem:[%s8096 + $0x8] sm:$0xff]
        %v8099 = vld [vmem:[%s8096 + $0x10] sm:$0xff]
        %v8100 = vld [vmem:[%s8096 + $0x18] sm:$0xff]
        %v8101 = vcombine.low %v7997, %v8095
        %v8103 = vunpack.c.l.s4 1983009808
        %v8104 = vunpack.c.0.s8 %v8103
        %v8105 = vlaneseq
        %v8106 = vshrl.u32 %v8105, 7
        %v8107 = vsub.s32 %v8104, %v8106
        %v8108 = vrot.slane %v8101, %v8107
        %v8109 = vsel %vm4656, %v8108, 0
        %8111 = vmatprep.subr.mxu0 0.0
        %8112 = vmatpush1.msra.mxu0 0.0
        %8113 = vmatprep.subr.mxu0 0.0
        %8114 = vmatpush1.msra.mxu0 0.0
        %8115 = vmatprep.subr.mxu0 0.0
        %8116 = vmatpush1.msra.mxu0 0.0
        %8117 = vmatprep.subr.mxu0 0.0
        %8118 = vmatpush1.msra.mxu0 0.0
        %8119 = vmatprep.subr.mxu0 0.0
        %8120 = vmatpush1.msra.mxu0 0.0
        %8121 = vmatprep.subr.mxu0 0.0
        %8122 = vmatpush1.msra.mxu0 0.0
        %8123 = vmatprep.subr.mxu0 0.0
        %8124 = vmatpush1.msra.mxu0 0.0
        %8125 = vmatprep.subr.mxu0 0.0
        %8126 = vmatpush1.msra.mxu0 0.0
        %8127 = vmatprep.subr.mxu0 0.0
        %8128 = vmatpush1.msra.mxu0 0.0
        %8129 = vmatprep.subr.mxu0 0.0
        %8130 = vmatpush1.msra.mxu0 0.0
        %8131 = vmatprep.subr.mxu0 0.0
        %8132 = vmatpush1.msra.mxu0 0.0
        %8133 = vmatprep.subr.mxu0 0.0
        %8134 = vmatpush1.msra.mxu0 0.0
        %8135 = vmatprep.subr.mxu0 0.0
        %8136 = vmatpush1.msra.mxu0 %v8100
        %8137 = vmatprep.subr.mxu0 0.0
        %8138 = vmatpush1.msra.mxu0 %v8099
        %8139 = vmatprep.subr.mxu0 0.0
        %8140 = vmatpush1.msra.mxu0 %v8098
        %8141 = vmatprep.subr.mxu0 0.0
        %8142 = vmatpush1.msra.mxu0 %v8097
        %8143 = vmatprep.subr.mxu0 0.0
        %8144 = vmatpush2.msra.mxu0 0.0
        %8145 = vmatprep.subr.mxu0 0.0
        %8146 = vmatpush2.msra.mxu0 0.0
        %8147 = vmatprep.subr.mxu0 0.0
        %8148 = vmatpush2.msra.mxu0 0.0
        %8149 = vmatprep.subr.mxu0 0.0
        %8150 = vmatpush2.msra.mxu0 0.0
        %8151 = vmatprep.subr.mxu0 0.0
        %8152 = vmatpush2.msra.mxu0 0.0
        %8153 = vmatprep.subr.mxu0 0.0
        %8154 = vmatpush2.msra.mxu0 0.0
        %8155 = vmatprep.subr.mxu0 0.0
        %8156 = vmatpush2.msra.mxu0 0.0
        %8157 = vmatprep.subr.mxu0 0.0
        %8158 = vmatpush2.msra.mxu0 0.0
        %8159 = vmatprep.subr.mxu0 0.0
        %8160 = vmatpush2.msra.mxu0 0.0
        %8161 = vmatprep.subr.mxu0 0.0
        %8162 = vmatpush2.msra.mxu0 0.0
        %8163 = vmatprep.subr.mxu0 0.0
        %8164 = vmatpush2.msra.mxu0 0.0
        %8165 = vmatprep.subr.mxu0 0.0
        %8166 = vmatpush2.msra.mxu0 0.0
        %8167 = vmatprep.subr.mxu0 0.0
        %8168 = vmatpush2.msra.mxu0 0.0
        %8169 = vmatprep.subr.mxu0 0.0
        %8170 = vmatpush2.msra.mxu0 0.0
        %8171 = vmatprep.subr.mxu0 0.0
        %8172 = vmatpush2.msra.mxu0 0.0
        %8173 = vmatprep.subr.mxu0 0.0
        %8174 = vmatpush2.msra.mxu0 0.0
        %8175 = vmatprep.mubr.f32.mxu0 0.0
        %8176 = vmatmul.mubr.f32.gmra.mxu0 %v8109
        %v8177 = vpop.f32.mrf.mxu0
        %v8178 = vadd.f32 0.0, %v8177
        %v8179 = vpop.f32.mrf.mxu0
        %8180 = vdwg.mxu0
        %v8181 = vadd.f32 %v8083, %v8178
        %v8183 = vunpack.c.l.s4 1983009808
        %v8184 = vunpack.c.0.s8 %v8183
        %v8185 = vlaneseq
        %v8186 = vshrl.u32 %v8185, 7
        %v8187 = vsub.s32 %v8184, %v8186
        %v8188 = vrot.slane %v7710, %v8187
        %v8189 = vcombine.high %v8188, %v8188
        %v8190 = vrot.slane %v8188, 7
        %v8191 = vrot.slane %v8190, 2
        %v8192 = vrot.slane %v8189, 7
        %v8193 = vsel %vm7989, %v8191, %v8192
        %s8194 = scalar_lea.vmem %s7, 224
        %v8195 = vld [vmem:[%s8194] sm:$0xff]
        %v8196 = vld [vmem:[%s8194 + $0x8] sm:$0xff]
        %v8197 = vld [vmem:[%s8194 + $0x10] sm:$0xff]
        %v8198 = vld [vmem:[%s8194 + $0x18] sm:$0xff]
        %v8199 = vcombine.low %v8095, %v8193
        %v8201 = vunpack.c.l.s4 1983009808
        %v8202 = vunpack.c.0.s8 %v8201
        %v8203 = vlaneseq
        %v8204 = vshrl.u32 %v8203, 7
        %v8205 = vsub.s32 %v8202, %v8204
        %v8206 = vrot.slane %v8199, %v8205
        %v8207 = vsel %vm4656, %v8206, 0
        %8209 = vmatprep.subr.mxu0 0.0
        %8210 = vmatpush1.msra.mxu0 0.0
        %8211 = vmatprep.subr.mxu0 0.0
        %8212 = vmatpush1.msra.mxu0 0.0
        %8213 = vmatprep.subr.mxu0 0.0
        %8214 = vmatpush1.msra.mxu0 0.0
        %8215 = vmatprep.subr.mxu0 0.0
        %8216 = vmatpush1.msra.mxu0 0.0
        %8217 = vmatprep.subr.mxu0 0.0
        %8218 = vmatpush1.msra.mxu0 0.0
        %8219 = vmatprep.subr.mxu0 0.0
        %8220 = vmatpush1.msra.mxu0 0.0
        %8221 = vmatprep.subr.mxu0 0.0
        %8222 = vmatpush1.msra.mxu0 0.0
        %8223 = vmatprep.subr.mxu0 0.0
        %8224 = vmatpush1.msra.mxu0 0.0
        %8225 = vmatprep.subr.mxu0 0.0
        %8226 = vmatpush1.msra.mxu0 0.0
        %8227 = vmatprep.subr.mxu0 0.0
        %8228 = vmatpush1.msra.mxu0 0.0
        %8229 = vmatprep.subr.mxu0 0.0
        %8230 = vmatpush1.msra.mxu0 0.0
        %8231 = vmatprep.subr.mxu0 0.0
        %8232 = vmatpush1.msra.mxu0 0.0
        %8233 = vmatprep.subr.mxu0 0.0
        %8234 = vmatpush1.msra.mxu0 %v8198
        %8235 = vmatprep.subr.mxu0 0.0
        %8236 = vmatpush1.msra.mxu0 %v8197
        %8237 = vmatprep.subr.mxu0 0.0
        %8238 = vmatpush1.msra.mxu0 %v8196
        %8239 = vmatprep.subr.mxu0 0.0
        %8240 = vmatpush1.msra.mxu0 %v8195
        %8241 = vmatprep.subr.mxu0 0.0
        %8242 = vmatpush2.msra.mxu0 0.0
        %8243 = vmatprep.subr.mxu0 0.0
        %8244 = vmatpush2.msra.mxu0 0.0
        %8245 = vmatprep.subr.mxu0 0.0
        %8246 = vmatpush2.msra.mxu0 0.0
        %8247 = vmatprep.subr.mxu0 0.0
        %8248 = vmatpush2.msra.mxu0 0.0
        %8249 = vmatprep.subr.mxu0 0.0
        %8250 = vmatpush2.msra.mxu0 0.0
        %8251 = vmatprep.subr.mxu0 0.0
        %8252 = vmatpush2.msra.mxu0 0.0
        %8253 = vmatprep.subr.mxu0 0.0
        %8254 = vmatpush2.msra.mxu0 0.0
        %8255 = vmatprep.subr.mxu0 0.0
        %8256 = vmatpush2.msra.mxu0 0.0
        %8257 = vmatprep.subr.mxu0 0.0
        %8258 = vmatpush2.msra.mxu0 0.0
        %8259 = vmatprep.subr.mxu0 0.0
        %8260 = vmatpush2.msra.mxu0 0.0
        %8261 = vmatprep.subr.mxu0 0.0
        %8262 = vmatpush2.msra.mxu0 0.0
        %8263 = vmatprep.subr.mxu0 0.0
        %8264 = vmatpush2.msra.mxu0 0.0
        %8265 = vmatprep.subr.mxu0 0.0
        %8266 = vmatpush2.msra.mxu0 0.0
        %8267 = vmatprep.subr.mxu0 0.0
        %8268 = vmatpush2.msra.mxu0 0.0
        %8269 = vmatprep.subr.mxu0 0.0
        %8270 = vmatpush2.msra.mxu0 0.0
        %8271 = vmatprep.subr.mxu0 0.0
        %8272 = vmatpush2.msra.mxu0 0.0
        %8273 = vmatprep.mubr.f32.mxu0 0.0
        %8274 = vmatmul.mubr.f32.gmra.mxu0 %v8207
        %v8275 = vpop.f32.mrf.mxu0
        %v8276 = vadd.f32 0.0, %v8275
        %v8277 = vpop.f32.mrf.mxu0
        %8278 = vdwg.mxu0
        %v8279 = vadd.f32 %v8181, %v8276
        %s8280 = scalar_lea.vmem %s7, 64
        %v8281 = vld [vmem:[%s8280] sm:$0xff]
        %v8282 = vld [vmem:[%s8280 + $0x8] sm:$0xff]
        %v8283 = vld [vmem:[%s8280 + $0x10] sm:$0xff]
        %v8284 = vld [vmem:[%s8280 + $0x18] sm:$0xff]
        %v8285 = vcombine.low %v7977, %v7985
        %v8287 = vunpack.c.l.s4 1983009808
        %v8288 = vunpack.c.0.s8 %v8287
        %v8289 = vlaneseq
        %v8290 = vshrl.u32 %v8289, 7
        %v8291 = vsub.s32 %v8288, %v8290
        %v8292 = vrot.slane %v8285, %v8291
        %v8293 = vsel %vm4656, %v8292, 0
        %8295 = vmatprep.subr.mxu0 0.0
        %8296 = vmatpush1.msra.mxu0 0.0
        %8297 = vmatprep.subr.mxu0 0.0
        %8298 = vmatpush1.msra.mxu0 0.0
        %8299 = vmatprep.subr.mxu0 0.0
        %8300 = vmatpush1.msra.mxu0 0.0
        %8301 = vmatprep.subr.mxu0 0.0
        %8302 = vmatpush1.msra.mxu0 0.0
        %8303 = vmatprep.subr.mxu0 0.0
        %8304 = vmatpush1.msra.mxu0 0.0
        %8305 = vmatprep.subr.mxu0 0.0
        %8306 = vmatpush1.msra.mxu0 0.0
        %8307 = vmatprep.subr.mxu0 0.0
        %8308 = vmatpush1.msra.mxu0 0.0
        %8309 = vmatprep.subr.mxu0 0.0
        %8310 = vmatpush1.msra.mxu0 0.0
        %8311 = vmatprep.subr.mxu0 0.0
        %8312 = vmatpush1.msra.mxu0 0.0
        %8313 = vmatprep.subr.mxu0 0.0
        %8314 = vmatpush1.msra.mxu0 0.0
        %8315 = vmatprep.subr.mxu0 0.0
        %8316 = vmatpush1.msra.mxu0 0.0
        %8317 = vmatprep.subr.mxu0 0.0
        %8318 = vmatpush1.msra.mxu0 0.0
        %8319 = vmatprep.subr.mxu0 0.0
        %8320 = vmatpush1.msra.mxu0 %v8284
        %8321 = vmatprep.subr.mxu0 0.0
        %8322 = vmatpush1.msra.mxu0 %v8283
        %8323 = vmatprep.subr.mxu0 0.0
        %8324 = vmatpush1.msra.mxu0 %v8282
        %8325 = vmatprep.subr.mxu0 0.0
        %8326 = vmatpush1.msra.mxu0 %v8281
        %8327 = vmatprep.subr.mxu0 0.0
        %8328 = vmatpush2.msra.mxu0 0.0
        %8329 = vmatprep.subr.mxu0 0.0
        %8330 = vmatpush2.msra.mxu0 0.0
        %8331 = vmatprep.subr.mxu0 0.0
        %8332 = vmatpush2.msra.mxu0 0.0
        %8333 = vmatprep.subr.mxu0 0.0
        %8334 = vmatpush2.msra.mxu0 0.0
        %8335 = vmatprep.subr.mxu0 0.0
        %8336 = vmatpush2.msra.mxu0 0.0
        %8337 = vmatprep.subr.mxu0 0.0
        %8338 = vmatpush2.msra.mxu0 0.0
        %8339 = vmatprep.subr.mxu0 0.0
        %8340 = vmatpush2.msra.mxu0 0.0
        %8341 = vmatprep.subr.mxu0 0.0
        %8342 = vmatpush2.msra.mxu0 0.0
        %8343 = vmatprep.subr.mxu0 0.0
        %8344 = vmatpush2.msra.mxu0 0.0
        %8345 = vmatprep.subr.mxu0 0.0
        %8346 = vmatpush2.msra.mxu0 0.0
        %8347 = vmatprep.subr.mxu0 0.0
        %8348 = vmatpush2.msra.mxu0 0.0
        %8349 = vmatprep.subr.mxu0 0.0
        %8350 = vmatpush2.msra.mxu0 0.0
        %8351 = vmatprep.subr.mxu0 0.0
        %8352 = vmatpush2.msra.mxu0 0.0
        %8353 = vmatprep.subr.mxu0 0.0
        %8354 = vmatpush2.msra.mxu0 0.0
        %8355 = vmatprep.subr.mxu0 0.0
        %8356 = vmatpush2.msra.mxu0 0.0
        %8357 = vmatprep.subr.mxu0 0.0
        %8358 = vmatpush2.msra.mxu0 0.0
        %8359 = vmatprep.mubr.f32.mxu0 0.0
        %8360 = vmatmul.mubr.f32.gmra.mxu0 %v8293
        %v8361 = vpop.f32.mrf.mxu0
        %v8362 = vadd.f32 0.0, %v8361
        %v8363 = vpop.f32.mrf.mxu0
        %8364 = vdwg.mxu0
        %v8365 = vadd.f32 %v8279, %v8362
        %s8366 = scalar_lea.vmem %s7, 160
        %v8367 = vld [vmem:[%s8366] sm:$0xff]
        %v8368 = vld [vmem:[%s8366 + $0x8] sm:$0xff]
        %v8369 = vld [vmem:[%s8366 + $0x10] sm:$0xff]
        %v8370 = vld [vmem:[%s8366 + $0x18] sm:$0xff]
        %v8371 = vcombine.low %v7985, %v8091
        %v8373 = vunpack.c.l.s4 1983009808
        %v8374 = vunpack.c.0.s8 %v8373
        %v8375 = vlaneseq
        %v8376 = vshrl.u32 %v8375, 7
        %v8377 = vsub.s32 %v8374, %v8376
        %v8378 = vrot.slane %v8371, %v8377
        %v8379 = vsel %vm4656, %v8378, 0
        %8381 = vmatprep.subr.mxu0 0.0
        %8382 = vmatpush1.msra.mxu0 0.0
        %8383 = vmatprep.subr.mxu0 0.0
        %8384 = vmatpush1.msra.mxu0 0.0
        %8385 = vmatprep.subr.mxu0 0.0
        %8386 = vmatpush1.msra.mxu0 0.0
        %8387 = vmatprep.subr.mxu0 0.0
        %8388 = vmatpush1.msra.mxu0 0.0
        %8389 = vmatprep.subr.mxu0 0.0
        %8390 = vmatpush1.msra.mxu0 0.0
        %8391 = vmatprep.subr.mxu0 0.0
        %8392 = vmatpush1.msra.mxu0 0.0
        %8393 = vmatprep.subr.mxu0 0.0
        %8394 = vmatpush1.msra.mxu0 0.0
        %8395 = vmatprep.subr.mxu0 0.0
        %8396 = vmatpush1.msra.mxu0 0.0
        %8397 = vmatprep.subr.mxu0 0.0
        %8398 = vmatpush1.msra.mxu0 0.0
        %8399 = vmatprep.subr.mxu0 0.0
        %8400 = vmatpush1.msra.mxu0 0.0
        %8401 = vmatprep.subr.mxu0 0.0
        %8402 = vmatpush1.msra.mxu0 0.0
        %8403 = vmatprep.subr.mxu0 0.0
        %8404 = vmatpush1.msra.mxu0 0.0
        %8405 = vmatprep.subr.mxu0 0.0
        %8406 = vmatpush1.msra.mxu0 %v8370
        %8407 = vmatprep.subr.mxu0 0.0
        %8408 = vmatpush1.msra.mxu0 %v8369
        %8409 = vmatprep.subr.mxu0 0.0
        %8410 = vmatpush1.msra.mxu0 %v8368
        %8411 = vmatprep.subr.mxu0 0.0
        %8412 = vmatpush1.msra.mxu0 %v8367
        %8413 = vmatprep.subr.mxu0 0.0
        %8414 = vmatpush2.msra.mxu0 0.0
        %8415 = vmatprep.subr.mxu0 0.0
        %8416 = vmatpush2.msra.mxu0 0.0
        %8417 = vmatprep.subr.mxu0 0.0
        %8418 = vmatpush2.msra.mxu0 0.0
        %8419 = vmatprep.subr.mxu0 0.0
        %8420 = vmatpush2.msra.mxu0 0.0
        %8421 = vmatprep.subr.mxu0 0.0
        %8422 = vmatpush2.msra.mxu0 0.0
        %8423 = vmatprep.subr.mxu0 0.0
        %8424 = vmatpush2.msra.mxu0 0.0
        %8425 = vmatprep.subr.mxu0 0.0
        %8426 = vmatpush2.msra.mxu0 0.0
        %8427 = vmatprep.subr.mxu0 0.0
        %8428 = vmatpush2.msra.mxu0 0.0
        %8429 = vmatprep.subr.mxu0 0.0
        %8430 = vmatpush2.msra.mxu0 0.0
        %8431 = vmatprep.subr.mxu0 0.0
        %8432 = vmatpush2.msra.mxu0 0.0
        %8433 = vmatprep.subr.mxu0 0.0
        %8434 = vmatpush2.msra.mxu0 0.0
        %8435 = vmatprep.subr.mxu0 0.0
        %8436 = vmatpush2.msra.mxu0 0.0
        %8437 = vmatprep.subr.mxu0 0.0
        %8438 = vmatpush2.msra.mxu0 0.0
        %8439 = vmatprep.subr.mxu0 0.0
        %8440 = vmatpush2.msra.mxu0 0.0
        %8441 = vmatprep.subr.mxu0 0.0
        %8442 = vmatpush2.msra.mxu0 0.0
        %8443 = vmatprep.subr.mxu0 0.0
        %8444 = vmatpush2.msra.mxu0 0.0
        %8445 = vmatprep.mubr.f32.mxu0 0.0
        %8446 = vmatmul.mubr.f32.gmra.mxu0 %v8379
        %v8447 = vpop.f32.mrf.mxu0
        %v8448 = vadd.f32 0.0, %v8447
        %v8449 = vpop.f32.mrf.mxu0
        %8450 = vdwg.mxu0
        %v8451 = vadd.f32 %v8365, %v8448
        %s8452 = scalar_lea.vmem %s7, 256
        %v8453 = vld [vmem:[%s8452] sm:$0xff]
        %v8454 = vld [vmem:[%s8452 + $0x8] sm:$0xff]
        %v8455 = vld [vmem:[%s8452 + $0x10] sm:$0xff]
        %v8456 = vld [vmem:[%s8452 + $0x18] sm:$0xff]
        %v8457 = vcombine.low %v8091, %v8189
        %v8459 = vunpack.c.l.s4 1983009808
        %v8460 = vunpack.c.0.s8 %v8459
        %v8461 = vlaneseq
        %v8462 = vshrl.u32 %v8461, 7
        %v8463 = vsub.s32 %v8460, %v8462
        %v8464 = vrot.slane %v8457, %v8463
        %v8465 = vsel %vm4656, %v8464, 0
        %8467 = vmatprep.subr.mxu0 0.0
        %8468 = vmatpush1.msra.mxu0 0.0
        %8469 = vmatprep.subr.mxu0 0.0
        %8470 = vmatpush1.msra.mxu0 0.0
        %8471 = vmatprep.subr.mxu0 0.0
        %8472 = vmatpush1.msra.mxu0 0.0
        %8473 = vmatprep.subr.mxu0 0.0
        %8474 = vmatpush1.msra.mxu0 0.0
        %8475 = vmatprep.subr.mxu0 0.0
        %8476 = vmatpush1.msra.mxu0 0.0
        %8477 = vmatprep.subr.mxu0 0.0
        %8478 = vmatpush1.msra.mxu0 0.0
        %8479 = vmatprep.subr.mxu0 0.0
        %8480 = vmatpush1.msra.mxu0 0.0
        %8481 = vmatprep.subr.mxu0 0.0
        %8482 = vmatpush1.msra.mxu0 0.0
        %8483 = vmatprep.subr.mxu0 0.0
        %8484 = vmatpush1.msra.mxu0 0.0
        %8485 = vmatprep.subr.mxu0 0.0
        %8486 = vmatpush1.msra.mxu0 0.0
        %8487 = vmatprep.subr.mxu0 0.0
        %8488 = vmatpush1.msra.mxu0 0.0
        %8489 = vmatprep.subr.mxu0 0.0
        %8490 = vmatpush1.msra.mxu0 0.0
        %8491 = vmatprep.subr.mxu0 0.0
        %8492 = vmatpush1.msra.mxu0 %v8456
        %8493 = vmatprep.subr.mxu0 0.0
        %8494 = vmatpush1.msra.mxu0 %v8455
        %8495 = vmatprep.subr.mxu0 0.0
        %8496 = vmatpush1.msra.mxu0 %v8454
        %8497 = vmatprep.subr.mxu0 0.0
        %8498 = vmatpush1.msra.mxu0 %v8453
        %8499 = vmatprep.subr.mxu0 0.0
        %8500 = vmatpush2.msra.mxu0 0.0
        %8501 = vmatprep.subr.mxu0 0.0
        %8502 = vmatpush2.msra.mxu0 0.0
        %8503 = vmatprep.subr.mxu0 0.0
        %8504 = vmatpush2.msra.mxu0 0.0
        %8505 = vmatprep.subr.mxu0 0.0
        %8506 = vmatpush2.msra.mxu0 0.0
        %8507 = vmatprep.subr.mxu0 0.0
        %8508 = vmatpush2.msra.mxu0 0.0
        %8509 = vmatprep.subr.mxu0 0.0
        %8510 = vmatpush2.msra.mxu0 0.0
        %8511 = vmatprep.subr.mxu0 0.0
        %8512 = vmatpush2.msra.mxu0 0.0
        %8513 = vmatprep.subr.mxu0 0.0
        %8514 = vmatpush2.msra.mxu0 0.0
        %8515 = vmatprep.subr.mxu0 0.0
        %8516 = vmatpush2.msra.mxu0 0.0
        %8517 = vmatprep.subr.mxu0 0.0
        %8518 = vmatpush2.msra.mxu0 0.0
        %8519 = vmatprep.subr.mxu0 0.0
        %8520 = vmatpush2.msra.mxu0 0.0
        %8521 = vmatprep.subr.mxu0 0.0
        %8522 = vmatpush2.msra.mxu0 0.0
        %8523 = vmatprep.subr.mxu0 0.0
        %8524 = vmatpush2.msra.mxu0 0.0
        %8525 = vmatprep.subr.mxu0 0.0
        %8526 = vmatpush2.msra.mxu0 0.0
        %8527 = vmatprep.subr.mxu0 0.0
        %8528 = vmatpush2.msra.mxu0 0.0
        %8529 = vmatprep.subr.mxu0 0.0
        %8530 = vmatpush2.msra.mxu0 0.0
        %8531 = vmatprep.mubr.f32.mxu0 0.0
        %8532 = vmatmul.mubr.f32.gmra.mxu0 %v8465
        %v8533 = vpop.f32.mrf.mxu0
        %v8534 = vadd.f32 0.0, %v8533
        %v8535 = vpop.f32.mrf.mxu0
        %8536 = vdwg.mxu0
        %v8537 = vadd.f32 %v8451, %v8534
        %v8538 = vld [vmem:[%s8] sm:$0x1]
        %v8540 = vlaneseq
        %v8541 = vshrl.u32 %v8540, 7
        %v8542 = vsub.s32 0, %v8541
        %v8543 = vrot.slane %v8538, %v8542
        %v8545 = vadd.f32 %v8537, %v8543
        %v8546 = vmax.f32 %v8545, 0.0
        %v8548 = vrot.slane %v8546, 1
        %v8550 = vmax.f32 %v8546, %v8548
        %v8552 = vrot.slane %v8550, 2
        %v8554 = vmax.f32 %v8550, %v8552
        %v8555 = vadd.f32 %v8554, 0.0
        %v8556 = vld [vmem:[%s9] sm:$0xff]
        %v8557 = vld [vmem:[%s9 + $0x8] sm:$0xff]
        %v8558 = vld [vmem:[%s9 + $0x10] sm:$0xff]
        %v8559 = vld [vmem:[%s9 + $0x18] sm:$0xff]
        %v8560 = vld [vmem:[%s9 + $0x20] sm:$0xff]
        %v8561 = vld [vmem:[%s9 + $0x28] sm:$0xff]
        %v8562 = vld [vmem:[%s9 + $0x30] sm:$0xff]
        %v8563 = vld [vmem:[%s9 + $0x38] sm:$0xff]
        %v8564 = vld [vmem:[%s10] sm:$0x1]
        %vm8565 = vcmask 523264
        %v8567 = vsel %vm8565, %v8555, 0
        %8569 = vmatprep.subr.mxu0 0.0
        %8570 = vmatpush1.msra.mxu0 0.0
        %8571 = vmatprep.subr.mxu0 0.0
        %8572 = vmatpush1.msra.mxu0 0.0
        %8573 = vmatprep.subr.mxu0 0.0
        %8574 = vmatpush1.msra.mxu0 0.0
        %8575 = vmatprep.subr.mxu0 0.0
        %8576 = vmatpush1.msra.mxu0 0.0
        %8577 = vmatprep.subr.mxu0 0.0
        %8578 = vmatpush1.msra.mxu0 0.0
        %8579 = vmatprep.subr.mxu0 0.0
        %8580 = vmatpush1.msra.mxu0 0.0
        %8581 = vmatprep.subr.mxu0 0.0
        %8582 = vmatpush1.msra.mxu0 0.0
        %8583 = vmatprep.subr.mxu0 0.0
        %8584 = vmatpush1.msra.mxu0 0.0
        %8585 = vmatprep.subr.mxu0 0.0
        %8586 = vmatpush1.msra.mxu0 %v8563
        %8587 = vmatprep.subr.mxu0 0.0
        %8588 = vmatpush1.msra.mxu0 %v8562
        %8589 = vmatprep.subr.mxu0 0.0
        %8590 = vmatpush1.msra.mxu0 %v8561
        %8591 = vmatprep.subr.mxu0 0.0
        %8592 = vmatpush1.msra.mxu0 %v8560
        %8593 = vmatprep.subr.mxu0 0.0
        %8594 = vmatpush1.msra.mxu0 %v8559
        %8595 = vmatprep.subr.mxu0 0.0
        %8596 = vmatpush1.msra.mxu0 %v8558
        %8597 = vmatprep.subr.mxu0 0.0
        %8598 = vmatpush1.msra.mxu0 %v8557
        %8599 = vmatprep.subr.mxu0 0.0
        %8600 = vmatpush1.msra.mxu0 %v8556
        %8601 = vmatprep.subr.mxu0 0.0
        %8602 = vmatpush2.msra.mxu0 0.0
        %8603 = vmatprep.subr.mxu0 0.0
        %8604 = vmatpush2.msra.mxu0 0.0
        %8605 = vmatprep.subr.mxu0 0.0
        %8606 = vmatpush2.msra.mxu0 0.0
        %8607 = vmatprep.subr.mxu0 0.0
        %8608 = vmatpush2.msra.mxu0 0.0
        %8609 = vmatprep.subr.mxu0 0.0
        %8610 = vmatpush2.msra.mxu0 0.0
        %8611 = vmatprep.subr.mxu0 0.0
        %8612 = vmatpush2.msra.mxu0 0.0
        %8613 = vmatprep.subr.mxu0 0.0
        %8614 = vmatpush2.msra.mxu0 0.0
        %8615 = vmatprep.subr.mxu0 0.0
        %8616 = vmatpush2.msra.mxu0 0.0
        %8617 = vmatprep.subr.mxu0 0.0
        %8618 = vmatpush2.msra.mxu0 0.0
        %8619 = vmatprep.subr.mxu0 0.0
        %8620 = vmatpush2.msra.mxu0 0.0
        %8621 = vmatprep.subr.mxu0 0.0
        %8622 = vmatpush2.msra.mxu0 0.0
        %8623 = vmatprep.subr.mxu0 0.0
        %8624 = vmatpush2.msra.mxu0 0.0
        %8625 = vmatprep.subr.mxu0 0.0
        %8626 = vmatpush2.msra.mxu0 0.0
        %8627 = vmatprep.subr.mxu0 0.0
        %8628 = vmatpush2.msra.mxu0 0.0
        %8629 = vmatprep.subr.mxu0 0.0
        %8630 = vmatpush2.msra.mxu0 0.0
        %8631 = vmatprep.subr.mxu0 0.0
        %8632 = vmatpush2.msra.mxu0 0.0
        %8633 = vmatprep.mubr.f32.mxu0 0.0
        %8634 = vmatmul.mubr.f32.gmra.mxu0 %v8567
        %v8635 = vpop.f32.mrf.mxu0
        %v8636 = vadd.f32 %v8564, %v8635
        %v8637 = vpop.f32.mrf.mxu0
        %8638 = vdwg.mxu0
        %vm8639 = vcmask 32768
        %8640 = vst.msk [vmem:[%s378] sm:$0x1] %vm8639, %v8636
        %s8641 = sand.u32 %s269, 1
        %s8642 = scalar_lea.sflag [#allocation7], %s8641
        %s8643 = sand.u32 %s269, 1
        %s8644 = scalar_lea.vmem [#allocation6], %s8643
        // Predicated region
        $region65: #{convnet_forward.1} parent=63 // pred_check
          %p8645 = pneg %p279
        $region66: #{convnet_forward.1} parent=63 // pred_check_branch
          %8647 = sbr.rel (%p8645) target = $region68
        $region67: #{convnet_forward.1} parent=63 // pred_region
          %s8649 = ssub.s32 16, 16
          %8650 = vsyncadd %s8642, %s8649
          %s8651 = smul.addr %s25, 16
          %s8652 = scalar_lea.hbm %s11, %s8651
          %s8654 = sshll.u32 %s8644, 4
          %s8655 = int_to_ptr.vmem [resolvable:$true] %s8654
          %8657 = dma.vmem_to_hbm [thread:$0]  %s8655, 16, %s8652, %s8642
        $region68: #{convnet_forward.1} parent=63 // pred_fallthru
          _
      $region64: #{convnet_forward.1} parent=5 // pred_fallthru
        _
      %p8658 = scmp.le.s32.totalorder 2, %s20
      // Predicated region
      $region69: #{convnet_forward.1} parent=5 // pred_check
        %p8659 = pneg %p8658
      $region70: #{convnet_forward.1} parent=5 // pred_check_branch
        %8661 = sbr.rel (%p8659) target = $region72
      $region71: #{convnet_forward.1} parent=5 // pred_region
        %s8662 = ssub.s32 %s20, 2
        // Predicated region
        $region73: #{convnet_forward.1} parent=71 // pred_check
          %p8663 = pneg %p285
        $region74: #{convnet_forward.1} parent=71 // pred_check_branch
          %8665 = sbr.rel (%p8663) target = $region76
        $region75: #{convnet_forward.1} parent=71 // pred_region
          %s8666 = sand.u32 %s270, 1
          %s8667 = scalar_lea.sflag [#allocation7], %s8666
          %s8668 = sand.u32 %s270, 1
          %s8669 = scalar_lea.vmem [#allocation6], %s8668
          %8670 = dma.done %s8667, 16
        $region76: #{convnet_forward.1} parent=71 // pred_fallthru
          _
      $region72: #{convnet_forward.1} parent=5 // pred_fallthru
        _
    $region6: #{convnet_forward.1} parent=1 // loop_footer
      %s24 = sadd.s32 1, %s20
    $region7: #{convnet_forward.1} parent=1 // loop_footer_branch
      %19 = sbr.rel target = $region3
    $region8: #{convnet_forward.1} parent=1 // loop_exit
      _
    %8671 = vsyncpa [#allocation7], 1
    %s8672 = scalar_lea.sflag [#allocation7], 1
    %8673 = vsyncpa %s8672, 1

</llo_original>
